<compile_context>
chip_gen: v5e
topology: v5e:2x2
jax: 0.10.0
libtpu: 0.0.40
codegen_flags: <defaults>
</compile_context>

<pallas_src>
import math
import functools

import jax
import jax.numpy as jnp
from jax.experimental import pallas as pl
from jax.experimental.pallas import tpu as pltpu


# ---------------------------- helpers ----------------------------

def _pick_block(total, target, align=1):
    """Largest aligned divisor of `total` that is <= target; falls back to `total`."""
    if total <= target:
        return total
    for cand in range(min(target, total), 0, -1):
        if total % cand == 0 and cand % align == 0:
            return cand
    return total


# ---------------------------- Pallas kernels ----------------------------

def _fused_attn_kernel(x_ref, wqkv_ref, bqkv_ref, wo_ref, bo_ref, o_ref, *,
                       nheads, scale):
    """Fused MHA for a (Bblk, L, D) slab of independent length-L sequences.

    out = x + ( concat_h softmax(q_h k_h^T / sqrt(dk)) v_h ) @ Wo + bo
    The output projection is accumulated per head (row-slices of Wo), which is
    mathematically identical to concatenating heads then one matmul.
    """
    blk_b, L, D = x_ref.shape
    dk = D // nheads

    x = x_ref[...]                                  # (Bblk, L, D), f32
    x2d = x.reshape(blk_b * L, D)

    # Fused Q|K|V projection: one (Bblk*L, D) @ (D, 3D) MXU matmul.
    qkv = jnp.dot(x2d, wqkv_ref[...],
                  preferred_element_type=jnp.float32) + bqkv_ref[...]
    qkv = qkv.reshape(blk_b, L, 3 * D)

    # Per-head attention + fused output projection + residual.
    proj = jnp.zeros((blk_b * L, D), jnp.float32) + bo_ref[...]
    for h in range(nheads):
        q = qkv[:, :, h * dk:(h + 1) * dk]                    # (Bblk, L, dk)
        k = qkv[:, :, D + h * dk:D + (h + 1) * dk]
        v = qkv[:, :, 2 * D + h * dk:2 * D + (h + 1) * dk]
        s = jnp.einsum("bqd,bkd->bqk", q, k,
                       preferred_element_type=jnp.float32) * scale
        s = s - jnp.max(s, axis=-1, keepdims=True)
        p = jnp.exp(s)
        # exact normalization (kept f32-exact so the 1e-4 reference check holds;
        # pl.reciprocal(approx=True) is a drop-in if a looser tolerance is OK)
        p = p / jnp.sum(p, axis=-1, keepdims=True)
        oh = jnp.einsum("bqk,bkd->bqd", p, v,
                        preferred_element_type=jnp.float32)   # (Bblk, L, dk)
        proj = proj + jnp.dot(oh.reshape(blk_b * L, dk),
                              wo_ref[h * dk:(h + 1) * dk, :],
                              preferred_element_type=jnp.float32)

    o_ref[...] = (x + proj.reshape(blk_b, L, D)).astype(o_ref.dtype)


def fused_attention(x3d, wqkv, bqkv, wo, bo, nheads):
    """x3d: (B, L, D) independent sequences -> x3d + MHA(x3d)."""
    B, L, D = x3d.shape
    blk_b = _pick_block(B, 64)
    kern = functools.partial(_fused_attn_kernel, nheads=nheads,
                             scale=1.0 / math.sqrt(D // nheads))
    xspec = pl.BlockSpec((blk_b, L, D), lambda b: (b, 0, 0))
    return pl.pallas_call(
        kern,
        out_shape=jax.ShapeDtypeStruct((B, L, D), x3d.dtype),
        grid=(B // blk_b,),
        in_specs=[
            xspec,
            pl.BlockSpec((D, 3 * D), lambda b: (0, 0)),
            pl.BlockSpec((1, 3 * D), lambda b: (0, 0)),
            pl.BlockSpec((D, D), lambda b: (0, 0)),
            pl.BlockSpec((1, D), lambda b: (0, 0)),
        ],
        out_specs=xspec,
        compiler_params=pltpu.CompilerParams(dimension_semantics=("parallel",)),
    )(x3d, wqkv, bqkv.reshape(1, 3 * D), wo, bo.reshape(1, D))


def _ffn_residual_kernel(x_ref, w1_ref, b1_ref, w2_ref, b2_ref, o_ref):
    x = x_ref[...]
    h = jnp.dot(x, w1_ref[...], preferred_element_type=jnp.float32) + b1_ref[...]
    h = jnp.maximum(h, 0.0)
    y = jnp.dot(h, w2_ref[...], preferred_element_type=jnp.float32) + b2_ref[...]
    o_ref[...] = (x + y).astype(o_ref.dtype)


def feed_forward_residual(x2d, w1, b1, w2, b2):
    """x + ReLU(x @ W1 + b1) @ W2 + b2, tiled over rows, weights resident in VMEM."""
    M, D = x2d.shape
    F = w1.shape[1]
    # Row tile: re-derive for large M / v7x's 64 MiB VMEM budget; here M is tiny.
    tm = _pick_block(M, 512, align=8)
    return pl.pallas_call(
        _ffn_residual_kernel,
        out_shape=jax.ShapeDtypeStruct((M, D), x2d.dtype),
        grid=(M // tm,),
        in_specs=[
            pl.BlockSpec((tm, D), lambda i: (i, 0)),
            pl.BlockSpec((D, F), lambda i: (0, 0)),
            pl.BlockSpec((1, F), lambda i: (0, 0)),
            pl.BlockSpec((F, D), lambda i: (0, 0)),
            pl.BlockSpec((1, D), lambda i: (0, 0)),
        ],
        out_specs=pl.BlockSpec((tm, D), lambda i: (i, 0)),
        compiler_params=pltpu.CompilerParams(dimension_semantics=("parallel",)),
    )(x2d, w1, b1.reshape(1, F), w2, b2.reshape(1, D))


# ---------------------------- model wrappers ----------------------------

def multi_head_attention_residual(x, p, nheads, mode):
    """Returns x + MHA(x).  mode: 'time' (attend over T) or 'space' (attend over S).

    Dropout is identity at inference; mask is only supported as None.
    """
    # TODO(synk): boolean TimeAttention mask (masked_fill with -inf) not wired in;
    # the EncoderLayer forward default (mask=None) is implemented.
    N, S, T, D = x.shape
    wqkv = jnp.concatenate([p["wq"], p["wk"], p["wv"]], axis=1)   # (D, 3D)
    bqkv = jnp.concatenate([p["bq"], p["bk"], p["bv"]], axis=0)   # (3D,)

    if mode == "time":
        x3 = x.reshape(N * S, T, D)
        y3 = fused_attention(x3, wqkv, bqkv, p["wo"], p["bo"], nheads)
        return y3.reshape(N, S, T, D)
    else:  # space: one transpose of x in, one of the output out (residual commutes)
        x3 = x.transpose(0, 2, 1, 3).reshape(N * T, S, D)
        y3 = fused_attention(x3, wqkv, bqkv, p["wo"], p["bo"], nheads)
        return y3.reshape(N, T, S, D).transpose(0, 2, 1, 3)


def encoder_layer(x, params, nheads):
    x = multi_head_attention_residual(x, params["time_attn"], nheads, "time")
    x = multi_head_attention_residual(x, params["space_attn"], nheads, "space")
    N, S, T, D = x.shape
    return feed_forward_residual(
        x.reshape(N * S * T, D),
        params["w1"], params["b1"], params["w2"], params["b2"],
    ).reshape(N, S, T, D)


# ---------------------------- pure-JAX reference ----------------------------

def _ref_mha(x, p, nheads, mode):
    N, S, T, D = x.shape
    dk = D // nheads

    def proj(w, b):
        return (x @ w + b).reshape(N, S, T, nheads, dk).transpose(0, 3, 1, 2, 4)

    q, k, v = proj(p["wq"], p["bq"]), proj(p["wk"], p["bk"]), proj(p["wv"], p["bv"])
    if mode == "space":
        q, k, v = (t.transpose(0, 1, 3, 2, 4) for t in (q, k, v))
    s = jnp.einsum("...qd,...kd->...qk", q, k) / math.sqrt(dk)
    a = jax.nn.softmax(s, axis=-1)
    o = jnp.einsum("...qk,...kd->...qd", a, v)
    if mode == "space":
        o = o.transpose(0, 1, 3, 2, 4)
    o = o.transpose(0, 2, 3, 1, 4).reshape(N, S, T, D)
    return o @ p["wo"] + p["bo"]


def encoder_layer_ref(x, params, nheads):
    x = x + _ref_mha(x, params["time_attn"], nheads, "time")
    x = x + _ref_mha(x, params["space_attn"], nheads, "space")
    h = jnp.maximum(x @ params["w1"] + params["b1"], 0.0)
    return x + (h @ params["w2"] + params["b2"])


# ---------------------------- init & main ----------------------------

def init_params(key, d_model, nheads, dim_feedforward):
    keys = jax.random.split(key, 20)
    it = iter(keys)

    def lin(kin, kout):
        scale = 1.0 / math.sqrt(kin)
        w = jax.random.uniform(next(it), (kin, kout), jnp.float32, -scale, scale)
        b = jax.random.uniform(next(it), (kout,), jnp.float32, -scale, scale)
        return w, b

    def attn_params():
        wq, bq = lin(d_model, d_model)
        wk, bk = lin(d_model, d_model)
        wv, bv = lin(d_model, d_model)
        wo, bo = lin(d_model, d_model)
        return dict(wq=wq, bq=bq, wk=wk, bk=bk, wv=wv, bv=bv, wo=wo, bo=bo)

    params = {
        "time_attn": attn_params(),
        "space_attn": attn_params(),
    }
    params["w1"], params["b1"] = lin(d_model, dim_feedforward)
    params["w2"], params["b2"] = lin(dim_feedforward, d_model)
    return params


if __name__ == "__main__":
    N, S, T = 2, 4, 8            # batch, space positions, time steps
    D, NHEADS, DFF = 32, 4, 64   # d_model, nheads, dim_feedforward

    key = jax.random.PRNGKey(0)
    kx, kp = jax.random.split(key)
    x = jax.random.normal(kx, (N, S, T, D), dtype=jnp.float32)
    params = init_params(kp, D, NHEADS, DFF)

    run = jax.jit(lambda xx, pp: encoder_layer(xx, pp, NHEADS))
    out = jax.block_until_ready(run(x, params))

    ref = encoder_layer_ref(x, params, NHEADS)
    assert out.shape == (N, S, T, D)
    assert jnp.allclose(out, ref, atol=1e-4, rtol=1e-4)

    print("KERNEL_OK")
</pallas_src>

<mosaic_0001>
module attributes {stable_mosaic.version = 11 : i64} {
  func.func @_fused_attn_kernel(%arg0: i32, %arg1: memref<8x8x32xf32, #tpu.memory_space<vmem>>, %arg2: memref<32x96xf32, #tpu.memory_space<vmem>>, %arg3: memref<1x96xf32, #tpu.memory_space<vmem>>, %arg4: memref<32x32xf32, #tpu.memory_space<vmem>>, %arg5: memref<1x32xf32, #tpu.memory_space<vmem>>, %arg6: memref<8x8x32xf32, #tpu.memory_space<vmem>>) attributes {dimension_semantics = [#tpu.dimension_semantics<parallel>], iteration_bounds = array<i64: 1>, scalar_prefetch = 0 : i64, scratch_operands = 0 : i64, tpu.core_type = #tpu.core_type<tc>, window_params = [{transform_indices = @transform_0, window_bounds = array<i64: 8, 8, 32>}, {pipeline_mode = #tpu.pipeline_mode<synchronous>, transform_indices = @transform_1, window_bounds = array<i64: 32, 96>}, {pipeline_mode = #tpu.pipeline_mode<synchronous>, transform_indices = @transform_2, window_bounds = array<i64: 1, 96>}, {pipeline_mode = #tpu.pipeline_mode<synchronous>, transform_indices = @transform_3, window_bounds = array<i64: 32, 32>}, {pipeline_mode = #tpu.pipeline_mode<synchronous>, transform_indices = @transform_4, window_bounds = array<i64: 1, 32>}, {transform_indices = @transform_5, window_bounds = array<i64: 8, 8, 32>}]} {
    %c0 = arith.constant 0 : index
    %c0_0 = arith.constant 0 : index
    %c0_1 = arith.constant 0 : index
    %0 = vector.load %arg1[%c0, %c0_0, %c0_1] : memref<8x8x32xf32, #tpu.memory_space<vmem>>, vector<8x8x32xf32>
    %1 = vector.shape_cast %0 : vector<8x8x32xf32> to vector<64x32xf32>
    %c0_2 = arith.constant 0 : index
    %c0_3 = arith.constant 0 : index
    %2 = vector.load %arg2[%c0_2, %c0_3] : memref<32x96xf32, #tpu.memory_space<vmem>>, vector<32x96xf32>
    %cst = arith.constant dense<0.000000e+00> : vector<64x96xf32>
    %3 = tpu.matmul %1, %2, %cst {dimension_numbers = #tpu.dot_dimension_numbers<[1], [0], [0], [1], [0, 0, 1, 1], [], []>} : vector<64x32xf32>, vector<32x96xf32>, vector<64x96xf32> -> vector<64x96xf32>
    %c0_4 = arith.constant 0 : index
    %c0_5 = arith.constant 0 : index
    %4 = vector.load %arg3[%c0_4, %c0_5] : memref<1x96xf32, #tpu.memory_space<vmem>>, vector<1x96xf32>
    %5 = vector.broadcast %4 : vector<1x96xf32> to vector<64x96xf32>
    %6 = arith.addf %3, %5 : vector<64x96xf32>
    %7 = vector.shape_cast %6 : vector<64x96xf32> to vector<8x8x96xf32>
    %cst_6 = arith.constant 0.000000e+00 : f32
    %8 = vector.broadcast %cst_6 : f32 to vector<64x32xf32>
    %c0_7 = arith.constant 0 : index
    %c0_8 = arith.constant 0 : index
    %9 = vector.load %arg5[%c0_7, %c0_8] : memref<1x32xf32, #tpu.memory_space<vmem>>, vector<1x32xf32>
    %10 = vector.broadcast %9 : vector<1x32xf32> to vector<64x32xf32>
    %11 = arith.addf %8, %10 : vector<64x32xf32>
    %12 = vector.extract_strided_slice %7 {offsets = [0, 0, 0], sizes = [8, 8, 8], strides = [1, 1, 1]} : vector<8x8x96xf32> to vector<8x8x8xf32>
    %13 = vector.extract_strided_slice %7 {offsets = [0, 0, 32], sizes = [8, 8, 8], strides = [1, 1, 1]} : vector<8x8x96xf32> to vector<8x8x8xf32>
    %14 = vector.extract_strided_slice %7 {offsets = [0, 0, 64], sizes = [8, 8, 8], strides = [1, 1, 1]} : vector<8x8x96xf32> to vector<8x8x8xf32>
    "tpu.trace_start"() <{level = 10 : i32, message = "bqd,bkd->bqk"}> : () -> ()
    %cst_9 = arith.constant dense<0.000000e+00> : vector<8x8x8xf32>
    %15 = tpu.matmul %12, %13, %cst_9 {dimension_numbers = #tpu.dot_dimension_numbers<[2], [2], [1], [1], [0, 0, 0, 1, 1, 1], [0], [0]>} : vector<8x8x8xf32>, vector<8x8x8xf32>, vector<8x8x8xf32> -> vector<8x8x8xf32>
    "tpu.trace_stop"() : () -> ()
    %cst_10 = arith.constant 0.353553385 : f32
    %16 = vector.broadcast %cst_10 : f32 to vector<8x8x8xf32>
    %17 = arith.mulf %15, %16 : vector<8x8x8xf32>
    %cst_11 = arith.constant dense<0xFF800000> : vector<8x8xf32>
    %18 = vector.multi_reduction <maximumf>, %17, %cst_11 [2] : vector<8x8x8xf32> to vector<8x8xf32>
    %19 = vector.shape_cast %18 : vector<8x8xf32> to vector<8x8x1xf32>
    %20 = vector.broadcast %19 : vector<8x8x1xf32> to vector<8x8x8xf32>
    %21 = arith.subf %17, %20 : vector<8x8x8xf32>
    %22 = math.exp %21 : vector<8x8x8xf32>
    %cst_12 = arith.constant dense<0.000000e+00> : vector<8x8xf32>
    %23 = vector.multi_reduction <add>, %22, %cst_12 [2] : vector<8x8x8xf32> to vector<8x8xf32>
    %24 = vector.shape_cast %23 : vector<8x8xf32> to vector<8x8x1xf32>
    %25 = vector.broadcast %24 : vector<8x8x1xf32> to vector<8x8x8xf32>
    %26 = arith.divf %22, %25 : vector<8x8x8xf32>
    "tpu.trace_start"() <{level = 10 : i32, message = "bqk,bkd->bqd"}> : () -> ()
    %cst_13 = arith.constant dense<0.000000e+00> : vector<8x8x8xf32>
    %27 = tpu.matmul %26, %14, %cst_13 {dimension_numbers = #tpu.dot_dimension_numbers<[2], [1], [1], [2], [0, 0, 0, 1, 1, 2], [0], [0]>} : vector<8x8x8xf32>, vector<8x8x8xf32>, vector<8x8x8xf32> -> vector<8x8x8xf32>
    "tpu.trace_stop"() : () -> ()
    %28 = vector.shape_cast %27 : vector<8x8x8xf32> to vector<64x8xf32>
    %c0_14 = arith.constant 0 : index
    %c0_15 = arith.constant 0 : index
    %29 = vector.load %arg4[%c0_14, %c0_15] : memref<32x32xf32, #tpu.memory_space<vmem>>, vector<8x32xf32>
    %cst_16 = arith.constant dense<0.000000e+00> : vector<64x32xf32>
    %30 = tpu.matmul %28, %29, %cst_16 {dimension_numbers = #tpu.dot_dimension_numbers<[1], [0], [0], [1], [0, 0, 1, 1], [], []>} : vector<64x8xf32>, vector<8x32xf32>, vector<64x32xf32> -> vector<64x32xf32>
    %31 = arith.addf %11, %30 : vector<64x32xf32>
    %32 = vector.extract_strided_slice %7 {offsets = [0, 0, 8], sizes = [8, 8, 8], strides = [1, 1, 1]} : vector<8x8x96xf32> to vector<8x8x8xf32>
    %33 = vector.extract_strided_slice %7 {offsets = [0, 0, 40], sizes = [8, 8, 8], strides = [1, 1, 1]} : vector<8x8x96xf32> to vector<8x8x8xf32>
    %34 = vector.extract_strided_slice %7 {offsets = [0, 0, 72], sizes = [8, 8, 8], strides = [1, 1, 1]} : vector<8x8x96xf32> to vector<8x8x8xf32>
    "tpu.trace_start"() <{level = 10 : i32, message = "bqd,bkd->bqk"}> : () -> ()
    %cst_17 = arith.constant dense<0.000000e+00> : vector<8x8x8xf32>
    %35 = tpu.matmul %32, %33, %cst_17 {dimension_numbers = #tpu.dot_dimension_numbers<[2], [2], [1], [1], [0, 0, 0, 1, 1, 1], [0], [0]>} : vector<8x8x8xf32>, vector<8x8x8xf32>, vector<8x8x8xf32> -> vector<8x8x8xf32>
    "tpu.trace_stop"() : () -> ()
    %cst_18 = arith.constant 0.353553385 : f32
    %36 = vector.broadcast %cst_18 : f32 to vector<8x8x8xf32>
    %37 = arith.mulf %35, %36 : vector<8x8x8xf32>
    %cst_19 = arith.constant dense<0xFF800000> : vector<8x8xf32>
    %38 = vector.multi_reduction <maximumf>, %37, %cst_19 [2] : vector<8x8x8xf32> to vector<8x8xf32>
    %39 = vector.shape_cast %38 : vector<8x8xf32> to vector<8x8x1xf32>
    %40 = vector.broadcast %39 : vector<8x8x1xf32> to vector<8x8x8xf32>
    %41 = arith.subf %37, %40 : vector<8x8x8xf32>
    %42 = math.exp %41 : vector<8x8x8xf32>
    %cst_20 = arith.constant dense<0.000000e+00> : vector<8x8xf32>
    %43 = vector.multi_reduction <add>, %42, %cst_20 [2] : vector<8x8x8xf32> to vector<8x8xf32>
    %44 = vector.shape_cast %43 : vector<8x8xf32> to vector<8x8x1xf32>
    %45 = vector.broadcast %44 : vector<8x8x1xf32> to vector<8x8x8xf32>
    %46 = arith.divf %42, %45 : vector<8x8x8xf32>
    "tpu.trace_start"() <{level = 10 : i32, message = "bqk,bkd->bqd"}> : () -> ()
    %cst_21 = arith.constant dense<0.000000e+00> : vector<8x8x8xf32>
    %47 = tpu.matmul %46, %34, %cst_21 {dimension_numbers = #tpu.dot_dimension_numbers<[2], [1], [1], [2], [0, 0, 0, 1, 1, 2], [0], [0]>} : vector<8x8x8xf32>, vector<8x8x8xf32>, vector<8x8x8xf32> -> vector<8x8x8xf32>
    "tpu.trace_stop"() : () -> ()
    %48 = vector.shape_cast %47 : vector<8x8x8xf32> to vector<64x8xf32>
    %c8 = arith.constant 8 : index
    %c0_22 = arith.constant 0 : index
    %49 = vector.load %arg4[%c8, %c0_22] : memref<32x32xf32, #tpu.memory_space<vmem>>, vector<8x32xf32>
    %cst_23 = arith.constant dense<0.000000e+00> : vector<64x32xf32>
    %50 = tpu.matmul %48, %49, %cst_23 {dimension_numbers = #tpu.dot_dimension_numbers<[1], [0], [0], [1], [0, 0, 1, 1], [], []>} : vector<64x8xf32>, vector<8x32xf32>, vector<64x32xf32> -> vector<64x32xf32>
    %51 = arith.addf %31, %50 : vector<64x32xf32>
    %52 = vector.extract_strided_slice %7 {offsets = [0, 0, 16], sizes = [8, 8, 8], strides = [1, 1, 1]} : vector<8x8x96xf32> to vector<8x8x8xf32>
    %53 = vector.extract_strided_slice %7 {offsets = [0, 0, 48], sizes = [8, 8, 8], strides = [1, 1, 1]} : vector<8x8x96xf32> to vector<8x8x8xf32>
    %54 = vector.extract_strided_slice %7 {offsets = [0, 0, 80], sizes = [8, 8, 8], strides = [1, 1, 1]} : vector<8x8x96xf32> to vector<8x8x8xf32>
    "tpu.trace_start"() <{level = 10 : i32, message = "bqd,bkd->bqk"}> : () -> ()
    %cst_24 = arith.constant dense<0.000000e+00> : vector<8x8x8xf32>
    %55 = tpu.matmul %52, %53, %cst_24 {dimension_numbers = #tpu.dot_dimension_numbers<[2], [2], [1], [1], [0, 0, 0, 1, 1, 1], [0], [0]>} : vector<8x8x8xf32>, vector<8x8x8xf32>, vector<8x8x8xf32> -> vector<8x8x8xf32>
    "tpu.trace_stop"() : () -> ()
    %cst_25 = arith.constant 0.353553385 : f32
    %56 = vector.broadcast %cst_25 : f32 to vector<8x8x8xf32>
    %57 = arith.mulf %55, %56 : vector<8x8x8xf32>
    %cst_26 = arith.constant dense<0xFF800000> : vector<8x8xf32>
    %58 = vector.multi_reduction <maximumf>, %57, %cst_26 [2] : vector<8x8x8xf32> to vector<8x8xf32>
    %59 = vector.shape_cast %58 : vector<8x8xf32> to vector<8x8x1xf32>
    %60 = vector.broadcast %59 : vector<8x8x1xf32> to vector<8x8x8xf32>
    %61 = arith.subf %57, %60 : vector<8x8x8xf32>
    %62 = math.exp %61 : vector<8x8x8xf32>
    %cst_27 = arith.constant dense<0.000000e+00> : vector<8x8xf32>
    %63 = vector.multi_reduction <add>, %62, %cst_27 [2] : vector<8x8x8xf32> to vector<8x8xf32>
    %64 = vector.shape_cast %63 : vector<8x8xf32> to vector<8x8x1xf32>
    %65 = vector.broadcast %64 : vector<8x8x1xf32> to vector<8x8x8xf32>
    %66 = arith.divf %62, %65 : vector<8x8x8xf32>
    "tpu.trace_start"() <{level = 10 : i32, message = "bqk,bkd->bqd"}> : () -> ()
    %cst_28 = arith.constant dense<0.000000e+00> : vector<8x8x8xf32>
    %67 = tpu.matmul %66, %54, %cst_28 {dimension_numbers = #tpu.dot_dimension_numbers<[2], [1], [1], [2], [0, 0, 0, 1, 1, 2], [0], [0]>} : vector<8x8x8xf32>, vector<8x8x8xf32>, vector<8x8x8xf32> -> vector<8x8x8xf32>
    "tpu.trace_stop"() : () -> ()
    %68 = vector.shape_cast %67 : vector<8x8x8xf32> to vector<64x8xf32>
    %c16 = arith.constant 16 : index
    %c0_29 = arith.constant 0 : index
    %69 = vector.load %arg4[%c16, %c0_29] : memref<32x32xf32, #tpu.memory_space<vmem>>, vector<8x32xf32>
    %cst_30 = arith.constant dense<0.000000e+00> : vector<64x32xf32>
    %70 = tpu.matmul %68, %69, %cst_30 {dimension_numbers = #tpu.dot_dimension_numbers<[1], [0], [0], [1], [0, 0, 1, 1], [], []>} : vector<64x8xf32>, vector<8x32xf32>, vector<64x32xf32> -> vector<64x32xf32>
    %71 = arith.addf %51, %70 : vector<64x32xf32>
    %72 = vector.extract_strided_slice %7 {offsets = [0, 0, 24], sizes = [8, 8, 8], strides = [1, 1, 1]} : vector<8x8x96xf32> to vector<8x8x8xf32>
    %73 = vector.extract_strided_slice %7 {offsets = [0, 0, 56], sizes = [8, 8, 8], strides = [1, 1, 1]} : vector<8x8x96xf32> to vector<8x8x8xf32>
    %74 = vector.extract_strided_slice %7 {offsets = [0, 0, 88], sizes = [8, 8, 8], strides = [1, 1, 1]} : vector<8x8x96xf32> to vector<8x8x8xf32>
    "tpu.trace_start"() <{level = 10 : i32, message = "bqd,bkd->bqk"}> : () -> ()
    %cst_31 = arith.constant dense<0.000000e+00> : vector<8x8x8xf32>
    %75 = tpu.matmul %72, %73, %cst_31 {dimension_numbers = #tpu.dot_dimension_numbers<[2], [2], [1], [1], [0, 0, 0, 1, 1, 1], [0], [0]>} : vector<8x8x8xf32>, vector<8x8x8xf32>, vector<8x8x8xf32> -> vector<8x8x8xf32>
    "tpu.trace_stop"() : () -> ()
    %cst_32 = arith.constant 0.353553385 : f32
    %76 = vector.broadcast %cst_32 : f32 to vector<8x8x8xf32>
    %77 = arith.mulf %75, %76 : vector<8x8x8xf32>
    %cst_33 = arith.constant dense<0xFF800000> : vector<8x8xf32>
    %78 = vector.multi_reduction <maximumf>, %77, %cst_33 [2] : vector<8x8x8xf32> to vector<8x8xf32>
    %79 = vector.shape_cast %78 : vector<8x8xf32> to vector<8x8x1xf32>
    %80 = vector.broadcast %79 : vector<8x8x1xf32> to vector<8x8x8xf32>
    %81 = arith.subf %77, %80 : vector<8x8x8xf32>
    %82 = math.exp %81 : vector<8x8x8xf32>
    %cst_34 = arith.constant dense<0.000000e+00> : vector<8x8xf32>
    %83 = vector.multi_reduction <add>, %82, %cst_34 [2] : vector<8x8x8xf32> to vector<8x8xf32>
    %84 = vector.shape_cast %83 : vector<8x8xf32> to vector<8x8x1xf32>
    %85 = vector.broadcast %84 : vector<8x8x1xf32> to vector<8x8x8xf32>
    %86 = arith.divf %82, %85 : vector<8x8x8xf32>
    "tpu.trace_start"() <{level = 10 : i32, message = "bqk,bkd->bqd"}> : () -> ()
    %cst_35 = arith.constant dense<0.000000e+00> : vector<8x8x8xf32>
    %87 = tpu.matmul %86, %74, %cst_35 {dimension_numbers = #tpu.dot_dimension_numbers<[2], [1], [1], [2], [0, 0, 0, 1, 1, 2], [0], [0]>} : vector<8x8x8xf32>, vector<8x8x8xf32>, vector<8x8x8xf32> -> vector<8x8x8xf32>
    "tpu.trace_stop"() : () -> ()
    %88 = vector.shape_cast %87 : vector<8x8x8xf32> to vector<64x8xf32>
    %c24 = arith.constant 24 : index
    %c0_36 = arith.constant 0 : index
    %89 = vector.load %arg4[%c24, %c0_36] : memref<32x32xf32, #tpu.memory_space<vmem>>, vector<8x32xf32>
    %cst_37 = arith.constant dense<0.000000e+00> : vector<64x32xf32>
    %90 = tpu.matmul %88, %89, %cst_37 {dimension_numbers = #tpu.dot_dimension_numbers<[1], [0], [0], [1], [0, 0, 1, 1], [], []>} : vector<64x8xf32>, vector<8x32xf32>, vector<64x32xf32> -> vector<64x32xf32>
    %91 = arith.addf %71, %90 : vector<64x32xf32>
    %92 = vector.shape_cast %91 : vector<64x32xf32> to vector<8x8x32xf32>
    %93 = arith.addf %0, %92 : vector<8x8x32xf32>
    %c0_38 = arith.constant 0 : index
    %c0_39 = arith.constant 0 : index
    %c0_40 = arith.constant 0 : index
    %94 = vector.load %arg6[%c0_38, %c0_39, %c0_40] : memref<8x8x32xf32, #tpu.memory_space<vmem>>, vector<8x8x32xf32>
    tpu.vector_store %arg6[%c0_38, %c0_39, %c0_40], %93 {strides = array<i32>} : memref<8x8x32xf32, #tpu.memory_space<vmem>>, vector<8x8x32xf32>,
    return
  }
  func.func @transform_0(%arg0: i32) -> (i32, i32, i32) {
    %c0_i32 = arith.constant 0 : i32
    %c0_i32_0 = arith.constant 0 : i32
    %c0_i32_1 = arith.constant 0 : i32
    return %arg0, %c0_i32, %c0_i32_0 : i32, i32, i32
  }
  func.func @transform_1(%arg0: i32) -> (i32, i32) {
    %c0_i32 = arith.constant 0 : i32
    %c0_i32_0 = arith.constant 0 : i32
    %c0_i32_1 = arith.constant 0 : i32
    return %c0_i32, %c0_i32_0 : i32, i32
  }
  func.func @transform_2(%arg0: i32) -> (i32, i32) {
    %c0_i32 = arith.constant 0 : i32
    %c0_i32_0 = arith.constant 0 : i32
    %c0_i32_1 = arith.constant 0 : i32
    return %c0_i32, %c0_i32_0 : i32, i32
  }
  func.func @transform_3(%arg0: i32) -> (i32, i32) {
    %c0_i32 = arith.constant 0 : i32
    %c0_i32_0 = arith.constant 0 : i32
    %c0_i32_1 = arith.constant 0 : i32
    return %c0_i32, %c0_i32_0 : i32, i32
  }
  func.func @transform_4(%arg0: i32) -> (i32, i32) {
    %c0_i32 = arith.constant 0 : i32
    %c0_i32_0 = arith.constant 0 : i32
    %c0_i32_1 = arith.constant 0 : i32
    return %c0_i32, %c0_i32_0 : i32, i32
  }
  func.func @transform_5(%arg0: i32) -> (i32, i32, i32) {
    %c0_i32 = arith.constant 0 : i32
    %c0_i32_0 = arith.constant 0 : i32
    %c0_i32_1 = arith.constant 0 : i32
    return %arg0, %c0_i32, %c0_i32_0 : i32, i32, i32
  }
}

module attributes {stable_mosaic.version = 11 : i64} {
  func.func @_ffn_residual_kernel(%arg0: i32, %arg1: memref<64x32xf32, #tpu.memory_space<vmem>>, %arg2: memref<32x64xf32, #tpu.memory_space<vmem>>, %arg3: memref<1x64xf32, #tpu.memory_space<vmem>>, %arg4: memref<64x32xf32, #tpu.memory_space<vmem>>, %arg5: memref<1x32xf32, #tpu.memory_space<vmem>>, %arg6: memref<64x32xf32, #tpu.memory_space<vmem>>) attributes {dimension_semantics = [#tpu.dimension_semantics<parallel>], iteration_bounds = array<i64: 1>, scalar_prefetch = 0 : i64, scratch_operands = 0 : i64, tpu.core_type = #tpu.core_type<tc>, window_params = [{transform_indices = @transform_0, window_bounds = array<i64: 64, 32>}, {pipeline_mode = #tpu.pipeline_mode<synchronous>, transform_indices = @transform_1, window_bounds = array<i64: 32, 64>}, {pipeline_mode = #tpu.pipeline_mode<synchronous>, transform_indices = @transform_2, window_bounds = array<i64: 1, 64>}, {pipeline_mode = #tpu.pipeline_mode<synchronous>, transform_indices = @transform_3, window_bounds = array<i64: 64, 32>}, {pipeline_mode = #tpu.pipeline_mode<synchronous>, transform_indices = @transform_4, window_bounds = array<i64: 1, 32>}, {transform_indices = @transform_5, window_bounds = array<i64: 64, 32>}]} {
    %c0 = arith.constant 0 : index
    %c0_0 = arith.constant 0 : index
    %0 = vector.load %arg1[%c0, %c0_0] : memref<64x32xf32, #tpu.memory_space<vmem>>, vector<64x32xf32>
    %c0_1 = arith.constant 0 : index
    %c0_2 = arith.constant 0 : index
    %1 = vector.load %arg2[%c0_1, %c0_2] : memref<32x64xf32, #tpu.memory_space<vmem>>, vector<32x64xf32>
    %cst = arith.constant dense<0.000000e+00> : vector<64x64xf32>
    %2 = tpu.matmul %0, %1, %cst {dimension_numbers = #tpu.dot_dimension_numbers<[1], [0], [0], [1], [0, 0, 1, 1], [], []>} : vector<64x32xf32>, vector<32x64xf32>, vector<64x64xf32> -> vector<64x64xf32>
    %c0_3 = arith.constant 0 : index
    %c0_4 = arith.constant 0 : index
    %3 = vector.load %arg3[%c0_3, %c0_4] : memref<1x64xf32, #tpu.memory_space<vmem>>, vector<1x64xf32>
    %4 = vector.broadcast %3 : vector<1x64xf32> to vector<64x64xf32>
    %5 = arith.addf %2, %4 : vector<64x64xf32>
    %cst_5 = arith.constant 0.000000e+00 : f32
    %6 = vector.broadcast %cst_5 : f32 to vector<64x64xf32>
    %7 = arith.maximumf %5, %6 : vector<64x64xf32>
    %c0_6 = arith.constant 0 : index
    %c0_7 = arith.constant 0 : index
    %8 = vector.load %arg4[%c0_6, %c0_7] : memref<64x32xf32, #tpu.memory_space<vmem>>, vector<64x32xf32>
    %cst_8 = arith.constant dense<0.000000e+00> : vector<64x32xf32>
    %9 = tpu.matmul %7, %8, %cst_8 {dimension_numbers = #tpu.dot_dimension_numbers<[1], [0], [0], [1], [0, 0, 1, 1], [], []>} : vector<64x64xf32>, vector<64x32xf32>, vector<64x32xf32> -> vector<64x32xf32>
    %c0_9 = arith.constant 0 : index
    %c0_10 = arith.constant 0 : index
    %10 = vector.load %arg5[%c0_9, %c0_10] : memref<1x32xf32, #tpu.memory_space<vmem>>, vector<1x32xf32>
    %11 = vector.broadcast %10 : vector<1x32xf32> to vector<64x32xf32>
    %12 = arith.addf %9, %11 : vector<64x32xf32>
    %13 = arith.addf %0, %12 : vector<64x32xf32>
    %c0_11 = arith.constant 0 : index
    %c0_12 = arith.constant 0 : index
    %14 = vector.load %arg6[%c0_11, %c0_12] : memref<64x32xf32, #tpu.memory_space<vmem>>, vector<64x32xf32>
    tpu.vector_store %arg6[%c0_11, %c0_12], %13 {strides = array<i32>} : memref<64x32xf32, #tpu.memory_space<vmem>>, vector<64x32xf32>,
    return
  }
  func.func @transform_0(%arg0: i32) -> (i32, i32) {
    %c0_i32 = arith.constant 0 : i32
    %c0_i32_0 = arith.constant 0 : i32
    return %arg0, %c0_i32 : i32, i32
  }
  func.func @transform_1(%arg0: i32) -> (i32, i32) {
    %c0_i32 = arith.constant 0 : i32
    %c0_i32_0 = arith.constant 0 : i32
    %c0_i32_1 = arith.constant 0 : i32
    return %c0_i32, %c0_i32_0 : i32, i32
  }
  func.func @transform_2(%arg0: i32) -> (i32, i32) {
    %c0_i32 = arith.constant 0 : i32
    %c0_i32_0 = arith.constant 0 : i32
    %c0_i32_1 = arith.constant 0 : i32
    return %c0_i32, %c0_i32_0 : i32, i32
  }
  func.func @transform_3(%arg0: i32) -> (i32, i32) {
    %c0_i32 = arith.constant 0 : i32
    %c0_i32_0 = arith.constant 0 : i32
    %c0_i32_1 = arith.constant 0 : i32
    return %c0_i32, %c0_i32_0 : i32, i32
  }
  func.func @transform_4(%arg0: i32) -> (i32, i32) {
    %c0_i32 = arith.constant 0 : i32
    %c0_i32_0 = arith.constant 0 : i32
    %c0_i32_1 = arith.constant 0 : i32
    return %c0_i32, %c0_i32_0 : i32, i32
  }
  func.func @transform_5(%arg0: i32) -> (i32, i32) {
    %c0_i32 = arith.constant 0 : i32
    %c0_i32_0 = arith.constant 0 : i32
    return %arg0, %c0_i32 : i32, i32
  }
}

module attributes {stable_mosaic.version = 11 : i64} {
  func.func @_fused_attn_kernel(%arg0: i32, %arg1: memref<16x4x32xf32, #tpu.memory_space<vmem>>, %arg2: memref<32x96xf32, #tpu.memory_space<vmem>>, %arg3: memref<1x96xf32, #tpu.memory_space<vmem>>, %arg4: memref<32x32xf32, #tpu.memory_space<vmem>>, %arg5: memref<1x32xf32, #tpu.memory_space<vmem>>, %arg6: memref<16x4x32xf32, #tpu.memory_space<vmem>>) attributes {dimension_semantics = [#tpu.dimension_semantics<parallel>], iteration_bounds = array<i64: 1>, scalar_prefetch = 0 : i64, scratch_operands = 0 : i64, tpu.core_type = #tpu.core_type<tc>, window_params = [{transform_indices = @transform_0, window_bounds = array<i64: 16, 4, 32>}, {pipeline_mode = #tpu.pipeline_mode<synchronous>, transform_indices = @transform_1, window_bounds = array<i64: 32, 96>}, {pipeline_mode = #tpu.pipeline_mode<synchronous>, transform_indices = @transform_2, window_bounds = array<i64: 1, 96>}, {pipeline_mode = #tpu.pipeline_mode<synchronous>, transform_indices = @transform_3, window_bounds = array<i64: 32, 32>}, {pipeline_mode = #tpu.pipeline_mode<synchronous>, transform_indices = @transform_4, window_bounds = array<i64: 1, 32>}, {transform_indices = @transform_5, window_bounds = array<i64: 16, 4, 32>}]} {
    %c0 = arith.constant 0 : index
    %c0_0 = arith.constant 0 : index
    %c0_1 = arith.constant 0 : index
    %0 = vector.load %arg1[%c0, %c0_0, %c0_1] : memref<16x4x32xf32, #tpu.memory_space<vmem>>, vector<16x4x32xf32>
    %1 = vector.shape_cast %0 : vector<16x4x32xf32> to vector<64x32xf32>
    %c0_2 = arith.constant 0 : index
    %c0_3 = arith.constant 0 : index
    %2 = vector.load %arg2[%c0_2, %c0_3] : memref<32x96xf32, #tpu.memory_space<vmem>>, vector<32x96xf32>
    %cst = arith.constant dense<0.000000e+00> : vector<64x96xf32>
    %3 = tpu.matmul %1, %2, %cst {dimension_numbers = #tpu.dot_dimension_numbers<[1], [0], [0], [1], [0, 0, 1, 1], [], []>} : vector<64x32xf32>, vector<32x96xf32>, vector<64x96xf32> -> vector<64x96xf32>
    %c0_4 = arith.constant 0 : index
    %c0_5 = arith.constant 0 : index
    %4 = vector.load %arg3[%c0_4, %c0_5] : memref<1x96xf32, #tpu.memory_space<vmem>>, vector<1x96xf32>
    %5 = vector.broadcast %4 : vector<1x96xf32> to vector<64x96xf32>
    %6 = arith.addf %3, %5 : vector<64x96xf32>
    %7 = vector.shape_cast %6 : vector<64x96xf32> to vector<16x4x96xf32>
    %cst_6 = arith.constant 0.000000e+00 : f32
    %8 = vector.broadcast %cst_6 : f32 to vector<64x32xf32>
    %c0_7 = arith.constant 0 : index
    %c0_8 = arith.constant 0 : index
    %9 = vector.load %arg5[%c0_7, %c0_8] : memref<1x32xf32, #tpu.memory_space<vmem>>, vector<1x32xf32>
    %10 = vector.broadcast %9 : vector<1x32xf32> to vector<64x32xf32>
    %11 = arith.addf %8, %10 : vector<64x32xf32>
    %12 = vector.extract_strided_slice %7 {offsets = [0, 0, 0], sizes = [16, 4, 8], strides = [1, 1, 1]} : vector<16x4x96xf32> to vector<16x4x8xf32>
    %13 = vector.extract_strided_slice %7 {offsets = [0, 0, 32], sizes = [16, 4, 8], strides = [1, 1, 1]} : vector<16x4x96xf32> to vector<16x4x8xf32>
    %14 = vector.extract_strided_slice %7 {offsets = [0, 0, 64], sizes = [16, 4, 8], strides = [1, 1, 1]} : vector<16x4x96xf32> to vector<16x4x8xf32>
    "tpu.trace_start"() <{level = 10 : i32, message = "bqd,bkd->bqk"}> : () -> ()
    %cst_9 = arith.constant dense<0.000000e+00> : vector<16x4x4xf32>
    %15 = tpu.matmul %12, %13, %cst_9 {dimension_numbers = #tpu.dot_dimension_numbers<[2], [2], [1], [1], [0, 0, 0, 1, 1, 1], [0], [0]>} : vector<16x4x8xf32>, vector<16x4x8xf32>, vector<16x4x4xf32> -> vector<16x4x4xf32>
    "tpu.trace_stop"() : () -> ()
    %cst_10 = arith.constant 0.353553385 : f32
    %16 = vector.broadcast %cst_10 : f32 to vector<16x4x4xf32>
    %17 = arith.mulf %15, %16 : vector<16x4x4xf32>
    %cst_11 = arith.constant dense<0xFF800000> : vector<16x4xf32>
    %18 = vector.multi_reduction <maximumf>, %17, %cst_11 [2] : vector<16x4x4xf32> to vector<16x4xf32>
    %19 = vector.shape_cast %18 : vector<16x4xf32> to vector<16x4x1xf32>
    %20 = vector.broadcast %19 : vector<16x4x1xf32> to vector<16x4x4xf32>
    %21 = arith.subf %17, %20 : vector<16x4x4xf32>
    %22 = math.exp %21 : vector<16x4x4xf32>
    %cst_12 = arith.constant dense<0.000000e+00> : vector<16x4xf32>
    %23 = vector.multi_reduction <add>, %22, %cst_12 [2] : vector<16x4x4xf32> to vector<16x4xf32>
    %24 = vector.shape_cast %23 : vector<16x4xf32> to vector<16x4x1xf32>
    %25 = vector.broadcast %24 : vector<16x4x1xf32> to vector<16x4x4xf32>
    %26 = arith.divf %22, %25 : vector<16x4x4xf32>
    "tpu.trace_start"() <{level = 10 : i32, message = "bqk,bkd->bqd"}> : () -> ()
    %cst_13 = arith.constant dense<0.000000e+00> : vector<16x4x8xf32>
    %27 = tpu.matmul %26, %14, %cst_13 {dimension_numbers = #tpu.dot_dimension_numbers<[2], [1], [1], [2], [0, 0, 0, 1, 1, 2], [0], [0]>} : vector<16x4x4xf32>, vector<16x4x8xf32>, vector<16x4x8xf32> -> vector<16x4x8xf32>
    "tpu.trace_stop"() : () -> ()
    %28 = vector.shape_cast %27 : vector<16x4x8xf32> to vector<64x8xf32>
    %c0_14 = arith.constant 0 : index
    %c0_15 = arith.constant 0 : index
    %29 = vector.load %arg4[%c0_14, %c0_15] : memref<32x32xf32, #tpu.memory_space<vmem>>, vector<8x32xf32>
    %cst_16 = arith.constant dense<0.000000e+00> : vector<64x32xf32>
    %30 = tpu.matmul %28, %29, %cst_16 {dimension_numbers = #tpu.dot_dimension_numbers<[1], [0], [0], [1], [0, 0, 1, 1], [], []>} : vector<64x8xf32>, vector<8x32xf32>, vector<64x32xf32> -> vector<64x32xf32>
    %31 = arith.addf %11, %30 : vector<64x32xf32>
    %32 = vector.extract_strided_slice %7 {offsets = [0, 0, 8], sizes = [16, 4, 8], strides = [1, 1, 1]} : vector<16x4x96xf32> to vector<16x4x8xf32>
    %33 = vector.extract_strided_slice %7 {offsets = [0, 0, 40], sizes = [16, 4, 8], strides = [1, 1, 1]} : vector<16x4x96xf32> to vector<16x4x8xf32>
    %34 = vector.extract_strided_slice %7 {offsets = [0, 0, 72], sizes = [16, 4, 8], strides = [1, 1, 1]} : vector<16x4x96xf32> to vector<16x4x8xf32>
    "tpu.trace_start"() <{level = 10 : i32, message = "bqd,bkd->bqk"}> : () -> ()
    %cst_17 = arith.constant dense<0.000000e+00> : vector<16x4x4xf32>
    %35 = tpu.matmul %32, %33, %cst_17 {dimension_numbers = #tpu.dot_dimension_numbers<[2], [2], [1], [1], [0, 0, 0, 1, 1, 1], [0], [0]>} : vector<16x4x8xf32>, vector<16x4x8xf32>, vector<16x4x4xf32> -> vector<16x4x4xf32>
    "tpu.trace_stop"() : () -> ()
    %cst_18 = arith.constant 0.353553385 : f32
    %36 = vector.broadcast %cst_18 : f32 to vector<16x4x4xf32>
    %37 = arith.mulf %35, %36 : vector<16x4x4xf32>
    %cst_19 = arith.constant dense<0xFF800000> : vector<16x4xf32>
    %38 = vector.multi_reduction <maximumf>, %37, %cst_19 [2] : vector<16x4x4xf32> to vector<16x4xf32>
    %39 = vector.shape_cast %38 : vector<16x4xf32> to vector<16x4x1xf32>
    %40 = vector.broadcast %39 : vector<16x4x1xf32> to vector<16x4x4xf32>
    %41 = arith.subf %37, %40 : vector<16x4x4xf32>
    %42 = math.exp %41 : vector<16x4x4xf32>
    %cst_20 = arith.constant dense<0.000000e+00> : vector<16x4xf32>
    %43 = vector.multi_reduction <add>, %42, %cst_20 [2] : vector<16x4x4xf32> to vector<16x4xf32>
    %44 = vector.shape_cast %43 : vector<16x4xf32> to vector<16x4x1xf32>
    %45 = vector.broadcast %44 : vector<16x4x1xf32> to vector<16x4x4xf32>
    %46 = arith.divf %42, %45 : vector<16x4x4xf32>
    "tpu.trace_start"() <{level = 10 : i32, message = "bqk,bkd->bqd"}> : () -> ()
    %cst_21 = arith.constant dense<0.000000e+00> : vector<16x4x8xf32>
    %47 = tpu.matmul %46, %34, %cst_21 {dimension_numbers = #tpu.dot_dimension_numbers<[2], [1], [1], [2], [0, 0, 0, 1, 1, 2], [0], [0]>} : vector<16x4x4xf32>, vector<16x4x8xf32>, vector<16x4x8xf32> -> vector<16x4x8xf32>
    "tpu.trace_stop"() : () -> ()
    %48 = vector.shape_cast %47 : vector<16x4x8xf32> to vector<64x8xf32>
    %c8 = arith.constant 8 : index
    %c0_22 = arith.constant 0 : index
    %49 = vector.load %arg4[%c8, %c0_22] : memref<32x32xf32, #tpu.memory_space<vmem>>, vector<8x32xf32>
    %cst_23 = arith.constant dense<0.000000e+00> : vector<64x32xf32>
    %50 = tpu.matmul %48, %49, %cst_23 {dimension_numbers = #tpu.dot_dimension_numbers<[1], [0], [0], [1], [0, 0, 1, 1], [], []>} : vector<64x8xf32>, vector<8x32xf32>, vector<64x32xf32> -> vector<64x32xf32>
    %51 = arith.addf %31, %50 : vector<64x32xf32>
    %52 = vector.extract_strided_slice %7 {offsets = [0, 0, 16], sizes = [16, 4, 8], strides = [1, 1, 1]} : vector<16x4x96xf32> to vector<16x4x8xf32>
    %53 = vector.extract_strided_slice %7 {offsets = [0, 0, 48], sizes = [16, 4, 8], strides = [1, 1, 1]} : vector<16x4x96xf32> to vector<16x4x8xf32>
    %54 = vector.extract_strided_slice %7 {offsets = [0, 0, 80], sizes = [16, 4, 8], strides = [1, 1, 1]} : vector<16x4x96xf32> to vector<16x4x8xf32>
    "tpu.trace_start"() <{level = 10 : i32, message = "bqd,bkd->bqk"}> : () -> ()
    %cst_24 = arith.constant dense<0.000000e+00> : vector<16x4x4xf32>
    %55 = tpu.matmul %52, %53, %cst_24 {dimension_numbers = #tpu.dot_dimension_numbers<[2], [2], [1], [1], [0, 0, 0, 1, 1, 1], [0], [0]>} : vector<16x4x8xf32>, vector<16x4x8xf32>, vector<16x4x4xf32> -> vector<16x4x4xf32>
    "tpu.trace_stop"() : () -> ()
    %cst_25 = arith.constant 0.353553385 : f32
    %56 = vector.broadcast %cst_25 : f32 to vector<16x4x4xf32>
    %57 = arith.mulf %55, %56 : vector<16x4x4xf32>
    %cst_26 = arith.constant dense<0xFF800000> : vector<16x4xf32>
    %58 = vector.multi_reduction <maximumf>, %57, %cst_26 [2] : vector<16x4x4xf32> to vector<16x4xf32>
    %59 = vector.shape_cast %58 : vector<16x4xf32> to vector<16x4x1xf32>
    %60 = vector.broadcast %59 : vector<16x4x1xf32> to vector<16x4x4xf32>
    %61 = arith.subf %57, %60 : vector<16x4x4xf32>
    %62 = math.exp %61 : vector<16x4x4xf32>
    %cst_27 = arith.constant dense<0.000000e+00> : vector<16x4xf32>
    %63 = vector.multi_reduction <add>, %62, %cst_27 [2] : vector<16x4x4xf32> to vector<16x4xf32>
    %64 = vector.shape_cast %63 : vector<16x4xf32> to vector<16x4x1xf32>
    %65 = vector.broadcast %64 : vector<16x4x1xf32> to vector<16x4x4xf32>
    %66 = arith.divf %62, %65 : vector<16x4x4xf32>
    "tpu.trace_start"() <{level = 10 : i32, message = "bqk,bkd->bqd"}> : () -> ()
    %cst_28 = arith.constant dense<0.000000e+00> : vector<16x4x8xf32>
    %67 = tpu.matmul %66, %54, %cst_28 {dimension_numbers = #tpu.dot_dimension_numbers<[2], [1], [1], [2], [0, 0, 0, 1, 1, 2], [0], [0]>} : vector<16x4x4xf32>, vector<16x4x8xf32>, vector<16x4x8xf32> -> vector<16x4x8xf32>
    "tpu.trace_stop"() : () -> ()
    %68 = vector.shape_cast %67 : vector<16x4x8xf32> to vector<64x8xf32>
    %c16 = arith.constant 16 : index
    %c0_29 = arith.constant 0 : index
    %69 = vector.load %arg4[%c16, %c0_29] : memref<32x32xf32, #tpu.memory_space<vmem>>, vector<8x32xf32>
    %cst_30 = arith.constant dense<0.000000e+00> : vector<64x32xf32>
    %70 = tpu.matmul %68, %69, %cst_30 {dimension_numbers = #tpu.dot_dimension_numbers<[1], [0], [0], [1], [0, 0, 1, 1], [], []>} : vector<64x8xf32>, vector<8x32xf32>, vector<64x32xf32> -> vector<64x32xf32>
    %71 = arith.addf %51, %70 : vector<64x32xf32>
    %72 = vector.extract_strided_slice %7 {offsets = [0, 0, 24], sizes = [16, 4, 8], strides = [1, 1, 1]} : vector<16x4x96xf32> to vector<16x4x8xf32>
    %73 = vector.extract_strided_slice %7 {offsets = [0, 0, 56], sizes = [16, 4, 8], strides = [1, 1, 1]} : vector<16x4x96xf32> to vector<16x4x8xf32>
    %74 = vector.extract_strided_slice %7 {offsets = [0, 0, 88], sizes = [16, 4, 8], strides = [1, 1, 1]} : vector<16x4x96xf32> to vector<16x4x8xf32>
    "tpu.trace_start"() <{level = 10 : i32, message = "bqd,bkd->bqk"}> : () -> ()
    %cst_31 = arith.constant dense<0.000000e+00> : vector<16x4x4xf32>
    %75 = tpu.matmul %72, %73, %cst_31 {dimension_numbers = #tpu.dot_dimension_numbers<[2], [2], [1], [1], [0, 0, 0, 1, 1, 1], [0], [0]>} : vector<16x4x8xf32>, vector<16x4x8xf32>, vector<16x4x4xf32> -> vector<16x4x4xf32>
    "tpu.trace_stop"() : () -> ()
    %cst_32 = arith.constant 0.353553385 : f32
    %76 = vector.broadcast %cst_32 : f32 to vector<16x4x4xf32>
    %77 = arith.mulf %75, %76 : vector<16x4x4xf32>
    %cst_33 = arith.constant dense<0xFF800000> : vector<16x4xf32>
    %78 = vector.multi_reduction <maximumf>, %77, %cst_33 [2] : vector<16x4x4xf32> to vector<16x4xf32>
    %79 = vector.shape_cast %78 : vector<16x4xf32> to vector<16x4x1xf32>
    %80 = vector.broadcast %79 : vector<16x4x1xf32> to vector<16x4x4xf32>
    %81 = arith.subf %77, %80 : vector<16x4x4xf32>
    %82 = math.exp %81 : vector<16x4x4xf32>
    %cst_34 = arith.constant dense<0.000000e+00> : vector<16x4xf32>
    %83 = vector.multi_reduction <add>, %82, %cst_34 [2] : vector<16x4x4xf32> to vector<16x4xf32>
    %84 = vector.shape_cast %83 : vector<16x4xf32> to vector<16x4x1xf32>
    %85 = vector.broadcast %84 : vector<16x4x1xf32> to vector<16x4x4xf32>
    %86 = arith.divf %82, %85 : vector<16x4x4xf32>
    "tpu.trace_start"() <{level = 10 : i32, message = "bqk,bkd->bqd"}> : () -> ()
    %cst_35 = arith.constant dense<0.000000e+00> : vector<16x4x8xf32>
    %87 = tpu.matmul %86, %74, %cst_35 {dimension_numbers = #tpu.dot_dimension_numbers<[2], [1], [1], [2], [0, 0, 0, 1, 1, 2], [0], [0]>} : vector<16x4x4xf32>, vector<16x4x8xf32>, vector<16x4x8xf32> -> vector<16x4x8xf32>
    "tpu.trace_stop"() : () -> ()
    %88 = vector.shape_cast %87 : vector<16x4x8xf32> to vector<64x8xf32>
    %c24 = arith.constant 24 : index
    %c0_36 = arith.constant 0 : index
    %89 = vector.load %arg4[%c24, %c0_36] : memref<32x32xf32, #tpu.memory_space<vmem>>, vector<8x32xf32>
    %cst_37 = arith.constant dense<0.000000e+00> : vector<64x32xf32>
    %90 = tpu.matmul %88, %89, %cst_37 {dimension_numbers = #tpu.dot_dimension_numbers<[1], [0], [0], [1], [0, 0, 1, 1], [], []>} : vector<64x8xf32>, vector<8x32xf32>, vector<64x32xf32> -> vector<64x32xf32>
    %91 = arith.addf %71, %90 : vector<64x32xf32>
    %92 = vector.shape_cast %91 : vector<64x32xf32> to vector<16x4x32xf32>
    %93 = arith.addf %0, %92 : vector<16x4x32xf32>
    %c0_38 = arith.constant 0 : index
    %c0_39 = arith.constant 0 : index
    %c0_40 = arith.constant 0 : index
    %94 = vector.load %arg6[%c0_38, %c0_39, %c0_40] : memref<16x4x32xf32, #tpu.memory_space<vmem>>, vector<16x4x32xf32>
    tpu.vector_store %arg6[%c0_38, %c0_39, %c0_40], %93 {strides = array<i32>} : memref<16x4x32xf32, #tpu.memory_space<vmem>>, vector<16x4x32xf32>,
    return
  }
  func.func @transform_0(%arg0: i32) -> (i32, i32, i32) {
    %c0_i32 = arith.constant 0 : i32
    %c0_i32_0 = arith.constant 0 : i32
    %c0_i32_1 = arith.constant 0 : i32
    return %arg0, %c0_i32, %c0_i32_0 : i32, i32, i32
  }
  func.func @transform_1(%arg0: i32) -> (i32, i32) {
    %c0_i32 = arith.constant 0 : i32
    %c0_i32_0 = arith.constant 0 : i32
    %c0_i32_1 = arith.constant 0 : i32
    return %c0_i32, %c0_i32_0 : i32, i32
  }
  func.func @transform_2(%arg0: i32) -> (i32, i32) {
    %c0_i32 = arith.constant 0 : i32
    %c0_i32_0 = arith.constant 0 : i32
    %c0_i32_1 = arith.constant 0 : i32
    return %c0_i32, %c0_i32_0 : i32, i32
  }
  func.func @transform_3(%arg0: i32) -> (i32, i32) {
    %c0_i32 = arith.constant 0 : i32
    %c0_i32_0 = arith.constant 0 : i32
    %c0_i32_1 = arith.constant 0 : i32
    return %c0_i32, %c0_i32_0 : i32, i32
  }
  func.func @transform_4(%arg0: i32) -> (i32, i32) {
    %c0_i32 = arith.constant 0 : i32
    %c0_i32_0 = arith.constant 0 : i32
    %c0_i32_1 = arith.constant 0 : i32
    return %c0_i32, %c0_i32_0 : i32, i32
  }
  func.func @transform_5(%arg0: i32) -> (i32, i32, i32) {
    %c0_i32 = arith.constant 0 : i32
    %c0_i32_0 = arith.constant 0 : i32
    %c0_i32_1 = arith.constant 0 : i32
    return %arg0, %c0_i32, %c0_i32_0 : i32, i32, i32
  }
}

</mosaic_0001>

<llo_original>
// kernel: _lambda_.5
$region0: #{_lambda_.5}
  #allocation0 [shape = 'u32[]', space=smem, size = 0x4, offset = 0x4, fixed_abs, tag = 'smem constant byte address 0x4 - core index']
  #allocation1 [shape = 'u32[72,128]{1,0:T(1,128)}', space=vmem, size = 0x9000, scoped, tag = 'internal scratch']
  %s0 = inlined_call_operand.vmem [shape: f32[64,32], index: 0, kind: input, shape index: {}]
  %s1 = inlined_call_operand.vmem [shape: f32[32,64], index: 1, kind: input, shape index: {}]
  %s2 = inlined_call_operand.vmem [shape: f32[1,64], index: 2, kind: input, shape index: {}]
  %s3 = inlined_call_operand.vmem [shape: f32[64,32], index: 3, kind: input, shape index: {}]
  %s4 = inlined_call_operand.vmem [shape: f32[1,32], index: 4, kind: input, shape index: {}]
  %s5 = inlined_call_operand.hbm [shape: f32[64,32], index: 5, kind: output, shape index: {}]
  %s6 = sld [smem:[#allocation0]]
  $region30: #{_lambda_.5} parent=0
    _
  %s8 = ssub.s32 1, %s6
  %s9 = scalar_select 0, %s8, %s6
  $region1: #{_lambda_.5} parent=0
    #allocation2 [shape = 'u8[32768]{0}', space=vmem, size = 0x8000, scoped, tag = 'output window, operand 0, single buffered']
    #allocation3 [shape = 's32[1]{0}', space=sflag, size = 0x4, scoped, tag = 'scoped memory for _lambda_.5']
    %10 = vsyncpa [#allocation3], 0
    // Predicated region
    $region2: #{_lambda_.5} parent=1 // pred_check
      _
    $region3: #{_lambda_.5} parent=1 // pred_check_branch
      %12 = sbr.rel (0) target = $region5
    $region4: #{_lambda_.5} parent=1 // pred_region
      _
    $region5: #{_lambda_.5} parent=1 // pred_fallthru
      _
    // Predicated region
    $region6: #{_lambda_.5} parent=1 // pred_check
      _
    $region7: #{_lambda_.5} parent=1 // pred_check_branch
      %14 = sbr.rel (0) target = $region9
    $region8: #{_lambda_.5} parent=1 // pred_region
      _
    $region9: #{_lambda_.5} parent=1 // pred_fallthru
      _
    // Predicated region
    $region10: #{_lambda_.5} parent=1 // pred_check
      _
    $region11: #{_lambda_.5} parent=1 // pred_check_branch
      %16 = sbr.rel (0) target = $region13
    $region12: #{_lambda_.5} parent=1 // pred_region
      _
    $region13: #{_lambda_.5} parent=1 // pred_fallthru
      _
    // Predicated region
    $region14: #{_lambda_.5} parent=1 // pred_check
      _
    $region15: #{_lambda_.5} parent=1 // pred_check_branch
      %18 = sbr.rel (0) target = $region17
    $region16: #{_lambda_.5} parent=1 // pred_region
      _
    $region17: #{_lambda_.5} parent=1 // pred_fallthru
      _
    // Predicated region
    $region18: #{_lambda_.5} parent=1 // pred_check
      _
    $region19: #{_lambda_.5} parent=1 // pred_check_branch
      %20 = sbr.rel (0) target = $region21
    $region20: #{_lambda_.5} parent=1 // pred_region
      _
    $region21: #{_lambda_.5} parent=1 // pred_fallthru
      _
    %v21 = vld [vmem:[%s0] sm:$0xff]
    %v22 = vld [vmem:[%s0 + $0x8] sm:$0xff]
    %v23 = vld [vmem:[%s0 + $0x10] sm:$0xff]
    %v24 = vld [vmem:[%s0 + $0x18] sm:$0xff]
    %v25 = vld [vmem:[%s0 + $0x20] sm:$0xff]
    %v26 = vld [vmem:[%s0 + $0x28] sm:$0xff]
    %v27 = vld [vmem:[%s0 + $0x30] sm:$0xff]
    %v28 = vld [vmem:[%s0 + $0x38] sm:$0xff]
    %v29 = vld [vmem:[%s1] sm:$0xff]
    %v30 = vld [vmem:[%s1 + $0x8] sm:$0xff]
    %v31 = vld [vmem:[%s1 + $0x10] sm:$0xff]
    %v32 = vld [vmem:[%s1 + $0x18] sm:$0xff]
    %v33 = vld [vmem:[%s2] sm:$0x1]
    %v35 = vperm.slane %v33, 0
    %vm37 = vcmask 261120
    %v39 = vsel %vm37, %v21, 0
    %v42 = vsel %vm37, %v22, 0
    %v45 = vsel %vm37, %v23, 0
    %v48 = vsel %vm37, %v24, 0
    %v51 = vsel %vm37, %v25, 0
    %v54 = vsel %vm37, %v26, 0
    %v57 = vsel %vm37, %v27, 0
    %v60 = vsel %vm37, %v28, 0
    %62 = vmatpush.msra.mxu0 0.0
    %63 = vmatpush.msra.mxu0 0.0
    %64 = vmatpush.msra.mxu0 0.0
    %65 = vmatpush.msra.mxu0 0.0
    %66 = vmatpush.msra.mxu0 0.0
    %67 = vmatpush.msra.mxu0 0.0
    %68 = vmatpush.msra.mxu0 0.0
    %69 = vmatpush.msra.mxu0 0.0
    %70 = vmatpush.msra.mxu0 0.0
    %71 = vmatpush.msra.mxu0 0.0
    %72 = vmatpush.msra.mxu0 0.0
    %73 = vmatpush.msra.mxu0 0.0
    %74 = vmatpush.msra.mxu0 %v32
    %75 = vmatpush.msra.mxu0 %v31
    %76 = vmatpush.msra.mxu0 %v30
    %77 = vmatpush.msra.mxu0 %v29
    %78 = vmatmul.f32.gmra.mxu0 %v39
    %v79 = vpop.f32.mrf.mxu0
    %v80 = vadd.f32 %v35, %v79
    %81 = vmatmul.f32.gmra.mxu0 %v42
    %v82 = vpop.f32.mrf.mxu0
    %v83 = vadd.f32 %v35, %v82
    %84 = vmatmul.f32.gmra.mxu0 %v45
    %v85 = vpop.f32.mrf.mxu0
    %v86 = vadd.f32 %v35, %v85
    %87 = vmatmul.f32.gmra.mxu0 %v48
    %v88 = vpop.f32.mrf.mxu0
    %v89 = vadd.f32 %v35, %v88
    %90 = vmatmul.f32.gmra.mxu0 %v51
    %v91 = vpop.f32.mrf.mxu0
    %v92 = vadd.f32 %v35, %v91
    %93 = vmatmul.f32.gmra.mxu0 %v54
    %v94 = vpop.f32.mrf.mxu0
    %v95 = vadd.f32 %v35, %v94
    %96 = vmatmul.f32.gmra.mxu0 %v57
    %v97 = vpop.f32.mrf.mxu0
    %v98 = vadd.f32 %v35, %v97
    %99 = vmatmul.f32.gmra.mxu0 %v60
    %v100 = vpop.f32.mrf.mxu0
    %v101 = vadd.f32 %v35, %v100
    %102 = vdwg.mxu0
    %v103 = vmax.f32 %v80, 0.0
    %v104 = vmax.f32 %v83, 0.0
    %v105 = vmax.f32 %v86, 0.0
    %v106 = vmax.f32 %v89, 0.0
    %v107 = vmax.f32 %v92, 0.0
    %v108 = vmax.f32 %v95, 0.0
    %v109 = vmax.f32 %v98, 0.0
    %v110 = vmax.f32 %v101, 0.0
    %v111 = vld [vmem:[%s3] sm:$0xff]
    %v112 = vld [vmem:[%s3 + $0x8] sm:$0xff]
    %v113 = vld [vmem:[%s3 + $0x10] sm:$0xff]
    %v114 = vld [vmem:[%s3 + $0x18] sm:$0xff]
    %v115 = vld [vmem:[%s3 + $0x20] sm:$0xff]
    %v116 = vld [vmem:[%s3 + $0x28] sm:$0xff]
    %v117 = vld [vmem:[%s3 + $0x30] sm:$0xff]
    %v118 = vld [vmem:[%s3 + $0x38] sm:$0xff]
    %v119 = vld [vmem:[%s4] sm:$0x1]
    %v121 = vperm.slane %v119, 0
    %vm123 = vcmask 523264
    %v125 = vsel %vm123, %v103, 0
    %v128 = vsel %vm123, %v104, 0
    %v131 = vsel %vm123, %v105, 0
    %v134 = vsel %vm123, %v106, 0
    %v137 = vsel %vm123, %v107, 0
    %v140 = vsel %vm123, %v108, 0
    %v143 = vsel %vm123, %v109, 0
    %v146 = vsel %vm123, %v110, 0
    %148 = vmatpush.msra.mxu0 0.0
    %149 = vmatpush.msra.mxu0 0.0
    %150 = vmatpush.msra.mxu0 0.0
    %151 = vmatpush.msra.mxu0 0.0
    %152 = vmatpush.msra.mxu0 0.0
    %153 = vmatpush.msra.mxu0 0.0
    %154 = vmatpush.msra.mxu0 0.0
    %155 = vmatpush.msra.mxu0 0.0
    %156 = vmatpush.msra.mxu0 %v118
    %157 = vmatpush.msra.mxu0 %v117
    %158 = vmatpush.msra.mxu0 %v116
    %159 = vmatpush.msra.mxu0 %v115
    %160 = vmatpush.msra.mxu0 %v114
    %161 = vmatpush.msra.mxu0 %v113
    %162 = vmatpush.msra.mxu0 %v112
    %163 = vmatpush.msra.mxu0 %v111
    %164 = vmatmul.f32.gmra.mxu0 %v125
    %v165 = vpop.f32.mrf.mxu0
    %v166 = vadd.f32 %v121, %v165
    %167 = vmatmul.f32.gmra.mxu0 %v128
    %v168 = vpop.f32.mrf.mxu0
    %v169 = vadd.f32 %v121, %v168
    %170 = vmatmul.f32.gmra.mxu0 %v131
    %v171 = vpop.f32.mrf.mxu0
    %v172 = vadd.f32 %v121, %v171
    %173 = vmatmul.f32.gmra.mxu0 %v134
    %v174 = vpop.f32.mrf.mxu0
    %v175 = vadd.f32 %v121, %v174
    %176 = vmatmul.f32.gmra.mxu0 %v137
    %v177 = vpop.f32.mrf.mxu0
    %v178 = vadd.f32 %v121, %v177
    %179 = vmatmul.f32.gmra.mxu0 %v140
    %v180 = vpop.f32.mrf.mxu0
    %v181 = vadd.f32 %v121, %v180
    %182 = vmatmul.f32.gmra.mxu0 %v143
    %v183 = vpop.f32.mrf.mxu0
    %v184 = vadd.f32 %v121, %v183
    %185 = vmatmul.f32.gmra.mxu0 %v146
    %v186 = vpop.f32.mrf.mxu0
    %v187 = vadd.f32 %v121, %v186
    %188 = vdwg.mxu0
    %v189 = vadd.f32 %v21, %v166
    %v190 = vadd.f32 %v22, %v169
    %v191 = vadd.f32 %v23, %v172
    %v192 = vadd.f32 %v24, %v175
    %v193 = vadd.f32 %v25, %v178
    %v194 = vadd.f32 %v26, %v181
    %v195 = vadd.f32 %v27, %v184
    %v196 = vadd.f32 %v28, %v187
    %197 = vst.msk [vmem:[#allocation2] sm:$0xff] %vm37, %v189
    %198 = vst.msk [vmem:[#allocation2 + $0x8] sm:$0xff] %vm37, %v190
    %199 = vst.msk [vmem:[#allocation2 + $0x10] sm:$0xff] %vm37, %v191
    %200 = vst.msk [vmem:[#allocation2 + $0x18] sm:$0xff] %vm37, %v192
    %201 = vst.msk [vmem:[#allocation2 + $0x20] sm:$0xff] %vm37, %v193
    %202 = vst.msk [vmem:[#allocation2 + $0x28] sm:$0xff] %vm37, %v194
    %203 = vst.msk [vmem:[#allocation2 + $0x30] sm:$0xff] %vm37, %v195
    %204 = vst.msk [vmem:[#allocation2 + $0x38] sm:$0xff] %vm37, %v196
    // Predicated region
    $region22: #{_lambda_.5} parent=1 // pred_check
      _
    $region23: #{_lambda_.5} parent=1 // pred_check_branch
      %206 = sbr.rel (0) target = $region25
    $region24: #{_lambda_.5} parent=1 // pred_region
      %208 = vsyncadd [#allocation3], 0
      %s209 = sshll.u32 [#allocation2], 4
      %s210 = int_to_ptr.vmem [resolvable:$true] %s209
      %s211 = sshll.u32 %s5, 4
      %s212 = int_to_ptr.hbm [resolvable:$true] %s211
      %217 = dma.vmem_to_hbm [thread:$0]  %s210, 1024, %s212, [#allocation3], 128, 128, 8
    $region25: #{_lambda_.5} parent=1 // pred_fallthru
      _
    // Predicated region
    $region26: #{_lambda_.5} parent=1 // pred_check
      _
    $region27: #{_lambda_.5} parent=1 // pred_check_branch
      %219 = sbr.rel (0) target = $region29
    $region28: #{_lambda_.5} parent=1 // pred_region
      %221 = dma.done [#allocation3], 1024
    $region29: #{_lambda_.5} parent=1 // pred_fallthru
      _
    %222 = vsyncpa [#allocation3], 1

// kernel: _lambda_.3
$region0: #{_lambda_.3}
  #allocation0 [shape = 'u32[]', space=smem, size = 0x4, offset = 0x4, fixed_abs, tag = 'smem constant byte address 0x4 - core index']
  #allocation1 [shape = 'u32[72,128]{1,0:T(1,128)}', space=vmem, size = 0x9000, scoped, tag = 'internal scratch']
  %s0 = inlined_call_operand.vmem [shape: f32[8,8,32], index: 0, kind: input, shape index: {}]
  %s1 = inlined_call_operand.vmem [shape: f32[32,96], index: 1, kind: input, shape index: {}]
  %s2 = inlined_call_operand.vmem [shape: f32[1,96], index: 2, kind: input, shape index: {}]
  %s3 = inlined_call_operand.vmem [shape: f32[32,32], index: 3, kind: input, shape index: {}]
  %s4 = inlined_call_operand.vmem [shape: f32[1,32], index: 4, kind: input, shape index: {}]
  %s5 = inlined_call_operand.vmem [shape: f32[8,8,32], index: 5, kind: output, shape index: {}]
  %s6 = sld [smem:[#allocation0]]
  $region30: #{_lambda_.3} parent=0
    _
  %s8 = ssub.s32 1, %s6
  %s9 = scalar_select 0, %s8, %s6
  // Predicated region
  $region2: #{_lambda_.3} parent=0 // pred_check
    _
  $region3: #{_lambda_.3} parent=0 // pred_check_branch
    %11 = sbr.rel (0) target = $region5
  $region4: #{_lambda_.3} parent=0 // pred_region
    _
  $region5: #{_lambda_.3} parent=0 // pred_fallthru
    _
  // Predicated region
  $region6: #{_lambda_.3} parent=0 // pred_check
    _
  $region7: #{_lambda_.3} parent=0 // pred_check_branch
    %13 = sbr.rel (0) target = $region9
  $region8: #{_lambda_.3} parent=0 // pred_region
    _
  $region9: #{_lambda_.3} parent=0 // pred_fallthru
    _
  // Predicated region
  $region10: #{_lambda_.3} parent=0 // pred_check
    _
  $region11: #{_lambda_.3} parent=0 // pred_check_branch
    %15 = sbr.rel (0) target = $region13
  $region12: #{_lambda_.3} parent=0 // pred_region
    _
  $region13: #{_lambda_.3} parent=0 // pred_fallthru
    _
  // Predicated region
  $region14: #{_lambda_.3} parent=0 // pred_check
    _
  $region15: #{_lambda_.3} parent=0 // pred_check_branch
    %17 = sbr.rel (0) target = $region17
  $region16: #{_lambda_.3} parent=0 // pred_region
    _
  $region17: #{_lambda_.3} parent=0 // pred_fallthru
    _
  // Predicated region
  $region18: #{_lambda_.3} parent=0 // pred_check
    _
  $region19: #{_lambda_.3} parent=0 // pred_check_branch
    %19 = sbr.rel (0) target = $region21
  $region20: #{_lambda_.3} parent=0 // pred_region
    _
  $region21: #{_lambda_.3} parent=0 // pred_fallthru
    _
  %v20 = vld [vmem:[%s0] sm:$0xff]
  %v21 = vld [vmem:[%s0 + $0x8] sm:$0xff]
  %v22 = vld [vmem:[%s0 + $0x10] sm:$0xff]
  %v23 = vld [vmem:[%s0 + $0x18] sm:$0xff]
  %v24 = vld [vmem:[%s0 + $0x20] sm:$0xff]
  %v25 = vld [vmem:[%s0 + $0x28] sm:$0xff]
  %v26 = vld [vmem:[%s0 + $0x30] sm:$0xff]
  %v27 = vld [vmem:[%s0 + $0x38] sm:$0xff]
  %v28 = vld [vmem:[%s1] sm:$0xff]
  %v29 = vld [vmem:[%s1 + $0x8] sm:$0xff]
  %v30 = vld [vmem:[%s1 + $0x10] sm:$0xff]
  %v31 = vld [vmem:[%s1 + $0x18] sm:$0xff]
  %v32 = vld [vmem:[%s2] sm:$0x1]
  %v34 = vperm.slane %v32, 0
  %vm36 = vcmask 261120
  %v38 = vsel %vm36, %v20, 0
  %v41 = vsel %vm36, %v21, 0
  %v44 = vsel %vm36, %v22, 0
  %v47 = vsel %vm36, %v23, 0
  %v50 = vsel %vm36, %v24, 0
  %v53 = vsel %vm36, %v25, 0
  %v56 = vsel %vm36, %v26, 0
  %v59 = vsel %vm36, %v27, 0
  %61 = vmatpush.msra.mxu0 0.0
  %62 = vmatpush.msra.mxu0 0.0
  %63 = vmatpush.msra.mxu0 0.0
  %64 = vmatpush.msra.mxu0 0.0
  %65 = vmatpush.msra.mxu0 0.0
  %66 = vmatpush.msra.mxu0 0.0
  %67 = vmatpush.msra.mxu0 0.0
  %68 = vmatpush.msra.mxu0 0.0
  %69 = vmatpush.msra.mxu0 0.0
  %70 = vmatpush.msra.mxu0 0.0
  %71 = vmatpush.msra.mxu0 0.0
  %72 = vmatpush.msra.mxu0 0.0
  %73 = vmatpush.msra.mxu0 %v31
  %74 = vmatpush.msra.mxu0 %v30
  %75 = vmatpush.msra.mxu0 %v29
  %76 = vmatpush.msra.mxu0 %v28
  %77 = vmatmul.f32.gmra.mxu0 %v38
  %v78 = vpop.f32.mrf.mxu0
  %v79 = vadd.f32 %v34, %v78
  %80 = vmatmul.f32.gmra.mxu0 %v41
  %v81 = vpop.f32.mrf.mxu0
  %v82 = vadd.f32 %v34, %v81
  %83 = vmatmul.f32.gmra.mxu0 %v44
  %v84 = vpop.f32.mrf.mxu0
  %v85 = vadd.f32 %v34, %v84
  %86 = vmatmul.f32.gmra.mxu0 %v47
  %v87 = vpop.f32.mrf.mxu0
  %v88 = vadd.f32 %v34, %v87
  %89 = vmatmul.f32.gmra.mxu0 %v50
  %v90 = vpop.f32.mrf.mxu0
  %v91 = vadd.f32 %v34, %v90
  %92 = vmatmul.f32.gmra.mxu0 %v53
  %v93 = vpop.f32.mrf.mxu0
  %v94 = vadd.f32 %v34, %v93
  %95 = vmatmul.f32.gmra.mxu0 %v56
  %v96 = vpop.f32.mrf.mxu0
  %v97 = vadd.f32 %v34, %v96
  %98 = vmatmul.f32.gmra.mxu0 %v59
  %v99 = vpop.f32.mrf.mxu0
  %v100 = vadd.f32 %v34, %v99
  %101 = vdwg.mxu0
  %v102 = vld [vmem:[%s4] sm:$0x1]
  %v104 = vperm.slane %v102, 0
  %v106 = vadd.f32 %v104, 0.0
  %108 = vrot.lane.b32.xlu0 %v79, 96
  %v109 = vpop.permute.xlu0 %108
  %vm110 = vcmask 64512
  %v111 = vsel %vm110, %v79, 0
  %v113 = vsel %vm110, %v109, 0
  %115 = vmatpush.xpose.msra.mxu0 0.0
  %116 = vmatpush.xpose.msra.mxu0 0.0
  %117 = vmatpush.xpose.msra.mxu0 0.0
  %118 = vmatpush.xpose.msra.mxu0 0.0
  %119 = vmatpush.xpose.msra.mxu0 0.0
  %120 = vmatpush.xpose.msra.mxu0 0.0
  %121 = vmatpush.xpose.msra.mxu0 0.0
  %122 = vmatpush.xpose.msra.mxu0 0.0
  %123 = vmatpush.xpose.msra.mxu0 0.0
  %124 = vmatpush.xpose.msra.mxu0 0.0
  %125 = vmatpush.xpose.msra.mxu0 0.0
  %126 = vmatpush.xpose.msra.mxu0 0.0
  %127 = vmatpush.xpose.msra.mxu0 0.0
  %128 = vmatpush.xpose.msra.mxu0 0.0
  %129 = vmatpush.xpose.msra.mxu0 0.0
  %130 = vmatpush.xpose.msra.mxu0 %v113
  %131 = vmatmul.f32.gmra.mxu0 %v111
  %v132 = vpop.f32.mrf.mxu0
  %v133 = vadd.f32 0.0, %v132
  %134 = vdwg.mxu0
  %136 = vrot.lane.b32.xlu0 %v82, 96
  %v137 = vpop.permute.xlu0 %136
  %v138 = vsel %vm110, %v82, 0
  %v140 = vsel %vm110, %v137, 0
  %142 = vmatpush.xpose.msra.mxu0 0.0
  %143 = vmatpush.xpose.msra.mxu0 0.0
  %144 = vmatpush.xpose.msra.mxu0 0.0
  %145 = vmatpush.xpose.msra.mxu0 0.0
  %146 = vmatpush.xpose.msra.mxu0 0.0
  %147 = vmatpush.xpose.msra.mxu0 0.0
  %148 = vmatpush.xpose.msra.mxu0 0.0
  %149 = vmatpush.xpose.msra.mxu0 0.0
  %150 = vmatpush.xpose.msra.mxu0 0.0
  %151 = vmatpush.xpose.msra.mxu0 0.0
  %152 = vmatpush.xpose.msra.mxu0 0.0
  %153 = vmatpush.xpose.msra.mxu0 0.0
  %154 = vmatpush.xpose.msra.mxu0 0.0
  %155 = vmatpush.xpose.msra.mxu0 0.0
  %156 = vmatpush.xpose.msra.mxu0 0.0
  %157 = vmatpush.xpose.msra.mxu0 %v140
  %158 = vmatmul.f32.gmra.mxu0 %v138
  %v159 = vpop.f32.mrf.mxu0
  %v160 = vadd.f32 0.0, %v159
  %161 = vdwg.mxu0
  %163 = vrot.lane.b32.xlu0 %v85, 96
  %v164 = vpop.permute.xlu0 %163
  %v165 = vsel %vm110, %v85, 0
  %v167 = vsel %vm110, %v164, 0
  %169 = vmatpush.xpose.msra.mxu0 0.0
  %170 = vmatpush.xpose.msra.mxu0 0.0
  %171 = vmatpush.xpose.msra.mxu0 0.0
  %172 = vmatpush.xpose.msra.mxu0 0.0
  %173 = vmatpush.xpose.msra.mxu0 0.0
  %174 = vmatpush.xpose.msra.mxu0 0.0
  %175 = vmatpush.xpose.msra.mxu0 0.0
  %176 = vmatpush.xpose.msra.mxu0 0.0
  %177 = vmatpush.xpose.msra.mxu0 0.0
  %178 = vmatpush.xpose.msra.mxu0 0.0
  %179 = vmatpush.xpose.msra.mxu0 0.0
  %180 = vmatpush.xpose.msra.mxu0 0.0
  %181 = vmatpush.xpose.msra.mxu0 0.0
  %182 = vmatpush.xpose.msra.mxu0 0.0
  %183 = vmatpush.xpose.msra.mxu0 0.0
  %184 = vmatpush.xpose.msra.mxu0 %v167
  %185 = vmatmul.f32.gmra.mxu0 %v165
  %v186 = vpop.f32.mrf.mxu0
  %v187 = vadd.f32 0.0, %v186
  %188 = vdwg.mxu0
  %190 = vrot.lane.b32.xlu0 %v88, 96
  %v191 = vpop.permute.xlu0 %190
  %v192 = vsel %vm110, %v88, 0
  %v194 = vsel %vm110, %v191, 0
  %196 = vmatpush.xpose.msra.mxu0 0.0
  %197 = vmatpush.xpose.msra.mxu0 0.0
  %198 = vmatpush.xpose.msra.mxu0 0.0
  %199 = vmatpush.xpose.msra.mxu0 0.0
  %200 = vmatpush.xpose.msra.mxu0 0.0
  %201 = vmatpush.xpose.msra.mxu0 0.0
  %202 = vmatpush.xpose.msra.mxu0 0.0
  %203 = vmatpush.xpose.msra.mxu0 0.0
  %204 = vmatpush.xpose.msra.mxu0 0.0
  %205 = vmatpush.xpose.msra.mxu0 0.0
  %206 = vmatpush.xpose.msra.mxu0 0.0
  %207 = vmatpush.xpose.msra.mxu0 0.0
  %208 = vmatpush.xpose.msra.mxu0 0.0
  %209 = vmatpush.xpose.msra.mxu0 0.0
  %210 = vmatpush.xpose.msra.mxu0 0.0
  %211 = vmatpush.xpose.msra.mxu0 %v194
  %212 = vmatmul.f32.gmra.mxu0 %v192
  %v213 = vpop.f32.mrf.mxu0
  %v214 = vadd.f32 0.0, %v213
  %215 = vdwg.mxu0
  %217 = vrot.lane.b32.xlu0 %v91, 96
  %v218 = vpop.permute.xlu0 %217
  %v219 = vsel %vm110, %v91, 0
  %v221 = vsel %vm110, %v218, 0
  %223 = vmatpush.xpose.msra.mxu0 0.0
  %224 = vmatpush.xpose.msra.mxu0 0.0
  %225 = vmatpush.xpose.msra.mxu0 0.0
  %226 = vmatpush.xpose.msra.mxu0 0.0
  %227 = vmatpush.xpose.msra.mxu0 0.0
  %228 = vmatpush.xpose.msra.mxu0 0.0
  %229 = vmatpush.xpose.msra.mxu0 0.0
  %230 = vmatpush.xpose.msra.mxu0 0.0
  %231 = vmatpush.xpose.msra.mxu0 0.0
  %232 = vmatpush.xpose.msra.mxu0 0.0
  %233 = vmatpush.xpose.msra.mxu0 0.0
  %234 = vmatpush.xpose.msra.mxu0 0.0
  %235 = vmatpush.xpose.msra.mxu0 0.0
  %236 = vmatpush.xpose.msra.mxu0 0.0
  %237 = vmatpush.xpose.msra.mxu0 0.0
  %238 = vmatpush.xpose.msra.mxu0 %v221
  %239 = vmatmul.f32.gmra.mxu0 %v219
  %v240 = vpop.f32.mrf.mxu0
  %v241 = vadd.f32 0.0, %v240
  %242 = vdwg.mxu0
  %244 = vrot.lane.b32.xlu0 %v94, 96
  %v245 = vpop.permute.xlu0 %244
  %v246 = vsel %vm110, %v94, 0
  %v248 = vsel %vm110, %v245, 0
  %250 = vmatpush.xpose.msra.mxu0 0.0
  %251 = vmatpush.xpose.msra.mxu0 0.0
  %252 = vmatpush.xpose.msra.mxu0 0.0
  %253 = vmatpush.xpose.msra.mxu0 0.0
  %254 = vmatpush.xpose.msra.mxu0 0.0
  %255 = vmatpush.xpose.msra.mxu0 0.0
  %256 = vmatpush.xpose.msra.mxu0 0.0
  %257 = vmatpush.xpose.msra.mxu0 0.0
  %258 = vmatpush.xpose.msra.mxu0 0.0
  %259 = vmatpush.xpose.msra.mxu0 0.0
  %260 = vmatpush.xpose.msra.mxu0 0.0
  %261 = vmatpush.xpose.msra.mxu0 0.0
  %262 = vmatpush.xpose.msra.mxu0 0.0
  %263 = vmatpush.xpose.msra.mxu0 0.0
  %264 = vmatpush.xpose.msra.mxu0 0.0
  %265 = vmatpush.xpose.msra.mxu0 %v248
  %266 = vmatmul.f32.gmra.mxu0 %v246
  %v267 = vpop.f32.mrf.mxu0
  %v268 = vadd.f32 0.0, %v267
  %269 = vdwg.mxu0
  %271 = vrot.lane.b32.xlu0 %v97, 96
  %v272 = vpop.permute.xlu0 %271
  %v273 = vsel %vm110, %v97, 0
  %v275 = vsel %vm110, %v272, 0
  %277 = vmatpush.xpose.msra.mxu0 0.0
  %278 = vmatpush.xpose.msra.mxu0 0.0
  %279 = vmatpush.xpose.msra.mxu0 0.0
  %280 = vmatpush.xpose.msra.mxu0 0.0
  %281 = vmatpush.xpose.msra.mxu0 0.0
  %282 = vmatpush.xpose.msra.mxu0 0.0
  %283 = vmatpush.xpose.msra.mxu0 0.0
  %284 = vmatpush.xpose.msra.mxu0 0.0
  %285 = vmatpush.xpose.msra.mxu0 0.0
  %286 = vmatpush.xpose.msra.mxu0 0.0
  %287 = vmatpush.xpose.msra.mxu0 0.0
  %288 = vmatpush.xpose.msra.mxu0 0.0
  %289 = vmatpush.xpose.msra.mxu0 0.0
  %290 = vmatpush.xpose.msra.mxu0 0.0
  %291 = vmatpush.xpose.msra.mxu0 0.0
  %292 = vmatpush.xpose.msra.mxu0 %v275
  %293 = vmatmul.f32.gmra.mxu0 %v273
  %v294 = vpop.f32.mrf.mxu0
  %v295 = vadd.f32 0.0, %v294
  %296 = vdwg.mxu0
  %298 = vrot.lane.b32.xlu0 %v100, 96
  %v299 = vpop.permute.xlu0 %298
  %v300 = vsel %vm110, %v100, 0
  %v302 = vsel %vm110, %v299, 0
  %304 = vmatpush.xpose.msra.mxu0 0.0
  %305 = vmatpush.xpose.msra.mxu0 0.0
  %306 = vmatpush.xpose.msra.mxu0 0.0
  %307 = vmatpush.xpose.msra.mxu0 0.0
  %308 = vmatpush.xpose.msra.mxu0 0.0
  %309 = vmatpush.xpose.msra.mxu0 0.0
  %310 = vmatpush.xpose.msra.mxu0 0.0
  %311 = vmatpush.xpose.msra.mxu0 0.0
  %312 = vmatpush.xpose.msra.mxu0 0.0
  %313 = vmatpush.xpose.msra.mxu0 0.0
  %314 = vmatpush.xpose.msra.mxu0 0.0
  %315 = vmatpush.xpose.msra.mxu0 0.0
  %316 = vmatpush.xpose.msra.mxu0 0.0
  %317 = vmatpush.xpose.msra.mxu0 0.0
  %318 = vmatpush.xpose.msra.mxu0 0.0
  %319 = vmatpush.xpose.msra.mxu0 %v302
  %320 = vmatmul.f32.gmra.mxu0 %v300
  %v321 = vpop.f32.mrf.mxu0
  %v322 = vadd.f32 0.0, %v321
  %323 = vdwg.mxu0
  %v324 = vmul.f32 %v133, 0.35355338
  %v325 = vmul.f32 %v160, 0.35355338
  %v326 = vmul.f32 %v187, 0.35355338
  %v327 = vmul.f32 %v214, 0.35355338
  %v328 = vmul.f32 %v241, 0.35355338
  %v329 = vmul.f32 %v268, 0.35355338
  %v330 = vmul.f32 %v295, 0.35355338
  %v331 = vmul.f32 %v322, 0.35355338
  %v332 = vsel %vm110, %v324, -inf
  %333 = vmax.xlane.f32.xlu0 %v332
  %v334 = vpop.xlane.xlu0 %333
  %v335 = vsel %vm110, %v325, -inf
  %336 = vmax.xlane.f32.xlu0 %v335
  %v337 = vpop.xlane.xlu0 %336
  %v338 = vsel %vm110, %v326, -inf
  %339 = vmax.xlane.f32.xlu0 %v338
  %v340 = vpop.xlane.xlu0 %339
  %v341 = vsel %vm110, %v327, -inf
  %342 = vmax.xlane.f32.xlu0 %v341
  %v343 = vpop.xlane.xlu0 %342
  %v344 = vsel %vm110, %v328, -inf
  %345 = vmax.xlane.f32.xlu0 %v344
  %v346 = vpop.xlane.xlu0 %345
  %v347 = vsel %vm110, %v329, -inf
  %348 = vmax.xlane.f32.xlu0 %v347
  %v349 = vpop.xlane.xlu0 %348
  %v350 = vsel %vm110, %v330, -inf
  %351 = vmax.xlane.f32.xlu0 %v350
  %v352 = vpop.xlane.xlu0 %351
  %v353 = vsel %vm110, %v331, -inf
  %354 = vmax.xlane.f32.xlu0 %v353
  %v355 = vpop.xlane.xlu0 %354
  %v356 = vsub.f32 %v324, %v334
  %v357 = vsub.f32 %v325, %v337
  %v358 = vsub.f32 %v326, %v340
  %v359 = vsub.f32 %v327, %v343
  %v360 = vsub.f32 %v328, %v346
  %v361 = vsub.f32 %v329, %v349
  %v362 = vsub.f32 %v330, %v352
  %v363 = vsub.f32 %v331, %v355
  %v364 = vmul.f32 %v356, 1.442695
  %v365 = vpow.pop %v364
  %v366 = vmul.f32 %v357, 1.442695
  %v367 = vpow.pop %v366
  %v368 = vmul.f32 %v358, 1.442695
  %v369 = vpow.pop %v368
  %v370 = vmul.f32 %v359, 1.442695
  %v371 = vpow.pop %v370
  %v372 = vmul.f32 %v360, 1.442695
  %v373 = vpow.pop %v372
  %v374 = vmul.f32 %v361, 1.442695
  %v375 = vpow.pop %v374
  %v376 = vmul.f32 %v362, 1.442695
  %v377 = vpow.pop %v376
  %v378 = vmul.f32 %v363, 1.442695
  %v379 = vpow.pop %v378
  %v380 = vsel %vm110, %v365, 0.0
  %381 = vadd.xlane.f32.xlu0 %v380
  %v382 = vpop.xlane.xlu0 %381
  %v383 = vsel %vm110, %v367, 0.0
  %384 = vadd.xlane.f32.xlu0 %v383
  %v385 = vpop.xlane.xlu0 %384
  %v386 = vsel %vm110, %v369, 0.0
  %387 = vadd.xlane.f32.xlu0 %v386
  %v388 = vpop.xlane.xlu0 %387
  %v389 = vsel %vm110, %v371, 0.0
  %390 = vadd.xlane.f32.xlu0 %v389
  %v391 = vpop.xlane.xlu0 %390
  %v392 = vsel %vm110, %v373, 0.0
  %393 = vadd.xlane.f32.xlu0 %v392
  %v394 = vpop.xlane.xlu0 %393
  %v395 = vsel %vm110, %v375, 0.0
  %396 = vadd.xlane.f32.xlu0 %v395
  %v397 = vpop.xlane.xlu0 %396
  %v398 = vsel %vm110, %v377, 0.0
  %399 = vadd.xlane.f32.xlu0 %v398
  %v400 = vpop.xlane.xlu0 %399
  %v401 = vsel %vm110, %v379, 0.0
  %402 = vadd.xlane.f32.xlu0 %v401
  %v403 = vpop.xlane.xlu0 %402
  %v404 = vrcp.pop %v382
  %v405 = vmul.f32 %v382, %v404
  %v406 = vsub.f32 1.0, %v405
  %v407 = vmul.f32 %v404, %v406
  %v408 = vadd.f32 %v404, %v407
  %vm409 = vweird.f32 %v382
  %vm410 = vweird.f32 %v404
  %vm411 = vmor %vm409, %vm410
  %v412 = vsel %vm411, %v404, %v408
  %v413 = vand.u32 2147483647, %v382
  %vm414 = vcmp.eq.f32.partialorder %v413, 8.507059e+37
  %v415 = vand.u32 %v382, 2147483648
  %v416 = vor.u32 1.1754944e-38, %v415
  %v417 = vsel %vm414, %v416, %v412
  %v418 = vmul.f32 %v365, %v417
  %v419 = vrcp.pop %v385
  %v420 = vmul.f32 %v385, %v419
  %v421 = vsub.f32 1.0, %v420
  %v422 = vmul.f32 %v419, %v421
  %v423 = vadd.f32 %v419, %v422
  %vm424 = vweird.f32 %v385
  %vm425 = vweird.f32 %v419
  %vm426 = vmor %vm424, %vm425
  %v427 = vsel %vm426, %v419, %v423
  %v428 = vand.u32 2147483647, %v385
  %vm429 = vcmp.eq.f32.partialorder %v428, 8.507059e+37
  %v430 = vand.u32 %v385, 2147483648
  %v431 = vor.u32 1.1754944e-38, %v430
  %v432 = vsel %vm429, %v431, %v427
  %v433 = vmul.f32 %v367, %v432
  %v434 = vrcp.pop %v388
  %v435 = vmul.f32 %v388, %v434
  %v436 = vsub.f32 1.0, %v435
  %v437 = vmul.f32 %v434, %v436
  %v438 = vadd.f32 %v434, %v437
  %vm439 = vweird.f32 %v388
  %vm440 = vweird.f32 %v434
  %vm441 = vmor %vm439, %vm440
  %v442 = vsel %vm441, %v434, %v438
  %v443 = vand.u32 2147483647, %v388
  %vm444 = vcmp.eq.f32.partialorder %v443, 8.507059e+37
  %v445 = vand.u32 %v388, 2147483648
  %v446 = vor.u32 1.1754944e-38, %v445
  %v447 = vsel %vm444, %v446, %v442
  %v448 = vmul.f32 %v369, %v447
  %v449 = vrcp.pop %v391
  %v450 = vmul.f32 %v391, %v449
  %v451 = vsub.f32 1.0, %v450
  %v452 = vmul.f32 %v449, %v451
  %v453 = vadd.f32 %v449, %v452
  %vm454 = vweird.f32 %v391
  %vm455 = vweird.f32 %v449
  %vm456 = vmor %vm454, %vm455
  %v457 = vsel %vm456, %v449, %v453
  %v458 = vand.u32 2147483647, %v391
  %vm459 = vcmp.eq.f32.partialorder %v458, 8.507059e+37
  %v460 = vand.u32 %v391, 2147483648
  %v461 = vor.u32 1.1754944e-38, %v460
  %v462 = vsel %vm459, %v461, %v457
  %v463 = vmul.f32 %v371, %v462
  %v464 = vrcp.pop %v394
  %v465 = vmul.f32 %v394, %v464
  %v466 = vsub.f32 1.0, %v465
  %v467 = vmul.f32 %v464, %v466
  %v468 = vadd.f32 %v464, %v467
  %vm469 = vweird.f32 %v394
  %vm470 = vweird.f32 %v464
  %vm471 = vmor %vm469, %vm470
  %v472 = vsel %vm471, %v464, %v468
  %v473 = vand.u32 2147483647, %v394
  %vm474 = vcmp.eq.f32.partialorder %v473, 8.507059e+37
  %v475 = vand.u32 %v394, 2147483648
  %v476 = vor.u32 1.1754944e-38, %v475
  %v477 = vsel %vm474, %v476, %v472
  %v478 = vmul.f32 %v373, %v477
  %v479 = vrcp.pop %v397
  %v480 = vmul.f32 %v397, %v479
  %v481 = vsub.f32 1.0, %v480
  %v482 = vmul.f32 %v479, %v481
  %v483 = vadd.f32 %v479, %v482
  %vm484 = vweird.f32 %v397
  %vm485 = vweird.f32 %v479
  %vm486 = vmor %vm484, %vm485
  %v487 = vsel %vm486, %v479, %v483
  %v488 = vand.u32 2147483647, %v397
  %vm489 = vcmp.eq.f32.partialorder %v488, 8.507059e+37
  %v490 = vand.u32 %v397, 2147483648
  %v491 = vor.u32 1.1754944e-38, %v490
  %v492 = vsel %vm489, %v491, %v487
  %v493 = vmul.f32 %v375, %v492
  %v494 = vrcp.pop %v400
  %v495 = vmul.f32 %v400, %v494
  %v496 = vsub.f32 1.0, %v495
  %v497 = vmul.f32 %v494, %v496
  %v498 = vadd.f32 %v494, %v497
  %vm499 = vweird.f32 %v400
  %vm500 = vweird.f32 %v494
  %vm501 = vmor %vm499, %vm500
  %v502 = vsel %vm501, %v494, %v498
  %v503 = vand.u32 2147483647, %v400
  %vm504 = vcmp.eq.f32.partialorder %v503, 8.507059e+37
  %v505 = vand.u32 %v400, 2147483648
  %v506 = vor.u32 1.1754944e-38, %v505
  %v507 = vsel %vm504, %v506, %v502
  %v508 = vmul.f32 %v377, %v507
  %v509 = vrcp.pop %v403
  %v510 = vmul.f32 %v403, %v509
  %v511 = vsub.f32 1.0, %v510
  %v512 = vmul.f32 %v509, %v511
  %v513 = vadd.f32 %v509, %v512
  %vm514 = vweird.f32 %v403
  %vm515 = vweird.f32 %v509
  %vm516 = vmor %vm514, %vm515
  %v517 = vsel %vm516, %v509, %v513
  %v518 = vand.u32 2147483647, %v403
  %vm519 = vcmp.eq.f32.partialorder %v518, 8.507059e+37
  %v520 = vand.u32 %v403, 2147483648
  %v521 = vor.u32 1.1754944e-38, %v520
  %v522 = vsel %vm519, %v521, %v517
  %v523 = vmul.f32 %v379, %v522
  %524 = vrot.lane.b32.xlu0 %v79, 64
  %v525 = vpop.permute.xlu0 %524
  %v528 = vsel %vm110, %v418, 0
  %530 = vmatpush.msra.mxu0 0.0
  %531 = vmatpush.msra.mxu0 0.0
  %532 = vmatpush.msra.mxu0 0.0
  %533 = vmatpush.msra.mxu0 0.0
  %534 = vmatpush.msra.mxu0 0.0
  %535 = vmatpush.msra.mxu0 0.0
  %536 = vmatpush.msra.mxu0 0.0
  %537 = vmatpush.msra.mxu0 0.0
  %538 = vmatpush.msra.mxu0 0.0
  %539 = vmatpush.msra.mxu0 0.0
  %540 = vmatpush.msra.mxu0 0.0
  %541 = vmatpush.msra.mxu0 0.0
  %542 = vmatpush.msra.mxu0 0.0
  %543 = vmatpush.msra.mxu0 0.0
  %544 = vmatpush.msra.mxu0 0.0
  %545 = vmatpush.msra.mxu0 %v525
  %546 = vmatmul.f32.gmra.mxu0 %v528
  %v547 = vpop.f32.mrf.mxu0
  %v548 = vadd.f32 0.0, %v547
  %549 = vdwg.mxu0
  %550 = vrot.lane.b32.xlu0 %v82, 64
  %v551 = vpop.permute.xlu0 %550
  %v554 = vsel %vm110, %v433, 0
  %556 = vmatpush.msra.mxu0 0.0
  %557 = vmatpush.msra.mxu0 0.0
  %558 = vmatpush.msra.mxu0 0.0
  %559 = vmatpush.msra.mxu0 0.0
  %560 = vmatpush.msra.mxu0 0.0
  %561 = vmatpush.msra.mxu0 0.0
  %562 = vmatpush.msra.mxu0 0.0
  %563 = vmatpush.msra.mxu0 0.0
  %564 = vmatpush.msra.mxu0 0.0
  %565 = vmatpush.msra.mxu0 0.0
  %566 = vmatpush.msra.mxu0 0.0
  %567 = vmatpush.msra.mxu0 0.0
  %568 = vmatpush.msra.mxu0 0.0
  %569 = vmatpush.msra.mxu0 0.0
  %570 = vmatpush.msra.mxu0 0.0
  %571 = vmatpush.msra.mxu0 %v551
  %572 = vmatmul.f32.gmra.mxu0 %v554
  %v573 = vpop.f32.mrf.mxu0
  %v574 = vadd.f32 0.0, %v573
  %575 = vdwg.mxu0
  %576 = vrot.lane.b32.xlu0 %v85, 64
  %v577 = vpop.permute.xlu0 %576
  %v580 = vsel %vm110, %v448, 0
  %582 = vmatpush.msra.mxu0 0.0
  %583 = vmatpush.msra.mxu0 0.0
  %584 = vmatpush.msra.mxu0 0.0
  %585 = vmatpush.msra.mxu0 0.0
  %586 = vmatpush.msra.mxu0 0.0
  %587 = vmatpush.msra.mxu0 0.0
  %588 = vmatpush.msra.mxu0 0.0
  %589 = vmatpush.msra.mxu0 0.0
  %590 = vmatpush.msra.mxu0 0.0
  %591 = vmatpush.msra.mxu0 0.0
  %592 = vmatpush.msra.mxu0 0.0
  %593 = vmatpush.msra.mxu0 0.0
  %594 = vmatpush.msra.mxu0 0.0
  %595 = vmatpush.msra.mxu0 0.0
  %596 = vmatpush.msra.mxu0 0.0
  %597 = vmatpush.msra.mxu0 %v577
  %598 = vmatmul.f32.gmra.mxu0 %v580
  %v599 = vpop.f32.mrf.mxu0
  %v600 = vadd.f32 0.0, %v599
  %601 = vdwg.mxu0
  %602 = vrot.lane.b32.xlu0 %v88, 64
  %v603 = vpop.permute.xlu0 %602
  %v606 = vsel %vm110, %v463, 0
  %608 = vmatpush.msra.mxu0 0.0
  %609 = vmatpush.msra.mxu0 0.0
  %610 = vmatpush.msra.mxu0 0.0
  %611 = vmatpush.msra.mxu0 0.0
  %612 = vmatpush.msra.mxu0 0.0
  %613 = vmatpush.msra.mxu0 0.0
  %614 = vmatpush.msra.mxu0 0.0
  %615 = vmatpush.msra.mxu0 0.0
  %616 = vmatpush.msra.mxu0 0.0
  %617 = vmatpush.msra.mxu0 0.0
  %618 = vmatpush.msra.mxu0 0.0
  %619 = vmatpush.msra.mxu0 0.0
  %620 = vmatpush.msra.mxu0 0.0
  %621 = vmatpush.msra.mxu0 0.0
  %622 = vmatpush.msra.mxu0 0.0
  %623 = vmatpush.msra.mxu0 %v603
  %624 = vmatmul.f32.gmra.mxu0 %v606
  %v625 = vpop.f32.mrf.mxu0
  %v626 = vadd.f32 0.0, %v625
  %627 = vdwg.mxu0
  %628 = vrot.lane.b32.xlu0 %v91, 64
  %v629 = vpop.permute.xlu0 %628
  %v632 = vsel %vm110, %v478, 0
  %634 = vmatpush.msra.mxu0 0.0
  %635 = vmatpush.msra.mxu0 0.0
  %636 = vmatpush.msra.mxu0 0.0
  %637 = vmatpush.msra.mxu0 0.0
  %638 = vmatpush.msra.mxu0 0.0
  %639 = vmatpush.msra.mxu0 0.0
  %640 = vmatpush.msra.mxu0 0.0
  %641 = vmatpush.msra.mxu0 0.0
  %642 = vmatpush.msra.mxu0 0.0
  %643 = vmatpush.msra.mxu0 0.0
  %644 = vmatpush.msra.mxu0 0.0
  %645 = vmatpush.msra.mxu0 0.0
  %646 = vmatpush.msra.mxu0 0.0
  %647 = vmatpush.msra.mxu0 0.0
  %648 = vmatpush.msra.mxu0 0.0
  %649 = vmatpush.msra.mxu0 %v629
  %650 = vmatmul.f32.gmra.mxu0 %v632
  %v651 = vpop.f32.mrf.mxu0
  %v652 = vadd.f32 0.0, %v651
  %653 = vdwg.mxu0
  %654 = vrot.lane.b32.xlu0 %v94, 64
  %v655 = vpop.permute.xlu0 %654
  %v658 = vsel %vm110, %v493, 0
  %660 = vmatpush.msra.mxu0 0.0
  %661 = vmatpush.msra.mxu0 0.0
  %662 = vmatpush.msra.mxu0 0.0
  %663 = vmatpush.msra.mxu0 0.0
  %664 = vmatpush.msra.mxu0 0.0
  %665 = vmatpush.msra.mxu0 0.0
  %666 = vmatpush.msra.mxu0 0.0
  %667 = vmatpush.msra.mxu0 0.0
  %668 = vmatpush.msra.mxu0 0.0
  %669 = vmatpush.msra.mxu0 0.0
  %670 = vmatpush.msra.mxu0 0.0
  %671 = vmatpush.msra.mxu0 0.0
  %672 = vmatpush.msra.mxu0 0.0
  %673 = vmatpush.msra.mxu0 0.0
  %674 = vmatpush.msra.mxu0 0.0
  %675 = vmatpush.msra.mxu0 %v655
  %676 = vmatmul.f32.gmra.mxu0 %v658
  %v677 = vpop.f32.mrf.mxu0
  %v678 = vadd.f32 0.0, %v677
  %679 = vdwg.mxu0
  %680 = vrot.lane.b32.xlu0 %v97, 64
  %v681 = vpop.permute.xlu0 %680
  %v684 = vsel %vm110, %v508, 0
  %686 = vmatpush.msra.mxu0 0.0
  %687 = vmatpush.msra.mxu0 0.0
  %688 = vmatpush.msra.mxu0 0.0
  %689 = vmatpush.msra.mxu0 0.0
  %690 = vmatpush.msra.mxu0 0.0
  %691 = vmatpush.msra.mxu0 0.0
  %692 = vmatpush.msra.mxu0 0.0
  %693 = vmatpush.msra.mxu0 0.0
  %694 = vmatpush.msra.mxu0 0.0
  %695 = vmatpush.msra.mxu0 0.0
  %696 = vmatpush.msra.mxu0 0.0
  %697 = vmatpush.msra.mxu0 0.0
  %698 = vmatpush.msra.mxu0 0.0
  %699 = vmatpush.msra.mxu0 0.0
  %700 = vmatpush.msra.mxu0 0.0
  %701 = vmatpush.msra.mxu0 %v681
  %702 = vmatmul.f32.gmra.mxu0 %v684
  %v703 = vpop.f32.mrf.mxu0
  %v704 = vadd.f32 0.0, %v703
  %705 = vdwg.mxu0
  %706 = vrot.lane.b32.xlu0 %v100, 64
  %v707 = vpop.permute.xlu0 %706
  %v710 = vsel %vm110, %v523, 0
  %712 = vmatpush.msra.mxu0 0.0
  %713 = vmatpush.msra.mxu0 0.0
  %714 = vmatpush.msra.mxu0 0.0
  %715 = vmatpush.msra.mxu0 0.0
  %716 = vmatpush.msra.mxu0 0.0
  %717 = vmatpush.msra.mxu0 0.0
  %718 = vmatpush.msra.mxu0 0.0
  %719 = vmatpush.msra.mxu0 0.0
  %720 = vmatpush.msra.mxu0 0.0
  %721 = vmatpush.msra.mxu0 0.0
  %722 = vmatpush.msra.mxu0 0.0
  %723 = vmatpush.msra.mxu0 0.0
  %724 = vmatpush.msra.mxu0 0.0
  %725 = vmatpush.msra.mxu0 0.0
  %726 = vmatpush.msra.mxu0 0.0
  %727 = vmatpush.msra.mxu0 %v707
  %728 = vmatmul.f32.gmra.mxu0 %v710
  %v729 = vpop.f32.mrf.mxu0
  %v730 = vadd.f32 0.0, %v729
  %731 = vdwg.mxu0
  %v732 = vld [vmem:[%s3] sm:$0xff]
  %v734 = vsel %vm110, %v548, 0
  %v737 = vsel %vm110, %v574, 0
  %v740 = vsel %vm110, %v600, 0
  %v743 = vsel %vm110, %v626, 0
  %v746 = vsel %vm110, %v652, 0
  %v749 = vsel %vm110, %v678, 0
  %v752 = vsel %vm110, %v704, 0
  %v755 = vsel %vm110, %v730, 0
  %757 = vmatpush.msra.mxu0 0.0
  %758 = vmatpush.msra.mxu0 0.0
  %759 = vmatpush.msra.mxu0 0.0
  %760 = vmatpush.msra.mxu0 0.0
  %761 = vmatpush.msra.mxu0 0.0
  %762 = vmatpush.msra.mxu0 0.0
  %763 = vmatpush.msra.mxu0 0.0
  %764 = vmatpush.msra.mxu0 0.0
  %765 = vmatpush.msra.mxu0 0.0
  %766 = vmatpush.msra.mxu0 0.0
  %767 = vmatpush.msra.mxu0 0.0
  %768 = vmatpush.msra.mxu0 0.0
  %769 = vmatpush.msra.mxu0 0.0
  %770 = vmatpush.msra.mxu0 0.0
  %771 = vmatpush.msra.mxu0 0.0
  %772 = vmatpush.msra.mxu0 %v732
  %773 = vmatmul.f32.gmra.mxu0 %v734
  %v774 = vpop.f32.mrf.mxu0
  %v775 = vadd.f32 0.0, %v774
  %776 = vmatmul.f32.gmra.mxu0 %v737
  %v777 = vpop.f32.mrf.mxu0
  %v778 = vadd.f32 0.0, %v777
  %779 = vmatmul.f32.gmra.mxu0 %v740
  %v780 = vpop.f32.mrf.mxu0
  %v781 = vadd.f32 0.0, %v780
  %782 = vmatmul.f32.gmra.mxu0 %v743
  %v783 = vpop.f32.mrf.mxu0
  %v784 = vadd.f32 0.0, %v783
  %785 = vmatmul.f32.gmra.mxu0 %v746
  %v786 = vpop.f32.mrf.mxu0
  %v787 = vadd.f32 0.0, %v786
  %788 = vmatmul.f32.gmra.mxu0 %v749
  %v789 = vpop.f32.mrf.mxu0
  %v790 = vadd.f32 0.0, %v789
  %791 = vmatmul.f32.gmra.mxu0 %v752
  %v792 = vpop.f32.mrf.mxu0
  %v793 = vadd.f32 0.0, %v792
  %794 = vmatmul.f32.gmra.mxu0 %v755
  %v795 = vpop.f32.mrf.mxu0
  %v796 = vadd.f32 0.0, %v795
  %797 = vdwg.mxu0
  %v798 = vadd.f32 %v106, %v775
  %v799 = vadd.f32 %v106, %v778
  %v800 = vadd.f32 %v106, %v781
  %v801 = vadd.f32 %v106, %v784
  %v802 = vadd.f32 %v106, %v787
  %v803 = vadd.f32 %v106, %v790
  %v804 = vadd.f32 %v106, %v793
  %v805 = vadd.f32 %v106, %v796
  %806 = vrot.lane.b32.xlu0 %v79, 120
  %v807 = vpop.permute.xlu0 %806
  %808 = vrot.lane.b32.xlu0 %v79, 88
  %v809 = vpop.permute.xlu0 %808
  %v810 = vsel %vm110, %v807, 0
  %v812 = vsel %vm110, %v809, 0
  %814 = vmatpush.xpose.msra.mxu0 0.0
  %815 = vmatpush.xpose.msra.mxu0 0.0
  %816 = vmatpush.xpose.msra.mxu0 0.0
  %817 = vmatpush.xpose.msra.mxu0 0.0
  %818 = vmatpush.xpose.msra.mxu0 0.0
  %819 = vmatpush.xpose.msra.mxu0 0.0
  %820 = vmatpush.xpose.msra.mxu0 0.0
  %821 = vmatpush.xpose.msra.mxu0 0.0
  %822 = vmatpush.xpose.msra.mxu0 0.0
  %823 = vmatpush.xpose.msra.mxu0 0.0
  %824 = vmatpush.xpose.msra.mxu0 0.0
  %825 = vmatpush.xpose.msra.mxu0 0.0
  %826 = vmatpush.xpose.msra.mxu0 0.0
  %827 = vmatpush.xpose.msra.mxu0 0.0
  %828 = vmatpush.xpose.msra.mxu0 0.0
  %829 = vmatpush.xpose.msra.mxu0 %v812
  %830 = vmatmul.f32.gmra.mxu0 %v810
  %v831 = vpop.f32.mrf.mxu0
  %v832 = vadd.f32 0.0, %v831
  %833 = vdwg.mxu0
  %834 = vrot.lane.b32.xlu0 %v82, 120
  %v835 = vpop.permute.xlu0 %834
  %836 = vrot.lane.b32.xlu0 %v82, 88
  %v837 = vpop.permute.xlu0 %836
  %v838 = vsel %vm110, %v835, 0
  %v840 = vsel %vm110, %v837, 0
  %842 = vmatpush.xpose.msra.mxu0 0.0
  %843 = vmatpush.xpose.msra.mxu0 0.0
  %844 = vmatpush.xpose.msra.mxu0 0.0
  %845 = vmatpush.xpose.msra.mxu0 0.0
  %846 = vmatpush.xpose.msra.mxu0 0.0
  %847 = vmatpush.xpose.msra.mxu0 0.0
  %848 = vmatpush.xpose.msra.mxu0 0.0
  %849 = vmatpush.xpose.msra.mxu0 0.0
  %850 = vmatpush.xpose.msra.mxu0 0.0
  %851 = vmatpush.xpose.msra.mxu0 0.0
  %852 = vmatpush.xpose.msra.mxu0 0.0
  %853 = vmatpush.xpose.msra.mxu0 0.0
  %854 = vmatpush.xpose.msra.mxu0 0.0
  %855 = vmatpush.xpose.msra.mxu0 0.0
  %856 = vmatpush.xpose.msra.mxu0 0.0
  %857 = vmatpush.xpose.msra.mxu0 %v840
  %858 = vmatmul.f32.gmra.mxu0 %v838
  %v859 = vpop.f32.mrf.mxu0
  %v860 = vadd.f32 0.0, %v859
  %861 = vdwg.mxu0
  %862 = vrot.lane.b32.xlu0 %v85, 120
  %v863 = vpop.permute.xlu0 %862
  %864 = vrot.lane.b32.xlu0 %v85, 88
  %v865 = vpop.permute.xlu0 %864
  %v866 = vsel %vm110, %v863, 0
  %v868 = vsel %vm110, %v865, 0
  %870 = vmatpush.xpose.msra.mxu0 0.0
  %871 = vmatpush.xpose.msra.mxu0 0.0
  %872 = vmatpush.xpose.msra.mxu0 0.0
  %873 = vmatpush.xpose.msra.mxu0 0.0
  %874 = vmatpush.xpose.msra.mxu0 0.0
  %875 = vmatpush.xpose.msra.mxu0 0.0
  %876 = vmatpush.xpose.msra.mxu0 0.0
  %877 = vmatpush.xpose.msra.mxu0 0.0
  %878 = vmatpush.xpose.msra.mxu0 0.0
  %879 = vmatpush.xpose.msra.mxu0 0.0
  %880 = vmatpush.xpose.msra.mxu0 0.0
  %881 = vmatpush.xpose.msra.mxu0 0.0
  %882 = vmatpush.xpose.msra.mxu0 0.0
  %883 = vmatpush.xpose.msra.mxu0 0.0
  %884 = vmatpush.xpose.msra.mxu0 0.0
  %885 = vmatpush.xpose.msra.mxu0 %v868
  %886 = vmatmul.f32.gmra.mxu0 %v866
  %v887 = vpop.f32.mrf.mxu0
  %v888 = vadd.f32 0.0, %v887
  %889 = vdwg.mxu0
  %890 = vrot.lane.b32.xlu0 %v88, 120
  %v891 = vpop.permute.xlu0 %890
  %892 = vrot.lane.b32.xlu0 %v88, 88
  %v893 = vpop.permute.xlu0 %892
  %v894 = vsel %vm110, %v891, 0
  %v896 = vsel %vm110, %v893, 0
  %898 = vmatpush.xpose.msra.mxu0 0.0
  %899 = vmatpush.xpose.msra.mxu0 0.0
  %900 = vmatpush.xpose.msra.mxu0 0.0
  %901 = vmatpush.xpose.msra.mxu0 0.0
  %902 = vmatpush.xpose.msra.mxu0 0.0
  %903 = vmatpush.xpose.msra.mxu0 0.0
  %904 = vmatpush.xpose.msra.mxu0 0.0
  %905 = vmatpush.xpose.msra.mxu0 0.0
  %906 = vmatpush.xpose.msra.mxu0 0.0
  %907 = vmatpush.xpose.msra.mxu0 0.0
  %908 = vmatpush.xpose.msra.mxu0 0.0
  %909 = vmatpush.xpose.msra.mxu0 0.0
  %910 = vmatpush.xpose.msra.mxu0 0.0
  %911 = vmatpush.xpose.msra.mxu0 0.0
  %912 = vmatpush.xpose.msra.mxu0 0.0
  %913 = vmatpush.xpose.msra.mxu0 %v896
  %914 = vmatmul.f32.gmra.mxu0 %v894
  %v915 = vpop.f32.mrf.mxu0
  %v916 = vadd.f32 0.0, %v915
  %917 = vdwg.mxu0
  %918 = vrot.lane.b32.xlu0 %v91, 120
  %v919 = vpop.permute.xlu0 %918
  %920 = vrot.lane.b32.xlu0 %v91, 88
  %v921 = vpop.permute.xlu0 %920
  %v922 = vsel %vm110, %v919, 0
  %v924 = vsel %vm110, %v921, 0
  %926 = vmatpush.xpose.msra.mxu0 0.0
  %927 = vmatpush.xpose.msra.mxu0 0.0
  %928 = vmatpush.xpose.msra.mxu0 0.0
  %929 = vmatpush.xpose.msra.mxu0 0.0
  %930 = vmatpush.xpose.msra.mxu0 0.0
  %931 = vmatpush.xpose.msra.mxu0 0.0
  %932 = vmatpush.xpose.msra.mxu0 0.0
  %933 = vmatpush.xpose.msra.mxu0 0.0
  %934 = vmatpush.xpose.msra.mxu0 0.0
  %935 = vmatpush.xpose.msra.mxu0 0.0
  %936 = vmatpush.xpose.msra.mxu0 0.0
  %937 = vmatpush.xpose.msra.mxu0 0.0
  %938 = vmatpush.xpose.msra.mxu0 0.0
  %939 = vmatpush.xpose.msra.mxu0 0.0
  %940 = vmatpush.xpose.msra.mxu0 0.0
  %941 = vmatpush.xpose.msra.mxu0 %v924
  %942 = vmatmul.f32.gmra.mxu0 %v922
  %v943 = vpop.f32.mrf.mxu0
  %v944 = vadd.f32 0.0, %v943
  %945 = vdwg.mxu0
  %946 = vrot.lane.b32.xlu0 %v94, 120
  %v947 = vpop.permute.xlu0 %946
  %948 = vrot.lane.b32.xlu0 %v94, 88
  %v949 = vpop.permute.xlu0 %948
  %v950 = vsel %vm110, %v947, 0
  %v952 = vsel %vm110, %v949, 0
  %954 = vmatpush.xpose.msra.mxu0 0.0
  %955 = vmatpush.xpose.msra.mxu0 0.0
  %956 = vmatpush.xpose.msra.mxu0 0.0
  %957 = vmatpush.xpose.msra.mxu0 0.0
  %958 = vmatpush.xpose.msra.mxu0 0.0
  %959 = vmatpush.xpose.msra.mxu0 0.0
  %960 = vmatpush.xpose.msra.mxu0 0.0
  %961 = vmatpush.xpose.msra.mxu0 0.0
  %962 = vmatpush.xpose.msra.mxu0 0.0
  %963 = vmatpush.xpose.msra.mxu0 0.0
  %964 = vmatpush.xpose.msra.mxu0 0.0
  %965 = vmatpush.xpose.msra.mxu0 0.0
  %966 = vmatpush.xpose.msra.mxu0 0.0
  %967 = vmatpush.xpose.msra.mxu0 0.0
  %968 = vmatpush.xpose.msra.mxu0 0.0
  %969 = vmatpush.xpose.msra.mxu0 %v952
  %970 = vmatmul.f32.gmra.mxu0 %v950
  %v971 = vpop.f32.mrf.mxu0
  %v972 = vadd.f32 0.0, %v971
  %973 = vdwg.mxu0
  %974 = vrot.lane.b32.xlu0 %v97, 120
  %v975 = vpop.permute.xlu0 %974
  %976 = vrot.lane.b32.xlu0 %v97, 88
  %v977 = vpop.permute.xlu0 %976
  %v978 = vsel %vm110, %v975, 0
  %v980 = vsel %vm110, %v977, 0
  %982 = vmatpush.xpose.msra.mxu0 0.0
  %983 = vmatpush.xpose.msra.mxu0 0.0
  %984 = vmatpush.xpose.msra.mxu0 0.0
  %985 = vmatpush.xpose.msra.mxu0 0.0
  %986 = vmatpush.xpose.msra.mxu0 0.0
  %987 = vmatpush.xpose.msra.mxu0 0.0
  %988 = vmatpush.xpose.msra.mxu0 0.0
  %989 = vmatpush.xpose.msra.mxu0 0.0
  %990 = vmatpush.xpose.msra.mxu0 0.0
  %991 = vmatpush.xpose.msra.mxu0 0.0
  %992 = vmatpush.xpose.msra.mxu0 0.0
  %993 = vmatpush.xpose.msra.mxu0 0.0
  %994 = vmatpush.xpose.msra.mxu0 0.0
  %995 = vmatpush.xpose.msra.mxu0 0.0
  %996 = vmatpush.xpose.msra.mxu0 0.0
  %997 = vmatpush.xpose.msra.mxu0 %v980
  %998 = vmatmul.f32.gmra.mxu0 %v978
  %v999 = vpop.f32.mrf.mxu0
  %v1000 = vadd.f32 0.0, %v999
  %1001 = vdwg.mxu0
  %1002 = vrot.lane.b32.xlu0 %v100, 120
  %v1003 = vpop.permute.xlu0 %1002
  %1004 = vrot.lane.b32.xlu0 %v100, 88
  %v1005 = vpop.permute.xlu0 %1004
  %v1006 = vsel %vm110, %v1003, 0
  %v1008 = vsel %vm110, %v1005, 0
  %1010 = vmatpush.xpose.msra.mxu0 0.0
  %1011 = vmatpush.xpose.msra.mxu0 0.0
  %1012 = vmatpush.xpose.msra.mxu0 0.0
  %1013 = vmatpush.xpose.msra.mxu0 0.0
  %1014 = vmatpush.xpose.msra.mxu0 0.0
  %1015 = vmatpush.xpose.msra.mxu0 0.0
  %1016 = vmatpush.xpose.msra.mxu0 0.0
  %1017 = vmatpush.xpose.msra.mxu0 0.0
  %1018 = vmatpush.xpose.msra.mxu0 0.0
  %1019 = vmatpush.xpose.msra.mxu0 0.0
  %1020 = vmatpush.xpose.msra.mxu0 0.0
  %1021 = vmatpush.xpose.msra.mxu0 0.0
  %1022 = vmatpush.xpose.msra.mxu0 0.0
  %1023 = vmatpush.xpose.msra.mxu0 0.0
  %1024 = vmatpush.xpose.msra.mxu0 0.0
  %1025 = vmatpush.xpose.msra.mxu0 %v1008
  %1026 = vmatmul.f32.gmra.mxu0 %v1006
  %v1027 = vpop.f32.mrf.mxu0
  %v1028 = vadd.f32 0.0, %v1027
  %1029 = vdwg.mxu0
  %v1030 = vmul.f32 %v832, 0.35355338
  %v1031 = vmul.f32 %v860, 0.35355338
  %v1032 = vmul.f32 %v888, 0.35355338
  %v1033 = vmul.f32 %v916, 0.35355338
  %v1034 = vmul.f32 %v944, 0.35355338
  %v1035 = vmul.f32 %v972, 0.35355338
  %v1036 = vmul.f32 %v1000, 0.35355338
  %v1037 = vmul.f32 %v1028, 0.35355338
  %v1038 = vsel %vm110, %v1030, -inf
  %1039 = vmax.xlane.f32.xlu0 %v1038
  %v1040 = vpop.xlane.xlu0 %1039
  %v1041 = vsel %vm110, %v1031, -inf
  %1042 = vmax.xlane.f32.xlu0 %v1041
  %v1043 = vpop.xlane.xlu0 %1042
  %v1044 = vsel %vm110, %v1032, -inf
  %1045 = vmax.xlane.f32.xlu0 %v1044
  %v1046 = vpop.xlane.xlu0 %1045
  %v1047 = vsel %vm110, %v1033, -inf
  %1048 = vmax.xlane.f32.xlu0 %v1047
  %v1049 = vpop.xlane.xlu0 %1048
  %v1050 = vsel %vm110, %v1034, -inf
  %1051 = vmax.xlane.f32.xlu0 %v1050
  %v1052 = vpop.xlane.xlu0 %1051
  %v1053 = vsel %vm110, %v1035, -inf
  %1054 = vmax.xlane.f32.xlu0 %v1053
  %v1055 = vpop.xlane.xlu0 %1054
  %v1056 = vsel %vm110, %v1036, -inf
  %1057 = vmax.xlane.f32.xlu0 %v1056
  %v1058 = vpop.xlane.xlu0 %1057
  %v1059 = vsel %vm110, %v1037, -inf
  %1060 = vmax.xlane.f32.xlu0 %v1059
  %v1061 = vpop.xlane.xlu0 %1060
  %v1062 = vsub.f32 %v1030, %v1040
  %v1063 = vsub.f32 %v1031, %v1043
  %v1064 = vsub.f32 %v1032, %v1046
  %v1065 = vsub.f32 %v1033, %v1049
  %v1066 = vsub.f32 %v1034, %v1052
  %v1067 = vsub.f32 %v1035, %v1055
  %v1068 = vsub.f32 %v1036, %v1058
  %v1069 = vsub.f32 %v1037, %v1061
  %v1070 = vmul.f32 %v1062, 1.442695
  %v1071 = vpow.pop %v1070
  %v1072 = vmul.f32 %v1063, 1.442695
  %v1073 = vpow.pop %v1072
  %v1074 = vmul.f32 %v1064, 1.442695
  %v1075 = vpow.pop %v1074
  %v1076 = vmul.f32 %v1065, 1.442695
  %v1077 = vpow.pop %v1076
  %v1078 = vmul.f32 %v1066, 1.442695
  %v1079 = vpow.pop %v1078
  %v1080 = vmul.f32 %v1067, 1.442695
  %v1081 = vpow.pop %v1080
  %v1082 = vmul.f32 %v1068, 1.442695
  %v1083 = vpow.pop %v1082
  %v1084 = vmul.f32 %v1069, 1.442695
  %v1085 = vpow.pop %v1084
  %v1086 = vsel %vm110, %v1071, 0.0
  %1087 = vadd.xlane.f32.xlu0 %v1086
  %v1088 = vpop.xlane.xlu0 %1087
  %v1089 = vsel %vm110, %v1073, 0.0
  %1090 = vadd.xlane.f32.xlu0 %v1089
  %v1091 = vpop.xlane.xlu0 %1090
  %v1092 = vsel %vm110, %v1075, 0.0
  %1093 = vadd.xlane.f32.xlu0 %v1092
  %v1094 = vpop.xlane.xlu0 %1093
  %v1095 = vsel %vm110, %v1077, 0.0
  %1096 = vadd.xlane.f32.xlu0 %v1095
  %v1097 = vpop.xlane.xlu0 %1096
  %v1098 = vsel %vm110, %v1079, 0.0
  %1099 = vadd.xlane.f32.xlu0 %v1098
  %v1100 = vpop.xlane.xlu0 %1099
  %v1101 = vsel %vm110, %v1081, 0.0
  %1102 = vadd.xlane.f32.xlu0 %v1101
  %v1103 = vpop.xlane.xlu0 %1102
  %v1104 = vsel %vm110, %v1083, 0.0
  %1105 = vadd.xlane.f32.xlu0 %v1104
  %v1106 = vpop.xlane.xlu0 %1105
  %v1107 = vsel %vm110, %v1085, 0.0
  %1108 = vadd.xlane.f32.xlu0 %v1107
  %v1109 = vpop.xlane.xlu0 %1108
  %v1110 = vrcp.pop %v1088
  %v1111 = vmul.f32 %v1088, %v1110
  %v1112 = vsub.f32 1.0, %v1111
  %v1113 = vmul.f32 %v1110, %v1112
  %v1114 = vadd.f32 %v1110, %v1113
  %vm1115 = vweird.f32 %v1088
  %vm1116 = vweird.f32 %v1110
  %vm1117 = vmor %vm1115, %vm1116
  %v1118 = vsel %vm1117, %v1110, %v1114
  %v1119 = vand.u32 2147483647, %v1088
  %vm1120 = vcmp.eq.f32.partialorder %v1119, 8.507059e+37
  %v1121 = vand.u32 %v1088, 2147483648
  %v1122 = vor.u32 1.1754944e-38, %v1121
  %v1123 = vsel %vm1120, %v1122, %v1118
  %v1124 = vmul.f32 %v1071, %v1123
  %v1125 = vrcp.pop %v1091
  %v1126 = vmul.f32 %v1091, %v1125
  %v1127 = vsub.f32 1.0, %v1126
  %v1128 = vmul.f32 %v1125, %v1127
  %v1129 = vadd.f32 %v1125, %v1128
  %vm1130 = vweird.f32 %v1091
  %vm1131 = vweird.f32 %v1125
  %vm1132 = vmor %vm1130, %vm1131
  %v1133 = vsel %vm1132, %v1125, %v1129
  %v1134 = vand.u32 2147483647, %v1091
  %vm1135 = vcmp.eq.f32.partialorder %v1134, 8.507059e+37
  %v1136 = vand.u32 %v1091, 2147483648
  %v1137 = vor.u32 1.1754944e-38, %v1136
  %v1138 = vsel %vm1135, %v1137, %v1133
  %v1139 = vmul.f32 %v1073, %v1138
  %v1140 = vrcp.pop %v1094
  %v1141 = vmul.f32 %v1094, %v1140
  %v1142 = vsub.f32 1.0, %v1141
  %v1143 = vmul.f32 %v1140, %v1142
  %v1144 = vadd.f32 %v1140, %v1143
  %vm1145 = vweird.f32 %v1094
  %vm1146 = vweird.f32 %v1140
  %vm1147 = vmor %vm1145, %vm1146
  %v1148 = vsel %vm1147, %v1140, %v1144
  %v1149 = vand.u32 2147483647, %v1094
  %vm1150 = vcmp.eq.f32.partialorder %v1149, 8.507059e+37
  %v1151 = vand.u32 %v1094, 2147483648
  %v1152 = vor.u32 1.1754944e-38, %v1151
  %v1153 = vsel %vm1150, %v1152, %v1148
  %v1154 = vmul.f32 %v1075, %v1153
  %v1155 = vrcp.pop %v1097
  %v1156 = vmul.f32 %v1097, %v1155
  %v1157 = vsub.f32 1.0, %v1156
  %v1158 = vmul.f32 %v1155, %v1157
  %v1159 = vadd.f32 %v1155, %v1158
  %vm1160 = vweird.f32 %v1097
  %vm1161 = vweird.f32 %v1155
  %vm1162 = vmor %vm1160, %vm1161
  %v1163 = vsel %vm1162, %v1155, %v1159
  %v1164 = vand.u32 2147483647, %v1097
  %vm1165 = vcmp.eq.f32.partialorder %v1164, 8.507059e+37
  %v1166 = vand.u32 %v1097, 2147483648
  %v1167 = vor.u32 1.1754944e-38, %v1166
  %v1168 = vsel %vm1165, %v1167, %v1163
  %v1169 = vmul.f32 %v1077, %v1168
  %v1170 = vrcp.pop %v1100
  %v1171 = vmul.f32 %v1100, %v1170
  %v1172 = vsub.f32 1.0, %v1171
  %v1173 = vmul.f32 %v1170, %v1172
  %v1174 = vadd.f32 %v1170, %v1173
  %vm1175 = vweird.f32 %v1100
  %vm1176 = vweird.f32 %v1170
  %vm1177 = vmor %vm1175, %vm1176
  %v1178 = vsel %vm1177, %v1170, %v1174
  %v1179 = vand.u32 2147483647, %v1100
  %vm1180 = vcmp.eq.f32.partialorder %v1179, 8.507059e+37
  %v1181 = vand.u32 %v1100, 2147483648
  %v1182 = vor.u32 1.1754944e-38, %v1181
  %v1183 = vsel %vm1180, %v1182, %v1178
  %v1184 = vmul.f32 %v1079, %v1183
  %v1185 = vrcp.pop %v1103
  %v1186 = vmul.f32 %v1103, %v1185
  %v1187 = vsub.f32 1.0, %v1186
  %v1188 = vmul.f32 %v1185, %v1187
  %v1189 = vadd.f32 %v1185, %v1188
  %vm1190 = vweird.f32 %v1103
  %vm1191 = vweird.f32 %v1185
  %vm1192 = vmor %vm1190, %vm1191
  %v1193 = vsel %vm1192, %v1185, %v1189
  %v1194 = vand.u32 2147483647, %v1103
  %vm1195 = vcmp.eq.f32.partialorder %v1194, 8.507059e+37
  %v1196 = vand.u32 %v1103, 2147483648
  %v1197 = vor.u32 1.1754944e-38, %v1196
  %v1198 = vsel %vm1195, %v1197, %v1193
  %v1199 = vmul.f32 %v1081, %v1198
  %v1200 = vrcp.pop %v1106
  %v1201 = vmul.f32 %v1106, %v1200
  %v1202 = vsub.f32 1.0, %v1201
  %v1203 = vmul.f32 %v1200, %v1202
  %v1204 = vadd.f32 %v1200, %v1203
  %vm1205 = vweird.f32 %v1106
  %vm1206 = vweird.f32 %v1200
  %vm1207 = vmor %vm1205, %vm1206
  %v1208 = vsel %vm1207, %v1200, %v1204
  %v1209 = vand.u32 2147483647, %v1106
  %vm1210 = vcmp.eq.f32.partialorder %v1209, 8.507059e+37
  %v1211 = vand.u32 %v1106, 2147483648
  %v1212 = vor.u32 1.1754944e-38, %v1211
  %v1213 = vsel %vm1210, %v1212, %v1208
  %v1214 = vmul.f32 %v1083, %v1213
  %v1215 = vrcp.pop %v1109
  %v1216 = vmul.f32 %v1109, %v1215
  %v1217 = vsub.f32 1.0, %v1216
  %v1218 = vmul.f32 %v1215, %v1217
  %v1219 = vadd.f32 %v1215, %v1218
  %vm1220 = vweird.f32 %v1109
  %vm1221 = vweird.f32 %v1215
  %vm1222 = vmor %vm1220, %vm1221
  %v1223 = vsel %vm1222, %v1215, %v1219
  %v1224 = vand.u32 2147483647, %v1109
  %vm1225 = vcmp.eq.f32.partialorder %v1224, 8.507059e+37
  %v1226 = vand.u32 %v1109, 2147483648
  %v1227 = vor.u32 1.1754944e-38, %v1226
  %v1228 = vsel %vm1225, %v1227, %v1223
  %v1229 = vmul.f32 %v1085, %v1228
  %1230 = vrot.lane.b32.xlu0 %v79, 56
  %v1231 = vpop.permute.xlu0 %1230
  %v1234 = vsel %vm110, %v1124, 0
  %1236 = vmatpush.msra.mxu0 0.0
  %1237 = vmatpush.msra.mxu0 0.0
  %1238 = vmatpush.msra.mxu0 0.0
  %1239 = vmatpush.msra.mxu0 0.0
  %1240 = vmatpush.msra.mxu0 0.0
  %1241 = vmatpush.msra.mxu0 0.0
  %1242 = vmatpush.msra.mxu0 0.0
  %1243 = vmatpush.msra.mxu0 0.0
  %1244 = vmatpush.msra.mxu0 0.0
  %1245 = vmatpush.msra.mxu0 0.0
  %1246 = vmatpush.msra.mxu0 0.0
  %1247 = vmatpush.msra.mxu0 0.0
  %1248 = vmatpush.msra.mxu0 0.0
  %1249 = vmatpush.msra.mxu0 0.0
  %1250 = vmatpush.msra.mxu0 0.0
  %1251 = vmatpush.msra.mxu0 %v1231
  %1252 = vmatmul.f32.gmra.mxu0 %v1234
  %v1253 = vpop.f32.mrf.mxu0
  %v1254 = vadd.f32 0.0, %v1253
  %1255 = vdwg.mxu0
  %1256 = vrot.lane.b32.xlu0 %v82, 56
  %v1257 = vpop.permute.xlu0 %1256
  %v1260 = vsel %vm110, %v1139, 0
  %1262 = vmatpush.msra.mxu0 0.0
  %1263 = vmatpush.msra.mxu0 0.0
  %1264 = vmatpush.msra.mxu0 0.0
  %1265 = vmatpush.msra.mxu0 0.0
  %1266 = vmatpush.msra.mxu0 0.0
  %1267 = vmatpush.msra.mxu0 0.0
  %1268 = vmatpush.msra.mxu0 0.0
  %1269 = vmatpush.msra.mxu0 0.0
  %1270 = vmatpush.msra.mxu0 0.0
  %1271 = vmatpush.msra.mxu0 0.0
  %1272 = vmatpush.msra.mxu0 0.0
  %1273 = vmatpush.msra.mxu0 0.0
  %1274 = vmatpush.msra.mxu0 0.0
  %1275 = vmatpush.msra.mxu0 0.0
  %1276 = vmatpush.msra.mxu0 0.0
  %1277 = vmatpush.msra.mxu0 %v1257
  %1278 = vmatmul.f32.gmra.mxu0 %v1260
  %v1279 = vpop.f32.mrf.mxu0
  %v1280 = vadd.f32 0.0, %v1279
  %1281 = vdwg.mxu0
  %1282 = vrot.lane.b32.xlu0 %v85, 56
  %v1283 = vpop.permute.xlu0 %1282
  %v1286 = vsel %vm110, %v1154, 0
  %1288 = vmatpush.msra.mxu0 0.0
  %1289 = vmatpush.msra.mxu0 0.0
  %1290 = vmatpush.msra.mxu0 0.0
  %1291 = vmatpush.msra.mxu0 0.0
  %1292 = vmatpush.msra.mxu0 0.0
  %1293 = vmatpush.msra.mxu0 0.0
  %1294 = vmatpush.msra.mxu0 0.0
  %1295 = vmatpush.msra.mxu0 0.0
  %1296 = vmatpush.msra.mxu0 0.0
  %1297 = vmatpush.msra.mxu0 0.0
  %1298 = vmatpush.msra.mxu0 0.0
  %1299 = vmatpush.msra.mxu0 0.0
  %1300 = vmatpush.msra.mxu0 0.0
  %1301 = vmatpush.msra.mxu0 0.0
  %1302 = vmatpush.msra.mxu0 0.0
  %1303 = vmatpush.msra.mxu0 %v1283
  %1304 = vmatmul.f32.gmra.mxu0 %v1286
  %v1305 = vpop.f32.mrf.mxu0
  %v1306 = vadd.f32 0.0, %v1305
  %1307 = vdwg.mxu0
  %1308 = vrot.lane.b32.xlu0 %v88, 56
  %v1309 = vpop.permute.xlu0 %1308
  %v1312 = vsel %vm110, %v1169, 0
  %1314 = vmatpush.msra.mxu0 0.0
  %1315 = vmatpush.msra.mxu0 0.0
  %1316 = vmatpush.msra.mxu0 0.0
  %1317 = vmatpush.msra.mxu0 0.0
  %1318 = vmatpush.msra.mxu0 0.0
  %1319 = vmatpush.msra.mxu0 0.0
  %1320 = vmatpush.msra.mxu0 0.0
  %1321 = vmatpush.msra.mxu0 0.0
  %1322 = vmatpush.msra.mxu0 0.0
  %1323 = vmatpush.msra.mxu0 0.0
  %1324 = vmatpush.msra.mxu0 0.0
  %1325 = vmatpush.msra.mxu0 0.0
  %1326 = vmatpush.msra.mxu0 0.0
  %1327 = vmatpush.msra.mxu0 0.0
  %1328 = vmatpush.msra.mxu0 0.0
  %1329 = vmatpush.msra.mxu0 %v1309
  %1330 = vmatmul.f32.gmra.mxu0 %v1312
  %v1331 = vpop.f32.mrf.mxu0
  %v1332 = vadd.f32 0.0, %v1331
  %1333 = vdwg.mxu0
  %1334 = vrot.lane.b32.xlu0 %v91, 56
  %v1335 = vpop.permute.xlu0 %1334
  %v1338 = vsel %vm110, %v1184, 0
  %1340 = vmatpush.msra.mxu0 0.0
  %1341 = vmatpush.msra.mxu0 0.0
  %1342 = vmatpush.msra.mxu0 0.0
  %1343 = vmatpush.msra.mxu0 0.0
  %1344 = vmatpush.msra.mxu0 0.0
  %1345 = vmatpush.msra.mxu0 0.0
  %1346 = vmatpush.msra.mxu0 0.0
  %1347 = vmatpush.msra.mxu0 0.0
  %1348 = vmatpush.msra.mxu0 0.0
  %1349 = vmatpush.msra.mxu0 0.0
  %1350 = vmatpush.msra.mxu0 0.0
  %1351 = vmatpush.msra.mxu0 0.0
  %1352 = vmatpush.msra.mxu0 0.0
  %1353 = vmatpush.msra.mxu0 0.0
  %1354 = vmatpush.msra.mxu0 0.0
  %1355 = vmatpush.msra.mxu0 %v1335
  %1356 = vmatmul.f32.gmra.mxu0 %v1338
  %v1357 = vpop.f32.mrf.mxu0
  %v1358 = vadd.f32 0.0, %v1357
  %1359 = vdwg.mxu0
  %1360 = vrot.lane.b32.xlu0 %v94, 56
  %v1361 = vpop.permute.xlu0 %1360
  %v1364 = vsel %vm110, %v1199, 0
  %1366 = vmatpush.msra.mxu0 0.0
  %1367 = vmatpush.msra.mxu0 0.0
  %1368 = vmatpush.msra.mxu0 0.0
  %1369 = vmatpush.msra.mxu0 0.0
  %1370 = vmatpush.msra.mxu0 0.0
  %1371 = vmatpush.msra.mxu0 0.0
  %1372 = vmatpush.msra.mxu0 0.0
  %1373 = vmatpush.msra.mxu0 0.0
  %1374 = vmatpush.msra.mxu0 0.0
  %1375 = vmatpush.msra.mxu0 0.0
  %1376 = vmatpush.msra.mxu0 0.0
  %1377 = vmatpush.msra.mxu0 0.0
  %1378 = vmatpush.msra.mxu0 0.0
  %1379 = vmatpush.msra.mxu0 0.0
  %1380 = vmatpush.msra.mxu0 0.0
  %1381 = vmatpush.msra.mxu0 %v1361
  %1382 = vmatmul.f32.gmra.mxu0 %v1364
  %v1383 = vpop.f32.mrf.mxu0
  %v1384 = vadd.f32 0.0, %v1383
  %1385 = vdwg.mxu0
  %1386 = vrot.lane.b32.xlu0 %v97, 56
  %v1387 = vpop.permute.xlu0 %1386
  %v1390 = vsel %vm110, %v1214, 0
  %1392 = vmatpush.msra.mxu0 0.0
  %1393 = vmatpush.msra.mxu0 0.0
  %1394 = vmatpush.msra.mxu0 0.0
  %1395 = vmatpush.msra.mxu0 0.0
  %1396 = vmatpush.msra.mxu0 0.0
  %1397 = vmatpush.msra.mxu0 0.0
  %1398 = vmatpush.msra.mxu0 0.0
  %1399 = vmatpush.msra.mxu0 0.0
  %1400 = vmatpush.msra.mxu0 0.0
  %1401 = vmatpush.msra.mxu0 0.0
  %1402 = vmatpush.msra.mxu0 0.0
  %1403 = vmatpush.msra.mxu0 0.0
  %1404 = vmatpush.msra.mxu0 0.0
  %1405 = vmatpush.msra.mxu0 0.0
  %1406 = vmatpush.msra.mxu0 0.0
  %1407 = vmatpush.msra.mxu0 %v1387
  %1408 = vmatmul.f32.gmra.mxu0 %v1390
  %v1409 = vpop.f32.mrf.mxu0
  %v1410 = vadd.f32 0.0, %v1409
  %1411 = vdwg.mxu0
  %1412 = vrot.lane.b32.xlu0 %v100, 56
  %v1413 = vpop.permute.xlu0 %1412
  %v1416 = vsel %vm110, %v1229, 0
  %1418 = vmatpush.msra.mxu0 0.0
  %1419 = vmatpush.msra.mxu0 0.0
  %1420 = vmatpush.msra.mxu0 0.0
  %1421 = vmatpush.msra.mxu0 0.0
  %1422 = vmatpush.msra.mxu0 0.0
  %1423 = vmatpush.msra.mxu0 0.0
  %1424 = vmatpush.msra.mxu0 0.0
  %1425 = vmatpush.msra.mxu0 0.0
  %1426 = vmatpush.msra.mxu0 0.0
  %1427 = vmatpush.msra.mxu0 0.0
  %1428 = vmatpush.msra.mxu0 0.0
  %1429 = vmatpush.msra.mxu0 0.0
  %1430 = vmatpush.msra.mxu0 0.0
  %1431 = vmatpush.msra.mxu0 0.0
  %1432 = vmatpush.msra.mxu0 0.0
  %1433 = vmatpush.msra.mxu0 %v1413
  %1434 = vmatmul.f32.gmra.mxu0 %v1416
  %v1435 = vpop.f32.mrf.mxu0
  %v1436 = vadd.f32 0.0, %v1435
  %1437 = vdwg.mxu0
  %v1438 = vld [vmem:[%s3 + $0x8] sm:$0xff]
  %v1440 = vsel %vm110, %v1254, 0
  %v1443 = vsel %vm110, %v1280, 0
  %v1446 = vsel %vm110, %v1306, 0
  %v1449 = vsel %vm110, %v1332, 0
  %v1452 = vsel %vm110, %v1358, 0
  %v1455 = vsel %vm110, %v1384, 0
  %v1458 = vsel %vm110, %v1410, 0
  %v1461 = vsel %vm110, %v1436, 0
  %1463 = vmatpush.msra.mxu0 0.0
  %1464 = vmatpush.msra.mxu0 0.0
  %1465 = vmatpush.msra.mxu0 0.0
  %1466 = vmatpush.msra.mxu0 0.0
  %1467 = vmatpush.msra.mxu0 0.0
  %1468 = vmatpush.msra.mxu0 0.0
  %1469 = vmatpush.msra.mxu0 0.0
  %1470 = vmatpush.msra.mxu0 0.0
  %1471 = vmatpush.msra.mxu0 0.0
  %1472 = vmatpush.msra.mxu0 0.0
  %1473 = vmatpush.msra.mxu0 0.0
  %1474 = vmatpush.msra.mxu0 0.0
  %1475 = vmatpush.msra.mxu0 0.0
  %1476 = vmatpush.msra.mxu0 0.0
  %1477 = vmatpush.msra.mxu0 0.0
  %1478 = vmatpush.msra.mxu0 %v1438
  %1479 = vmatmul.f32.gmra.mxu0 %v1440
  %v1480 = vpop.f32.mrf.mxu0
  %v1481 = vadd.f32 0.0, %v1480
  %1482 = vmatmul.f32.gmra.mxu0 %v1443
  %v1483 = vpop.f32.mrf.mxu0
  %v1484 = vadd.f32 0.0, %v1483
  %1485 = vmatmul.f32.gmra.mxu0 %v1446
  %v1486 = vpop.f32.mrf.mxu0
  %v1487 = vadd.f32 0.0, %v1486
  %1488 = vmatmul.f32.gmra.mxu0 %v1449
  %v1489 = vpop.f32.mrf.mxu0
  %v1490 = vadd.f32 0.0, %v1489
  %1491 = vmatmul.f32.gmra.mxu0 %v1452
  %v1492 = vpop.f32.mrf.mxu0
  %v1493 = vadd.f32 0.0, %v1492
  %1494 = vmatmul.f32.gmra.mxu0 %v1455
  %v1495 = vpop.f32.mrf.mxu0
  %v1496 = vadd.f32 0.0, %v1495
  %1497 = vmatmul.f32.gmra.mxu0 %v1458
  %v1498 = vpop.f32.mrf.mxu0
  %v1499 = vadd.f32 0.0, %v1498
  %1500 = vmatmul.f32.gmra.mxu0 %v1461
  %v1501 = vpop.f32.mrf.mxu0
  %v1502 = vadd.f32 0.0, %v1501
  %1503 = vdwg.mxu0
  %v1504 = vadd.f32 %v798, %v1481
  %v1505 = vadd.f32 %v799, %v1484
  %v1506 = vadd.f32 %v800, %v1487
  %v1507 = vadd.f32 %v801, %v1490
  %v1508 = vadd.f32 %v802, %v1493
  %v1509 = vadd.f32 %v803, %v1496
  %v1510 = vadd.f32 %v804, %v1499
  %v1511 = vadd.f32 %v805, %v1502
  %1512 = vrot.lane.b32.xlu0 %v79, 112
  %v1513 = vpop.permute.xlu0 %1512
  %1514 = vrot.lane.b32.xlu0 %v79, 80
  %v1515 = vpop.permute.xlu0 %1514
  %v1516 = vsel %vm110, %v1513, 0
  %v1518 = vsel %vm110, %v1515, 0
  %1520 = vmatpush.xpose.msra.mxu0 0.0
  %1521 = vmatpush.xpose.msra.mxu0 0.0
  %1522 = vmatpush.xpose.msra.mxu0 0.0
  %1523 = vmatpush.xpose.msra.mxu0 0.0
  %1524 = vmatpush.xpose.msra.mxu0 0.0
  %1525 = vmatpush.xpose.msra.mxu0 0.0
  %1526 = vmatpush.xpose.msra.mxu0 0.0
  %1527 = vmatpush.xpose.msra.mxu0 0.0
  %1528 = vmatpush.xpose.msra.mxu0 0.0
  %1529 = vmatpush.xpose.msra.mxu0 0.0
  %1530 = vmatpush.xpose.msra.mxu0 0.0
  %1531 = vmatpush.xpose.msra.mxu0 0.0
  %1532 = vmatpush.xpose.msra.mxu0 0.0
  %1533 = vmatpush.xpose.msra.mxu0 0.0
  %1534 = vmatpush.xpose.msra.mxu0 0.0
  %1535 = vmatpush.xpose.msra.mxu0 %v1518
  %1536 = vmatmul.f32.gmra.mxu0 %v1516
  %v1537 = vpop.f32.mrf.mxu0
  %v1538 = vadd.f32 0.0, %v1537
  %1539 = vdwg.mxu0
  %1540 = vrot.lane.b32.xlu0 %v82, 112
  %v1541 = vpop.permute.xlu0 %1540
  %1542 = vrot.lane.b32.xlu0 %v82, 80
  %v1543 = vpop.permute.xlu0 %1542
  %v1544 = vsel %vm110, %v1541, 0
  %v1546 = vsel %vm110, %v1543, 0
  %1548 = vmatpush.xpose.msra.mxu0 0.0
  %1549 = vmatpush.xpose.msra.mxu0 0.0
  %1550 = vmatpush.xpose.msra.mxu0 0.0
  %1551 = vmatpush.xpose.msra.mxu0 0.0
  %1552 = vmatpush.xpose.msra.mxu0 0.0
  %1553 = vmatpush.xpose.msra.mxu0 0.0
  %1554 = vmatpush.xpose.msra.mxu0 0.0
  %1555 = vmatpush.xpose.msra.mxu0 0.0
  %1556 = vmatpush.xpose.msra.mxu0 0.0
  %1557 = vmatpush.xpose.msra.mxu0 0.0
  %1558 = vmatpush.xpose.msra.mxu0 0.0
  %1559 = vmatpush.xpose.msra.mxu0 0.0
  %1560 = vmatpush.xpose.msra.mxu0 0.0
  %1561 = vmatpush.xpose.msra.mxu0 0.0
  %1562 = vmatpush.xpose.msra.mxu0 0.0
  %1563 = vmatpush.xpose.msra.mxu0 %v1546
  %1564 = vmatmul.f32.gmra.mxu0 %v1544
  %v1565 = vpop.f32.mrf.mxu0
  %v1566 = vadd.f32 0.0, %v1565
  %1567 = vdwg.mxu0
  %1568 = vrot.lane.b32.xlu0 %v85, 112
  %v1569 = vpop.permute.xlu0 %1568
  %1570 = vrot.lane.b32.xlu0 %v85, 80
  %v1571 = vpop.permute.xlu0 %1570
  %v1572 = vsel %vm110, %v1569, 0
  %v1574 = vsel %vm110, %v1571, 0
  %1576 = vmatpush.xpose.msra.mxu0 0.0
  %1577 = vmatpush.xpose.msra.mxu0 0.0
  %1578 = vmatpush.xpose.msra.mxu0 0.0
  %1579 = vmatpush.xpose.msra.mxu0 0.0
  %1580 = vmatpush.xpose.msra.mxu0 0.0
  %1581 = vmatpush.xpose.msra.mxu0 0.0
  %1582 = vmatpush.xpose.msra.mxu0 0.0
  %1583 = vmatpush.xpose.msra.mxu0 0.0
  %1584 = vmatpush.xpose.msra.mxu0 0.0
  %1585 = vmatpush.xpose.msra.mxu0 0.0
  %1586 = vmatpush.xpose.msra.mxu0 0.0
  %1587 = vmatpush.xpose.msra.mxu0 0.0
  %1588 = vmatpush.xpose.msra.mxu0 0.0
  %1589 = vmatpush.xpose.msra.mxu0 0.0
  %1590 = vmatpush.xpose.msra.mxu0 0.0
  %1591 = vmatpush.xpose.msra.mxu0 %v1574
  %1592 = vmatmul.f32.gmra.mxu0 %v1572
  %v1593 = vpop.f32.mrf.mxu0
  %v1594 = vadd.f32 0.0, %v1593
  %1595 = vdwg.mxu0
  %1596 = vrot.lane.b32.xlu0 %v88, 112
  %v1597 = vpop.permute.xlu0 %1596
  %1598 = vrot.lane.b32.xlu0 %v88, 80
  %v1599 = vpop.permute.xlu0 %1598
  %v1600 = vsel %vm110, %v1597, 0
  %v1602 = vsel %vm110, %v1599, 0
  %1604 = vmatpush.xpose.msra.mxu0 0.0
  %1605 = vmatpush.xpose.msra.mxu0 0.0
  %1606 = vmatpush.xpose.msra.mxu0 0.0
  %1607 = vmatpush.xpose.msra.mxu0 0.0
  %1608 = vmatpush.xpose.msra.mxu0 0.0
  %1609 = vmatpush.xpose.msra.mxu0 0.0
  %1610 = vmatpush.xpose.msra.mxu0 0.0
  %1611 = vmatpush.xpose.msra.mxu0 0.0
  %1612 = vmatpush.xpose.msra.mxu0 0.0
  %1613 = vmatpush.xpose.msra.mxu0 0.0
  %1614 = vmatpush.xpose.msra.mxu0 0.0
  %1615 = vmatpush.xpose.msra.mxu0 0.0
  %1616 = vmatpush.xpose.msra.mxu0 0.0
  %1617 = vmatpush.xpose.msra.mxu0 0.0
  %1618 = vmatpush.xpose.msra.mxu0 0.0
  %1619 = vmatpush.xpose.msra.mxu0 %v1602
  %1620 = vmatmul.f32.gmra.mxu0 %v1600
  %v1621 = vpop.f32.mrf.mxu0
  %v1622 = vadd.f32 0.0, %v1621
  %1623 = vdwg.mxu0
  %1624 = vrot.lane.b32.xlu0 %v91, 112
  %v1625 = vpop.permute.xlu0 %1624
  %1626 = vrot.lane.b32.xlu0 %v91, 80
  %v1627 = vpop.permute.xlu0 %1626
  %v1628 = vsel %vm110, %v1625, 0
  %v1630 = vsel %vm110, %v1627, 0
  %1632 = vmatpush.xpose.msra.mxu0 0.0
  %1633 = vmatpush.xpose.msra.mxu0 0.0
  %1634 = vmatpush.xpose.msra.mxu0 0.0
  %1635 = vmatpush.xpose.msra.mxu0 0.0
  %1636 = vmatpush.xpose.msra.mxu0 0.0
  %1637 = vmatpush.xpose.msra.mxu0 0.0
  %1638 = vmatpush.xpose.msra.mxu0 0.0
  %1639 = vmatpush.xpose.msra.mxu0 0.0
  %1640 = vmatpush.xpose.msra.mxu0 0.0
  %1641 = vmatpush.xpose.msra.mxu0 0.0
  %1642 = vmatpush.xpose.msra.mxu0 0.0
  %1643 = vmatpush.xpose.msra.mxu0 0.0
  %1644 = vmatpush.xpose.msra.mxu0 0.0
  %1645 = vmatpush.xpose.msra.mxu0 0.0
  %1646 = vmatpush.xpose.msra.mxu0 0.0
  %1647 = vmatpush.xpose.msra.mxu0 %v1630
  %1648 = vmatmul.f32.gmra.mxu0 %v1628
  %v1649 = vpop.f32.mrf.mxu0
  %v1650 = vadd.f32 0.0, %v1649
  %1651 = vdwg.mxu0
  %1652 = vrot.lane.b32.xlu0 %v94, 112
  %v1653 = vpop.permute.xlu0 %1652
  %1654 = vrot.lane.b32.xlu0 %v94, 80
  %v1655 = vpop.permute.xlu0 %1654
  %v1656 = vsel %vm110, %v1653, 0
  %v1658 = vsel %vm110, %v1655, 0
  %1660 = vmatpush.xpose.msra.mxu0 0.0
  %1661 = vmatpush.xpose.msra.mxu0 0.0
  %1662 = vmatpush.xpose.msra.mxu0 0.0
  %1663 = vmatpush.xpose.msra.mxu0 0.0
  %1664 = vmatpush.xpose.msra.mxu0 0.0
  %1665 = vmatpush.xpose.msra.mxu0 0.0
  %1666 = vmatpush.xpose.msra.mxu0 0.0
  %1667 = vmatpush.xpose.msra.mxu0 0.0
  %1668 = vmatpush.xpose.msra.mxu0 0.0
  %1669 = vmatpush.xpose.msra.mxu0 0.0
  %1670 = vmatpush.xpose.msra.mxu0 0.0
  %1671 = vmatpush.xpose.msra.mxu0 0.0
  %1672 = vmatpush.xpose.msra.mxu0 0.0
  %1673 = vmatpush.xpose.msra.mxu0 0.0
  %1674 = vmatpush.xpose.msra.mxu0 0.0
  %1675 = vmatpush.xpose.msra.mxu0 %v1658
  %1676 = vmatmul.f32.gmra.mxu0 %v1656
  %v1677 = vpop.f32.mrf.mxu0
  %v1678 = vadd.f32 0.0, %v1677
  %1679 = vdwg.mxu0
  %1680 = vrot.lane.b32.xlu0 %v97, 112
  %v1681 = vpop.permute.xlu0 %1680
  %1682 = vrot.lane.b32.xlu0 %v97, 80
  %v1683 = vpop.permute.xlu0 %1682
  %v1684 = vsel %vm110, %v1681, 0
  %v1686 = vsel %vm110, %v1683, 0
  %1688 = vmatpush.xpose.msra.mxu0 0.0
  %1689 = vmatpush.xpose.msra.mxu0 0.0
  %1690 = vmatpush.xpose.msra.mxu0 0.0
  %1691 = vmatpush.xpose.msra.mxu0 0.0
  %1692 = vmatpush.xpose.msra.mxu0 0.0
  %1693 = vmatpush.xpose.msra.mxu0 0.0
  %1694 = vmatpush.xpose.msra.mxu0 0.0
  %1695 = vmatpush.xpose.msra.mxu0 0.0
  %1696 = vmatpush.xpose.msra.mxu0 0.0
  %1697 = vmatpush.xpose.msra.mxu0 0.0
  %1698 = vmatpush.xpose.msra.mxu0 0.0
  %1699 = vmatpush.xpose.msra.mxu0 0.0
  %1700 = vmatpush.xpose.msra.mxu0 0.0
  %1701 = vmatpush.xpose.msra.mxu0 0.0
  %1702 = vmatpush.xpose.msra.mxu0 0.0
  %1703 = vmatpush.xpose.msra.mxu0 %v1686
  %1704 = vmatmul.f32.gmra.mxu0 %v1684
  %v1705 = vpop.f32.mrf.mxu0
  %v1706 = vadd.f32 0.0, %v1705
  %1707 = vdwg.mxu0
  %1708 = vrot.lane.b32.xlu0 %v100, 112
  %v1709 = vpop.permute.xlu0 %1708
  %1710 = vrot.lane.b32.xlu0 %v100, 80
  %v1711 = vpop.permute.xlu0 %1710
  %v1712 = vsel %vm110, %v1709, 0
  %v1714 = vsel %vm110, %v1711, 0
  %1716 = vmatpush.xpose.msra.mxu0 0.0
  %1717 = vmatpush.xpose.msra.mxu0 0.0
  %1718 = vmatpush.xpose.msra.mxu0 0.0
  %1719 = vmatpush.xpose.msra.mxu0 0.0
  %1720 = vmatpush.xpose.msra.mxu0 0.0
  %1721 = vmatpush.xpose.msra.mxu0 0.0
  %1722 = vmatpush.xpose.msra.mxu0 0.0
  %1723 = vmatpush.xpose.msra.mxu0 0.0
  %1724 = vmatpush.xpose.msra.mxu0 0.0
  %1725 = vmatpush.xpose.msra.mxu0 0.0
  %1726 = vmatpush.xpose.msra.mxu0 0.0
  %1727 = vmatpush.xpose.msra.mxu0 0.0
  %1728 = vmatpush.xpose.msra.mxu0 0.0
  %1729 = vmatpush.xpose.msra.mxu0 0.0
  %1730 = vmatpush.xpose.msra.mxu0 0.0
  %1731 = vmatpush.xpose.msra.mxu0 %v1714
  %1732 = vmatmul.f32.gmra.mxu0 %v1712
  %v1733 = vpop.f32.mrf.mxu0
  %v1734 = vadd.f32 0.0, %v1733
  %1735 = vdwg.mxu0
  %v1736 = vmul.f32 %v1538, 0.35355338
  %v1737 = vmul.f32 %v1566, 0.35355338
  %v1738 = vmul.f32 %v1594, 0.35355338
  %v1739 = vmul.f32 %v1622, 0.35355338
  %v1740 = vmul.f32 %v1650, 0.35355338
  %v1741 = vmul.f32 %v1678, 0.35355338
  %v1742 = vmul.f32 %v1706, 0.35355338
  %v1743 = vmul.f32 %v1734, 0.35355338
  %v1744 = vsel %vm110, %v1736, -inf
  %1745 = vmax.xlane.f32.xlu0 %v1744
  %v1746 = vpop.xlane.xlu0 %1745
  %v1747 = vsel %vm110, %v1737, -inf
  %1748 = vmax.xlane.f32.xlu0 %v1747
  %v1749 = vpop.xlane.xlu0 %1748
  %v1750 = vsel %vm110, %v1738, -inf
  %1751 = vmax.xlane.f32.xlu0 %v1750
  %v1752 = vpop.xlane.xlu0 %1751
  %v1753 = vsel %vm110, %v1739, -inf
  %1754 = vmax.xlane.f32.xlu0 %v1753
  %v1755 = vpop.xlane.xlu0 %1754
  %v1756 = vsel %vm110, %v1740, -inf
  %1757 = vmax.xlane.f32.xlu0 %v1756
  %v1758 = vpop.xlane.xlu0 %1757
  %v1759 = vsel %vm110, %v1741, -inf
  %1760 = vmax.xlane.f32.xlu0 %v1759
  %v1761 = vpop.xlane.xlu0 %1760
  %v1762 = vsel %vm110, %v1742, -inf
  %1763 = vmax.xlane.f32.xlu0 %v1762
  %v1764 = vpop.xlane.xlu0 %1763
  %v1765 = vsel %vm110, %v1743, -inf
  %1766 = vmax.xlane.f32.xlu0 %v1765
  %v1767 = vpop.xlane.xlu0 %1766
  %v1768 = vsub.f32 %v1736, %v1746
  %v1769 = vsub.f32 %v1737, %v1749
  %v1770 = vsub.f32 %v1738, %v1752
  %v1771 = vsub.f32 %v1739, %v1755
  %v1772 = vsub.f32 %v1740, %v1758
  %v1773 = vsub.f32 %v1741, %v1761
  %v1774 = vsub.f32 %v1742, %v1764
  %v1775 = vsub.f32 %v1743, %v1767
  %v1776 = vmul.f32 %v1768, 1.442695
  %v1777 = vpow.pop %v1776
  %v1778 = vmul.f32 %v1769, 1.442695
  %v1779 = vpow.pop %v1778
  %v1780 = vmul.f32 %v1770, 1.442695
  %v1781 = vpow.pop %v1780
  %v1782 = vmul.f32 %v1771, 1.442695
  %v1783 = vpow.pop %v1782
  %v1784 = vmul.f32 %v1772, 1.442695
  %v1785 = vpow.pop %v1784
  %v1786 = vmul.f32 %v1773, 1.442695
  %v1787 = vpow.pop %v1786
  %v1788 = vmul.f32 %v1774, 1.442695
  %v1789 = vpow.pop %v1788
  %v1790 = vmul.f32 %v1775, 1.442695
  %v1791 = vpow.pop %v1790
  %v1792 = vsel %vm110, %v1777, 0.0
  %1793 = vadd.xlane.f32.xlu0 %v1792
  %v1794 = vpop.xlane.xlu0 %1793
  %v1795 = vsel %vm110, %v1779, 0.0
  %1796 = vadd.xlane.f32.xlu0 %v1795
  %v1797 = vpop.xlane.xlu0 %1796
  %v1798 = vsel %vm110, %v1781, 0.0
  %1799 = vadd.xlane.f32.xlu0 %v1798
  %v1800 = vpop.xlane.xlu0 %1799
  %v1801 = vsel %vm110, %v1783, 0.0
  %1802 = vadd.xlane.f32.xlu0 %v1801
  %v1803 = vpop.xlane.xlu0 %1802
  %v1804 = vsel %vm110, %v1785, 0.0
  %1805 = vadd.xlane.f32.xlu0 %v1804
  %v1806 = vpop.xlane.xlu0 %1805
  %v1807 = vsel %vm110, %v1787, 0.0
  %1808 = vadd.xlane.f32.xlu0 %v1807
  %v1809 = vpop.xlane.xlu0 %1808
  %v1810 = vsel %vm110, %v1789, 0.0
  %1811 = vadd.xlane.f32.xlu0 %v1810
  %v1812 = vpop.xlane.xlu0 %1811
  %v1813 = vsel %vm110, %v1791, 0.0
  %1814 = vadd.xlane.f32.xlu0 %v1813
  %v1815 = vpop.xlane.xlu0 %1814
  %v1816 = vrcp.pop %v1794
  %v1817 = vmul.f32 %v1794, %v1816
  %v1818 = vsub.f32 1.0, %v1817
  %v1819 = vmul.f32 %v1816, %v1818
  %v1820 = vadd.f32 %v1816, %v1819
  %vm1821 = vweird.f32 %v1794
  %vm1822 = vweird.f32 %v1816
  %vm1823 = vmor %vm1821, %vm1822
  %v1824 = vsel %vm1823, %v1816, %v1820
  %v1825 = vand.u32 2147483647, %v1794
  %vm1826 = vcmp.eq.f32.partialorder %v1825, 8.507059e+37
  %v1827 = vand.u32 %v1794, 2147483648
  %v1828 = vor.u32 1.1754944e-38, %v1827
  %v1829 = vsel %vm1826, %v1828, %v1824
  %v1830 = vmul.f32 %v1777, %v1829
  %v1831 = vrcp.pop %v1797
  %v1832 = vmul.f32 %v1797, %v1831
  %v1833 = vsub.f32 1.0, %v1832
  %v1834 = vmul.f32 %v1831, %v1833
  %v1835 = vadd.f32 %v1831, %v1834
  %vm1836 = vweird.f32 %v1797
  %vm1837 = vweird.f32 %v1831
  %vm1838 = vmor %vm1836, %vm1837
  %v1839 = vsel %vm1838, %v1831, %v1835
  %v1840 = vand.u32 2147483647, %v1797
  %vm1841 = vcmp.eq.f32.partialorder %v1840, 8.507059e+37
  %v1842 = vand.u32 %v1797, 2147483648
  %v1843 = vor.u32 1.1754944e-38, %v1842
  %v1844 = vsel %vm1841, %v1843, %v1839
  %v1845 = vmul.f32 %v1779, %v1844
  %v1846 = vrcp.pop %v1800
  %v1847 = vmul.f32 %v1800, %v1846
  %v1848 = vsub.f32 1.0, %v1847
  %v1849 = vmul.f32 %v1846, %v1848
  %v1850 = vadd.f32 %v1846, %v1849
  %vm1851 = vweird.f32 %v1800
  %vm1852 = vweird.f32 %v1846
  %vm1853 = vmor %vm1851, %vm1852
  %v1854 = vsel %vm1853, %v1846, %v1850
  %v1855 = vand.u32 2147483647, %v1800
  %vm1856 = vcmp.eq.f32.partialorder %v1855, 8.507059e+37
  %v1857 = vand.u32 %v1800, 2147483648
  %v1858 = vor.u32 1.1754944e-38, %v1857
  %v1859 = vsel %vm1856, %v1858, %v1854
  %v1860 = vmul.f32 %v1781, %v1859
  %v1861 = vrcp.pop %v1803
  %v1862 = vmul.f32 %v1803, %v1861
  %v1863 = vsub.f32 1.0, %v1862
  %v1864 = vmul.f32 %v1861, %v1863
  %v1865 = vadd.f32 %v1861, %v1864
  %vm1866 = vweird.f32 %v1803
  %vm1867 = vweird.f32 %v1861
  %vm1868 = vmor %vm1866, %vm1867
  %v1869 = vsel %vm1868, %v1861, %v1865
  %v1870 = vand.u32 2147483647, %v1803
  %vm1871 = vcmp.eq.f32.partialorder %v1870, 8.507059e+37
  %v1872 = vand.u32 %v1803, 2147483648
  %v1873 = vor.u32 1.1754944e-38, %v1872
  %v1874 = vsel %vm1871, %v1873, %v1869
  %v1875 = vmul.f32 %v1783, %v1874
  %v1876 = vrcp.pop %v1806
  %v1877 = vmul.f32 %v1806, %v1876
  %v1878 = vsub.f32 1.0, %v1877
  %v1879 = vmul.f32 %v1876, %v1878
  %v1880 = vadd.f32 %v1876, %v1879
  %vm1881 = vweird.f32 %v1806
  %vm1882 = vweird.f32 %v1876
  %vm1883 = vmor %vm1881, %vm1882
  %v1884 = vsel %vm1883, %v1876, %v1880
  %v1885 = vand.u32 2147483647, %v1806
  %vm1886 = vcmp.eq.f32.partialorder %v1885, 8.507059e+37
  %v1887 = vand.u32 %v1806, 2147483648
  %v1888 = vor.u32 1.1754944e-38, %v1887
  %v1889 = vsel %vm1886, %v1888, %v1884
  %v1890 = vmul.f32 %v1785, %v1889
  %v1891 = vrcp.pop %v1809
  %v1892 = vmul.f32 %v1809, %v1891
  %v1893 = vsub.f32 1.0, %v1892
  %v1894 = vmul.f32 %v1891, %v1893
  %v1895 = vadd.f32 %v1891, %v1894
  %vm1896 = vweird.f32 %v1809
  %vm1897 = vweird.f32 %v1891
  %vm1898 = vmor %vm1896, %vm1897
  %v1899 = vsel %vm1898, %v1891, %v1895
  %v1900 = vand.u32 2147483647, %v1809
  %vm1901 = vcmp.eq.f32.partialorder %v1900, 8.507059e+37
  %v1902 = vand.u32 %v1809, 2147483648
  %v1903 = vor.u32 1.1754944e-38, %v1902
  %v1904 = vsel %vm1901, %v1903, %v1899
  %v1905 = vmul.f32 %v1787, %v1904
  %v1906 = vrcp.pop %v1812
  %v1907 = vmul.f32 %v1812, %v1906
  %v1908 = vsub.f32 1.0, %v1907
  %v1909 = vmul.f32 %v1906, %v1908
  %v1910 = vadd.f32 %v1906, %v1909
  %vm1911 = vweird.f32 %v1812
  %vm1912 = vweird.f32 %v1906
  %vm1913 = vmor %vm1911, %vm1912
  %v1914 = vsel %vm1913, %v1906, %v1910
  %v1915 = vand.u32 2147483647, %v1812
  %vm1916 = vcmp.eq.f32.partialorder %v1915, 8.507059e+37
  %v1917 = vand.u32 %v1812, 2147483648
  %v1918 = vor.u32 1.1754944e-38, %v1917
  %v1919 = vsel %vm1916, %v1918, %v1914
  %v1920 = vmul.f32 %v1789, %v1919
  %v1921 = vrcp.pop %v1815
  %v1922 = vmul.f32 %v1815, %v1921
  %v1923 = vsub.f32 1.0, %v1922
  %v1924 = vmul.f32 %v1921, %v1923
  %v1925 = vadd.f32 %v1921, %v1924
  %vm1926 = vweird.f32 %v1815
  %vm1927 = vweird.f32 %v1921
  %vm1928 = vmor %vm1926, %vm1927
  %v1929 = vsel %vm1928, %v1921, %v1925
  %v1930 = vand.u32 2147483647, %v1815
  %vm1931 = vcmp.eq.f32.partialorder %v1930, 8.507059e+37
  %v1932 = vand.u32 %v1815, 2147483648
  %v1933 = vor.u32 1.1754944e-38, %v1932
  %v1934 = vsel %vm1931, %v1933, %v1929
  %v1935 = vmul.f32 %v1791, %v1934
  %1936 = vrot.lane.b32.xlu0 %v79, 48
  %v1937 = vpop.permute.xlu0 %1936
  %v1940 = vsel %vm110, %v1830, 0
  %1942 = vmatpush.msra.mxu0 0.0
  %1943 = vmatpush.msra.mxu0 0.0
  %1944 = vmatpush.msra.mxu0 0.0
  %1945 = vmatpush.msra.mxu0 0.0
  %1946 = vmatpush.msra.mxu0 0.0
  %1947 = vmatpush.msra.mxu0 0.0
  %1948 = vmatpush.msra.mxu0 0.0
  %1949 = vmatpush.msra.mxu0 0.0
  %1950 = vmatpush.msra.mxu0 0.0
  %1951 = vmatpush.msra.mxu0 0.0
  %1952 = vmatpush.msra.mxu0 0.0
  %1953 = vmatpush.msra.mxu0 0.0
  %1954 = vmatpush.msra.mxu0 0.0
  %1955 = vmatpush.msra.mxu0 0.0
  %1956 = vmatpush.msra.mxu0 0.0
  %1957 = vmatpush.msra.mxu0 %v1937
  %1958 = vmatmul.f32.gmra.mxu0 %v1940
  %v1959 = vpop.f32.mrf.mxu0
  %v1960 = vadd.f32 0.0, %v1959
  %1961 = vdwg.mxu0
  %1962 = vrot.lane.b32.xlu0 %v82, 48
  %v1963 = vpop.permute.xlu0 %1962
  %v1966 = vsel %vm110, %v1845, 0
  %1968 = vmatpush.msra.mxu0 0.0
  %1969 = vmatpush.msra.mxu0 0.0
  %1970 = vmatpush.msra.mxu0 0.0
  %1971 = vmatpush.msra.mxu0 0.0
  %1972 = vmatpush.msra.mxu0 0.0
  %1973 = vmatpush.msra.mxu0 0.0
  %1974 = vmatpush.msra.mxu0 0.0
  %1975 = vmatpush.msra.mxu0 0.0
  %1976 = vmatpush.msra.mxu0 0.0
  %1977 = vmatpush.msra.mxu0 0.0
  %1978 = vmatpush.msra.mxu0 0.0
  %1979 = vmatpush.msra.mxu0 0.0
  %1980 = vmatpush.msra.mxu0 0.0
  %1981 = vmatpush.msra.mxu0 0.0
  %1982 = vmatpush.msra.mxu0 0.0
  %1983 = vmatpush.msra.mxu0 %v1963
  %1984 = vmatmul.f32.gmra.mxu0 %v1966
  %v1985 = vpop.f32.mrf.mxu0
  %v1986 = vadd.f32 0.0, %v1985
  %1987 = vdwg.mxu0
  %1988 = vrot.lane.b32.xlu0 %v85, 48
  %v1989 = vpop.permute.xlu0 %1988
  %v1992 = vsel %vm110, %v1860, 0
  %1994 = vmatpush.msra.mxu0 0.0
  %1995 = vmatpush.msra.mxu0 0.0
  %1996 = vmatpush.msra.mxu0 0.0
  %1997 = vmatpush.msra.mxu0 0.0
  %1998 = vmatpush.msra.mxu0 0.0
  %1999 = vmatpush.msra.mxu0 0.0
  %2000 = vmatpush.msra.mxu0 0.0
  %2001 = vmatpush.msra.mxu0 0.0
  %2002 = vmatpush.msra.mxu0 0.0
  %2003 = vmatpush.msra.mxu0 0.0
  %2004 = vmatpush.msra.mxu0 0.0
  %2005 = vmatpush.msra.mxu0 0.0
  %2006 = vmatpush.msra.mxu0 0.0
  %2007 = vmatpush.msra.mxu0 0.0
  %2008 = vmatpush.msra.mxu0 0.0
  %2009 = vmatpush.msra.mxu0 %v1989
  %2010 = vmatmul.f32.gmra.mxu0 %v1992
  %v2011 = vpop.f32.mrf.mxu0
  %v2012 = vadd.f32 0.0, %v2011
  %2013 = vdwg.mxu0
  %2014 = vrot.lane.b32.xlu0 %v88, 48
  %v2015 = vpop.permute.xlu0 %2014
  %v2018 = vsel %vm110, %v1875, 0
  %2020 = vmatpush.msra.mxu0 0.0
  %2021 = vmatpush.msra.mxu0 0.0
  %2022 = vmatpush.msra.mxu0 0.0
  %2023 = vmatpush.msra.mxu0 0.0
  %2024 = vmatpush.msra.mxu0 0.0
  %2025 = vmatpush.msra.mxu0 0.0
  %2026 = vmatpush.msra.mxu0 0.0
  %2027 = vmatpush.msra.mxu0 0.0
  %2028 = vmatpush.msra.mxu0 0.0
  %2029 = vmatpush.msra.mxu0 0.0
  %2030 = vmatpush.msra.mxu0 0.0
  %2031 = vmatpush.msra.mxu0 0.0
  %2032 = vmatpush.msra.mxu0 0.0
  %2033 = vmatpush.msra.mxu0 0.0
  %2034 = vmatpush.msra.mxu0 0.0
  %2035 = vmatpush.msra.mxu0 %v2015
  %2036 = vmatmul.f32.gmra.mxu0 %v2018
  %v2037 = vpop.f32.mrf.mxu0
  %v2038 = vadd.f32 0.0, %v2037
  %2039 = vdwg.mxu0
  %2040 = vrot.lane.b32.xlu0 %v91, 48
  %v2041 = vpop.permute.xlu0 %2040
  %v2044 = vsel %vm110, %v1890, 0
  %2046 = vmatpush.msra.mxu0 0.0
  %2047 = vmatpush.msra.mxu0 0.0
  %2048 = vmatpush.msra.mxu0 0.0
  %2049 = vmatpush.msra.mxu0 0.0
  %2050 = vmatpush.msra.mxu0 0.0
  %2051 = vmatpush.msra.mxu0 0.0
  %2052 = vmatpush.msra.mxu0 0.0
  %2053 = vmatpush.msra.mxu0 0.0
  %2054 = vmatpush.msra.mxu0 0.0
  %2055 = vmatpush.msra.mxu0 0.0
  %2056 = vmatpush.msra.mxu0 0.0
  %2057 = vmatpush.msra.mxu0 0.0
  %2058 = vmatpush.msra.mxu0 0.0
  %2059 = vmatpush.msra.mxu0 0.0
  %2060 = vmatpush.msra.mxu0 0.0
  %2061 = vmatpush.msra.mxu0 %v2041
  %2062 = vmatmul.f32.gmra.mxu0 %v2044
  %v2063 = vpop.f32.mrf.mxu0
  %v2064 = vadd.f32 0.0, %v2063
  %2065 = vdwg.mxu0
  %2066 = vrot.lane.b32.xlu0 %v94, 48
  %v2067 = vpop.permute.xlu0 %2066
  %v2070 = vsel %vm110, %v1905, 0
  %2072 = vmatpush.msra.mxu0 0.0
  %2073 = vmatpush.msra.mxu0 0.0
  %2074 = vmatpush.msra.mxu0 0.0
  %2075 = vmatpush.msra.mxu0 0.0
  %2076 = vmatpush.msra.mxu0 0.0
  %2077 = vmatpush.msra.mxu0 0.0
  %2078 = vmatpush.msra.mxu0 0.0
  %2079 = vmatpush.msra.mxu0 0.0
  %2080 = vmatpush.msra.mxu0 0.0
  %2081 = vmatpush.msra.mxu0 0.0
  %2082 = vmatpush.msra.mxu0 0.0
  %2083 = vmatpush.msra.mxu0 0.0
  %2084 = vmatpush.msra.mxu0 0.0
  %2085 = vmatpush.msra.mxu0 0.0
  %2086 = vmatpush.msra.mxu0 0.0
  %2087 = vmatpush.msra.mxu0 %v2067
  %2088 = vmatmul.f32.gmra.mxu0 %v2070
  %v2089 = vpop.f32.mrf.mxu0
  %v2090 = vadd.f32 0.0, %v2089
  %2091 = vdwg.mxu0
  %2092 = vrot.lane.b32.xlu0 %v97, 48
  %v2093 = vpop.permute.xlu0 %2092
  %v2096 = vsel %vm110, %v1920, 0
  %2098 = vmatpush.msra.mxu0 0.0
  %2099 = vmatpush.msra.mxu0 0.0
  %2100 = vmatpush.msra.mxu0 0.0
  %2101 = vmatpush.msra.mxu0 0.0
  %2102 = vmatpush.msra.mxu0 0.0
  %2103 = vmatpush.msra.mxu0 0.0
  %2104 = vmatpush.msra.mxu0 0.0
  %2105 = vmatpush.msra.mxu0 0.0
  %2106 = vmatpush.msra.mxu0 0.0
  %2107 = vmatpush.msra.mxu0 0.0
  %2108 = vmatpush.msra.mxu0 0.0
  %2109 = vmatpush.msra.mxu0 0.0
  %2110 = vmatpush.msra.mxu0 0.0
  %2111 = vmatpush.msra.mxu0 0.0
  %2112 = vmatpush.msra.mxu0 0.0
  %2113 = vmatpush.msra.mxu0 %v2093
  %2114 = vmatmul.f32.gmra.mxu0 %v2096
  %v2115 = vpop.f32.mrf.mxu0
  %v2116 = vadd.f32 0.0, %v2115
  %2117 = vdwg.mxu0
  %2118 = vrot.lane.b32.xlu0 %v100, 48
  %v2119 = vpop.permute.xlu0 %2118
  %v2122 = vsel %vm110, %v1935, 0
  %2124 = vmatpush.msra.mxu0 0.0
  %2125 = vmatpush.msra.mxu0 0.0
  %2126 = vmatpush.msra.mxu0 0.0
  %2127 = vmatpush.msra.mxu0 0.0
  %2128 = vmatpush.msra.mxu0 0.0
  %2129 = vmatpush.msra.mxu0 0.0
  %2130 = vmatpush.msra.mxu0 0.0
  %2131 = vmatpush.msra.mxu0 0.0
  %2132 = vmatpush.msra.mxu0 0.0
  %2133 = vmatpush.msra.mxu0 0.0
  %2134 = vmatpush.msra.mxu0 0.0
  %2135 = vmatpush.msra.mxu0 0.0
  %2136 = vmatpush.msra.mxu0 0.0
  %2137 = vmatpush.msra.mxu0 0.0
  %2138 = vmatpush.msra.mxu0 0.0
  %2139 = vmatpush.msra.mxu0 %v2119
  %2140 = vmatmul.f32.gmra.mxu0 %v2122
  %v2141 = vpop.f32.mrf.mxu0
  %v2142 = vadd.f32 0.0, %v2141
  %2143 = vdwg.mxu0
  %v2144 = vld [vmem:[%s3 + $0x10] sm:$0xff]
  %v2146 = vsel %vm110, %v1960, 0
  %v2149 = vsel %vm110, %v1986, 0
  %v2152 = vsel %vm110, %v2012, 0
  %v2155 = vsel %vm110, %v2038, 0
  %v2158 = vsel %vm110, %v2064, 0
  %v2161 = vsel %vm110, %v2090, 0
  %v2164 = vsel %vm110, %v2116, 0
  %v2167 = vsel %vm110, %v2142, 0
  %2169 = vmatpush.msra.mxu0 0.0
  %2170 = vmatpush.msra.mxu0 0.0
  %2171 = vmatpush.msra.mxu0 0.0
  %2172 = vmatpush.msra.mxu0 0.0
  %2173 = vmatpush.msra.mxu0 0.0
  %2174 = vmatpush.msra.mxu0 0.0
  %2175 = vmatpush.msra.mxu0 0.0
  %2176 = vmatpush.msra.mxu0 0.0
  %2177 = vmatpush.msra.mxu0 0.0
  %2178 = vmatpush.msra.mxu0 0.0
  %2179 = vmatpush.msra.mxu0 0.0
  %2180 = vmatpush.msra.mxu0 0.0
  %2181 = vmatpush.msra.mxu0 0.0
  %2182 = vmatpush.msra.mxu0 0.0
  %2183 = vmatpush.msra.mxu0 0.0
  %2184 = vmatpush.msra.mxu0 %v2144
  %2185 = vmatmul.f32.gmra.mxu0 %v2146
  %v2186 = vpop.f32.mrf.mxu0
  %v2187 = vadd.f32 0.0, %v2186
  %2188 = vmatmul.f32.gmra.mxu0 %v2149
  %v2189 = vpop.f32.mrf.mxu0
  %v2190 = vadd.f32 0.0, %v2189
  %2191 = vmatmul.f32.gmra.mxu0 %v2152
  %v2192 = vpop.f32.mrf.mxu0
  %v2193 = vadd.f32 0.0, %v2192
  %2194 = vmatmul.f32.gmra.mxu0 %v2155
  %v2195 = vpop.f32.mrf.mxu0
  %v2196 = vadd.f32 0.0, %v2195
  %2197 = vmatmul.f32.gmra.mxu0 %v2158
  %v2198 = vpop.f32.mrf.mxu0
  %v2199 = vadd.f32 0.0, %v2198
  %2200 = vmatmul.f32.gmra.mxu0 %v2161
  %v2201 = vpop.f32.mrf.mxu0
  %v2202 = vadd.f32 0.0, %v2201
  %2203 = vmatmul.f32.gmra.mxu0 %v2164
  %v2204 = vpop.f32.mrf.mxu0
  %v2205 = vadd.f32 0.0, %v2204
  %2206 = vmatmul.f32.gmra.mxu0 %v2167
  %v2207 = vpop.f32.mrf.mxu0
  %v2208 = vadd.f32 0.0, %v2207
  %2209 = vdwg.mxu0
  %v2210 = vadd.f32 %v1504, %v2187
  %v2211 = vadd.f32 %v1505, %v2190
  %v2212 = vadd.f32 %v1506, %v2193
  %v2213 = vadd.f32 %v1507, %v2196
  %v2214 = vadd.f32 %v1508, %v2199
  %v2215 = vadd.f32 %v1509, %v2202
  %v2216 = vadd.f32 %v1510, %v2205
  %v2217 = vadd.f32 %v1511, %v2208
  %2218 = vrot.lane.b32.xlu0 %v79, 104
  %v2219 = vpop.permute.xlu0 %2218
  %2220 = vrot.lane.b32.xlu0 %v79, 72
  %v2221 = vpop.permute.xlu0 %2220
  %v2222 = vsel %vm110, %v2219, 0
  %v2224 = vsel %vm110, %v2221, 0
  %2226 = vmatpush.xpose.msra.mxu0 0.0
  %2227 = vmatpush.xpose.msra.mxu0 0.0
  %2228 = vmatpush.xpose.msra.mxu0 0.0
  %2229 = vmatpush.xpose.msra.mxu0 0.0
  %2230 = vmatpush.xpose.msra.mxu0 0.0
  %2231 = vmatpush.xpose.msra.mxu0 0.0
  %2232 = vmatpush.xpose.msra.mxu0 0.0
  %2233 = vmatpush.xpose.msra.mxu0 0.0
  %2234 = vmatpush.xpose.msra.mxu0 0.0
  %2235 = vmatpush.xpose.msra.mxu0 0.0
  %2236 = vmatpush.xpose.msra.mxu0 0.0
  %2237 = vmatpush.xpose.msra.mxu0 0.0
  %2238 = vmatpush.xpose.msra.mxu0 0.0
  %2239 = vmatpush.xpose.msra.mxu0 0.0
  %2240 = vmatpush.xpose.msra.mxu0 0.0
  %2241 = vmatpush.xpose.msra.mxu0 %v2224
  %2242 = vmatmul.f32.gmra.mxu0 %v2222
  %v2243 = vpop.f32.mrf.mxu0
  %v2244 = vadd.f32 0.0, %v2243
  %2245 = vdwg.mxu0
  %2246 = vrot.lane.b32.xlu0 %v82, 104
  %v2247 = vpop.permute.xlu0 %2246
  %2248 = vrot.lane.b32.xlu0 %v82, 72
  %v2249 = vpop.permute.xlu0 %2248
  %v2250 = vsel %vm110, %v2247, 0
  %v2252 = vsel %vm110, %v2249, 0
  %2254 = vmatpush.xpose.msra.mxu0 0.0
  %2255 = vmatpush.xpose.msra.mxu0 0.0
  %2256 = vmatpush.xpose.msra.mxu0 0.0
  %2257 = vmatpush.xpose.msra.mxu0 0.0
  %2258 = vmatpush.xpose.msra.mxu0 0.0
  %2259 = vmatpush.xpose.msra.mxu0 0.0
  %2260 = vmatpush.xpose.msra.mxu0 0.0
  %2261 = vmatpush.xpose.msra.mxu0 0.0
  %2262 = vmatpush.xpose.msra.mxu0 0.0
  %2263 = vmatpush.xpose.msra.mxu0 0.0
  %2264 = vmatpush.xpose.msra.mxu0 0.0
  %2265 = vmatpush.xpose.msra.mxu0 0.0
  %2266 = vmatpush.xpose.msra.mxu0 0.0
  %2267 = vmatpush.xpose.msra.mxu0 0.0
  %2268 = vmatpush.xpose.msra.mxu0 0.0
  %2269 = vmatpush.xpose.msra.mxu0 %v2252
  %2270 = vmatmul.f32.gmra.mxu0 %v2250
  %v2271 = vpop.f32.mrf.mxu0
  %v2272 = vadd.f32 0.0, %v2271
  %2273 = vdwg.mxu0
  %2274 = vrot.lane.b32.xlu0 %v85, 104
  %v2275 = vpop.permute.xlu0 %2274
  %2276 = vrot.lane.b32.xlu0 %v85, 72
  %v2277 = vpop.permute.xlu0 %2276
  %v2278 = vsel %vm110, %v2275, 0
  %v2280 = vsel %vm110, %v2277, 0
  %2282 = vmatpush.xpose.msra.mxu0 0.0
  %2283 = vmatpush.xpose.msra.mxu0 0.0
  %2284 = vmatpush.xpose.msra.mxu0 0.0
  %2285 = vmatpush.xpose.msra.mxu0 0.0
  %2286 = vmatpush.xpose.msra.mxu0 0.0
  %2287 = vmatpush.xpose.msra.mxu0 0.0
  %2288 = vmatpush.xpose.msra.mxu0 0.0
  %2289 = vmatpush.xpose.msra.mxu0 0.0
  %2290 = vmatpush.xpose.msra.mxu0 0.0
  %2291 = vmatpush.xpose.msra.mxu0 0.0
  %2292 = vmatpush.xpose.msra.mxu0 0.0
  %2293 = vmatpush.xpose.msra.mxu0 0.0
  %2294 = vmatpush.xpose.msra.mxu0 0.0
  %2295 = vmatpush.xpose.msra.mxu0 0.0
  %2296 = vmatpush.xpose.msra.mxu0 0.0
  %2297 = vmatpush.xpose.msra.mxu0 %v2280
  %2298 = vmatmul.f32.gmra.mxu0 %v2278
  %v2299 = vpop.f32.mrf.mxu0
  %v2300 = vadd.f32 0.0, %v2299
  %2301 = vdwg.mxu0
  %2302 = vrot.lane.b32.xlu0 %v88, 104
  %v2303 = vpop.permute.xlu0 %2302
  %2304 = vrot.lane.b32.xlu0 %v88, 72
  %v2305 = vpop.permute.xlu0 %2304
  %v2306 = vsel %vm110, %v2303, 0
  %v2308 = vsel %vm110, %v2305, 0
  %2310 = vmatpush.xpose.msra.mxu0 0.0
  %2311 = vmatpush.xpose.msra.mxu0 0.0
  %2312 = vmatpush.xpose.msra.mxu0 0.0
  %2313 = vmatpush.xpose.msra.mxu0 0.0
  %2314 = vmatpush.xpose.msra.mxu0 0.0
  %2315 = vmatpush.xpose.msra.mxu0 0.0
  %2316 = vmatpush.xpose.msra.mxu0 0.0
  %2317 = vmatpush.xpose.msra.mxu0 0.0
  %2318 = vmatpush.xpose.msra.mxu0 0.0
  %2319 = vmatpush.xpose.msra.mxu0 0.0
  %2320 = vmatpush.xpose.msra.mxu0 0.0
  %2321 = vmatpush.xpose.msra.mxu0 0.0
  %2322 = vmatpush.xpose.msra.mxu0 0.0
  %2323 = vmatpush.xpose.msra.mxu0 0.0
  %2324 = vmatpush.xpose.msra.mxu0 0.0
  %2325 = vmatpush.xpose.msra.mxu0 %v2308
  %2326 = vmatmul.f32.gmra.mxu0 %v2306
  %v2327 = vpop.f32.mrf.mxu0
  %v2328 = vadd.f32 0.0, %v2327
  %2329 = vdwg.mxu0
  %2330 = vrot.lane.b32.xlu0 %v91, 104
  %v2331 = vpop.permute.xlu0 %2330
  %2332 = vrot.lane.b32.xlu0 %v91, 72
  %v2333 = vpop.permute.xlu0 %2332
  %v2334 = vsel %vm110, %v2331, 0
  %v2336 = vsel %vm110, %v2333, 0
  %2338 = vmatpush.xpose.msra.mxu0 0.0
  %2339 = vmatpush.xpose.msra.mxu0 0.0
  %2340 = vmatpush.xpose.msra.mxu0 0.0
  %2341 = vmatpush.xpose.msra.mxu0 0.0
  %2342 = vmatpush.xpose.msra.mxu0 0.0
  %2343 = vmatpush.xpose.msra.mxu0 0.0
  %2344 = vmatpush.xpose.msra.mxu0 0.0
  %2345 = vmatpush.xpose.msra.mxu0 0.0
  %2346 = vmatpush.xpose.msra.mxu0 0.0
  %2347 = vmatpush.xpose.msra.mxu0 0.0
  %2348 = vmatpush.xpose.msra.mxu0 0.0
  %2349 = vmatpush.xpose.msra.mxu0 0.0
  %2350 = vmatpush.xpose.msra.mxu0 0.0
  %2351 = vmatpush.xpose.msra.mxu0 0.0
  %2352 = vmatpush.xpose.msra.mxu0 0.0
  %2353 = vmatpush.xpose.msra.mxu0 %v2336
  %2354 = vmatmul.f32.gmra.mxu0 %v2334
  %v2355 = vpop.f32.mrf.mxu0
  %v2356 = vadd.f32 0.0, %v2355
  %2357 = vdwg.mxu0
  %2358 = vrot.lane.b32.xlu0 %v94, 104
  %v2359 = vpop.permute.xlu0 %2358
  %2360 = vrot.lane.b32.xlu0 %v94, 72
  %v2361 = vpop.permute.xlu0 %2360
  %v2362 = vsel %vm110, %v2359, 0
  %v2364 = vsel %vm110, %v2361, 0
  %2366 = vmatpush.xpose.msra.mxu0 0.0
  %2367 = vmatpush.xpose.msra.mxu0 0.0
  %2368 = vmatpush.xpose.msra.mxu0 0.0
  %2369 = vmatpush.xpose.msra.mxu0 0.0
  %2370 = vmatpush.xpose.msra.mxu0 0.0
  %2371 = vmatpush.xpose.msra.mxu0 0.0
  %2372 = vmatpush.xpose.msra.mxu0 0.0
  %2373 = vmatpush.xpose.msra.mxu0 0.0
  %2374 = vmatpush.xpose.msra.mxu0 0.0
  %2375 = vmatpush.xpose.msra.mxu0 0.0
  %2376 = vmatpush.xpose.msra.mxu0 0.0
  %2377 = vmatpush.xpose.msra.mxu0 0.0
  %2378 = vmatpush.xpose.msra.mxu0 0.0
  %2379 = vmatpush.xpose.msra.mxu0 0.0
  %2380 = vmatpush.xpose.msra.mxu0 0.0
  %2381 = vmatpush.xpose.msra.mxu0 %v2364
  %2382 = vmatmul.f32.gmra.mxu0 %v2362
  %v2383 = vpop.f32.mrf.mxu0
  %v2384 = vadd.f32 0.0, %v2383
  %2385 = vdwg.mxu0
  %2386 = vrot.lane.b32.xlu0 %v97, 104
  %v2387 = vpop.permute.xlu0 %2386
  %2388 = vrot.lane.b32.xlu0 %v97, 72
  %v2389 = vpop.permute.xlu0 %2388
  %v2390 = vsel %vm110, %v2387, 0
  %v2392 = vsel %vm110, %v2389, 0
  %2394 = vmatpush.xpose.msra.mxu0 0.0
  %2395 = vmatpush.xpose.msra.mxu0 0.0
  %2396 = vmatpush.xpose.msra.mxu0 0.0
  %2397 = vmatpush.xpose.msra.mxu0 0.0
  %2398 = vmatpush.xpose.msra.mxu0 0.0
  %2399 = vmatpush.xpose.msra.mxu0 0.0
  %2400 = vmatpush.xpose.msra.mxu0 0.0
  %2401 = vmatpush.xpose.msra.mxu0 0.0
  %2402 = vmatpush.xpose.msra.mxu0 0.0
  %2403 = vmatpush.xpose.msra.mxu0 0.0
  %2404 = vmatpush.xpose.msra.mxu0 0.0
  %2405 = vmatpush.xpose.msra.mxu0 0.0
  %2406 = vmatpush.xpose.msra.mxu0 0.0
  %2407 = vmatpush.xpose.msra.mxu0 0.0
  %2408 = vmatpush.xpose.msra.mxu0 0.0
  %2409 = vmatpush.xpose.msra.mxu0 %v2392
  %2410 = vmatmul.f32.gmra.mxu0 %v2390
  %v2411 = vpop.f32.mrf.mxu0
  %v2412 = vadd.f32 0.0, %v2411
  %2413 = vdwg.mxu0
  %2414 = vrot.lane.b32.xlu0 %v100, 104
  %v2415 = vpop.permute.xlu0 %2414
  %2416 = vrot.lane.b32.xlu0 %v100, 72
  %v2417 = vpop.permute.xlu0 %2416
  %v2418 = vsel %vm110, %v2415, 0
  %v2420 = vsel %vm110, %v2417, 0
  %2422 = vmatpush.xpose.msra.mxu0 0.0
  %2423 = vmatpush.xpose.msra.mxu0 0.0
  %2424 = vmatpush.xpose.msra.mxu0 0.0
  %2425 = vmatpush.xpose.msra.mxu0 0.0
  %2426 = vmatpush.xpose.msra.mxu0 0.0
  %2427 = vmatpush.xpose.msra.mxu0 0.0
  %2428 = vmatpush.xpose.msra.mxu0 0.0
  %2429 = vmatpush.xpose.msra.mxu0 0.0
  %2430 = vmatpush.xpose.msra.mxu0 0.0
  %2431 = vmatpush.xpose.msra.mxu0 0.0
  %2432 = vmatpush.xpose.msra.mxu0 0.0
  %2433 = vmatpush.xpose.msra.mxu0 0.0
  %2434 = vmatpush.xpose.msra.mxu0 0.0
  %2435 = vmatpush.xpose.msra.mxu0 0.0
  %2436 = vmatpush.xpose.msra.mxu0 0.0
  %2437 = vmatpush.xpose.msra.mxu0 %v2420
  %2438 = vmatmul.f32.gmra.mxu0 %v2418
  %v2439 = vpop.f32.mrf.mxu0
  %v2440 = vadd.f32 0.0, %v2439
  %2441 = vdwg.mxu0
  %v2442 = vmul.f32 %v2244, 0.35355338
  %v2443 = vmul.f32 %v2272, 0.35355338
  %v2444 = vmul.f32 %v2300, 0.35355338
  %v2445 = vmul.f32 %v2328, 0.35355338
  %v2446 = vmul.f32 %v2356, 0.35355338
  %v2447 = vmul.f32 %v2384, 0.35355338
  %v2448 = vmul.f32 %v2412, 0.35355338
  %v2449 = vmul.f32 %v2440, 0.35355338
  %v2450 = vsel %vm110, %v2442, -inf
  %2451 = vmax.xlane.f32.xlu0 %v2450
  %v2452 = vpop.xlane.xlu0 %2451
  %v2453 = vsel %vm110, %v2443, -inf
  %2454 = vmax.xlane.f32.xlu0 %v2453
  %v2455 = vpop.xlane.xlu0 %2454
  %v2456 = vsel %vm110, %v2444, -inf
  %2457 = vmax.xlane.f32.xlu0 %v2456
  %v2458 = vpop.xlane.xlu0 %2457
  %v2459 = vsel %vm110, %v2445, -inf
  %2460 = vmax.xlane.f32.xlu0 %v2459
  %v2461 = vpop.xlane.xlu0 %2460
  %v2462 = vsel %vm110, %v2446, -inf
  %2463 = vmax.xlane.f32.xlu0 %v2462
  %v2464 = vpop.xlane.xlu0 %2463
  %v2465 = vsel %vm110, %v2447, -inf
  %2466 = vmax.xlane.f32.xlu0 %v2465
  %v2467 = vpop.xlane.xlu0 %2466
  %v2468 = vsel %vm110, %v2448, -inf
  %2469 = vmax.xlane.f32.xlu0 %v2468
  %v2470 = vpop.xlane.xlu0 %2469
  %v2471 = vsel %vm110, %v2449, -inf
  %2472 = vmax.xlane.f32.xlu0 %v2471
  %v2473 = vpop.xlane.xlu0 %2472
  %v2474 = vsub.f32 %v2442, %v2452
  %v2475 = vsub.f32 %v2443, %v2455
  %v2476 = vsub.f32 %v2444, %v2458
  %v2477 = vsub.f32 %v2445, %v2461
  %v2478 = vsub.f32 %v2446, %v2464
  %v2479 = vsub.f32 %v2447, %v2467
  %v2480 = vsub.f32 %v2448, %v2470
  %v2481 = vsub.f32 %v2449, %v2473
  %v2482 = vmul.f32 %v2474, 1.442695
  %v2483 = vpow.pop %v2482
  %v2484 = vmul.f32 %v2475, 1.442695
  %v2485 = vpow.pop %v2484
  %v2486 = vmul.f32 %v2476, 1.442695
  %v2487 = vpow.pop %v2486
  %v2488 = vmul.f32 %v2477, 1.442695
  %v2489 = vpow.pop %v2488
  %v2490 = vmul.f32 %v2478, 1.442695
  %v2491 = vpow.pop %v2490
  %v2492 = vmul.f32 %v2479, 1.442695
  %v2493 = vpow.pop %v2492
  %v2494 = vmul.f32 %v2480, 1.442695
  %v2495 = vpow.pop %v2494
  %v2496 = vmul.f32 %v2481, 1.442695
  %v2497 = vpow.pop %v2496
  %v2498 = vsel %vm110, %v2483, 0.0
  %2499 = vadd.xlane.f32.xlu0 %v2498
  %v2500 = vpop.xlane.xlu0 %2499
  %v2501 = vsel %vm110, %v2485, 0.0
  %2502 = vadd.xlane.f32.xlu0 %v2501
  %v2503 = vpop.xlane.xlu0 %2502
  %v2504 = vsel %vm110, %v2487, 0.0
  %2505 = vadd.xlane.f32.xlu0 %v2504
  %v2506 = vpop.xlane.xlu0 %2505
  %v2507 = vsel %vm110, %v2489, 0.0
  %2508 = vadd.xlane.f32.xlu0 %v2507
  %v2509 = vpop.xlane.xlu0 %2508
  %v2510 = vsel %vm110, %v2491, 0.0
  %2511 = vadd.xlane.f32.xlu0 %v2510
  %v2512 = vpop.xlane.xlu0 %2511
  %v2513 = vsel %vm110, %v2493, 0.0
  %2514 = vadd.xlane.f32.xlu0 %v2513
  %v2515 = vpop.xlane.xlu0 %2514
  %v2516 = vsel %vm110, %v2495, 0.0
  %2517 = vadd.xlane.f32.xlu0 %v2516
  %v2518 = vpop.xlane.xlu0 %2517
  %v2519 = vsel %vm110, %v2497, 0.0
  %2520 = vadd.xlane.f32.xlu0 %v2519
  %v2521 = vpop.xlane.xlu0 %2520
  %v2522 = vrcp.pop %v2500
  %v2523 = vmul.f32 %v2500, %v2522
  %v2524 = vsub.f32 1.0, %v2523
  %v2525 = vmul.f32 %v2522, %v2524
  %v2526 = vadd.f32 %v2522, %v2525
  %vm2527 = vweird.f32 %v2500
  %vm2528 = vweird.f32 %v2522
  %vm2529 = vmor %vm2527, %vm2528
  %v2530 = vsel %vm2529, %v2522, %v2526
  %v2531 = vand.u32 2147483647, %v2500
  %vm2532 = vcmp.eq.f32.partialorder %v2531, 8.507059e+37
  %v2533 = vand.u32 %v2500, 2147483648
  %v2534 = vor.u32 1.1754944e-38, %v2533
  %v2535 = vsel %vm2532, %v2534, %v2530
  %v2536 = vmul.f32 %v2483, %v2535
  %v2537 = vrcp.pop %v2503
  %v2538 = vmul.f32 %v2503, %v2537
  %v2539 = vsub.f32 1.0, %v2538
  %v2540 = vmul.f32 %v2537, %v2539
  %v2541 = vadd.f32 %v2537, %v2540
  %vm2542 = vweird.f32 %v2503
  %vm2543 = vweird.f32 %v2537
  %vm2544 = vmor %vm2542, %vm2543
  %v2545 = vsel %vm2544, %v2537, %v2541
  %v2546 = vand.u32 2147483647, %v2503
  %vm2547 = vcmp.eq.f32.partialorder %v2546, 8.507059e+37
  %v2548 = vand.u32 %v2503, 2147483648
  %v2549 = vor.u32 1.1754944e-38, %v2548
  %v2550 = vsel %vm2547, %v2549, %v2545
  %v2551 = vmul.f32 %v2485, %v2550
  %v2552 = vrcp.pop %v2506
  %v2553 = vmul.f32 %v2506, %v2552
  %v2554 = vsub.f32 1.0, %v2553
  %v2555 = vmul.f32 %v2552, %v2554
  %v2556 = vadd.f32 %v2552, %v2555
  %vm2557 = vweird.f32 %v2506
  %vm2558 = vweird.f32 %v2552
  %vm2559 = vmor %vm2557, %vm2558
  %v2560 = vsel %vm2559, %v2552, %v2556
  %v2561 = vand.u32 2147483647, %v2506
  %vm2562 = vcmp.eq.f32.partialorder %v2561, 8.507059e+37
  %v2563 = vand.u32 %v2506, 2147483648
  %v2564 = vor.u32 1.1754944e-38, %v2563
  %v2565 = vsel %vm2562, %v2564, %v2560
  %v2566 = vmul.f32 %v2487, %v2565
  %v2567 = vrcp.pop %v2509
  %v2568 = vmul.f32 %v2509, %v2567
  %v2569 = vsub.f32 1.0, %v2568
  %v2570 = vmul.f32 %v2567, %v2569
  %v2571 = vadd.f32 %v2567, %v2570
  %vm2572 = vweird.f32 %v2509
  %vm2573 = vweird.f32 %v2567
  %vm2574 = vmor %vm2572, %vm2573
  %v2575 = vsel %vm2574, %v2567, %v2571
  %v2576 = vand.u32 2147483647, %v2509
  %vm2577 = vcmp.eq.f32.partialorder %v2576, 8.507059e+37
  %v2578 = vand.u32 %v2509, 2147483648
  %v2579 = vor.u32 1.1754944e-38, %v2578
  %v2580 = vsel %vm2577, %v2579, %v2575
  %v2581 = vmul.f32 %v2489, %v2580
  %v2582 = vrcp.pop %v2512
  %v2583 = vmul.f32 %v2512, %v2582
  %v2584 = vsub.f32 1.0, %v2583
  %v2585 = vmul.f32 %v2582, %v2584
  %v2586 = vadd.f32 %v2582, %v2585
  %vm2587 = vweird.f32 %v2512
  %vm2588 = vweird.f32 %v2582
  %vm2589 = vmor %vm2587, %vm2588
  %v2590 = vsel %vm2589, %v2582, %v2586
  %v2591 = vand.u32 2147483647, %v2512
  %vm2592 = vcmp.eq.f32.partialorder %v2591, 8.507059e+37
  %v2593 = vand.u32 %v2512, 2147483648
  %v2594 = vor.u32 1.1754944e-38, %v2593
  %v2595 = vsel %vm2592, %v2594, %v2590
  %v2596 = vmul.f32 %v2491, %v2595
  %v2597 = vrcp.pop %v2515
  %v2598 = vmul.f32 %v2515, %v2597
  %v2599 = vsub.f32 1.0, %v2598
  %v2600 = vmul.f32 %v2597, %v2599
  %v2601 = vadd.f32 %v2597, %v2600
  %vm2602 = vweird.f32 %v2515
  %vm2603 = vweird.f32 %v2597
  %vm2604 = vmor %vm2602, %vm2603
  %v2605 = vsel %vm2604, %v2597, %v2601
  %v2606 = vand.u32 2147483647, %v2515
  %vm2607 = vcmp.eq.f32.partialorder %v2606, 8.507059e+37
  %v2608 = vand.u32 %v2515, 2147483648
  %v2609 = vor.u32 1.1754944e-38, %v2608
  %v2610 = vsel %vm2607, %v2609, %v2605
  %v2611 = vmul.f32 %v2493, %v2610
  %v2612 = vrcp.pop %v2518
  %v2613 = vmul.f32 %v2518, %v2612
  %v2614 = vsub.f32 1.0, %v2613
  %v2615 = vmul.f32 %v2612, %v2614
  %v2616 = vadd.f32 %v2612, %v2615
  %vm2617 = vweird.f32 %v2518
  %vm2618 = vweird.f32 %v2612
  %vm2619 = vmor %vm2617, %vm2618
  %v2620 = vsel %vm2619, %v2612, %v2616
  %v2621 = vand.u32 2147483647, %v2518
  %vm2622 = vcmp.eq.f32.partialorder %v2621, 8.507059e+37
  %v2623 = vand.u32 %v2518, 2147483648
  %v2624 = vor.u32 1.1754944e-38, %v2623
  %v2625 = vsel %vm2622, %v2624, %v2620
  %v2626 = vmul.f32 %v2495, %v2625
  %v2627 = vrcp.pop %v2521
  %v2628 = vmul.f32 %v2521, %v2627
  %v2629 = vsub.f32 1.0, %v2628
  %v2630 = vmul.f32 %v2627, %v2629
  %v2631 = vadd.f32 %v2627, %v2630
  %vm2632 = vweird.f32 %v2521
  %vm2633 = vweird.f32 %v2627
  %vm2634 = vmor %vm2632, %vm2633
  %v2635 = vsel %vm2634, %v2627, %v2631
  %v2636 = vand.u32 2147483647, %v2521
  %vm2637 = vcmp.eq.f32.partialorder %v2636, 8.507059e+37
  %v2638 = vand.u32 %v2521, 2147483648
  %v2639 = vor.u32 1.1754944e-38, %v2638
  %v2640 = vsel %vm2637, %v2639, %v2635
  %v2641 = vmul.f32 %v2497, %v2640
  %2642 = vrot.lane.b32.xlu0 %v79, 40
  %v2643 = vpop.permute.xlu0 %2642
  %v2646 = vsel %vm110, %v2536, 0
  %2648 = vmatpush.msra.mxu0 0.0
  %2649 = vmatpush.msra.mxu0 0.0
  %2650 = vmatpush.msra.mxu0 0.0
  %2651 = vmatpush.msra.mxu0 0.0
  %2652 = vmatpush.msra.mxu0 0.0
  %2653 = vmatpush.msra.mxu0 0.0
  %2654 = vmatpush.msra.mxu0 0.0
  %2655 = vmatpush.msra.mxu0 0.0
  %2656 = vmatpush.msra.mxu0 0.0
  %2657 = vmatpush.msra.mxu0 0.0
  %2658 = vmatpush.msra.mxu0 0.0
  %2659 = vmatpush.msra.mxu0 0.0
  %2660 = vmatpush.msra.mxu0 0.0
  %2661 = vmatpush.msra.mxu0 0.0
  %2662 = vmatpush.msra.mxu0 0.0
  %2663 = vmatpush.msra.mxu0 %v2643
  %2664 = vmatmul.f32.gmra.mxu0 %v2646
  %v2665 = vpop.f32.mrf.mxu0
  %v2666 = vadd.f32 0.0, %v2665
  %2667 = vdwg.mxu0
  %2668 = vrot.lane.b32.xlu0 %v82, 40
  %v2669 = vpop.permute.xlu0 %2668
  %v2672 = vsel %vm110, %v2551, 0
  %2674 = vmatpush.msra.mxu0 0.0
  %2675 = vmatpush.msra.mxu0 0.0
  %2676 = vmatpush.msra.mxu0 0.0
  %2677 = vmatpush.msra.mxu0 0.0
  %2678 = vmatpush.msra.mxu0 0.0
  %2679 = vmatpush.msra.mxu0 0.0
  %2680 = vmatpush.msra.mxu0 0.0
  %2681 = vmatpush.msra.mxu0 0.0
  %2682 = vmatpush.msra.mxu0 0.0
  %2683 = vmatpush.msra.mxu0 0.0
  %2684 = vmatpush.msra.mxu0 0.0
  %2685 = vmatpush.msra.mxu0 0.0
  %2686 = vmatpush.msra.mxu0 0.0
  %2687 = vmatpush.msra.mxu0 0.0
  %2688 = vmatpush.msra.mxu0 0.0
  %2689 = vmatpush.msra.mxu0 %v2669
  %2690 = vmatmul.f32.gmra.mxu0 %v2672
  %v2691 = vpop.f32.mrf.mxu0
  %v2692 = vadd.f32 0.0, %v2691
  %2693 = vdwg.mxu0
  %2694 = vrot.lane.b32.xlu0 %v85, 40
  %v2695 = vpop.permute.xlu0 %2694
  %v2698 = vsel %vm110, %v2566, 0
  %2700 = vmatpush.msra.mxu0 0.0
  %2701 = vmatpush.msra.mxu0 0.0
  %2702 = vmatpush.msra.mxu0 0.0
  %2703 = vmatpush.msra.mxu0 0.0
  %2704 = vmatpush.msra.mxu0 0.0
  %2705 = vmatpush.msra.mxu0 0.0
  %2706 = vmatpush.msra.mxu0 0.0
  %2707 = vmatpush.msra.mxu0 0.0
  %2708 = vmatpush.msra.mxu0 0.0
  %2709 = vmatpush.msra.mxu0 0.0
  %2710 = vmatpush.msra.mxu0 0.0
  %2711 = vmatpush.msra.mxu0 0.0
  %2712 = vmatpush.msra.mxu0 0.0
  %2713 = vmatpush.msra.mxu0 0.0
  %2714 = vmatpush.msra.mxu0 0.0
  %2715 = vmatpush.msra.mxu0 %v2695
  %2716 = vmatmul.f32.gmra.mxu0 %v2698
  %v2717 = vpop.f32.mrf.mxu0
  %v2718 = vadd.f32 0.0, %v2717
  %2719 = vdwg.mxu0
  %2720 = vrot.lane.b32.xlu0 %v88, 40
  %v2721 = vpop.permute.xlu0 %2720
  %v2724 = vsel %vm110, %v2581, 0
  %2726 = vmatpush.msra.mxu0 0.0
  %2727 = vmatpush.msra.mxu0 0.0
  %2728 = vmatpush.msra.mxu0 0.0
  %2729 = vmatpush.msra.mxu0 0.0
  %2730 = vmatpush.msra.mxu0 0.0
  %2731 = vmatpush.msra.mxu0 0.0
  %2732 = vmatpush.msra.mxu0 0.0
  %2733 = vmatpush.msra.mxu0 0.0
  %2734 = vmatpush.msra.mxu0 0.0
  %2735 = vmatpush.msra.mxu0 0.0
  %2736 = vmatpush.msra.mxu0 0.0
  %2737 = vmatpush.msra.mxu0 0.0
  %2738 = vmatpush.msra.mxu0 0.0
  %2739 = vmatpush.msra.mxu0 0.0
  %2740 = vmatpush.msra.mxu0 0.0
  %2741 = vmatpush.msra.mxu0 %v2721
  %2742 = vmatmul.f32.gmra.mxu0 %v2724
  %v2743 = vpop.f32.mrf.mxu0
  %v2744 = vadd.f32 0.0, %v2743
  %2745 = vdwg.mxu0
  %2746 = vrot.lane.b32.xlu0 %v91, 40
  %v2747 = vpop.permute.xlu0 %2746
  %v2750 = vsel %vm110, %v2596, 0
  %2752 = vmatpush.msra.mxu0 0.0
  %2753 = vmatpush.msra.mxu0 0.0
  %2754 = vmatpush.msra.mxu0 0.0
  %2755 = vmatpush.msra.mxu0 0.0
  %2756 = vmatpush.msra.mxu0 0.0
  %2757 = vmatpush.msra.mxu0 0.0
  %2758 = vmatpush.msra.mxu0 0.0
  %2759 = vmatpush.msra.mxu0 0.0
  %2760 = vmatpush.msra.mxu0 0.0
  %2761 = vmatpush.msra.mxu0 0.0
  %2762 = vmatpush.msra.mxu0 0.0
  %2763 = vmatpush.msra.mxu0 0.0
  %2764 = vmatpush.msra.mxu0 0.0
  %2765 = vmatpush.msra.mxu0 0.0
  %2766 = vmatpush.msra.mxu0 0.0
  %2767 = vmatpush.msra.mxu0 %v2747
  %2768 = vmatmul.f32.gmra.mxu0 %v2750
  %v2769 = vpop.f32.mrf.mxu0
  %v2770 = vadd.f32 0.0, %v2769
  %2771 = vdwg.mxu0
  %2772 = vrot.lane.b32.xlu0 %v94, 40
  %v2773 = vpop.permute.xlu0 %2772
  %v2776 = vsel %vm110, %v2611, 0
  %2778 = vmatpush.msra.mxu0 0.0
  %2779 = vmatpush.msra.mxu0 0.0
  %2780 = vmatpush.msra.mxu0 0.0
  %2781 = vmatpush.msra.mxu0 0.0
  %2782 = vmatpush.msra.mxu0 0.0
  %2783 = vmatpush.msra.mxu0 0.0
  %2784 = vmatpush.msra.mxu0 0.0
  %2785 = vmatpush.msra.mxu0 0.0
  %2786 = vmatpush.msra.mxu0 0.0
  %2787 = vmatpush.msra.mxu0 0.0
  %2788 = vmatpush.msra.mxu0 0.0
  %2789 = vmatpush.msra.mxu0 0.0
  %2790 = vmatpush.msra.mxu0 0.0
  %2791 = vmatpush.msra.mxu0 0.0
  %2792 = vmatpush.msra.mxu0 0.0
  %2793 = vmatpush.msra.mxu0 %v2773
  %2794 = vmatmul.f32.gmra.mxu0 %v2776
  %v2795 = vpop.f32.mrf.mxu0
  %v2796 = vadd.f32 0.0, %v2795
  %2797 = vdwg.mxu0
  %2798 = vrot.lane.b32.xlu0 %v97, 40
  %v2799 = vpop.permute.xlu0 %2798
  %v2802 = vsel %vm110, %v2626, 0
  %2804 = vmatpush.msra.mxu0 0.0
  %2805 = vmatpush.msra.mxu0 0.0
  %2806 = vmatpush.msra.mxu0 0.0
  %2807 = vmatpush.msra.mxu0 0.0
  %2808 = vmatpush.msra.mxu0 0.0
  %2809 = vmatpush.msra.mxu0 0.0
  %2810 = vmatpush.msra.mxu0 0.0
  %2811 = vmatpush.msra.mxu0 0.0
  %2812 = vmatpush.msra.mxu0 0.0
  %2813 = vmatpush.msra.mxu0 0.0
  %2814 = vmatpush.msra.mxu0 0.0
  %2815 = vmatpush.msra.mxu0 0.0
  %2816 = vmatpush.msra.mxu0 0.0
  %2817 = vmatpush.msra.mxu0 0.0
  %2818 = vmatpush.msra.mxu0 0.0
  %2819 = vmatpush.msra.mxu0 %v2799
  %2820 = vmatmul.f32.gmra.mxu0 %v2802
  %v2821 = vpop.f32.mrf.mxu0
  %v2822 = vadd.f32 0.0, %v2821
  %2823 = vdwg.mxu0
  %2824 = vrot.lane.b32.xlu0 %v100, 40
  %v2825 = vpop.permute.xlu0 %2824
  %v2828 = vsel %vm110, %v2641, 0
  %2830 = vmatpush.msra.mxu0 0.0
  %2831 = vmatpush.msra.mxu0 0.0
  %2832 = vmatpush.msra.mxu0 0.0
  %2833 = vmatpush.msra.mxu0 0.0
  %2834 = vmatpush.msra.mxu0 0.0
  %2835 = vmatpush.msra.mxu0 0.0
  %2836 = vmatpush.msra.mxu0 0.0
  %2837 = vmatpush.msra.mxu0 0.0
  %2838 = vmatpush.msra.mxu0 0.0
  %2839 = vmatpush.msra.mxu0 0.0
  %2840 = vmatpush.msra.mxu0 0.0
  %2841 = vmatpush.msra.mxu0 0.0
  %2842 = vmatpush.msra.mxu0 0.0
  %2843 = vmatpush.msra.mxu0 0.0
  %2844 = vmatpush.msra.mxu0 0.0
  %2845 = vmatpush.msra.mxu0 %v2825
  %2846 = vmatmul.f32.gmra.mxu0 %v2828
  %v2847 = vpop.f32.mrf.mxu0
  %v2848 = vadd.f32 0.0, %v2847
  %2849 = vdwg.mxu0
  %v2850 = vld [vmem:[%s3 + $0x18] sm:$0xff]
  %v2852 = vsel %vm110, %v2666, 0
  %v2855 = vsel %vm110, %v2692, 0
  %v2858 = vsel %vm110, %v2718, 0
  %v2861 = vsel %vm110, %v2744, 0
  %v2864 = vsel %vm110, %v2770, 0
  %v2867 = vsel %vm110, %v2796, 0
  %v2870 = vsel %vm110, %v2822, 0
  %v2873 = vsel %vm110, %v2848, 0
  %2875 = vmatpush.msra.mxu0 0.0
  %2876 = vmatpush.msra.mxu0 0.0
  %2877 = vmatpush.msra.mxu0 0.0
  %2878 = vmatpush.msra.mxu0 0.0
  %2879 = vmatpush.msra.mxu0 0.0
  %2880 = vmatpush.msra.mxu0 0.0
  %2881 = vmatpush.msra.mxu0 0.0
  %2882 = vmatpush.msra.mxu0 0.0
  %2883 = vmatpush.msra.mxu0 0.0
  %2884 = vmatpush.msra.mxu0 0.0
  %2885 = vmatpush.msra.mxu0 0.0
  %2886 = vmatpush.msra.mxu0 0.0
  %2887 = vmatpush.msra.mxu0 0.0
  %2888 = vmatpush.msra.mxu0 0.0
  %2889 = vmatpush.msra.mxu0 0.0
  %2890 = vmatpush.msra.mxu0 %v2850
  %2891 = vmatmul.f32.gmra.mxu0 %v2852
  %v2892 = vpop.f32.mrf.mxu0
  %v2893 = vadd.f32 0.0, %v2892
  %2894 = vmatmul.f32.gmra.mxu0 %v2855
  %v2895 = vpop.f32.mrf.mxu0
  %v2896 = vadd.f32 0.0, %v2895
  %2897 = vmatmul.f32.gmra.mxu0 %v2858
  %v2898 = vpop.f32.mrf.mxu0
  %v2899 = vadd.f32 0.0, %v2898
  %2900 = vmatmul.f32.gmra.mxu0 %v2861
  %v2901 = vpop.f32.mrf.mxu0
  %v2902 = vadd.f32 0.0, %v2901
  %2903 = vmatmul.f32.gmra.mxu0 %v2864
  %v2904 = vpop.f32.mrf.mxu0
  %v2905 = vadd.f32 0.0, %v2904
  %2906 = vmatmul.f32.gmra.mxu0 %v2867
  %v2907 = vpop.f32.mrf.mxu0
  %v2908 = vadd.f32 0.0, %v2907
  %2909 = vmatmul.f32.gmra.mxu0 %v2870
  %v2910 = vpop.f32.mrf.mxu0
  %v2911 = vadd.f32 0.0, %v2910
  %2912 = vmatmul.f32.gmra.mxu0 %v2873
  %v2913 = vpop.f32.mrf.mxu0
  %v2914 = vadd.f32 0.0, %v2913
  %2915 = vdwg.mxu0
  %v2916 = vadd.f32 %v2210, %v2893
  %v2917 = vadd.f32 %v2211, %v2896
  %v2918 = vadd.f32 %v2212, %v2899
  %v2919 = vadd.f32 %v2213, %v2902
  %v2920 = vadd.f32 %v2214, %v2905
  %v2921 = vadd.f32 %v2215, %v2908
  %v2922 = vadd.f32 %v2216, %v2911
  %v2923 = vadd.f32 %v2217, %v2914
  %v2924 = vadd.f32 %v20, %v2916
  %v2925 = vadd.f32 %v21, %v2917
  %v2926 = vadd.f32 %v22, %v2918
  %v2927 = vadd.f32 %v23, %v2919
  %v2928 = vadd.f32 %v24, %v2920
  %v2929 = vadd.f32 %v25, %v2921
  %v2930 = vadd.f32 %v26, %v2922
  %v2931 = vadd.f32 %v27, %v2923
  %2932 = vst.msk [vmem:[%s5] sm:$0xff] %vm36, %v2924
  %2933 = vst.msk [vmem:[%s5 + $0x8] sm:$0xff] %vm36, %v2925
  %2934 = vst.msk [vmem:[%s5 + $0x10] sm:$0xff] %vm36, %v2926
  %2935 = vst.msk [vmem:[%s5 + $0x18] sm:$0xff] %vm36, %v2927
  %2936 = vst.msk [vmem:[%s5 + $0x20] sm:$0xff] %vm36, %v2928
  %2937 = vst.msk [vmem:[%s5 + $0x28] sm:$0xff] %vm36, %v2929
  %2938 = vst.msk [vmem:[%s5 + $0x30] sm:$0xff] %vm36, %v2930
  %2939 = vst.msk [vmem:[%s5 + $0x38] sm:$0xff] %vm36, %v2931
  // Predicated region
  $region22: #{_lambda_.3} parent=0 // pred_check
    _
  $region23: #{_lambda_.3} parent=0 // pred_check_branch
    %2941 = sbr.rel (0) target = $region25
  $region24: #{_lambda_.3} parent=0 // pred_region
    _
  $region25: #{_lambda_.3} parent=0 // pred_fallthru
    _
  // Predicated region
  $region26: #{_lambda_.3} parent=0 // pred_check
    _
  $region27: #{_lambda_.3} parent=0 // pred_check_branch
    %2943 = sbr.rel (0) target = $region29
  $region28: #{_lambda_.3} parent=0 // pred_region
    _
  $region29: #{_lambda_.3} parent=0 // pred_fallthru
    _

// kernel: _lambda_.4
$region0: #{_lambda_.4}
  #allocation0 [shape = 'u32[]', space=smem, size = 0x4, offset = 0x4, fixed_abs, tag = 'smem constant byte address 0x4 - core index']
  #allocation1 [shape = 'u32[72,128]{1,0:T(1,128)}', space=vmem, size = 0x9000, scoped, tag = 'internal scratch']
  %s0 = inlined_call_operand.vmem [shape: f32[16,4,32], index: 0, kind: input, shape index: {}]
  %s1 = inlined_call_operand.vmem [shape: f32[32,96], index: 1, kind: input, shape index: {}]
  %s2 = inlined_call_operand.vmem [shape: f32[1,96], index: 2, kind: input, shape index: {}]
  %s3 = inlined_call_operand.vmem [shape: f32[32,32], index: 3, kind: input, shape index: {}]
  %s4 = inlined_call_operand.vmem [shape: f32[1,32], index: 4, kind: input, shape index: {}]
  %s5 = inlined_call_operand.vmem [shape: f32[16,4,32], index: 5, kind: output, shape index: {}]
  %s6 = sld [smem:[#allocation0]]
  $region30: #{_lambda_.4} parent=0
    _
  %s8 = ssub.s32 1, %s6
  %s9 = scalar_select 0, %s8, %s6
  // Predicated region
  $region2: #{_lambda_.4} parent=0 // pred_check
    _
  $region3: #{_lambda_.4} parent=0 // pred_check_branch
    %11 = sbr.rel (0) target = $region5
  $region4: #{_lambda_.4} parent=0 // pred_region
    _
  $region5: #{_lambda_.4} parent=0 // pred_fallthru
    _
  // Predicated region
  $region6: #{_lambda_.4} parent=0 // pred_check
    _
  $region7: #{_lambda_.4} parent=0 // pred_check_branch
    %13 = sbr.rel (0) target = $region9
  $region8: #{_lambda_.4} parent=0 // pred_region
    _
  $region9: #{_lambda_.4} parent=0 // pred_fallthru
    _
  // Predicated region
  $region10: #{_lambda_.4} parent=0 // pred_check
    _
  $region11: #{_lambda_.4} parent=0 // pred_check_branch
    %15 = sbr.rel (0) target = $region13
  $region12: #{_lambda_.4} parent=0 // pred_region
    _
  $region13: #{_lambda_.4} parent=0 // pred_fallthru
    _
  // Predicated region
  $region14: #{_lambda_.4} parent=0 // pred_check
    _
  $region15: #{_lambda_.4} parent=0 // pred_check_branch
    %17 = sbr.rel (0) target = $region17
  $region16: #{_lambda_.4} parent=0 // pred_region
    _
  $region17: #{_lambda_.4} parent=0 // pred_fallthru
    _
  // Predicated region
  $region18: #{_lambda_.4} parent=0 // pred_check
    _
  $region19: #{_lambda_.4} parent=0 // pred_check_branch
    %19 = sbr.rel (0) target = $region21
  $region20: #{_lambda_.4} parent=0 // pred_region
    _
  $region21: #{_lambda_.4} parent=0 // pred_fallthru
    _
  %v20 = vld [vmem:[%s0] sm:$0xf]
  %v21 = vld [vmem:[%s0 + $0x4] sm:$0xf]
  %v22 = vld [vmem:[%s0 + $0x8] sm:$0xf]
  %v23 = vld [vmem:[%s0 + $0xc] sm:$0xf]
  %v24 = vld [vmem:[%s0 + $0x10] sm:$0xf]
  %v25 = vld [vmem:[%s0 + $0x14] sm:$0xf]
  %v26 = vld [vmem:[%s0 + $0x18] sm:$0xf]
  %v27 = vld [vmem:[%s0 + $0x1c] sm:$0xf]
  %v28 = vld [vmem:[%s0 + $0x20] sm:$0xf]
  %v29 = vld [vmem:[%s0 + $0x24] sm:$0xf]
  %v30 = vld [vmem:[%s0 + $0x28] sm:$0xf]
  %v31 = vld [vmem:[%s0 + $0x2c] sm:$0xf]
  %v32 = vld [vmem:[%s0 + $0x30] sm:$0xf]
  %v33 = vld [vmem:[%s0 + $0x34] sm:$0xf]
  %v34 = vld [vmem:[%s0 + $0x38] sm:$0xf]
  %v35 = vld [vmem:[%s0 + $0x3c] sm:$0xf]
  %v36 = vld [vmem:[%s1] sm:$0xff]
  %v37 = vld [vmem:[%s1 + $0x8] sm:$0xff]
  %v38 = vld [vmem:[%s1 + $0x10] sm:$0xff]
  %v39 = vld [vmem:[%s1 + $0x18] sm:$0xff]
  %v40 = vld [vmem:[%s2] sm:$0x1]
  %v42 = vperm.slane %v40, 0
  %60 = vst [vmem:[#allocation1] ss:$2 sm:$0xff] %v20
  %s61 = scalar_lea.vmem [#allocation1], 1
  %62 = vst [vmem:[%s61] ss:$2 sm:$0xff] %v21
  %s63 = scalar_lea.vmem [#allocation1], 16
  %64 = vst [vmem:[%s63] ss:$2 sm:$0xff] %v22
  %s65 = scalar_lea.vmem [#allocation1], 17
  %66 = vst [vmem:[%s65] ss:$2 sm:$0xff] %v23
  %s67 = scalar_lea.vmem [#allocation1], 32
  %68 = vst [vmem:[%s67] ss:$2 sm:$0xff] %v24
  %s69 = scalar_lea.vmem [#allocation1], 33
  %70 = vst [vmem:[%s69] ss:$2 sm:$0xff] %v25
  %s71 = scalar_lea.vmem [#allocation1], 48
  %72 = vst [vmem:[%s71] ss:$2 sm:$0xff] %v26
  %s73 = scalar_lea.vmem [#allocation1], 49
  %74 = vst [vmem:[%s73] ss:$2 sm:$0xff] %v27
  %v75 = vld.sshfl [vmem:[#allocation1] sm:$0xff pattern:$0x75316420]
  %v76 = vld.sshfl [vmem:[#allocation1 + $0x10] sm:$0xff pattern:$0x75316420]
  %v77 = vld.sshfl [vmem:[#allocation1 + $0x20] sm:$0xff pattern:$0x75316420]
  %v78 = vld.sshfl [vmem:[#allocation1 + $0x30] sm:$0xff pattern:$0x75316420]
  %79 = vst [vmem:[#allocation1] ss:$2 sm:$0xff] %v28
  %80 = vst [vmem:[%s61] ss:$2 sm:$0xff] %v29
  %81 = vst [vmem:[%s63] ss:$2 sm:$0xff] %v30
  %82 = vst [vmem:[%s65] ss:$2 sm:$0xff] %v31
  %83 = vst [vmem:[%s67] ss:$2 sm:$0xff] %v32
  %84 = vst [vmem:[%s69] ss:$2 sm:$0xff] %v33
  %85 = vst [vmem:[%s71] ss:$2 sm:$0xff] %v34
  %86 = vst [vmem:[%s73] ss:$2 sm:$0xff] %v35
  %v87 = vld.sshfl [vmem:[#allocation1] sm:$0xff pattern:$0x75316420]
  %v88 = vld.sshfl [vmem:[#allocation1 + $0x10] sm:$0xff pattern:$0x75316420]
  %v89 = vld.sshfl [vmem:[#allocation1 + $0x20] sm:$0xff pattern:$0x75316420]
  %v90 = vld.sshfl [vmem:[#allocation1 + $0x30] sm:$0xff pattern:$0x75316420]
  %vm91 = vcmask 261120
  %v92 = vsel %vm91, %v75, 0
  %v94 = vsel %vm91, %v76, 0
  %v96 = vsel %vm91, %v77, 0
  %v98 = vsel %vm91, %v78, 0
  %v100 = vsel %vm91, %v87, 0
  %v102 = vsel %vm91, %v88, 0
  %v104 = vsel %vm91, %v89, 0
  %v106 = vsel %vm91, %v90, 0
  %108 = vmatpush.msra.mxu0 0.0
  %109 = vmatpush.msra.mxu0 0.0
  %110 = vmatpush.msra.mxu0 0.0
  %111 = vmatpush.msra.mxu0 0.0
  %112 = vmatpush.msra.mxu0 0.0
  %113 = vmatpush.msra.mxu0 0.0
  %114 = vmatpush.msra.mxu0 0.0
  %115 = vmatpush.msra.mxu0 0.0
  %116 = vmatpush.msra.mxu0 0.0
  %117 = vmatpush.msra.mxu0 0.0
  %118 = vmatpush.msra.mxu0 0.0
  %119 = vmatpush.msra.mxu0 0.0
  %120 = vmatpush.msra.mxu0 %v39
  %121 = vmatpush.msra.mxu0 %v38
  %122 = vmatpush.msra.mxu0 %v37
  %123 = vmatpush.msra.mxu0 %v36
  %124 = vmatmul.f32.gmra.mxu0 %v92
  %v125 = vpop.f32.mrf.mxu0
  %v126 = vadd.f32 %v42, %v125
  %127 = vmatmul.f32.gmra.mxu0 %v94
  %v128 = vpop.f32.mrf.mxu0
  %v129 = vadd.f32 %v42, %v128
  %130 = vmatmul.f32.gmra.mxu0 %v96
  %v131 = vpop.f32.mrf.mxu0
  %v132 = vadd.f32 %v42, %v131
  %133 = vmatmul.f32.gmra.mxu0 %v98
  %v134 = vpop.f32.mrf.mxu0
  %v135 = vadd.f32 %v42, %v134
  %136 = vmatmul.f32.gmra.mxu0 %v100
  %v137 = vpop.f32.mrf.mxu0
  %v138 = vadd.f32 %v42, %v137
  %139 = vmatmul.f32.gmra.mxu0 %v102
  %v140 = vpop.f32.mrf.mxu0
  %v141 = vadd.f32 %v42, %v140
  %142 = vmatmul.f32.gmra.mxu0 %v104
  %v143 = vpop.f32.mrf.mxu0
  %v144 = vadd.f32 %v42, %v143
  %145 = vmatmul.f32.gmra.mxu0 %v106
  %v146 = vpop.f32.mrf.mxu0
  %v147 = vadd.f32 %v42, %v146
  %148 = vdwg.mxu0
  %v157 = vrot.slane %v126, 4
  %v158 = vrot.slane %v129, 4
  %v159 = vrot.slane %v132, 4
  %v160 = vrot.slane %v135, 4
  %v161 = vrot.slane %v138, 4
  %v162 = vrot.slane %v141, 4
  %v163 = vrot.slane %v144, 4
  %v164 = vrot.slane %v147, 4
  %v165 = vld [vmem:[%s4] sm:$0x1]
  %v167 = vperm.slane %v165, 0
  %v169 = vadd.f32 %v167, 0.0
  %170 = vst [vmem:[#allocation1] ss:$2 sm:$0xff] %v126
  %v171 = vld.sshfl [vmem:[#allocation1] sm:$0xff pattern:$0x75316420]
  %172 = vrot.lane.b32.xlu0 %v171, 96
  %v173 = vpop.permute.xlu0 %172
  %vm174 = vcmask 64512
  %v175 = vsel %vm174, %v126, 0
  %v177 = vsel %vm174, %v173, 0
  %179 = vmatpush.xpose.msra.mxu0 0.0
  %180 = vmatpush.xpose.msra.mxu0 0.0
  %181 = vmatpush.xpose.msra.mxu0 0.0
  %182 = vmatpush.xpose.msra.mxu0 0.0
  %183 = vmatpush.xpose.msra.mxu0 0.0
  %184 = vmatpush.xpose.msra.mxu0 0.0
  %185 = vmatpush.xpose.msra.mxu0 0.0
  %186 = vmatpush.xpose.msra.mxu0 0.0
  %187 = vmatpush.xpose.msra.mxu0 0.0
  %188 = vmatpush.xpose.msra.mxu0 0.0
  %189 = vmatpush.xpose.msra.mxu0 0.0
  %190 = vmatpush.xpose.msra.mxu0 0.0
  %191 = vmatpush.xpose.msra.mxu0 0.0
  %192 = vmatpush.xpose.msra.mxu0 0.0
  %193 = vmatpush.xpose.msra.mxu0 0.0
  %194 = vmatpush.xpose.msra.mxu0 %v177
  %195 = vmatmul.f32.gmra.mxu0 %v175
  %v196 = vpop.f32.mrf.mxu0
  %v197 = vadd.f32 0.0, %v196
  %198 = vdwg.mxu0
  %199 = vst [vmem:[#allocation1] ss:$2 sm:$0xff] %v157
  %v200 = vld.sshfl [vmem:[#allocation1] sm:$0xff pattern:$0x75316420]
  %201 = vrot.lane.b32.xlu0 %v200, 96
  %v202 = vpop.permute.xlu0 %201
  %v203 = vsel %vm174, %v157, 0
  %v205 = vsel %vm174, %v202, 0
  %207 = vmatpush.xpose.msra.mxu0 0.0
  %208 = vmatpush.xpose.msra.mxu0 0.0
  %209 = vmatpush.xpose.msra.mxu0 0.0
  %210 = vmatpush.xpose.msra.mxu0 0.0
  %211 = vmatpush.xpose.msra.mxu0 0.0
  %212 = vmatpush.xpose.msra.mxu0 0.0
  %213 = vmatpush.xpose.msra.mxu0 0.0
  %214 = vmatpush.xpose.msra.mxu0 0.0
  %215 = vmatpush.xpose.msra.mxu0 0.0
  %216 = vmatpush.xpose.msra.mxu0 0.0
  %217 = vmatpush.xpose.msra.mxu0 0.0
  %218 = vmatpush.xpose.msra.mxu0 0.0
  %219 = vmatpush.xpose.msra.mxu0 0.0
  %220 = vmatpush.xpose.msra.mxu0 0.0
  %221 = vmatpush.xpose.msra.mxu0 0.0
  %222 = vmatpush.xpose.msra.mxu0 %v205
  %223 = vmatmul.f32.gmra.mxu0 %v203
  %v224 = vpop.f32.mrf.mxu0
  %v225 = vadd.f32 0.0, %v224
  %226 = vdwg.mxu0
  %227 = vst [vmem:[#allocation1] ss:$2 sm:$0xff] %v129
  %v228 = vld.sshfl [vmem:[#allocation1] sm:$0xff pattern:$0x75316420]
  %229 = vrot.lane.b32.xlu0 %v228, 96
  %v230 = vpop.permute.xlu0 %229
  %v231 = vsel %vm174, %v129, 0
  %v233 = vsel %vm174, %v230, 0
  %235 = vmatpush.xpose.msra.mxu0 0.0
  %236 = vmatpush.xpose.msra.mxu0 0.0
  %237 = vmatpush.xpose.msra.mxu0 0.0
  %238 = vmatpush.xpose.msra.mxu0 0.0
  %239 = vmatpush.xpose.msra.mxu0 0.0
  %240 = vmatpush.xpose.msra.mxu0 0.0
  %241 = vmatpush.xpose.msra.mxu0 0.0
  %242 = vmatpush.xpose.msra.mxu0 0.0
  %243 = vmatpush.xpose.msra.mxu0 0.0
  %244 = vmatpush.xpose.msra.mxu0 0.0
  %245 = vmatpush.xpose.msra.mxu0 0.0
  %246 = vmatpush.xpose.msra.mxu0 0.0
  %247 = vmatpush.xpose.msra.mxu0 0.0
  %248 = vmatpush.xpose.msra.mxu0 0.0
  %249 = vmatpush.xpose.msra.mxu0 0.0
  %250 = vmatpush.xpose.msra.mxu0 %v233
  %251 = vmatmul.f32.gmra.mxu0 %v231
  %v252 = vpop.f32.mrf.mxu0
  %v253 = vadd.f32 0.0, %v252
  %254 = vdwg.mxu0
  %255 = vst [vmem:[#allocation1] ss:$2 sm:$0xff] %v158
  %v256 = vld.sshfl [vmem:[#allocation1] sm:$0xff pattern:$0x75316420]
  %257 = vrot.lane.b32.xlu0 %v256, 96
  %v258 = vpop.permute.xlu0 %257
  %v259 = vsel %vm174, %v158, 0
  %v261 = vsel %vm174, %v258, 0
  %263 = vmatpush.xpose.msra.mxu0 0.0
  %264 = vmatpush.xpose.msra.mxu0 0.0
  %265 = vmatpush.xpose.msra.mxu0 0.0
  %266 = vmatpush.xpose.msra.mxu0 0.0
  %267 = vmatpush.xpose.msra.mxu0 0.0
  %268 = vmatpush.xpose.msra.mxu0 0.0
  %269 = vmatpush.xpose.msra.mxu0 0.0
  %270 = vmatpush.xpose.msra.mxu0 0.0
  %271 = vmatpush.xpose.msra.mxu0 0.0
  %272 = vmatpush.xpose.msra.mxu0 0.0
  %273 = vmatpush.xpose.msra.mxu0 0.0
  %274 = vmatpush.xpose.msra.mxu0 0.0
  %275 = vmatpush.xpose.msra.mxu0 0.0
  %276 = vmatpush.xpose.msra.mxu0 0.0
  %277 = vmatpush.xpose.msra.mxu0 0.0
  %278 = vmatpush.xpose.msra.mxu0 %v261
  %279 = vmatmul.f32.gmra.mxu0 %v259
  %v280 = vpop.f32.mrf.mxu0
  %v281 = vadd.f32 0.0, %v280
  %282 = vdwg.mxu0
  %283 = vst [vmem:[#allocation1] ss:$2 sm:$0xff] %v132
  %v284 = vld.sshfl [vmem:[#allocation1] sm:$0xff pattern:$0x75316420]
  %285 = vrot.lane.b32.xlu0 %v284, 96
  %v286 = vpop.permute.xlu0 %285
  %v287 = vsel %vm174, %v132, 0
  %v289 = vsel %vm174, %v286, 0
  %291 = vmatpush.xpose.msra.mxu0 0.0
  %292 = vmatpush.xpose.msra.mxu0 0.0
  %293 = vmatpush.xpose.msra.mxu0 0.0
  %294 = vmatpush.xpose.msra.mxu0 0.0
  %295 = vmatpush.xpose.msra.mxu0 0.0
  %296 = vmatpush.xpose.msra.mxu0 0.0
  %297 = vmatpush.xpose.msra.mxu0 0.0
  %298 = vmatpush.xpose.msra.mxu0 0.0
  %299 = vmatpush.xpose.msra.mxu0 0.0
  %300 = vmatpush.xpose.msra.mxu0 0.0
  %301 = vmatpush.xpose.msra.mxu0 0.0
  %302 = vmatpush.xpose.msra.mxu0 0.0
  %303 = vmatpush.xpose.msra.mxu0 0.0
  %304 = vmatpush.xpose.msra.mxu0 0.0
  %305 = vmatpush.xpose.msra.mxu0 0.0
  %306 = vmatpush.xpose.msra.mxu0 %v289
  %307 = vmatmul.f32.gmra.mxu0 %v287
  %v308 = vpop.f32.mrf.mxu0
  %v309 = vadd.f32 0.0, %v308
  %310 = vdwg.mxu0
  %311 = vst [vmem:[#allocation1] ss:$2 sm:$0xff] %v159
  %v312 = vld.sshfl [vmem:[#allocation1] sm:$0xff pattern:$0x75316420]
  %313 = vrot.lane.b32.xlu0 %v312, 96
  %v314 = vpop.permute.xlu0 %313
  %v315 = vsel %vm174, %v159, 0
  %v317 = vsel %vm174, %v314, 0
  %319 = vmatpush.xpose.msra.mxu0 0.0
  %320 = vmatpush.xpose.msra.mxu0 0.0
  %321 = vmatpush.xpose.msra.mxu0 0.0
  %322 = vmatpush.xpose.msra.mxu0 0.0
  %323 = vmatpush.xpose.msra.mxu0 0.0
  %324 = vmatpush.xpose.msra.mxu0 0.0
  %325 = vmatpush.xpose.msra.mxu0 0.0
  %326 = vmatpush.xpose.msra.mxu0 0.0
  %327 = vmatpush.xpose.msra.mxu0 0.0
  %328 = vmatpush.xpose.msra.mxu0 0.0
  %329 = vmatpush.xpose.msra.mxu0 0.0
  %330 = vmatpush.xpose.msra.mxu0 0.0
  %331 = vmatpush.xpose.msra.mxu0 0.0
  %332 = vmatpush.xpose.msra.mxu0 0.0
  %333 = vmatpush.xpose.msra.mxu0 0.0
  %334 = vmatpush.xpose.msra.mxu0 %v317
  %335 = vmatmul.f32.gmra.mxu0 %v315
  %v336 = vpop.f32.mrf.mxu0
  %v337 = vadd.f32 0.0, %v336
  %338 = vdwg.mxu0
  %339 = vst [vmem:[#allocation1] ss:$2 sm:$0xff] %v135
  %v340 = vld.sshfl [vmem:[#allocation1] sm:$0xff pattern:$0x75316420]
  %341 = vrot.lane.b32.xlu0 %v340, 96
  %v342 = vpop.permute.xlu0 %341
  %v343 = vsel %vm174, %v135, 0
  %v345 = vsel %vm174, %v342, 0
  %347 = vmatpush.xpose.msra.mxu0 0.0
  %348 = vmatpush.xpose.msra.mxu0 0.0
  %349 = vmatpush.xpose.msra.mxu0 0.0
  %350 = vmatpush.xpose.msra.mxu0 0.0
  %351 = vmatpush.xpose.msra.mxu0 0.0
  %352 = vmatpush.xpose.msra.mxu0 0.0
  %353 = vmatpush.xpose.msra.mxu0 0.0
  %354 = vmatpush.xpose.msra.mxu0 0.0
  %355 = vmatpush.xpose.msra.mxu0 0.0
  %356 = vmatpush.xpose.msra.mxu0 0.0
  %357 = vmatpush.xpose.msra.mxu0 0.0
  %358 = vmatpush.xpose.msra.mxu0 0.0
  %359 = vmatpush.xpose.msra.mxu0 0.0
  %360 = vmatpush.xpose.msra.mxu0 0.0
  %361 = vmatpush.xpose.msra.mxu0 0.0
  %362 = vmatpush.xpose.msra.mxu0 %v345
  %363 = vmatmul.f32.gmra.mxu0 %v343
  %v364 = vpop.f32.mrf.mxu0
  %v365 = vadd.f32 0.0, %v364
  %366 = vdwg.mxu0
  %367 = vst [vmem:[#allocation1] ss:$2 sm:$0xff] %v160
  %v368 = vld.sshfl [vmem:[#allocation1] sm:$0xff pattern:$0x75316420]
  %369 = vrot.lane.b32.xlu0 %v368, 96
  %v370 = vpop.permute.xlu0 %369
  %v371 = vsel %vm174, %v160, 0
  %v373 = vsel %vm174, %v370, 0
  %375 = vmatpush.xpose.msra.mxu0 0.0
  %376 = vmatpush.xpose.msra.mxu0 0.0
  %377 = vmatpush.xpose.msra.mxu0 0.0
  %378 = vmatpush.xpose.msra.mxu0 0.0
  %379 = vmatpush.xpose.msra.mxu0 0.0
  %380 = vmatpush.xpose.msra.mxu0 0.0
  %381 = vmatpush.xpose.msra.mxu0 0.0
  %382 = vmatpush.xpose.msra.mxu0 0.0
  %383 = vmatpush.xpose.msra.mxu0 0.0
  %384 = vmatpush.xpose.msra.mxu0 0.0
  %385 = vmatpush.xpose.msra.mxu0 0.0
  %386 = vmatpush.xpose.msra.mxu0 0.0
  %387 = vmatpush.xpose.msra.mxu0 0.0
  %388 = vmatpush.xpose.msra.mxu0 0.0
  %389 = vmatpush.xpose.msra.mxu0 0.0
  %390 = vmatpush.xpose.msra.mxu0 %v373
  %391 = vmatmul.f32.gmra.mxu0 %v371
  %v392 = vpop.f32.mrf.mxu0
  %v393 = vadd.f32 0.0, %v392
  %394 = vdwg.mxu0
  %395 = vst [vmem:[#allocation1] ss:$2 sm:$0xff] %v138
  %v396 = vld.sshfl [vmem:[#allocation1] sm:$0xff pattern:$0x75316420]
  %397 = vrot.lane.b32.xlu0 %v396, 96
  %v398 = vpop.permute.xlu0 %397
  %v399 = vsel %vm174, %v138, 0
  %v401 = vsel %vm174, %v398, 0
  %403 = vmatpush.xpose.msra.mxu0 0.0
  %404 = vmatpush.xpose.msra.mxu0 0.0
  %405 = vmatpush.xpose.msra.mxu0 0.0
  %406 = vmatpush.xpose.msra.mxu0 0.0
  %407 = vmatpush.xpose.msra.mxu0 0.0
  %408 = vmatpush.xpose.msra.mxu0 0.0
  %409 = vmatpush.xpose.msra.mxu0 0.0
  %410 = vmatpush.xpose.msra.mxu0 0.0
  %411 = vmatpush.xpose.msra.mxu0 0.0
  %412 = vmatpush.xpose.msra.mxu0 0.0
  %413 = vmatpush.xpose.msra.mxu0 0.0
  %414 = vmatpush.xpose.msra.mxu0 0.0
  %415 = vmatpush.xpose.msra.mxu0 0.0
  %416 = vmatpush.xpose.msra.mxu0 0.0
  %417 = vmatpush.xpose.msra.mxu0 0.0
  %418 = vmatpush.xpose.msra.mxu0 %v401
  %419 = vmatmul.f32.gmra.mxu0 %v399
  %v420 = vpop.f32.mrf.mxu0
  %v421 = vadd.f32 0.0, %v420
  %422 = vdwg.mxu0
  %423 = vst [vmem:[#allocation1] ss:$2 sm:$0xff] %v161
  %v424 = vld.sshfl [vmem:[#allocation1] sm:$0xff pattern:$0x75316420]
  %425 = vrot.lane.b32.xlu0 %v424, 96
  %v426 = vpop.permute.xlu0 %425
  %v427 = vsel %vm174, %v161, 0
  %v429 = vsel %vm174, %v426, 0
  %431 = vmatpush.xpose.msra.mxu0 0.0
  %432 = vmatpush.xpose.msra.mxu0 0.0
  %433 = vmatpush.xpose.msra.mxu0 0.0
  %434 = vmatpush.xpose.msra.mxu0 0.0
  %435 = vmatpush.xpose.msra.mxu0 0.0
  %436 = vmatpush.xpose.msra.mxu0 0.0
  %437 = vmatpush.xpose.msra.mxu0 0.0
  %438 = vmatpush.xpose.msra.mxu0 0.0
  %439 = vmatpush.xpose.msra.mxu0 0.0
  %440 = vmatpush.xpose.msra.mxu0 0.0
  %441 = vmatpush.xpose.msra.mxu0 0.0
  %442 = vmatpush.xpose.msra.mxu0 0.0
  %443 = vmatpush.xpose.msra.mxu0 0.0
  %444 = vmatpush.xpose.msra.mxu0 0.0
  %445 = vmatpush.xpose.msra.mxu0 0.0
  %446 = vmatpush.xpose.msra.mxu0 %v429
  %447 = vmatmul.f32.gmra.mxu0 %v427
  %v448 = vpop.f32.mrf.mxu0
  %v449 = vadd.f32 0.0, %v448
  %450 = vdwg.mxu0
  %451 = vst [vmem:[#allocation1] ss:$2 sm:$0xff] %v141
  %v452 = vld.sshfl [vmem:[#allocation1] sm:$0xff pattern:$0x75316420]
  %453 = vrot.lane.b32.xlu0 %v452, 96
  %v454 = vpop.permute.xlu0 %453
  %v455 = vsel %vm174, %v141, 0
  %v457 = vsel %vm174, %v454, 0
  %459 = vmatpush.xpose.msra.mxu0 0.0
  %460 = vmatpush.xpose.msra.mxu0 0.0
  %461 = vmatpush.xpose.msra.mxu0 0.0
  %462 = vmatpush.xpose.msra.mxu0 0.0
  %463 = vmatpush.xpose.msra.mxu0 0.0
  %464 = vmatpush.xpose.msra.mxu0 0.0
  %465 = vmatpush.xpose.msra.mxu0 0.0
  %466 = vmatpush.xpose.msra.mxu0 0.0
  %467 = vmatpush.xpose.msra.mxu0 0.0
  %468 = vmatpush.xpose.msra.mxu0 0.0
  %469 = vmatpush.xpose.msra.mxu0 0.0
  %470 = vmatpush.xpose.msra.mxu0 0.0
  %471 = vmatpush.xpose.msra.mxu0 0.0
  %472 = vmatpush.xpose.msra.mxu0 0.0
  %473 = vmatpush.xpose.msra.mxu0 0.0
  %474 = vmatpush.xpose.msra.mxu0 %v457
  %475 = vmatmul.f32.gmra.mxu0 %v455
  %v476 = vpop.f32.mrf.mxu0
  %v477 = vadd.f32 0.0, %v476
  %478 = vdwg.mxu0
  %479 = vst [vmem:[#allocation1] ss:$2 sm:$0xff] %v162
  %v480 = vld.sshfl [vmem:[#allocation1] sm:$0xff pattern:$0x75316420]
  %481 = vrot.lane.b32.xlu0 %v480, 96
  %v482 = vpop.permute.xlu0 %481
  %v483 = vsel %vm174, %v162, 0
  %v485 = vsel %vm174, %v482, 0
  %487 = vmatpush.xpose.msra.mxu0 0.0
  %488 = vmatpush.xpose.msra.mxu0 0.0
  %489 = vmatpush.xpose.msra.mxu0 0.0
  %490 = vmatpush.xpose.msra.mxu0 0.0
  %491 = vmatpush.xpose.msra.mxu0 0.0
  %492 = vmatpush.xpose.msra.mxu0 0.0
  %493 = vmatpush.xpose.msra.mxu0 0.0
  %494 = vmatpush.xpose.msra.mxu0 0.0
  %495 = vmatpush.xpose.msra.mxu0 0.0
  %496 = vmatpush.xpose.msra.mxu0 0.0
  %497 = vmatpush.xpose.msra.mxu0 0.0
  %498 = vmatpush.xpose.msra.mxu0 0.0
  %499 = vmatpush.xpose.msra.mxu0 0.0
  %500 = vmatpush.xpose.msra.mxu0 0.0
  %501 = vmatpush.xpose.msra.mxu0 0.0
  %502 = vmatpush.xpose.msra.mxu0 %v485
  %503 = vmatmul.f32.gmra.mxu0 %v483
  %v504 = vpop.f32.mrf.mxu0
  %v505 = vadd.f32 0.0, %v504
  %506 = vdwg.mxu0
  %507 = vst [vmem:[#allocation1] ss:$2 sm:$0xff] %v144
  %v508 = vld.sshfl [vmem:[#allocation1] sm:$0xff pattern:$0x75316420]
  %509 = vrot.lane.b32.xlu0 %v508, 96
  %v510 = vpop.permute.xlu0 %509
  %v511 = vsel %vm174, %v144, 0
  %v513 = vsel %vm174, %v510, 0
  %515 = vmatpush.xpose.msra.mxu0 0.0
  %516 = vmatpush.xpose.msra.mxu0 0.0
  %517 = vmatpush.xpose.msra.mxu0 0.0
  %518 = vmatpush.xpose.msra.mxu0 0.0
  %519 = vmatpush.xpose.msra.mxu0 0.0
  %520 = vmatpush.xpose.msra.mxu0 0.0
  %521 = vmatpush.xpose.msra.mxu0 0.0
  %522 = vmatpush.xpose.msra.mxu0 0.0
  %523 = vmatpush.xpose.msra.mxu0 0.0
  %524 = vmatpush.xpose.msra.mxu0 0.0
  %525 = vmatpush.xpose.msra.mxu0 0.0
  %526 = vmatpush.xpose.msra.mxu0 0.0
  %527 = vmatpush.xpose.msra.mxu0 0.0
  %528 = vmatpush.xpose.msra.mxu0 0.0
  %529 = vmatpush.xpose.msra.mxu0 0.0
  %530 = vmatpush.xpose.msra.mxu0 %v513
  %531 = vmatmul.f32.gmra.mxu0 %v511
  %v532 = vpop.f32.mrf.mxu0
  %v533 = vadd.f32 0.0, %v532
  %534 = vdwg.mxu0
  %535 = vst [vmem:[#allocation1] ss:$2 sm:$0xff] %v163
  %v536 = vld.sshfl [vmem:[#allocation1] sm:$0xff pattern:$0x75316420]
  %537 = vrot.lane.b32.xlu0 %v536, 96
  %v538 = vpop.permute.xlu0 %537
  %v539 = vsel %vm174, %v163, 0
  %v541 = vsel %vm174, %v538, 0
  %543 = vmatpush.xpose.msra.mxu0 0.0
  %544 = vmatpush.xpose.msra.mxu0 0.0
  %545 = vmatpush.xpose.msra.mxu0 0.0
  %546 = vmatpush.xpose.msra.mxu0 0.0
  %547 = vmatpush.xpose.msra.mxu0 0.0
  %548 = vmatpush.xpose.msra.mxu0 0.0
  %549 = vmatpush.xpose.msra.mxu0 0.0
  %550 = vmatpush.xpose.msra.mxu0 0.0
  %551 = vmatpush.xpose.msra.mxu0 0.0
  %552 = vmatpush.xpose.msra.mxu0 0.0
  %553 = vmatpush.xpose.msra.mxu0 0.0
  %554 = vmatpush.xpose.msra.mxu0 0.0
  %555 = vmatpush.xpose.msra.mxu0 0.0
  %556 = vmatpush.xpose.msra.mxu0 0.0
  %557 = vmatpush.xpose.msra.mxu0 0.0
  %558 = vmatpush.xpose.msra.mxu0 %v541
  %559 = vmatmul.f32.gmra.mxu0 %v539
  %v560 = vpop.f32.mrf.mxu0
  %v561 = vadd.f32 0.0, %v560
  %562 = vdwg.mxu0
  %563 = vst [vmem:[#allocation1] ss:$2 sm:$0xff] %v147
  %v564 = vld.sshfl [vmem:[#allocation1] sm:$0xff pattern:$0x75316420]
  %565 = vrot.lane.b32.xlu0 %v564, 96
  %v566 = vpop.permute.xlu0 %565
  %v567 = vsel %vm174, %v147, 0
  %v569 = vsel %vm174, %v566, 0
  %571 = vmatpush.xpose.msra.mxu0 0.0
  %572 = vmatpush.xpose.msra.mxu0 0.0
  %573 = vmatpush.xpose.msra.mxu0 0.0
  %574 = vmatpush.xpose.msra.mxu0 0.0
  %575 = vmatpush.xpose.msra.mxu0 0.0
  %576 = vmatpush.xpose.msra.mxu0 0.0
  %577 = vmatpush.xpose.msra.mxu0 0.0
  %578 = vmatpush.xpose.msra.mxu0 0.0
  %579 = vmatpush.xpose.msra.mxu0 0.0
  %580 = vmatpush.xpose.msra.mxu0 0.0
  %581 = vmatpush.xpose.msra.mxu0 0.0
  %582 = vmatpush.xpose.msra.mxu0 0.0
  %583 = vmatpush.xpose.msra.mxu0 0.0
  %584 = vmatpush.xpose.msra.mxu0 0.0
  %585 = vmatpush.xpose.msra.mxu0 0.0
  %586 = vmatpush.xpose.msra.mxu0 %v569
  %587 = vmatmul.f32.gmra.mxu0 %v567
  %v588 = vpop.f32.mrf.mxu0
  %v589 = vadd.f32 0.0, %v588
  %590 = vdwg.mxu0
  %591 = vst [vmem:[#allocation1] ss:$2 sm:$0xff] %v164
  %v592 = vld.sshfl [vmem:[#allocation1] sm:$0xff pattern:$0x75316420]
  %593 = vrot.lane.b32.xlu0 %v592, 96
  %v594 = vpop.permute.xlu0 %593
  %v595 = vsel %vm174, %v164, 0
  %v597 = vsel %vm174, %v594, 0
  %599 = vmatpush.xpose.msra.mxu0 0.0
  %600 = vmatpush.xpose.msra.mxu0 0.0
  %601 = vmatpush.xpose.msra.mxu0 0.0
  %602 = vmatpush.xpose.msra.mxu0 0.0
  %603 = vmatpush.xpose.msra.mxu0 0.0
  %604 = vmatpush.xpose.msra.mxu0 0.0
  %605 = vmatpush.xpose.msra.mxu0 0.0
  %606 = vmatpush.xpose.msra.mxu0 0.0
  %607 = vmatpush.xpose.msra.mxu0 0.0
  %608 = vmatpush.xpose.msra.mxu0 0.0
  %609 = vmatpush.xpose.msra.mxu0 0.0
  %610 = vmatpush.xpose.msra.mxu0 0.0
  %611 = vmatpush.xpose.msra.mxu0 0.0
  %612 = vmatpush.xpose.msra.mxu0 0.0
  %613 = vmatpush.xpose.msra.mxu0 0.0
  %614 = vmatpush.xpose.msra.mxu0 %v597
  %615 = vmatmul.f32.gmra.mxu0 %v595
  %v616 = vpop.f32.mrf.mxu0
  %v617 = vadd.f32 0.0, %v616
  %618 = vdwg.mxu0
  %v619 = vmul.f32 %v197, 0.35355338
  %v620 = vmul.f32 %v225, 0.35355338
  %v621 = vmul.f32 %v253, 0.35355338
  %v622 = vmul.f32 %v281, 0.35355338
  %v623 = vmul.f32 %v309, 0.35355338
  %v624 = vmul.f32 %v337, 0.35355338
  %v625 = vmul.f32 %v365, 0.35355338
  %v626 = vmul.f32 %v393, 0.35355338
  %v627 = vmul.f32 %v421, 0.35355338
  %v628 = vmul.f32 %v449, 0.35355338
  %v629 = vmul.f32 %v477, 0.35355338
  %v630 = vmul.f32 %v505, 0.35355338
  %v631 = vmul.f32 %v533, 0.35355338
  %v632 = vmul.f32 %v561, 0.35355338
  %v633 = vmul.f32 %v589, 0.35355338
  %v634 = vmul.f32 %v617, 0.35355338
  %vm635 = vcmask 27648
  %v636 = vsel %vm635, %v619, -inf
  %637 = vmax.xlane.f32.xlu0 %v636
  %v638 = vpop.xlane.xlu0 %637
  %v639 = vsel %vm635, %v620, -inf
  %640 = vmax.xlane.f32.xlu0 %v639
  %v641 = vpop.xlane.xlu0 %640
  %v642 = vsel %vm635, %v621, -inf
  %643 = vmax.xlane.f32.xlu0 %v642
  %v644 = vpop.xlane.xlu0 %643
  %v645 = vsel %vm635, %v622, -inf
  %646 = vmax.xlane.f32.xlu0 %v645
  %v647 = vpop.xlane.xlu0 %646
  %v648 = vsel %vm635, %v623, -inf
  %649 = vmax.xlane.f32.xlu0 %v648
  %v650 = vpop.xlane.xlu0 %649
  %v651 = vsel %vm635, %v624, -inf
  %652 = vmax.xlane.f32.xlu0 %v651
  %v653 = vpop.xlane.xlu0 %652
  %v654 = vsel %vm635, %v625, -inf
  %655 = vmax.xlane.f32.xlu0 %v654
  %v656 = vpop.xlane.xlu0 %655
  %v657 = vsel %vm635, %v626, -inf
  %658 = vmax.xlane.f32.xlu0 %v657
  %v659 = vpop.xlane.xlu0 %658
  %v660 = vsel %vm635, %v627, -inf
  %661 = vmax.xlane.f32.xlu0 %v660
  %v662 = vpop.xlane.xlu0 %661
  %v663 = vsel %vm635, %v628, -inf
  %664 = vmax.xlane.f32.xlu0 %v663
  %v665 = vpop.xlane.xlu0 %664
  %v666 = vsel %vm635, %v629, -inf
  %667 = vmax.xlane.f32.xlu0 %v666
  %v668 = vpop.xlane.xlu0 %667
  %v669 = vsel %vm635, %v630, -inf
  %670 = vmax.xlane.f32.xlu0 %v669
  %v671 = vpop.xlane.xlu0 %670
  %v672 = vsel %vm635, %v631, -inf
  %673 = vmax.xlane.f32.xlu0 %v672
  %v674 = vpop.xlane.xlu0 %673
  %v675 = vsel %vm635, %v632, -inf
  %676 = vmax.xlane.f32.xlu0 %v675
  %v677 = vpop.xlane.xlu0 %676
  %v678 = vsel %vm635, %v633, -inf
  %679 = vmax.xlane.f32.xlu0 %v678
  %v680 = vpop.xlane.xlu0 %679
  %v681 = vsel %vm635, %v634, -inf
  %682 = vmax.xlane.f32.xlu0 %v681
  %v683 = vpop.xlane.xlu0 %682
  %v684 = vsub.f32 %v619, %v638
  %v685 = vsub.f32 %v620, %v641
  %v686 = vsub.f32 %v621, %v644
  %v687 = vsub.f32 %v622, %v647
  %v688 = vsub.f32 %v623, %v650
  %v689 = vsub.f32 %v624, %v653
  %v690 = vsub.f32 %v625, %v656
  %v691 = vsub.f32 %v626, %v659
  %v692 = vsub.f32 %v627, %v662
  %v693 = vsub.f32 %v628, %v665
  %v694 = vsub.f32 %v629, %v668
  %v695 = vsub.f32 %v630, %v671
  %v696 = vsub.f32 %v631, %v674
  %v697 = vsub.f32 %v632, %v677
  %v698 = vsub.f32 %v633, %v680
  %v699 = vsub.f32 %v634, %v683
  %v700 = vmul.f32 %v684, 1.442695
  %v701 = vpow.pop %v700
  %v702 = vmul.f32 %v685, 1.442695
  %v703 = vpow.pop %v702
  %v704 = vmul.f32 %v686, 1.442695
  %v705 = vpow.pop %v704
  %v706 = vmul.f32 %v687, 1.442695
  %v707 = vpow.pop %v706
  %v708 = vmul.f32 %v688, 1.442695
  %v709 = vpow.pop %v708
  %v710 = vmul.f32 %v689, 1.442695
  %v711 = vpow.pop %v710
  %v712 = vmul.f32 %v690, 1.442695
  %v713 = vpow.pop %v712
  %v714 = vmul.f32 %v691, 1.442695
  %v715 = vpow.pop %v714
  %v716 = vmul.f32 %v692, 1.442695
  %v717 = vpow.pop %v716
  %v718 = vmul.f32 %v693, 1.442695
  %v719 = vpow.pop %v718
  %v720 = vmul.f32 %v694, 1.442695
  %v721 = vpow.pop %v720
  %v722 = vmul.f32 %v695, 1.442695
  %v723 = vpow.pop %v722
  %v724 = vmul.f32 %v696, 1.442695
  %v725 = vpow.pop %v724
  %v726 = vmul.f32 %v697, 1.442695
  %v727 = vpow.pop %v726
  %v728 = vmul.f32 %v698, 1.442695
  %v729 = vpow.pop %v728
  %v730 = vmul.f32 %v699, 1.442695
  %v731 = vpow.pop %v730
  %v732 = vsel %vm635, %v701, 0.0
  %733 = vadd.xlane.f32.xlu0 %v732
  %v734 = vpop.xlane.xlu0 %733
  %v735 = vsel %vm635, %v703, 0.0
  %736 = vadd.xlane.f32.xlu0 %v735
  %v737 = vpop.xlane.xlu0 %736
  %v738 = vsel %vm635, %v705, 0.0
  %739 = vadd.xlane.f32.xlu0 %v738
  %v740 = vpop.xlane.xlu0 %739
  %v741 = vsel %vm635, %v707, 0.0
  %742 = vadd.xlane.f32.xlu0 %v741
  %v743 = vpop.xlane.xlu0 %742
  %v744 = vsel %vm635, %v709, 0.0
  %745 = vadd.xlane.f32.xlu0 %v744
  %v746 = vpop.xlane.xlu0 %745
  %v747 = vsel %vm635, %v711, 0.0
  %748 = vadd.xlane.f32.xlu0 %v747
  %v749 = vpop.xlane.xlu0 %748
  %v750 = vsel %vm635, %v713, 0.0
  %751 = vadd.xlane.f32.xlu0 %v750
  %v752 = vpop.xlane.xlu0 %751
  %v753 = vsel %vm635, %v715, 0.0
  %754 = vadd.xlane.f32.xlu0 %v753
  %v755 = vpop.xlane.xlu0 %754
  %v756 = vsel %vm635, %v717, 0.0
  %757 = vadd.xlane.f32.xlu0 %v756
  %v758 = vpop.xlane.xlu0 %757
  %v759 = vsel %vm635, %v719, 0.0
  %760 = vadd.xlane.f32.xlu0 %v759
  %v761 = vpop.xlane.xlu0 %760
  %v762 = vsel %vm635, %v721, 0.0
  %763 = vadd.xlane.f32.xlu0 %v762
  %v764 = vpop.xlane.xlu0 %763
  %v765 = vsel %vm635, %v723, 0.0
  %766 = vadd.xlane.f32.xlu0 %v765
  %v767 = vpop.xlane.xlu0 %766
  %v768 = vsel %vm635, %v725, 0.0
  %769 = vadd.xlane.f32.xlu0 %v768
  %v770 = vpop.xlane.xlu0 %769
  %v771 = vsel %vm635, %v727, 0.0
  %772 = vadd.xlane.f32.xlu0 %v771
  %v773 = vpop.xlane.xlu0 %772
  %v774 = vsel %vm635, %v729, 0.0
  %775 = vadd.xlane.f32.xlu0 %v774
  %v776 = vpop.xlane.xlu0 %775
  %v777 = vsel %vm635, %v731, 0.0
  %778 = vadd.xlane.f32.xlu0 %v777
  %v779 = vpop.xlane.xlu0 %778
  %v780 = vrcp.pop %v734
  %v781 = vmul.f32 %v734, %v780
  %v782 = vsub.f32 1.0, %v781
  %v783 = vmul.f32 %v780, %v782
  %v784 = vadd.f32 %v780, %v783
  %vm785 = vweird.f32 %v734
  %vm786 = vweird.f32 %v780
  %vm787 = vmor %vm785, %vm786
  %v788 = vsel %vm787, %v780, %v784
  %v789 = vand.u32 2147483647, %v734
  %vm790 = vcmp.eq.f32.partialorder %v789, 8.507059e+37
  %v791 = vand.u32 %v734, 2147483648
  %v792 = vor.u32 1.1754944e-38, %v791
  %v793 = vsel %vm790, %v792, %v788
  %v794 = vmul.f32 %v701, %v793
  %v795 = vrcp.pop %v737
  %v796 = vmul.f32 %v737, %v795
  %v797 = vsub.f32 1.0, %v796
  %v798 = vmul.f32 %v795, %v797
  %v799 = vadd.f32 %v795, %v798
  %vm800 = vweird.f32 %v737
  %vm801 = vweird.f32 %v795
  %vm802 = vmor %vm800, %vm801
  %v803 = vsel %vm802, %v795, %v799
  %v804 = vand.u32 2147483647, %v737
  %vm805 = vcmp.eq.f32.partialorder %v804, 8.507059e+37
  %v806 = vand.u32 %v737, 2147483648
  %v807 = vor.u32 1.1754944e-38, %v806
  %v808 = vsel %vm805, %v807, %v803
  %v809 = vmul.f32 %v703, %v808
  %v810 = vrcp.pop %v740
  %v811 = vmul.f32 %v740, %v810
  %v812 = vsub.f32 1.0, %v811
  %v813 = vmul.f32 %v810, %v812
  %v814 = vadd.f32 %v810, %v813
  %vm815 = vweird.f32 %v740
  %vm816 = vweird.f32 %v810
  %vm817 = vmor %vm815, %vm816
  %v818 = vsel %vm817, %v810, %v814
  %v819 = vand.u32 2147483647, %v740
  %vm820 = vcmp.eq.f32.partialorder %v819, 8.507059e+37
  %v821 = vand.u32 %v740, 2147483648
  %v822 = vor.u32 1.1754944e-38, %v821
  %v823 = vsel %vm820, %v822, %v818
  %v824 = vmul.f32 %v705, %v823
  %v825 = vrcp.pop %v743
  %v826 = vmul.f32 %v743, %v825
  %v827 = vsub.f32 1.0, %v826
  %v828 = vmul.f32 %v825, %v827
  %v829 = vadd.f32 %v825, %v828
  %vm830 = vweird.f32 %v743
  %vm831 = vweird.f32 %v825
  %vm832 = vmor %vm830, %vm831
  %v833 = vsel %vm832, %v825, %v829
  %v834 = vand.u32 2147483647, %v743
  %vm835 = vcmp.eq.f32.partialorder %v834, 8.507059e+37
  %v836 = vand.u32 %v743, 2147483648
  %v837 = vor.u32 1.1754944e-38, %v836
  %v838 = vsel %vm835, %v837, %v833
  %v839 = vmul.f32 %v707, %v838
  %v840 = vrcp.pop %v746
  %v841 = vmul.f32 %v746, %v840
  %v842 = vsub.f32 1.0, %v841
  %v843 = vmul.f32 %v840, %v842
  %v844 = vadd.f32 %v840, %v843
  %vm845 = vweird.f32 %v746
  %vm846 = vweird.f32 %v840
  %vm847 = vmor %vm845, %vm846
  %v848 = vsel %vm847, %v840, %v844
  %v849 = vand.u32 2147483647, %v746
  %vm850 = vcmp.eq.f32.partialorder %v849, 8.507059e+37
  %v851 = vand.u32 %v746, 2147483648
  %v852 = vor.u32 1.1754944e-38, %v851
  %v853 = vsel %vm850, %v852, %v848
  %v854 = vmul.f32 %v709, %v853
  %v855 = vrcp.pop %v749
  %v856 = vmul.f32 %v749, %v855
  %v857 = vsub.f32 1.0, %v856
  %v858 = vmul.f32 %v855, %v857
  %v859 = vadd.f32 %v855, %v858
  %vm860 = vweird.f32 %v749
  %vm861 = vweird.f32 %v855
  %vm862 = vmor %vm860, %vm861
  %v863 = vsel %vm862, %v855, %v859
  %v864 = vand.u32 2147483647, %v749
  %vm865 = vcmp.eq.f32.partialorder %v864, 8.507059e+37
  %v866 = vand.u32 %v749, 2147483648
  %v867 = vor.u32 1.1754944e-38, %v866
  %v868 = vsel %vm865, %v867, %v863
  %v869 = vmul.f32 %v711, %v868
  %v870 = vrcp.pop %v752
  %v871 = vmul.f32 %v752, %v870
  %v872 = vsub.f32 1.0, %v871
  %v873 = vmul.f32 %v870, %v872
  %v874 = vadd.f32 %v870, %v873
  %vm875 = vweird.f32 %v752
  %vm876 = vweird.f32 %v870
  %vm877 = vmor %vm875, %vm876
  %v878 = vsel %vm877, %v870, %v874
  %v879 = vand.u32 2147483647, %v752
  %vm880 = vcmp.eq.f32.partialorder %v879, 8.507059e+37
  %v881 = vand.u32 %v752, 2147483648
  %v882 = vor.u32 1.1754944e-38, %v881
  %v883 = vsel %vm880, %v882, %v878
  %v884 = vmul.f32 %v713, %v883
  %v885 = vrcp.pop %v755
  %v886 = vmul.f32 %v755, %v885
  %v887 = vsub.f32 1.0, %v886
  %v888 = vmul.f32 %v885, %v887
  %v889 = vadd.f32 %v885, %v888
  %vm890 = vweird.f32 %v755
  %vm891 = vweird.f32 %v885
  %vm892 = vmor %vm890, %vm891
  %v893 = vsel %vm892, %v885, %v889
  %v894 = vand.u32 2147483647, %v755
  %vm895 = vcmp.eq.f32.partialorder %v894, 8.507059e+37
  %v896 = vand.u32 %v755, 2147483648
  %v897 = vor.u32 1.1754944e-38, %v896
  %v898 = vsel %vm895, %v897, %v893
  %v899 = vmul.f32 %v715, %v898
  %v900 = vrcp.pop %v758
  %v901 = vmul.f32 %v758, %v900
  %v902 = vsub.f32 1.0, %v901
  %v903 = vmul.f32 %v900, %v902
  %v904 = vadd.f32 %v900, %v903
  %vm905 = vweird.f32 %v758
  %vm906 = vweird.f32 %v900
  %vm907 = vmor %vm905, %vm906
  %v908 = vsel %vm907, %v900, %v904
  %v909 = vand.u32 2147483647, %v758
  %vm910 = vcmp.eq.f32.partialorder %v909, 8.507059e+37
  %v911 = vand.u32 %v758, 2147483648
  %v912 = vor.u32 1.1754944e-38, %v911
  %v913 = vsel %vm910, %v912, %v908
  %v914 = vmul.f32 %v717, %v913
  %v915 = vrcp.pop %v761
  %v916 = vmul.f32 %v761, %v915
  %v917 = vsub.f32 1.0, %v916
  %v918 = vmul.f32 %v915, %v917
  %v919 = vadd.f32 %v915, %v918
  %vm920 = vweird.f32 %v761
  %vm921 = vweird.f32 %v915
  %vm922 = vmor %vm920, %vm921
  %v923 = vsel %vm922, %v915, %v919
  %v924 = vand.u32 2147483647, %v761
  %vm925 = vcmp.eq.f32.partialorder %v924, 8.507059e+37
  %v926 = vand.u32 %v761, 2147483648
  %v927 = vor.u32 1.1754944e-38, %v926
  %v928 = vsel %vm925, %v927, %v923
  %v929 = vmul.f32 %v719, %v928
  %v930 = vrcp.pop %v764
  %v931 = vmul.f32 %v764, %v930
  %v932 = vsub.f32 1.0, %v931
  %v933 = vmul.f32 %v930, %v932
  %v934 = vadd.f32 %v930, %v933
  %vm935 = vweird.f32 %v764
  %vm936 = vweird.f32 %v930
  %vm937 = vmor %vm935, %vm936
  %v938 = vsel %vm937, %v930, %v934
  %v939 = vand.u32 2147483647, %v764
  %vm940 = vcmp.eq.f32.partialorder %v939, 8.507059e+37
  %v941 = vand.u32 %v764, 2147483648
  %v942 = vor.u32 1.1754944e-38, %v941
  %v943 = vsel %vm940, %v942, %v938
  %v944 = vmul.f32 %v721, %v943
  %v945 = vrcp.pop %v767
  %v946 = vmul.f32 %v767, %v945
  %v947 = vsub.f32 1.0, %v946
  %v948 = vmul.f32 %v945, %v947
  %v949 = vadd.f32 %v945, %v948
  %vm950 = vweird.f32 %v767
  %vm951 = vweird.f32 %v945
  %vm952 = vmor %vm950, %vm951
  %v953 = vsel %vm952, %v945, %v949
  %v954 = vand.u32 2147483647, %v767
  %vm955 = vcmp.eq.f32.partialorder %v954, 8.507059e+37
  %v956 = vand.u32 %v767, 2147483648
  %v957 = vor.u32 1.1754944e-38, %v956
  %v958 = vsel %vm955, %v957, %v953
  %v959 = vmul.f32 %v723, %v958
  %v960 = vrcp.pop %v770
  %v961 = vmul.f32 %v770, %v960
  %v962 = vsub.f32 1.0, %v961
  %v963 = vmul.f32 %v960, %v962
  %v964 = vadd.f32 %v960, %v963
  %vm965 = vweird.f32 %v770
  %vm966 = vweird.f32 %v960
  %vm967 = vmor %vm965, %vm966
  %v968 = vsel %vm967, %v960, %v964
  %v969 = vand.u32 2147483647, %v770
  %vm970 = vcmp.eq.f32.partialorder %v969, 8.507059e+37
  %v971 = vand.u32 %v770, 2147483648
  %v972 = vor.u32 1.1754944e-38, %v971
  %v973 = vsel %vm970, %v972, %v968
  %v974 = vmul.f32 %v725, %v973
  %v975 = vrcp.pop %v773
  %v976 = vmul.f32 %v773, %v975
  %v977 = vsub.f32 1.0, %v976
  %v978 = vmul.f32 %v975, %v977
  %v979 = vadd.f32 %v975, %v978
  %vm980 = vweird.f32 %v773
  %vm981 = vweird.f32 %v975
  %vm982 = vmor %vm980, %vm981
  %v983 = vsel %vm982, %v975, %v979
  %v984 = vand.u32 2147483647, %v773
  %vm985 = vcmp.eq.f32.partialorder %v984, 8.507059e+37
  %v986 = vand.u32 %v773, 2147483648
  %v987 = vor.u32 1.1754944e-38, %v986
  %v988 = vsel %vm985, %v987, %v983
  %v989 = vmul.f32 %v727, %v988
  %v990 = vrcp.pop %v776
  %v991 = vmul.f32 %v776, %v990
  %v992 = vsub.f32 1.0, %v991
  %v993 = vmul.f32 %v990, %v992
  %v994 = vadd.f32 %v990, %v993
  %vm995 = vweird.f32 %v776
  %vm996 = vweird.f32 %v990
  %vm997 = vmor %vm995, %vm996
  %v998 = vsel %vm997, %v990, %v994
  %v999 = vand.u32 2147483647, %v776
  %vm1000 = vcmp.eq.f32.partialorder %v999, 8.507059e+37
  %v1001 = vand.u32 %v776, 2147483648
  %v1002 = vor.u32 1.1754944e-38, %v1001
  %v1003 = vsel %vm1000, %v1002, %v998
  %v1004 = vmul.f32 %v729, %v1003
  %v1005 = vrcp.pop %v779
  %v1006 = vmul.f32 %v779, %v1005
  %v1007 = vsub.f32 1.0, %v1006
  %v1008 = vmul.f32 %v1005, %v1007
  %v1009 = vadd.f32 %v1005, %v1008
  %vm1010 = vweird.f32 %v779
  %vm1011 = vweird.f32 %v1005
  %vm1012 = vmor %vm1010, %vm1011
  %v1013 = vsel %vm1012, %v1005, %v1009
  %v1014 = vand.u32 2147483647, %v779
  %vm1015 = vcmp.eq.f32.partialorder %v1014, 8.507059e+37
  %v1016 = vand.u32 %v779, 2147483648
  %v1017 = vor.u32 1.1754944e-38, %v1016
  %v1018 = vsel %vm1015, %v1017, %v1013
  %v1019 = vmul.f32 %v731, %v1018
  %1020 = vst [vmem:[#allocation1] ss:$2 sm:$0xff] %v126
  %v1021 = vld.sshfl [vmem:[#allocation1] sm:$0xff pattern:$0x75316420]
  %1022 = vrot.lane.b32.xlu0 %v1021, 64
  %v1023 = vpop.permute.xlu0 %1022
  %vm1024 = vcmask 31744
  %v1026 = vsel %vm1024, %v794, 0
  %vm1028 = vcmask 1043456
  %v1029 = vsel %vm1028, %v1023, 0
  %1031 = vmatpush.msra.mxu0 0.0
  %1032 = vmatpush.msra.mxu0 0.0
  %1033 = vmatpush.msra.mxu0 0.0
  %1034 = vmatpush.msra.mxu0 0.0
  %1035 = vmatpush.msra.mxu0 0.0
  %1036 = vmatpush.msra.mxu0 0.0
  %1037 = vmatpush.msra.mxu0 0.0
  %1038 = vmatpush.msra.mxu0 0.0
  %1039 = vmatpush.msra.mxu0 0.0
  %1040 = vmatpush.msra.mxu0 0.0
  %1041 = vmatpush.msra.mxu0 0.0
  %1042 = vmatpush.msra.mxu0 0.0
  %1043 = vmatpush.msra.mxu0 0.0
  %1044 = vmatpush.msra.mxu0 0.0
  %1045 = vmatpush.msra.mxu0 0.0
  %1046 = vmatpush.msra.mxu0 %v1029
  %1047 = vmatmul.f32.gmra.mxu0 %v1026
  %v1048 = vpop.f32.mrf.mxu0
  %v1049 = vadd.f32 0.0, %v1048
  %1050 = vdwg.mxu0
  %1051 = vst [vmem:[#allocation1] ss:$2 sm:$0xff] %v157
  %v1052 = vld.sshfl [vmem:[#allocation1] sm:$0xff pattern:$0x75316420]
  %1053 = vrot.lane.b32.xlu0 %v1052, 64
  %v1054 = vpop.permute.xlu0 %1053
  %v1056 = vsel %vm1024, %v809, 0
  %v1058 = vsel %vm1028, %v1054, 0
  %1060 = vmatpush.msra.mxu0 0.0
  %1061 = vmatpush.msra.mxu0 0.0
  %1062 = vmatpush.msra.mxu0 0.0
  %1063 = vmatpush.msra.mxu0 0.0
  %1064 = vmatpush.msra.mxu0 0.0
  %1065 = vmatpush.msra.mxu0 0.0
  %1066 = vmatpush.msra.mxu0 0.0
  %1067 = vmatpush.msra.mxu0 0.0
  %1068 = vmatpush.msra.mxu0 0.0
  %1069 = vmatpush.msra.mxu0 0.0
  %1070 = vmatpush.msra.mxu0 0.0
  %1071 = vmatpush.msra.mxu0 0.0
  %1072 = vmatpush.msra.mxu0 0.0
  %1073 = vmatpush.msra.mxu0 0.0
  %1074 = vmatpush.msra.mxu0 0.0
  %1075 = vmatpush.msra.mxu0 %v1058
  %1076 = vmatmul.f32.gmra.mxu0 %v1056
  %v1077 = vpop.f32.mrf.mxu0
  %v1078 = vadd.f32 0.0, %v1077
  %1079 = vdwg.mxu0
  %1080 = vst [vmem:[#allocation1] ss:$2 sm:$0xff] %v129
  %v1081 = vld.sshfl [vmem:[#allocation1] sm:$0xff pattern:$0x75316420]
  %1082 = vrot.lane.b32.xlu0 %v1081, 64
  %v1083 = vpop.permute.xlu0 %1082
  %v1085 = vsel %vm1024, %v824, 0
  %v1087 = vsel %vm1028, %v1083, 0
  %1089 = vmatpush.msra.mxu0 0.0
  %1090 = vmatpush.msra.mxu0 0.0
  %1091 = vmatpush.msra.mxu0 0.0
  %1092 = vmatpush.msra.mxu0 0.0
  %1093 = vmatpush.msra.mxu0 0.0
  %1094 = vmatpush.msra.mxu0 0.0
  %1095 = vmatpush.msra.mxu0 0.0
  %1096 = vmatpush.msra.mxu0 0.0
  %1097 = vmatpush.msra.mxu0 0.0
  %1098 = vmatpush.msra.mxu0 0.0
  %1099 = vmatpush.msra.mxu0 0.0
  %1100 = vmatpush.msra.mxu0 0.0
  %1101 = vmatpush.msra.mxu0 0.0
  %1102 = vmatpush.msra.mxu0 0.0
  %1103 = vmatpush.msra.mxu0 0.0
  %1104 = vmatpush.msra.mxu0 %v1087
  %1105 = vmatmul.f32.gmra.mxu0 %v1085
  %v1106 = vpop.f32.mrf.mxu0
  %v1107 = vadd.f32 0.0, %v1106
  %1108 = vdwg.mxu0
  %1109 = vst [vmem:[#allocation1] ss:$2 sm:$0xff] %v158
  %v1110 = vld.sshfl [vmem:[#allocation1] sm:$0xff pattern:$0x75316420]
  %1111 = vrot.lane.b32.xlu0 %v1110, 64
  %v1112 = vpop.permute.xlu0 %1111
  %v1114 = vsel %vm1024, %v839, 0
  %v1116 = vsel %vm1028, %v1112, 0
  %1118 = vmatpush.msra.mxu0 0.0
  %1119 = vmatpush.msra.mxu0 0.0
  %1120 = vmatpush.msra.mxu0 0.0
  %1121 = vmatpush.msra.mxu0 0.0
  %1122 = vmatpush.msra.mxu0 0.0
  %1123 = vmatpush.msra.mxu0 0.0
  %1124 = vmatpush.msra.mxu0 0.0
  %1125 = vmatpush.msra.mxu0 0.0
  %1126 = vmatpush.msra.mxu0 0.0
  %1127 = vmatpush.msra.mxu0 0.0
  %1128 = vmatpush.msra.mxu0 0.0
  %1129 = vmatpush.msra.mxu0 0.0
  %1130 = vmatpush.msra.mxu0 0.0
  %1131 = vmatpush.msra.mxu0 0.0
  %1132 = vmatpush.msra.mxu0 0.0
  %1133 = vmatpush.msra.mxu0 %v1116
  %1134 = vmatmul.f32.gmra.mxu0 %v1114
  %v1135 = vpop.f32.mrf.mxu0
  %v1136 = vadd.f32 0.0, %v1135
  %1137 = vdwg.mxu0
  %1138 = vst [vmem:[#allocation1] ss:$2 sm:$0xff] %v132
  %v1139 = vld.sshfl [vmem:[#allocation1] sm:$0xff pattern:$0x75316420]
  %1140 = vrot.lane.b32.xlu0 %v1139, 64
  %v1141 = vpop.permute.xlu0 %1140
  %v1143 = vsel %vm1024, %v854, 0
  %v1145 = vsel %vm1028, %v1141, 0
  %1147 = vmatpush.msra.mxu0 0.0
  %1148 = vmatpush.msra.mxu0 0.0
  %1149 = vmatpush.msra.mxu0 0.0
  %1150 = vmatpush.msra.mxu0 0.0
  %1151 = vmatpush.msra.mxu0 0.0
  %1152 = vmatpush.msra.mxu0 0.0
  %1153 = vmatpush.msra.mxu0 0.0
  %1154 = vmatpush.msra.mxu0 0.0
  %1155 = vmatpush.msra.mxu0 0.0
  %1156 = vmatpush.msra.mxu0 0.0
  %1157 = vmatpush.msra.mxu0 0.0
  %1158 = vmatpush.msra.mxu0 0.0
  %1159 = vmatpush.msra.mxu0 0.0
  %1160 = vmatpush.msra.mxu0 0.0
  %1161 = vmatpush.msra.mxu0 0.0
  %1162 = vmatpush.msra.mxu0 %v1145
  %1163 = vmatmul.f32.gmra.mxu0 %v1143
  %v1164 = vpop.f32.mrf.mxu0
  %v1165 = vadd.f32 0.0, %v1164
  %1166 = vdwg.mxu0
  %1167 = vst [vmem:[#allocation1] ss:$2 sm:$0xff] %v159
  %v1168 = vld.sshfl [vmem:[#allocation1] sm:$0xff pattern:$0x75316420]
  %1169 = vrot.lane.b32.xlu0 %v1168, 64
  %v1170 = vpop.permute.xlu0 %1169
  %v1172 = vsel %vm1024, %v869, 0
  %v1174 = vsel %vm1028, %v1170, 0
  %1176 = vmatpush.msra.mxu0 0.0
  %1177 = vmatpush.msra.mxu0 0.0
  %1178 = vmatpush.msra.mxu0 0.0
  %1179 = vmatpush.msra.mxu0 0.0
  %1180 = vmatpush.msra.mxu0 0.0
  %1181 = vmatpush.msra.mxu0 0.0
  %1182 = vmatpush.msra.mxu0 0.0
  %1183 = vmatpush.msra.mxu0 0.0
  %1184 = vmatpush.msra.mxu0 0.0
  %1185 = vmatpush.msra.mxu0 0.0
  %1186 = vmatpush.msra.mxu0 0.0
  %1187 = vmatpush.msra.mxu0 0.0
  %1188 = vmatpush.msra.mxu0 0.0
  %1189 = vmatpush.msra.mxu0 0.0
  %1190 = vmatpush.msra.mxu0 0.0
  %1191 = vmatpush.msra.mxu0 %v1174
  %1192 = vmatmul.f32.gmra.mxu0 %v1172
  %v1193 = vpop.f32.mrf.mxu0
  %v1194 = vadd.f32 0.0, %v1193
  %1195 = vdwg.mxu0
  %1196 = vst [vmem:[#allocation1] ss:$2 sm:$0xff] %v135
  %v1197 = vld.sshfl [vmem:[#allocation1] sm:$0xff pattern:$0x75316420]
  %1198 = vrot.lane.b32.xlu0 %v1197, 64
  %v1199 = vpop.permute.xlu0 %1198
  %v1201 = vsel %vm1024, %v884, 0
  %v1203 = vsel %vm1028, %v1199, 0
  %1205 = vmatpush.msra.mxu0 0.0
  %1206 = vmatpush.msra.mxu0 0.0
  %1207 = vmatpush.msra.mxu0 0.0
  %1208 = vmatpush.msra.mxu0 0.0
  %1209 = vmatpush.msra.mxu0 0.0
  %1210 = vmatpush.msra.mxu0 0.0
  %1211 = vmatpush.msra.mxu0 0.0
  %1212 = vmatpush.msra.mxu0 0.0
  %1213 = vmatpush.msra.mxu0 0.0
  %1214 = vmatpush.msra.mxu0 0.0
  %1215 = vmatpush.msra.mxu0 0.0
  %1216 = vmatpush.msra.mxu0 0.0
  %1217 = vmatpush.msra.mxu0 0.0
  %1218 = vmatpush.msra.mxu0 0.0
  %1219 = vmatpush.msra.mxu0 0.0
  %1220 = vmatpush.msra.mxu0 %v1203
  %1221 = vmatmul.f32.gmra.mxu0 %v1201
  %v1222 = vpop.f32.mrf.mxu0
  %v1223 = vadd.f32 0.0, %v1222
  %1224 = vdwg.mxu0
  %1225 = vst [vmem:[#allocation1] ss:$2 sm:$0xff] %v160
  %v1226 = vld.sshfl [vmem:[#allocation1] sm:$0xff pattern:$0x75316420]
  %1227 = vrot.lane.b32.xlu0 %v1226, 64
  %v1228 = vpop.permute.xlu0 %1227
  %v1230 = vsel %vm1024, %v899, 0
  %v1232 = vsel %vm1028, %v1228, 0
  %1234 = vmatpush.msra.mxu0 0.0
  %1235 = vmatpush.msra.mxu0 0.0
  %1236 = vmatpush.msra.mxu0 0.0
  %1237 = vmatpush.msra.mxu0 0.0
  %1238 = vmatpush.msra.mxu0 0.0
  %1239 = vmatpush.msra.mxu0 0.0
  %1240 = vmatpush.msra.mxu0 0.0
  %1241 = vmatpush.msra.mxu0 0.0
  %1242 = vmatpush.msra.mxu0 0.0
  %1243 = vmatpush.msra.mxu0 0.0
  %1244 = vmatpush.msra.mxu0 0.0
  %1245 = vmatpush.msra.mxu0 0.0
  %1246 = vmatpush.msra.mxu0 0.0
  %1247 = vmatpush.msra.mxu0 0.0
  %1248 = vmatpush.msra.mxu0 0.0
  %1249 = vmatpush.msra.mxu0 %v1232
  %1250 = vmatmul.f32.gmra.mxu0 %v1230
  %v1251 = vpop.f32.mrf.mxu0
  %v1252 = vadd.f32 0.0, %v1251
  %1253 = vdwg.mxu0
  %1254 = vst [vmem:[#allocation1] ss:$2 sm:$0xff] %v138
  %v1255 = vld.sshfl [vmem:[#allocation1] sm:$0xff pattern:$0x75316420]
  %1256 = vrot.lane.b32.xlu0 %v1255, 64
  %v1257 = vpop.permute.xlu0 %1256
  %v1259 = vsel %vm1024, %v914, 0
  %v1261 = vsel %vm1028, %v1257, 0
  %1263 = vmatpush.msra.mxu0 0.0
  %1264 = vmatpush.msra.mxu0 0.0
  %1265 = vmatpush.msra.mxu0 0.0
  %1266 = vmatpush.msra.mxu0 0.0
  %1267 = vmatpush.msra.mxu0 0.0
  %1268 = vmatpush.msra.mxu0 0.0
  %1269 = vmatpush.msra.mxu0 0.0
  %1270 = vmatpush.msra.mxu0 0.0
  %1271 = vmatpush.msra.mxu0 0.0
  %1272 = vmatpush.msra.mxu0 0.0
  %1273 = vmatpush.msra.mxu0 0.0
  %1274 = vmatpush.msra.mxu0 0.0
  %1275 = vmatpush.msra.mxu0 0.0
  %1276 = vmatpush.msra.mxu0 0.0
  %1277 = vmatpush.msra.mxu0 0.0
  %1278 = vmatpush.msra.mxu0 %v1261
  %1279 = vmatmul.f32.gmra.mxu0 %v1259
  %v1280 = vpop.f32.mrf.mxu0
  %v1281 = vadd.f32 0.0, %v1280
  %1282 = vdwg.mxu0
  %1283 = vst [vmem:[#allocation1] ss:$2 sm:$0xff] %v161
  %v1284 = vld.sshfl [vmem:[#allocation1] sm:$0xff pattern:$0x75316420]
  %1285 = vrot.lane.b32.xlu0 %v1284, 64
  %v1286 = vpop.permute.xlu0 %1285
  %v1288 = vsel %vm1024, %v929, 0
  %v1290 = vsel %vm1028, %v1286, 0
  %1292 = vmatpush.msra.mxu0 0.0
  %1293 = vmatpush.msra.mxu0 0.0
  %1294 = vmatpush.msra.mxu0 0.0
  %1295 = vmatpush.msra.mxu0 0.0
  %1296 = vmatpush.msra.mxu0 0.0
  %1297 = vmatpush.msra.mxu0 0.0
  %1298 = vmatpush.msra.mxu0 0.0
  %1299 = vmatpush.msra.mxu0 0.0
  %1300 = vmatpush.msra.mxu0 0.0
  %1301 = vmatpush.msra.mxu0 0.0
  %1302 = vmatpush.msra.mxu0 0.0
  %1303 = vmatpush.msra.mxu0 0.0
  %1304 = vmatpush.msra.mxu0 0.0
  %1305 = vmatpush.msra.mxu0 0.0
  %1306 = vmatpush.msra.mxu0 0.0
  %1307 = vmatpush.msra.mxu0 %v1290
  %1308 = vmatmul.f32.gmra.mxu0 %v1288
  %v1309 = vpop.f32.mrf.mxu0
  %v1310 = vadd.f32 0.0, %v1309
  %1311 = vdwg.mxu0
  %1312 = vst [vmem:[#allocation1] ss:$2 sm:$0xff] %v141
  %v1313 = vld.sshfl [vmem:[#allocation1] sm:$0xff pattern:$0x75316420]
  %1314 = vrot.lane.b32.xlu0 %v1313, 64
  %v1315 = vpop.permute.xlu0 %1314
  %v1317 = vsel %vm1024, %v944, 0
  %v1319 = vsel %vm1028, %v1315, 0
  %1321 = vmatpush.msra.mxu0 0.0
  %1322 = vmatpush.msra.mxu0 0.0
  %1323 = vmatpush.msra.mxu0 0.0
  %1324 = vmatpush.msra.mxu0 0.0
  %1325 = vmatpush.msra.mxu0 0.0
  %1326 = vmatpush.msra.mxu0 0.0
  %1327 = vmatpush.msra.mxu0 0.0
  %1328 = vmatpush.msra.mxu0 0.0
  %1329 = vmatpush.msra.mxu0 0.0
  %1330 = vmatpush.msra.mxu0 0.0
  %1331 = vmatpush.msra.mxu0 0.0
  %1332 = vmatpush.msra.mxu0 0.0
  %1333 = vmatpush.msra.mxu0 0.0
  %1334 = vmatpush.msra.mxu0 0.0
  %1335 = vmatpush.msra.mxu0 0.0
  %1336 = vmatpush.msra.mxu0 %v1319
  %1337 = vmatmul.f32.gmra.mxu0 %v1317
  %v1338 = vpop.f32.mrf.mxu0
  %v1339 = vadd.f32 0.0, %v1338
  %1340 = vdwg.mxu0
  %1341 = vst [vmem:[#allocation1] ss:$2 sm:$0xff] %v162
  %v1342 = vld.sshfl [vmem:[#allocation1] sm:$0xff pattern:$0x75316420]
  %1343 = vrot.lane.b32.xlu0 %v1342, 64
  %v1344 = vpop.permute.xlu0 %1343
  %v1346 = vsel %vm1024, %v959, 0
  %v1348 = vsel %vm1028, %v1344, 0
  %1350 = vmatpush.msra.mxu0 0.0
  %1351 = vmatpush.msra.mxu0 0.0
  %1352 = vmatpush.msra.mxu0 0.0
  %1353 = vmatpush.msra.mxu0 0.0
  %1354 = vmatpush.msra.mxu0 0.0
  %1355 = vmatpush.msra.mxu0 0.0
  %1356 = vmatpush.msra.mxu0 0.0
  %1357 = vmatpush.msra.mxu0 0.0
  %1358 = vmatpush.msra.mxu0 0.0
  %1359 = vmatpush.msra.mxu0 0.0
  %1360 = vmatpush.msra.mxu0 0.0
  %1361 = vmatpush.msra.mxu0 0.0
  %1362 = vmatpush.msra.mxu0 0.0
  %1363 = vmatpush.msra.mxu0 0.0
  %1364 = vmatpush.msra.mxu0 0.0
  %1365 = vmatpush.msra.mxu0 %v1348
  %1366 = vmatmul.f32.gmra.mxu0 %v1346
  %v1367 = vpop.f32.mrf.mxu0
  %v1368 = vadd.f32 0.0, %v1367
  %1369 = vdwg.mxu0
  %1370 = vst [vmem:[#allocation1] ss:$2 sm:$0xff] %v144
  %v1371 = vld.sshfl [vmem:[#allocation1] sm:$0xff pattern:$0x75316420]
  %1372 = vrot.lane.b32.xlu0 %v1371, 64
  %v1373 = vpop.permute.xlu0 %1372
  %v1375 = vsel %vm1024, %v974, 0
  %v1377 = vsel %vm1028, %v1373, 0
  %1379 = vmatpush.msra.mxu0 0.0
  %1380 = vmatpush.msra.mxu0 0.0
  %1381 = vmatpush.msra.mxu0 0.0
  %1382 = vmatpush.msra.mxu0 0.0
  %1383 = vmatpush.msra.mxu0 0.0
  %1384 = vmatpush.msra.mxu0 0.0
  %1385 = vmatpush.msra.mxu0 0.0
  %1386 = vmatpush.msra.mxu0 0.0
  %1387 = vmatpush.msra.mxu0 0.0
  %1388 = vmatpush.msra.mxu0 0.0
  %1389 = vmatpush.msra.mxu0 0.0
  %1390 = vmatpush.msra.mxu0 0.0
  %1391 = vmatpush.msra.mxu0 0.0
  %1392 = vmatpush.msra.mxu0 0.0
  %1393 = vmatpush.msra.mxu0 0.0
  %1394 = vmatpush.msra.mxu0 %v1377
  %1395 = vmatmul.f32.gmra.mxu0 %v1375
  %v1396 = vpop.f32.mrf.mxu0
  %v1397 = vadd.f32 0.0, %v1396
  %1398 = vdwg.mxu0
  %1399 = vst [vmem:[#allocation1] ss:$2 sm:$0xff] %v163
  %v1400 = vld.sshfl [vmem:[#allocation1] sm:$0xff pattern:$0x75316420]
  %1401 = vrot.lane.b32.xlu0 %v1400, 64
  %v1402 = vpop.permute.xlu0 %1401
  %v1404 = vsel %vm1024, %v989, 0
  %v1406 = vsel %vm1028, %v1402, 0
  %1408 = vmatpush.msra.mxu0 0.0
  %1409 = vmatpush.msra.mxu0 0.0
  %1410 = vmatpush.msra.mxu0 0.0
  %1411 = vmatpush.msra.mxu0 0.0
  %1412 = vmatpush.msra.mxu0 0.0
  %1413 = vmatpush.msra.mxu0 0.0
  %1414 = vmatpush.msra.mxu0 0.0
  %1415 = vmatpush.msra.mxu0 0.0
  %1416 = vmatpush.msra.mxu0 0.0
  %1417 = vmatpush.msra.mxu0 0.0
  %1418 = vmatpush.msra.mxu0 0.0
  %1419 = vmatpush.msra.mxu0 0.0
  %1420 = vmatpush.msra.mxu0 0.0
  %1421 = vmatpush.msra.mxu0 0.0
  %1422 = vmatpush.msra.mxu0 0.0
  %1423 = vmatpush.msra.mxu0 %v1406
  %1424 = vmatmul.f32.gmra.mxu0 %v1404
  %v1425 = vpop.f32.mrf.mxu0
  %v1426 = vadd.f32 0.0, %v1425
  %1427 = vdwg.mxu0
  %1428 = vst [vmem:[#allocation1] ss:$2 sm:$0xff] %v147
  %v1429 = vld.sshfl [vmem:[#allocation1] sm:$0xff pattern:$0x75316420]
  %1430 = vrot.lane.b32.xlu0 %v1429, 64
  %v1431 = vpop.permute.xlu0 %1430
  %v1433 = vsel %vm1024, %v1004, 0
  %v1435 = vsel %vm1028, %v1431, 0
  %1437 = vmatpush.msra.mxu0 0.0
  %1438 = vmatpush.msra.mxu0 0.0
  %1439 = vmatpush.msra.mxu0 0.0
  %1440 = vmatpush.msra.mxu0 0.0
  %1441 = vmatpush.msra.mxu0 0.0
  %1442 = vmatpush.msra.mxu0 0.0
  %1443 = vmatpush.msra.mxu0 0.0
  %1444 = vmatpush.msra.mxu0 0.0
  %1445 = vmatpush.msra.mxu0 0.0
  %1446 = vmatpush.msra.mxu0 0.0
  %1447 = vmatpush.msra.mxu0 0.0
  %1448 = vmatpush.msra.mxu0 0.0
  %1449 = vmatpush.msra.mxu0 0.0
  %1450 = vmatpush.msra.mxu0 0.0
  %1451 = vmatpush.msra.mxu0 0.0
  %1452 = vmatpush.msra.mxu0 %v1435
  %1453 = vmatmul.f32.gmra.mxu0 %v1433
  %v1454 = vpop.f32.mrf.mxu0
  %v1455 = vadd.f32 0.0, %v1454
  %1456 = vdwg.mxu0
  %1457 = vst [vmem:[#allocation1] ss:$2 sm:$0xff] %v164
  %v1458 = vld.sshfl [vmem:[#allocation1] sm:$0xff pattern:$0x75316420]
  %1459 = vrot.lane.b32.xlu0 %v1458, 64
  %v1460 = vpop.permute.xlu0 %1459
  %v1462 = vsel %vm1024, %v1019, 0
  %v1464 = vsel %vm1028, %v1460, 0
  %1466 = vmatpush.msra.mxu0 0.0
  %1467 = vmatpush.msra.mxu0 0.0
  %1468 = vmatpush.msra.mxu0 0.0
  %1469 = vmatpush.msra.mxu0 0.0
  %1470 = vmatpush.msra.mxu0 0.0
  %1471 = vmatpush.msra.mxu0 0.0
  %1472 = vmatpush.msra.mxu0 0.0
  %1473 = vmatpush.msra.mxu0 0.0
  %1474 = vmatpush.msra.mxu0 0.0
  %1475 = vmatpush.msra.mxu0 0.0
  %1476 = vmatpush.msra.mxu0 0.0
  %1477 = vmatpush.msra.mxu0 0.0
  %1478 = vmatpush.msra.mxu0 0.0
  %1479 = vmatpush.msra.mxu0 0.0
  %1480 = vmatpush.msra.mxu0 0.0
  %1481 = vmatpush.msra.mxu0 %v1464
  %1482 = vmatmul.f32.gmra.mxu0 %v1462
  %v1483 = vpop.f32.mrf.mxu0
  %v1484 = vadd.f32 0.0, %v1483
  %1485 = vdwg.mxu0
  %v1486 = vld [vmem:[%s3] sm:$0xff]
  %1503 = vst [vmem:[#allocation1] ss:$2 sm:$0xff] %v1049
  %s1504 = scalar_lea.vmem [#allocation1], 1
  %1505 = vst [vmem:[%s1504] ss:$2 sm:$0xff] %v1078
  %s1506 = scalar_lea.vmem [#allocation1], 16
  %1507 = vst [vmem:[%s1506] ss:$2 sm:$0xff] %v1107
  %s1508 = scalar_lea.vmem [#allocation1], 17
  %1509 = vst [vmem:[%s1508] ss:$2 sm:$0xff] %v1136
  %s1510 = scalar_lea.vmem [#allocation1], 32
  %1511 = vst [vmem:[%s1510] ss:$2 sm:$0xff] %v1165
  %s1512 = scalar_lea.vmem [#allocation1], 33
  %1513 = vst [vmem:[%s1512] ss:$2 sm:$0xff] %v1194
  %s1514 = scalar_lea.vmem [#allocation1], 48
  %1515 = vst [vmem:[%s1514] ss:$2 sm:$0xff] %v1223
  %s1516 = scalar_lea.vmem [#allocation1], 49
  %1517 = vst [vmem:[%s1516] ss:$2 sm:$0xff] %v1252
  %v1518 = vld.sshfl [vmem:[#allocation1] sm:$0xff pattern:$0x75316420]
  %v1519 = vld.sshfl [vmem:[#allocation1 + $0x10] sm:$0xff pattern:$0x75316420]
  %v1520 = vld.sshfl [vmem:[#allocation1 + $0x20] sm:$0xff pattern:$0x75316420]
  %v1521 = vld.sshfl [vmem:[#allocation1 + $0x30] sm:$0xff pattern:$0x75316420]
  %1522 = vst [vmem:[#allocation1] ss:$2 sm:$0xff] %v1281
  %1523 = vst [vmem:[%s1504] ss:$2 sm:$0xff] %v1310
  %1524 = vst [vmem:[%s1506] ss:$2 sm:$0xff] %v1339
  %1525 = vst [vmem:[%s1508] ss:$2 sm:$0xff] %v1368
  %1526 = vst [vmem:[%s1510] ss:$2 sm:$0xff] %v1397
  %1527 = vst [vmem:[%s1512] ss:$2 sm:$0xff] %v1426
  %1528 = vst [vmem:[%s1514] ss:$2 sm:$0xff] %v1455
  %1529 = vst [vmem:[%s1516] ss:$2 sm:$0xff] %v1484
  %v1530 = vld.sshfl [vmem:[#allocation1] sm:$0xff pattern:$0x75316420]
  %v1531 = vld.sshfl [vmem:[#allocation1 + $0x10] sm:$0xff pattern:$0x75316420]
  %v1532 = vld.sshfl [vmem:[#allocation1 + $0x20] sm:$0xff pattern:$0x75316420]
  %v1533 = vld.sshfl [vmem:[#allocation1 + $0x30] sm:$0xff pattern:$0x75316420]
  %v1534 = vsel %vm174, %v1518, 0
  %v1536 = vsel %vm174, %v1519, 0
  %v1538 = vsel %vm174, %v1520, 0
  %v1540 = vsel %vm174, %v1521, 0
  %v1542 = vsel %vm174, %v1530, 0
  %v1544 = vsel %vm174, %v1531, 0
  %v1546 = vsel %vm174, %v1532, 0
  %v1548 = vsel %vm174, %v1533, 0
  %1550 = vmatpush.msra.mxu0 0.0
  %1551 = vmatpush.msra.mxu0 0.0
  %1552 = vmatpush.msra.mxu0 0.0
  %1553 = vmatpush.msra.mxu0 0.0
  %1554 = vmatpush.msra.mxu0 0.0
  %1555 = vmatpush.msra.mxu0 0.0
  %1556 = vmatpush.msra.mxu0 0.0
  %1557 = vmatpush.msra.mxu0 0.0
  %1558 = vmatpush.msra.mxu0 0.0
  %1559 = vmatpush.msra.mxu0 0.0
  %1560 = vmatpush.msra.mxu0 0.0
  %1561 = vmatpush.msra.mxu0 0.0
  %1562 = vmatpush.msra.mxu0 0.0
  %1563 = vmatpush.msra.mxu0 0.0
  %1564 = vmatpush.msra.mxu0 0.0
  %1565 = vmatpush.msra.mxu0 %v1486
  %1566 = vmatmul.f32.gmra.mxu0 %v1534
  %v1567 = vpop.f32.mrf.mxu0
  %v1568 = vadd.f32 0.0, %v1567
  %1569 = vmatmul.f32.gmra.mxu0 %v1536
  %v1570 = vpop.f32.mrf.mxu0
  %v1571 = vadd.f32 0.0, %v1570
  %1572 = vmatmul.f32.gmra.mxu0 %v1538
  %v1573 = vpop.f32.mrf.mxu0
  %v1574 = vadd.f32 0.0, %v1573
  %1575 = vmatmul.f32.gmra.mxu0 %v1540
  %v1576 = vpop.f32.mrf.mxu0
  %v1577 = vadd.f32 0.0, %v1576
  %1578 = vmatmul.f32.gmra.mxu0 %v1542
  %v1579 = vpop.f32.mrf.mxu0
  %v1580 = vadd.f32 0.0, %v1579
  %1581 = vmatmul.f32.gmra.mxu0 %v1544
  %v1582 = vpop.f32.mrf.mxu0
  %v1583 = vadd.f32 0.0, %v1582
  %1584 = vmatmul.f32.gmra.mxu0 %v1546
  %v1585 = vpop.f32.mrf.mxu0
  %v1586 = vadd.f32 0.0, %v1585
  %1587 = vmatmul.f32.gmra.mxu0 %v1548
  %v1588 = vpop.f32.mrf.mxu0
  %v1589 = vadd.f32 0.0, %v1588
  %1590 = vdwg.mxu0
  %v1591 = vadd.f32 %v169, %v1568
  %v1592 = vadd.f32 %v169, %v1571
  %v1593 = vadd.f32 %v169, %v1574
  %v1594 = vadd.f32 %v169, %v1577
  %v1595 = vadd.f32 %v169, %v1580
  %v1596 = vadd.f32 %v169, %v1583
  %v1597 = vadd.f32 %v169, %v1586
  %v1598 = vadd.f32 %v169, %v1589
  %1599 = vst [vmem:[#allocation1] ss:$2 sm:$0xff] %v126
  %v1600 = vld.sshfl [vmem:[#allocation1] sm:$0xff pattern:$0x75316420]
  %1601 = vrot.lane.b32.xlu0 %v1600, 120
  %v1602 = vpop.permute.xlu0 %1601
  %1603 = vst [vmem:[#allocation1] ss:$2 sm:$0xff] %v126
  %v1604 = vld.sshfl [vmem:[#allocation1] sm:$0xff pattern:$0x75316420]
  %1605 = vrot.lane.b32.xlu0 %v1604, 88
  %v1606 = vpop.permute.xlu0 %1605
  %v1607 = vsel %vm174, %v1602, 0
  %v1609 = vsel %vm174, %v1606, 0
  %1611 = vmatpush.xpose.msra.mxu0 0.0
  %1612 = vmatpush.xpose.msra.mxu0 0.0
  %1613 = vmatpush.xpose.msra.mxu0 0.0
  %1614 = vmatpush.xpose.msra.mxu0 0.0
  %1615 = vmatpush.xpose.msra.mxu0 0.0
  %1616 = vmatpush.xpose.msra.mxu0 0.0
  %1617 = vmatpush.xpose.msra.mxu0 0.0
  %1618 = vmatpush.xpose.msra.mxu0 0.0
  %1619 = vmatpush.xpose.msra.mxu0 0.0
  %1620 = vmatpush.xpose.msra.mxu0 0.0
  %1621 = vmatpush.xpose.msra.mxu0 0.0
  %1622 = vmatpush.xpose.msra.mxu0 0.0
  %1623 = vmatpush.xpose.msra.mxu0 0.0
  %1624 = vmatpush.xpose.msra.mxu0 0.0
  %1625 = vmatpush.xpose.msra.mxu0 0.0
  %1626 = vmatpush.xpose.msra.mxu0 %v1609
  %1627 = vmatmul.f32.gmra.mxu0 %v1607
  %v1628 = vpop.f32.mrf.mxu0
  %v1629 = vadd.f32 0.0, %v1628
  %1630 = vdwg.mxu0
  %1631 = vst [vmem:[#allocation1] ss:$2 sm:$0xff] %v157
  %v1632 = vld.sshfl [vmem:[#allocation1] sm:$0xff pattern:$0x75316420]
  %1633 = vrot.lane.b32.xlu0 %v1632, 120
  %v1634 = vpop.permute.xlu0 %1633
  %1635 = vst [vmem:[#allocation1] ss:$2 sm:$0xff] %v157
  %v1636 = vld.sshfl [vmem:[#allocation1] sm:$0xff pattern:$0x75316420]
  %1637 = vrot.lane.b32.xlu0 %v1636, 88
  %v1638 = vpop.permute.xlu0 %1637
  %v1639 = vsel %vm174, %v1634, 0
  %v1641 = vsel %vm174, %v1638, 0
  %1643 = vmatpush.xpose.msra.mxu0 0.0
  %1644 = vmatpush.xpose.msra.mxu0 0.0
  %1645 = vmatpush.xpose.msra.mxu0 0.0
  %1646 = vmatpush.xpose.msra.mxu0 0.0
  %1647 = vmatpush.xpose.msra.mxu0 0.0
  %1648 = vmatpush.xpose.msra.mxu0 0.0
  %1649 = vmatpush.xpose.msra.mxu0 0.0
  %1650 = vmatpush.xpose.msra.mxu0 0.0
  %1651 = vmatpush.xpose.msra.mxu0 0.0
  %1652 = vmatpush.xpose.msra.mxu0 0.0
  %1653 = vmatpush.xpose.msra.mxu0 0.0
  %1654 = vmatpush.xpose.msra.mxu0 0.0
  %1655 = vmatpush.xpose.msra.mxu0 0.0
  %1656 = vmatpush.xpose.msra.mxu0 0.0
  %1657 = vmatpush.xpose.msra.mxu0 0.0
  %1658 = vmatpush.xpose.msra.mxu0 %v1641
  %1659 = vmatmul.f32.gmra.mxu0 %v1639
  %v1660 = vpop.f32.mrf.mxu0
  %v1661 = vadd.f32 0.0, %v1660
  %1662 = vdwg.mxu0
  %1663 = vst [vmem:[#allocation1] ss:$2 sm:$0xff] %v129
  %v1664 = vld.sshfl [vmem:[#allocation1] sm:$0xff pattern:$0x75316420]
  %1665 = vrot.lane.b32.xlu0 %v1664, 120
  %v1666 = vpop.permute.xlu0 %1665
  %1667 = vst [vmem:[#allocation1] ss:$2 sm:$0xff] %v129
  %v1668 = vld.sshfl [vmem:[#allocation1] sm:$0xff pattern:$0x75316420]
  %1669 = vrot.lane.b32.xlu0 %v1668, 88
  %v1670 = vpop.permute.xlu0 %1669
  %v1671 = vsel %vm174, %v1666, 0
  %v1673 = vsel %vm174, %v1670, 0
  %1675 = vmatpush.xpose.msra.mxu0 0.0
  %1676 = vmatpush.xpose.msra.mxu0 0.0
  %1677 = vmatpush.xpose.msra.mxu0 0.0
  %1678 = vmatpush.xpose.msra.mxu0 0.0
  %1679 = vmatpush.xpose.msra.mxu0 0.0
  %1680 = vmatpush.xpose.msra.mxu0 0.0
  %1681 = vmatpush.xpose.msra.mxu0 0.0
  %1682 = vmatpush.xpose.msra.mxu0 0.0
  %1683 = vmatpush.xpose.msra.mxu0 0.0
  %1684 = vmatpush.xpose.msra.mxu0 0.0
  %1685 = vmatpush.xpose.msra.mxu0 0.0
  %1686 = vmatpush.xpose.msra.mxu0 0.0
  %1687 = vmatpush.xpose.msra.mxu0 0.0
  %1688 = vmatpush.xpose.msra.mxu0 0.0
  %1689 = vmatpush.xpose.msra.mxu0 0.0
  %1690 = vmatpush.xpose.msra.mxu0 %v1673
  %1691 = vmatmul.f32.gmra.mxu0 %v1671
  %v1692 = vpop.f32.mrf.mxu0
  %v1693 = vadd.f32 0.0, %v1692
  %1694 = vdwg.mxu0
  %1695 = vst [vmem:[#allocation1] ss:$2 sm:$0xff] %v158
  %v1696 = vld.sshfl [vmem:[#allocation1] sm:$0xff pattern:$0x75316420]
  %1697 = vrot.lane.b32.xlu0 %v1696, 120
  %v1698 = vpop.permute.xlu0 %1697
  %1699 = vst [vmem:[#allocation1] ss:$2 sm:$0xff] %v158
  %v1700 = vld.sshfl [vmem:[#allocation1] sm:$0xff pattern:$0x75316420]
  %1701 = vrot.lane.b32.xlu0 %v1700, 88
  %v1702 = vpop.permute.xlu0 %1701
  %v1703 = vsel %vm174, %v1698, 0
  %v1705 = vsel %vm174, %v1702, 0
  %1707 = vmatpush.xpose.msra.mxu0 0.0
  %1708 = vmatpush.xpose.msra.mxu0 0.0
  %1709 = vmatpush.xpose.msra.mxu0 0.0
  %1710 = vmatpush.xpose.msra.mxu0 0.0
  %1711 = vmatpush.xpose.msra.mxu0 0.0
  %1712 = vmatpush.xpose.msra.mxu0 0.0
  %1713 = vmatpush.xpose.msra.mxu0 0.0
  %1714 = vmatpush.xpose.msra.mxu0 0.0
  %1715 = vmatpush.xpose.msra.mxu0 0.0
  %1716 = vmatpush.xpose.msra.mxu0 0.0
  %1717 = vmatpush.xpose.msra.mxu0 0.0
  %1718 = vmatpush.xpose.msra.mxu0 0.0
  %1719 = vmatpush.xpose.msra.mxu0 0.0
  %1720 = vmatpush.xpose.msra.mxu0 0.0
  %1721 = vmatpush.xpose.msra.mxu0 0.0
  %1722 = vmatpush.xpose.msra.mxu0 %v1705
  %1723 = vmatmul.f32.gmra.mxu0 %v1703
  %v1724 = vpop.f32.mrf.mxu0
  %v1725 = vadd.f32 0.0, %v1724
  %1726 = vdwg.mxu0
  %1727 = vst [vmem:[#allocation1] ss:$2 sm:$0xff] %v132
  %v1728 = vld.sshfl [vmem:[#allocation1] sm:$0xff pattern:$0x75316420]
  %1729 = vrot.lane.b32.xlu0 %v1728, 120
  %v1730 = vpop.permute.xlu0 %1729
  %1731 = vst [vmem:[#allocation1] ss:$2 sm:$0xff] %v132
  %v1732 = vld.sshfl [vmem:[#allocation1] sm:$0xff pattern:$0x75316420]
  %1733 = vrot.lane.b32.xlu0 %v1732, 88
  %v1734 = vpop.permute.xlu0 %1733
  %v1735 = vsel %vm174, %v1730, 0
  %v1737 = vsel %vm174, %v1734, 0
  %1739 = vmatpush.xpose.msra.mxu0 0.0
  %1740 = vmatpush.xpose.msra.mxu0 0.0
  %1741 = vmatpush.xpose.msra.mxu0 0.0
  %1742 = vmatpush.xpose.msra.mxu0 0.0
  %1743 = vmatpush.xpose.msra.mxu0 0.0
  %1744 = vmatpush.xpose.msra.mxu0 0.0
  %1745 = vmatpush.xpose.msra.mxu0 0.0
  %1746 = vmatpush.xpose.msra.mxu0 0.0
  %1747 = vmatpush.xpose.msra.mxu0 0.0
  %1748 = vmatpush.xpose.msra.mxu0 0.0
  %1749 = vmatpush.xpose.msra.mxu0 0.0
  %1750 = vmatpush.xpose.msra.mxu0 0.0
  %1751 = vmatpush.xpose.msra.mxu0 0.0
  %1752 = vmatpush.xpose.msra.mxu0 0.0
  %1753 = vmatpush.xpose.msra.mxu0 0.0
  %1754 = vmatpush.xpose.msra.mxu0 %v1737
  %1755 = vmatmul.f32.gmra.mxu0 %v1735
  %v1756 = vpop.f32.mrf.mxu0
  %v1757 = vadd.f32 0.0, %v1756
  %1758 = vdwg.mxu0
  %1759 = vst [vmem:[#allocation1] ss:$2 sm:$0xff] %v159
  %v1760 = vld.sshfl [vmem:[#allocation1] sm:$0xff pattern:$0x75316420]
  %1761 = vrot.lane.b32.xlu0 %v1760, 120
  %v1762 = vpop.permute.xlu0 %1761
  %1763 = vst [vmem:[#allocation1] ss:$2 sm:$0xff] %v159
  %v1764 = vld.sshfl [vmem:[#allocation1] sm:$0xff pattern:$0x75316420]
  %1765 = vrot.lane.b32.xlu0 %v1764, 88
  %v1766 = vpop.permute.xlu0 %1765
  %v1767 = vsel %vm174, %v1762, 0
  %v1769 = vsel %vm174, %v1766, 0
  %1771 = vmatpush.xpose.msra.mxu0 0.0
  %1772 = vmatpush.xpose.msra.mxu0 0.0
  %1773 = vmatpush.xpose.msra.mxu0 0.0
  %1774 = vmatpush.xpose.msra.mxu0 0.0
  %1775 = vmatpush.xpose.msra.mxu0 0.0
  %1776 = vmatpush.xpose.msra.mxu0 0.0
  %1777 = vmatpush.xpose.msra.mxu0 0.0
  %1778 = vmatpush.xpose.msra.mxu0 0.0
  %1779 = vmatpush.xpose.msra.mxu0 0.0
  %1780 = vmatpush.xpose.msra.mxu0 0.0
  %1781 = vmatpush.xpose.msra.mxu0 0.0
  %1782 = vmatpush.xpose.msra.mxu0 0.0
  %1783 = vmatpush.xpose.msra.mxu0 0.0
  %1784 = vmatpush.xpose.msra.mxu0 0.0
  %1785 = vmatpush.xpose.msra.mxu0 0.0
  %1786 = vmatpush.xpose.msra.mxu0 %v1769
  %1787 = vmatmul.f32.gmra.mxu0 %v1767
  %v1788 = vpop.f32.mrf.mxu0
  %v1789 = vadd.f32 0.0, %v1788
  %1790 = vdwg.mxu0
  %1791 = vst [vmem:[#allocation1] ss:$2 sm:$0xff] %v135
  %v1792 = vld.sshfl [vmem:[#allocation1] sm:$0xff pattern:$0x75316420]
  %1793 = vrot.lane.b32.xlu0 %v1792, 120
  %v1794 = vpop.permute.xlu0 %1793
  %1795 = vst [vmem:[#allocation1] ss:$2 sm:$0xff] %v135
  %v1796 = vld.sshfl [vmem:[#allocation1] sm:$0xff pattern:$0x75316420]
  %1797 = vrot.lane.b32.xlu0 %v1796, 88
  %v1798 = vpop.permute.xlu0 %1797
  %v1799 = vsel %vm174, %v1794, 0
  %v1801 = vsel %vm174, %v1798, 0
  %1803 = vmatpush.xpose.msra.mxu0 0.0
  %1804 = vmatpush.xpose.msra.mxu0 0.0
  %1805 = vmatpush.xpose.msra.mxu0 0.0
  %1806 = vmatpush.xpose.msra.mxu0 0.0
  %1807 = vmatpush.xpose.msra.mxu0 0.0
  %1808 = vmatpush.xpose.msra.mxu0 0.0
  %1809 = vmatpush.xpose.msra.mxu0 0.0
  %1810 = vmatpush.xpose.msra.mxu0 0.0
  %1811 = vmatpush.xpose.msra.mxu0 0.0
  %1812 = vmatpush.xpose.msra.mxu0 0.0
  %1813 = vmatpush.xpose.msra.mxu0 0.0
  %1814 = vmatpush.xpose.msra.mxu0 0.0
  %1815 = vmatpush.xpose.msra.mxu0 0.0
  %1816 = vmatpush.xpose.msra.mxu0 0.0
  %1817 = vmatpush.xpose.msra.mxu0 0.0
  %1818 = vmatpush.xpose.msra.mxu0 %v1801
  %1819 = vmatmul.f32.gmra.mxu0 %v1799
  %v1820 = vpop.f32.mrf.mxu0
  %v1821 = vadd.f32 0.0, %v1820
  %1822 = vdwg.mxu0
  %1823 = vst [vmem:[#allocation1] ss:$2 sm:$0xff] %v160
  %v1824 = vld.sshfl [vmem:[#allocation1] sm:$0xff pattern:$0x75316420]
  %1825 = vrot.lane.b32.xlu0 %v1824, 120
  %v1826 = vpop.permute.xlu0 %1825
  %1827 = vst [vmem:[#allocation1] ss:$2 sm:$0xff] %v160
  %v1828 = vld.sshfl [vmem:[#allocation1] sm:$0xff pattern:$0x75316420]
  %1829 = vrot.lane.b32.xlu0 %v1828, 88
  %v1830 = vpop.permute.xlu0 %1829
  %v1831 = vsel %vm174, %v1826, 0
  %v1833 = vsel %vm174, %v1830, 0
  %1835 = vmatpush.xpose.msra.mxu0 0.0
  %1836 = vmatpush.xpose.msra.mxu0 0.0
  %1837 = vmatpush.xpose.msra.mxu0 0.0
  %1838 = vmatpush.xpose.msra.mxu0 0.0
  %1839 = vmatpush.xpose.msra.mxu0 0.0
  %1840 = vmatpush.xpose.msra.mxu0 0.0
  %1841 = vmatpush.xpose.msra.mxu0 0.0
  %1842 = vmatpush.xpose.msra.mxu0 0.0
  %1843 = vmatpush.xpose.msra.mxu0 0.0
  %1844 = vmatpush.xpose.msra.mxu0 0.0
  %1845 = vmatpush.xpose.msra.mxu0 0.0
  %1846 = vmatpush.xpose.msra.mxu0 0.0
  %1847 = vmatpush.xpose.msra.mxu0 0.0
  %1848 = vmatpush.xpose.msra.mxu0 0.0
  %1849 = vmatpush.xpose.msra.mxu0 0.0
  %1850 = vmatpush.xpose.msra.mxu0 %v1833
  %1851 = vmatmul.f32.gmra.mxu0 %v1831
  %v1852 = vpop.f32.mrf.mxu0
  %v1853 = vadd.f32 0.0, %v1852
  %1854 = vdwg.mxu0
  %1855 = vst [vmem:[#allocation1] ss:$2 sm:$0xff] %v138
  %v1856 = vld.sshfl [vmem:[#allocation1] sm:$0xff pattern:$0x75316420]
  %1857 = vrot.lane.b32.xlu0 %v1856, 120
  %v1858 = vpop.permute.xlu0 %1857
  %1859 = vst [vmem:[#allocation1] ss:$2 sm:$0xff] %v138
  %v1860 = vld.sshfl [vmem:[#allocation1] sm:$0xff pattern:$0x75316420]
  %1861 = vrot.lane.b32.xlu0 %v1860, 88
  %v1862 = vpop.permute.xlu0 %1861
  %v1863 = vsel %vm174, %v1858, 0
  %v1865 = vsel %vm174, %v1862, 0
  %1867 = vmatpush.xpose.msra.mxu0 0.0
  %1868 = vmatpush.xpose.msra.mxu0 0.0
  %1869 = vmatpush.xpose.msra.mxu0 0.0
  %1870 = vmatpush.xpose.msra.mxu0 0.0
  %1871 = vmatpush.xpose.msra.mxu0 0.0
  %1872 = vmatpush.xpose.msra.mxu0 0.0
  %1873 = vmatpush.xpose.msra.mxu0 0.0
  %1874 = vmatpush.xpose.msra.mxu0 0.0
  %1875 = vmatpush.xpose.msra.mxu0 0.0
  %1876 = vmatpush.xpose.msra.mxu0 0.0
  %1877 = vmatpush.xpose.msra.mxu0 0.0
  %1878 = vmatpush.xpose.msra.mxu0 0.0
  %1879 = vmatpush.xpose.msra.mxu0 0.0
  %1880 = vmatpush.xpose.msra.mxu0 0.0
  %1881 = vmatpush.xpose.msra.mxu0 0.0
  %1882 = vmatpush.xpose.msra.mxu0 %v1865
  %1883 = vmatmul.f32.gmra.mxu0 %v1863
  %v1884 = vpop.f32.mrf.mxu0
  %v1885 = vadd.f32 0.0, %v1884
  %1886 = vdwg.mxu0
  %1887 = vst [vmem:[#allocation1] ss:$2 sm:$0xff] %v161
  %v1888 = vld.sshfl [vmem:[#allocation1] sm:$0xff pattern:$0x75316420]
  %1889 = vrot.lane.b32.xlu0 %v1888, 120
  %v1890 = vpop.permute.xlu0 %1889
  %1891 = vst [vmem:[#allocation1] ss:$2 sm:$0xff] %v161
  %v1892 = vld.sshfl [vmem:[#allocation1] sm:$0xff pattern:$0x75316420]
  %1893 = vrot.lane.b32.xlu0 %v1892, 88
  %v1894 = vpop.permute.xlu0 %1893
  %v1895 = vsel %vm174, %v1890, 0
  %v1897 = vsel %vm174, %v1894, 0
  %1899 = vmatpush.xpose.msra.mxu0 0.0
  %1900 = vmatpush.xpose.msra.mxu0 0.0
  %1901 = vmatpush.xpose.msra.mxu0 0.0
  %1902 = vmatpush.xpose.msra.mxu0 0.0
  %1903 = vmatpush.xpose.msra.mxu0 0.0
  %1904 = vmatpush.xpose.msra.mxu0 0.0
  %1905 = vmatpush.xpose.msra.mxu0 0.0
  %1906 = vmatpush.xpose.msra.mxu0 0.0
  %1907 = vmatpush.xpose.msra.mxu0 0.0
  %1908 = vmatpush.xpose.msra.mxu0 0.0
  %1909 = vmatpush.xpose.msra.mxu0 0.0
  %1910 = vmatpush.xpose.msra.mxu0 0.0
  %1911 = vmatpush.xpose.msra.mxu0 0.0
  %1912 = vmatpush.xpose.msra.mxu0 0.0
  %1913 = vmatpush.xpose.msra.mxu0 0.0
  %1914 = vmatpush.xpose.msra.mxu0 %v1897
  %1915 = vmatmul.f32.gmra.mxu0 %v1895
  %v1916 = vpop.f32.mrf.mxu0
  %v1917 = vadd.f32 0.0, %v1916
  %1918 = vdwg.mxu0
  %1919 = vst [vmem:[#allocation1] ss:$2 sm:$0xff] %v141
  %v1920 = vld.sshfl [vmem:[#allocation1] sm:$0xff pattern:$0x75316420]
  %1921 = vrot.lane.b32.xlu0 %v1920, 120
  %v1922 = vpop.permute.xlu0 %1921
  %1923 = vst [vmem:[#allocation1] ss:$2 sm:$0xff] %v141
  %v1924 = vld.sshfl [vmem:[#allocation1] sm:$0xff pattern:$0x75316420]
  %1925 = vrot.lane.b32.xlu0 %v1924, 88
  %v1926 = vpop.permute.xlu0 %1925
  %v1927 = vsel %vm174, %v1922, 0
  %v1929 = vsel %vm174, %v1926, 0
  %1931 = vmatpush.xpose.msra.mxu0 0.0
  %1932 = vmatpush.xpose.msra.mxu0 0.0
  %1933 = vmatpush.xpose.msra.mxu0 0.0
  %1934 = vmatpush.xpose.msra.mxu0 0.0
  %1935 = vmatpush.xpose.msra.mxu0 0.0
  %1936 = vmatpush.xpose.msra.mxu0 0.0
  %1937 = vmatpush.xpose.msra.mxu0 0.0
  %1938 = vmatpush.xpose.msra.mxu0 0.0
  %1939 = vmatpush.xpose.msra.mxu0 0.0
  %1940 = vmatpush.xpose.msra.mxu0 0.0
  %1941 = vmatpush.xpose.msra.mxu0 0.0
  %1942 = vmatpush.xpose.msra.mxu0 0.0
  %1943 = vmatpush.xpose.msra.mxu0 0.0
  %1944 = vmatpush.xpose.msra.mxu0 0.0
  %1945 = vmatpush.xpose.msra.mxu0 0.0
  %1946 = vmatpush.xpose.msra.mxu0 %v1929
  %1947 = vmatmul.f32.gmra.mxu0 %v1927
  %v1948 = vpop.f32.mrf.mxu0
  %v1949 = vadd.f32 0.0, %v1948
  %1950 = vdwg.mxu0
  %1951 = vst [vmem:[#allocation1] ss:$2 sm:$0xff] %v162
  %v1952 = vld.sshfl [vmem:[#allocation1] sm:$0xff pattern:$0x75316420]
  %1953 = vrot.lane.b32.xlu0 %v1952, 120
  %v1954 = vpop.permute.xlu0 %1953
  %1955 = vst [vmem:[#allocation1] ss:$2 sm:$0xff] %v162
  %v1956 = vld.sshfl [vmem:[#allocation1] sm:$0xff pattern:$0x75316420]
  %1957 = vrot.lane.b32.xlu0 %v1956, 88
  %v1958 = vpop.permute.xlu0 %1957
  %v1959 = vsel %vm174, %v1954, 0
  %v1961 = vsel %vm174, %v1958, 0
  %1963 = vmatpush.xpose.msra.mxu0 0.0
  %1964 = vmatpush.xpose.msra.mxu0 0.0
  %1965 = vmatpush.xpose.msra.mxu0 0.0
  %1966 = vmatpush.xpose.msra.mxu0 0.0
  %1967 = vmatpush.xpose.msra.mxu0 0.0
  %1968 = vmatpush.xpose.msra.mxu0 0.0
  %1969 = vmatpush.xpose.msra.mxu0 0.0
  %1970 = vmatpush.xpose.msra.mxu0 0.0
  %1971 = vmatpush.xpose.msra.mxu0 0.0
  %1972 = vmatpush.xpose.msra.mxu0 0.0
  %1973 = vmatpush.xpose.msra.mxu0 0.0
  %1974 = vmatpush.xpose.msra.mxu0 0.0
  %1975 = vmatpush.xpose.msra.mxu0 0.0
  %1976 = vmatpush.xpose.msra.mxu0 0.0
  %1977 = vmatpush.xpose.msra.mxu0 0.0
  %1978 = vmatpush.xpose.msra.mxu0 %v1961
  %1979 = vmatmul.f32.gmra.mxu0 %v1959
  %v1980 = vpop.f32.mrf.mxu0
  %v1981 = vadd.f32 0.0, %v1980
  %1982 = vdwg.mxu0
  %1983 = vst [vmem:[#allocation1] ss:$2 sm:$0xff] %v144
  %v1984 = vld.sshfl [vmem:[#allocation1] sm:$0xff pattern:$0x75316420]
  %1985 = vrot.lane.b32.xlu0 %v1984, 120
  %v1986 = vpop.permute.xlu0 %1985
  %1987 = vst [vmem:[#allocation1] ss:$2 sm:$0xff] %v144
  %v1988 = vld.sshfl [vmem:[#allocation1] sm:$0xff pattern:$0x75316420]
  %1989 = vrot.lane.b32.xlu0 %v1988, 88
  %v1990 = vpop.permute.xlu0 %1989
  %v1991 = vsel %vm174, %v1986, 0
  %v1993 = vsel %vm174, %v1990, 0
  %1995 = vmatpush.xpose.msra.mxu0 0.0
  %1996 = vmatpush.xpose.msra.mxu0 0.0
  %1997 = vmatpush.xpose.msra.mxu0 0.0
  %1998 = vmatpush.xpose.msra.mxu0 0.0
  %1999 = vmatpush.xpose.msra.mxu0 0.0
  %2000 = vmatpush.xpose.msra.mxu0 0.0
  %2001 = vmatpush.xpose.msra.mxu0 0.0
  %2002 = vmatpush.xpose.msra.mxu0 0.0
  %2003 = vmatpush.xpose.msra.mxu0 0.0
  %2004 = vmatpush.xpose.msra.mxu0 0.0
  %2005 = vmatpush.xpose.msra.mxu0 0.0
  %2006 = vmatpush.xpose.msra.mxu0 0.0
  %2007 = vmatpush.xpose.msra.mxu0 0.0
  %2008 = vmatpush.xpose.msra.mxu0 0.0
  %2009 = vmatpush.xpose.msra.mxu0 0.0
  %2010 = vmatpush.xpose.msra.mxu0 %v1993
  %2011 = vmatmul.f32.gmra.mxu0 %v1991
  %v2012 = vpop.f32.mrf.mxu0
  %v2013 = vadd.f32 0.0, %v2012
  %2014 = vdwg.mxu0
  %2015 = vst [vmem:[#allocation1] ss:$2 sm:$0xff] %v163
  %v2016 = vld.sshfl [vmem:[#allocation1] sm:$0xff pattern:$0x75316420]
  %2017 = vrot.lane.b32.xlu0 %v2016, 120
  %v2018 = vpop.permute.xlu0 %2017
  %2019 = vst [vmem:[#allocation1] ss:$2 sm:$0xff] %v163
  %v2020 = vld.sshfl [vmem:[#allocation1] sm:$0xff pattern:$0x75316420]
  %2021 = vrot.lane.b32.xlu0 %v2020, 88
  %v2022 = vpop.permute.xlu0 %2021
  %v2023 = vsel %vm174, %v2018, 0
  %v2025 = vsel %vm174, %v2022, 0
  %2027 = vmatpush.xpose.msra.mxu0 0.0
  %2028 = vmatpush.xpose.msra.mxu0 0.0
  %2029 = vmatpush.xpose.msra.mxu0 0.0
  %2030 = vmatpush.xpose.msra.mxu0 0.0
  %2031 = vmatpush.xpose.msra.mxu0 0.0
  %2032 = vmatpush.xpose.msra.mxu0 0.0
  %2033 = vmatpush.xpose.msra.mxu0 0.0
  %2034 = vmatpush.xpose.msra.mxu0 0.0
  %2035 = vmatpush.xpose.msra.mxu0 0.0
  %2036 = vmatpush.xpose.msra.mxu0 0.0
  %2037 = vmatpush.xpose.msra.mxu0 0.0
  %2038 = vmatpush.xpose.msra.mxu0 0.0
  %2039 = vmatpush.xpose.msra.mxu0 0.0
  %2040 = vmatpush.xpose.msra.mxu0 0.0
  %2041 = vmatpush.xpose.msra.mxu0 0.0
  %2042 = vmatpush.xpose.msra.mxu0 %v2025
  %2043 = vmatmul.f32.gmra.mxu0 %v2023
  %v2044 = vpop.f32.mrf.mxu0
  %v2045 = vadd.f32 0.0, %v2044
  %2046 = vdwg.mxu0
  %2047 = vst [vmem:[#allocation1] ss:$2 sm:$0xff] %v147
  %v2048 = vld.sshfl [vmem:[#allocation1] sm:$0xff pattern:$0x75316420]
  %2049 = vrot.lane.b32.xlu0 %v2048, 120
  %v2050 = vpop.permute.xlu0 %2049
  %2051 = vst [vmem:[#allocation1] ss:$2 sm:$0xff] %v147
  %v2052 = vld.sshfl [vmem:[#allocation1] sm:$0xff pattern:$0x75316420]
  %2053 = vrot.lane.b32.xlu0 %v2052, 88
  %v2054 = vpop.permute.xlu0 %2053
  %v2055 = vsel %vm174, %v2050, 0
  %v2057 = vsel %vm174, %v2054, 0
  %2059 = vmatpush.xpose.msra.mxu0 0.0
  %2060 = vmatpush.xpose.msra.mxu0 0.0
  %2061 = vmatpush.xpose.msra.mxu0 0.0
  %2062 = vmatpush.xpose.msra.mxu0 0.0
  %2063 = vmatpush.xpose.msra.mxu0 0.0
  %2064 = vmatpush.xpose.msra.mxu0 0.0
  %2065 = vmatpush.xpose.msra.mxu0 0.0
  %2066 = vmatpush.xpose.msra.mxu0 0.0
  %2067 = vmatpush.xpose.msra.mxu0 0.0
  %2068 = vmatpush.xpose.msra.mxu0 0.0
  %2069 = vmatpush.xpose.msra.mxu0 0.0
  %2070 = vmatpush.xpose.msra.mxu0 0.0
  %2071 = vmatpush.xpose.msra.mxu0 0.0
  %2072 = vmatpush.xpose.msra.mxu0 0.0
  %2073 = vmatpush.xpose.msra.mxu0 0.0
  %2074 = vmatpush.xpose.msra.mxu0 %v2057
  %2075 = vmatmul.f32.gmra.mxu0 %v2055
  %v2076 = vpop.f32.mrf.mxu0
  %v2077 = vadd.f32 0.0, %v2076
  %2078 = vdwg.mxu0
  %2079 = vst [vmem:[#allocation1] ss:$2 sm:$0xff] %v164
  %v2080 = vld.sshfl [vmem:[#allocation1] sm:$0xff pattern:$0x75316420]
  %2081 = vrot.lane.b32.xlu0 %v2080, 120
  %v2082 = vpop.permute.xlu0 %2081
  %2083 = vst [vmem:[#allocation1] ss:$2 sm:$0xff] %v164
  %v2084 = vld.sshfl [vmem:[#allocation1] sm:$0xff pattern:$0x75316420]
  %2085 = vrot.lane.b32.xlu0 %v2084, 88
  %v2086 = vpop.permute.xlu0 %2085
  %v2087 = vsel %vm174, %v2082, 0
  %v2089 = vsel %vm174, %v2086, 0
  %2091 = vmatpush.xpose.msra.mxu0 0.0
  %2092 = vmatpush.xpose.msra.mxu0 0.0
  %2093 = vmatpush.xpose.msra.mxu0 0.0
  %2094 = vmatpush.xpose.msra.mxu0 0.0
  %2095 = vmatpush.xpose.msra.mxu0 0.0
  %2096 = vmatpush.xpose.msra.mxu0 0.0
  %2097 = vmatpush.xpose.msra.mxu0 0.0
  %2098 = vmatpush.xpose.msra.mxu0 0.0
  %2099 = vmatpush.xpose.msra.mxu0 0.0
  %2100 = vmatpush.xpose.msra.mxu0 0.0
  %2101 = vmatpush.xpose.msra.mxu0 0.0
  %2102 = vmatpush.xpose.msra.mxu0 0.0
  %2103 = vmatpush.xpose.msra.mxu0 0.0
  %2104 = vmatpush.xpose.msra.mxu0 0.0
  %2105 = vmatpush.xpose.msra.mxu0 0.0
  %2106 = vmatpush.xpose.msra.mxu0 %v2089
  %2107 = vmatmul.f32.gmra.mxu0 %v2087
  %v2108 = vpop.f32.mrf.mxu0
  %v2109 = vadd.f32 0.0, %v2108
  %2110 = vdwg.mxu0
  %v2111 = vmul.f32 %v1629, 0.35355338
  %v2112 = vmul.f32 %v1661, 0.35355338
  %v2113 = vmul.f32 %v1693, 0.35355338
  %v2114 = vmul.f32 %v1725, 0.35355338
  %v2115 = vmul.f32 %v1757, 0.35355338
  %v2116 = vmul.f32 %v1789, 0.35355338
  %v2117 = vmul.f32 %v1821, 0.35355338
  %v2118 = vmul.f32 %v1853, 0.35355338
  %v2119 = vmul.f32 %v1885, 0.35355338
  %v2120 = vmul.f32 %v1917, 0.35355338
  %v2121 = vmul.f32 %v1949, 0.35355338
  %v2122 = vmul.f32 %v1981, 0.35355338
  %v2123 = vmul.f32 %v2013, 0.35355338
  %v2124 = vmul.f32 %v2045, 0.35355338
  %v2125 = vmul.f32 %v2077, 0.35355338
  %v2126 = vmul.f32 %v2109, 0.35355338
  %v2127 = vsel %vm635, %v2111, -inf
  %2128 = vmax.xlane.f32.xlu0 %v2127
  %v2129 = vpop.xlane.xlu0 %2128
  %v2130 = vsel %vm635, %v2112, -inf
  %2131 = vmax.xlane.f32.xlu0 %v2130
  %v2132 = vpop.xlane.xlu0 %2131
  %v2133 = vsel %vm635, %v2113, -inf
  %2134 = vmax.xlane.f32.xlu0 %v2133
  %v2135 = vpop.xlane.xlu0 %2134
  %v2136 = vsel %vm635, %v2114, -inf
  %2137 = vmax.xlane.f32.xlu0 %v2136
  %v2138 = vpop.xlane.xlu0 %2137
  %v2139 = vsel %vm635, %v2115, -inf
  %2140 = vmax.xlane.f32.xlu0 %v2139
  %v2141 = vpop.xlane.xlu0 %2140
  %v2142 = vsel %vm635, %v2116, -inf
  %2143 = vmax.xlane.f32.xlu0 %v2142
  %v2144 = vpop.xlane.xlu0 %2143
  %v2145 = vsel %vm635, %v2117, -inf
  %2146 = vmax.xlane.f32.xlu0 %v2145
  %v2147 = vpop.xlane.xlu0 %2146
  %v2148 = vsel %vm635, %v2118, -inf
  %2149 = vmax.xlane.f32.xlu0 %v2148
  %v2150 = vpop.xlane.xlu0 %2149
  %v2151 = vsel %vm635, %v2119, -inf
  %2152 = vmax.xlane.f32.xlu0 %v2151
  %v2153 = vpop.xlane.xlu0 %2152
  %v2154 = vsel %vm635, %v2120, -inf
  %2155 = vmax.xlane.f32.xlu0 %v2154
  %v2156 = vpop.xlane.xlu0 %2155
  %v2157 = vsel %vm635, %v2121, -inf
  %2158 = vmax.xlane.f32.xlu0 %v2157
  %v2159 = vpop.xlane.xlu0 %2158
  %v2160 = vsel %vm635, %v2122, -inf
  %2161 = vmax.xlane.f32.xlu0 %v2160
  %v2162 = vpop.xlane.xlu0 %2161
  %v2163 = vsel %vm635, %v2123, -inf
  %2164 = vmax.xlane.f32.xlu0 %v2163
  %v2165 = vpop.xlane.xlu0 %2164
  %v2166 = vsel %vm635, %v2124, -inf
  %2167 = vmax.xlane.f32.xlu0 %v2166
  %v2168 = vpop.xlane.xlu0 %2167
  %v2169 = vsel %vm635, %v2125, -inf
  %2170 = vmax.xlane.f32.xlu0 %v2169
  %v2171 = vpop.xlane.xlu0 %2170
  %v2172 = vsel %vm635, %v2126, -inf
  %2173 = vmax.xlane.f32.xlu0 %v2172
  %v2174 = vpop.xlane.xlu0 %2173
  %v2175 = vsub.f32 %v2111, %v2129
  %v2176 = vsub.f32 %v2112, %v2132
  %v2177 = vsub.f32 %v2113, %v2135
  %v2178 = vsub.f32 %v2114, %v2138
  %v2179 = vsub.f32 %v2115, %v2141
  %v2180 = vsub.f32 %v2116, %v2144
  %v2181 = vsub.f32 %v2117, %v2147
  %v2182 = vsub.f32 %v2118, %v2150
  %v2183 = vsub.f32 %v2119, %v2153
  %v2184 = vsub.f32 %v2120, %v2156
  %v2185 = vsub.f32 %v2121, %v2159
  %v2186 = vsub.f32 %v2122, %v2162
  %v2187 = vsub.f32 %v2123, %v2165
  %v2188 = vsub.f32 %v2124, %v2168
  %v2189 = vsub.f32 %v2125, %v2171
  %v2190 = vsub.f32 %v2126, %v2174
  %v2191 = vmul.f32 %v2175, 1.442695
  %v2192 = vpow.pop %v2191
  %v2193 = vmul.f32 %v2176, 1.442695
  %v2194 = vpow.pop %v2193
  %v2195 = vmul.f32 %v2177, 1.442695
  %v2196 = vpow.pop %v2195
  %v2197 = vmul.f32 %v2178, 1.442695
  %v2198 = vpow.pop %v2197
  %v2199 = vmul.f32 %v2179, 1.442695
  %v2200 = vpow.pop %v2199
  %v2201 = vmul.f32 %v2180, 1.442695
  %v2202 = vpow.pop %v2201
  %v2203 = vmul.f32 %v2181, 1.442695
  %v2204 = vpow.pop %v2203
  %v2205 = vmul.f32 %v2182, 1.442695
  %v2206 = vpow.pop %v2205
  %v2207 = vmul.f32 %v2183, 1.442695
  %v2208 = vpow.pop %v2207
  %v2209 = vmul.f32 %v2184, 1.442695
  %v2210 = vpow.pop %v2209
  %v2211 = vmul.f32 %v2185, 1.442695
  %v2212 = vpow.pop %v2211
  %v2213 = vmul.f32 %v2186, 1.442695
  %v2214 = vpow.pop %v2213
  %v2215 = vmul.f32 %v2187, 1.442695
  %v2216 = vpow.pop %v2215
  %v2217 = vmul.f32 %v2188, 1.442695
  %v2218 = vpow.pop %v2217
  %v2219 = vmul.f32 %v2189, 1.442695
  %v2220 = vpow.pop %v2219
  %v2221 = vmul.f32 %v2190, 1.442695
  %v2222 = vpow.pop %v2221
  %v2223 = vsel %vm635, %v2192, 0.0
  %2224 = vadd.xlane.f32.xlu0 %v2223
  %v2225 = vpop.xlane.xlu0 %2224
  %v2226 = vsel %vm635, %v2194, 0.0
  %2227 = vadd.xlane.f32.xlu0 %v2226
  %v2228 = vpop.xlane.xlu0 %2227
  %v2229 = vsel %vm635, %v2196, 0.0
  %2230 = vadd.xlane.f32.xlu0 %v2229
  %v2231 = vpop.xlane.xlu0 %2230
  %v2232 = vsel %vm635, %v2198, 0.0
  %2233 = vadd.xlane.f32.xlu0 %v2232
  %v2234 = vpop.xlane.xlu0 %2233
  %v2235 = vsel %vm635, %v2200, 0.0
  %2236 = vadd.xlane.f32.xlu0 %v2235
  %v2237 = vpop.xlane.xlu0 %2236
  %v2238 = vsel %vm635, %v2202, 0.0
  %2239 = vadd.xlane.f32.xlu0 %v2238
  %v2240 = vpop.xlane.xlu0 %2239
  %v2241 = vsel %vm635, %v2204, 0.0
  %2242 = vadd.xlane.f32.xlu0 %v2241
  %v2243 = vpop.xlane.xlu0 %2242
  %v2244 = vsel %vm635, %v2206, 0.0
  %2245 = vadd.xlane.f32.xlu0 %v2244
  %v2246 = vpop.xlane.xlu0 %2245
  %v2247 = vsel %vm635, %v2208, 0.0
  %2248 = vadd.xlane.f32.xlu0 %v2247
  %v2249 = vpop.xlane.xlu0 %2248
  %v2250 = vsel %vm635, %v2210, 0.0
  %2251 = vadd.xlane.f32.xlu0 %v2250
  %v2252 = vpop.xlane.xlu0 %2251
  %v2253 = vsel %vm635, %v2212, 0.0
  %2254 = vadd.xlane.f32.xlu0 %v2253
  %v2255 = vpop.xlane.xlu0 %2254
  %v2256 = vsel %vm635, %v2214, 0.0
  %2257 = vadd.xlane.f32.xlu0 %v2256
  %v2258 = vpop.xlane.xlu0 %2257
  %v2259 = vsel %vm635, %v2216, 0.0
  %2260 = vadd.xlane.f32.xlu0 %v2259
  %v2261 = vpop.xlane.xlu0 %2260
  %v2262 = vsel %vm635, %v2218, 0.0
  %2263 = vadd.xlane.f32.xlu0 %v2262
  %v2264 = vpop.xlane.xlu0 %2263
  %v2265 = vsel %vm635, %v2220, 0.0
  %2266 = vadd.xlane.f32.xlu0 %v2265
  %v2267 = vpop.xlane.xlu0 %2266
  %v2268 = vsel %vm635, %v2222, 0.0
  %2269 = vadd.xlane.f32.xlu0 %v2268
  %v2270 = vpop.xlane.xlu0 %2269
  %v2271 = vrcp.pop %v2225
  %v2272 = vmul.f32 %v2225, %v2271
  %v2273 = vsub.f32 1.0, %v2272
  %v2274 = vmul.f32 %v2271, %v2273
  %v2275 = vadd.f32 %v2271, %v2274
  %vm2276 = vweird.f32 %v2225
  %vm2277 = vweird.f32 %v2271
  %vm2278 = vmor %vm2276, %vm2277
  %v2279 = vsel %vm2278, %v2271, %v2275
  %v2280 = vand.u32 2147483647, %v2225
  %vm2281 = vcmp.eq.f32.partialorder %v2280, 8.507059e+37
  %v2282 = vand.u32 %v2225, 2147483648
  %v2283 = vor.u32 1.1754944e-38, %v2282
  %v2284 = vsel %vm2281, %v2283, %v2279
  %v2285 = vmul.f32 %v2192, %v2284
  %v2286 = vrcp.pop %v2228
  %v2287 = vmul.f32 %v2228, %v2286
  %v2288 = vsub.f32 1.0, %v2287
  %v2289 = vmul.f32 %v2286, %v2288
  %v2290 = vadd.f32 %v2286, %v2289
  %vm2291 = vweird.f32 %v2228
  %vm2292 = vweird.f32 %v2286
  %vm2293 = vmor %vm2291, %vm2292
  %v2294 = vsel %vm2293, %v2286, %v2290
  %v2295 = vand.u32 2147483647, %v2228
  %vm2296 = vcmp.eq.f32.partialorder %v2295, 8.507059e+37
  %v2297 = vand.u32 %v2228, 2147483648
  %v2298 = vor.u32 1.1754944e-38, %v2297
  %v2299 = vsel %vm2296, %v2298, %v2294
  %v2300 = vmul.f32 %v2194, %v2299
  %v2301 = vrcp.pop %v2231
  %v2302 = vmul.f32 %v2231, %v2301
  %v2303 = vsub.f32 1.0, %v2302
  %v2304 = vmul.f32 %v2301, %v2303
  %v2305 = vadd.f32 %v2301, %v2304
  %vm2306 = vweird.f32 %v2231
  %vm2307 = vweird.f32 %v2301
  %vm2308 = vmor %vm2306, %vm2307
  %v2309 = vsel %vm2308, %v2301, %v2305
  %v2310 = vand.u32 2147483647, %v2231
  %vm2311 = vcmp.eq.f32.partialorder %v2310, 8.507059e+37
  %v2312 = vand.u32 %v2231, 2147483648
  %v2313 = vor.u32 1.1754944e-38, %v2312
  %v2314 = vsel %vm2311, %v2313, %v2309
  %v2315 = vmul.f32 %v2196, %v2314
  %v2316 = vrcp.pop %v2234
  %v2317 = vmul.f32 %v2234, %v2316
  %v2318 = vsub.f32 1.0, %v2317
  %v2319 = vmul.f32 %v2316, %v2318
  %v2320 = vadd.f32 %v2316, %v2319
  %vm2321 = vweird.f32 %v2234
  %vm2322 = vweird.f32 %v2316
  %vm2323 = vmor %vm2321, %vm2322
  %v2324 = vsel %vm2323, %v2316, %v2320
  %v2325 = vand.u32 2147483647, %v2234
  %vm2326 = vcmp.eq.f32.partialorder %v2325, 8.507059e+37
  %v2327 = vand.u32 %v2234, 2147483648
  %v2328 = vor.u32 1.1754944e-38, %v2327
  %v2329 = vsel %vm2326, %v2328, %v2324
  %v2330 = vmul.f32 %v2198, %v2329
  %v2331 = vrcp.pop %v2237
  %v2332 = vmul.f32 %v2237, %v2331
  %v2333 = vsub.f32 1.0, %v2332
  %v2334 = vmul.f32 %v2331, %v2333
  %v2335 = vadd.f32 %v2331, %v2334
  %vm2336 = vweird.f32 %v2237
  %vm2337 = vweird.f32 %v2331
  %vm2338 = vmor %vm2336, %vm2337
  %v2339 = vsel %vm2338, %v2331, %v2335
  %v2340 = vand.u32 2147483647, %v2237
  %vm2341 = vcmp.eq.f32.partialorder %v2340, 8.507059e+37
  %v2342 = vand.u32 %v2237, 2147483648
  %v2343 = vor.u32 1.1754944e-38, %v2342
  %v2344 = vsel %vm2341, %v2343, %v2339
  %v2345 = vmul.f32 %v2200, %v2344
  %v2346 = vrcp.pop %v2240
  %v2347 = vmul.f32 %v2240, %v2346
  %v2348 = vsub.f32 1.0, %v2347
  %v2349 = vmul.f32 %v2346, %v2348
  %v2350 = vadd.f32 %v2346, %v2349
  %vm2351 = vweird.f32 %v2240
  %vm2352 = vweird.f32 %v2346
  %vm2353 = vmor %vm2351, %vm2352
  %v2354 = vsel %vm2353, %v2346, %v2350
  %v2355 = vand.u32 2147483647, %v2240
  %vm2356 = vcmp.eq.f32.partialorder %v2355, 8.507059e+37
  %v2357 = vand.u32 %v2240, 2147483648
  %v2358 = vor.u32 1.1754944e-38, %v2357
  %v2359 = vsel %vm2356, %v2358, %v2354
  %v2360 = vmul.f32 %v2202, %v2359
  %v2361 = vrcp.pop %v2243
  %v2362 = vmul.f32 %v2243, %v2361
  %v2363 = vsub.f32 1.0, %v2362
  %v2364 = vmul.f32 %v2361, %v2363
  %v2365 = vadd.f32 %v2361, %v2364
  %vm2366 = vweird.f32 %v2243
  %vm2367 = vweird.f32 %v2361
  %vm2368 = vmor %vm2366, %vm2367
  %v2369 = vsel %vm2368, %v2361, %v2365
  %v2370 = vand.u32 2147483647, %v2243
  %vm2371 = vcmp.eq.f32.partialorder %v2370, 8.507059e+37
  %v2372 = vand.u32 %v2243, 2147483648
  %v2373 = vor.u32 1.1754944e-38, %v2372
  %v2374 = vsel %vm2371, %v2373, %v2369
  %v2375 = vmul.f32 %v2204, %v2374
  %v2376 = vrcp.pop %v2246
  %v2377 = vmul.f32 %v2246, %v2376
  %v2378 = vsub.f32 1.0, %v2377
  %v2379 = vmul.f32 %v2376, %v2378
  %v2380 = vadd.f32 %v2376, %v2379
  %vm2381 = vweird.f32 %v2246
  %vm2382 = vweird.f32 %v2376
  %vm2383 = vmor %vm2381, %vm2382
  %v2384 = vsel %vm2383, %v2376, %v2380
  %v2385 = vand.u32 2147483647, %v2246
  %vm2386 = vcmp.eq.f32.partialorder %v2385, 8.507059e+37
  %v2387 = vand.u32 %v2246, 2147483648
  %v2388 = vor.u32 1.1754944e-38, %v2387
  %v2389 = vsel %vm2386, %v2388, %v2384
  %v2390 = vmul.f32 %v2206, %v2389
  %v2391 = vrcp.pop %v2249
  %v2392 = vmul.f32 %v2249, %v2391
  %v2393 = vsub.f32 1.0, %v2392
  %v2394 = vmul.f32 %v2391, %v2393
  %v2395 = vadd.f32 %v2391, %v2394
  %vm2396 = vweird.f32 %v2249
  %vm2397 = vweird.f32 %v2391
  %vm2398 = vmor %vm2396, %vm2397
  %v2399 = vsel %vm2398, %v2391, %v2395
  %v2400 = vand.u32 2147483647, %v2249
  %vm2401 = vcmp.eq.f32.partialorder %v2400, 8.507059e+37
  %v2402 = vand.u32 %v2249, 2147483648
  %v2403 = vor.u32 1.1754944e-38, %v2402
  %v2404 = vsel %vm2401, %v2403, %v2399
  %v2405 = vmul.f32 %v2208, %v2404
  %v2406 = vrcp.pop %v2252
  %v2407 = vmul.f32 %v2252, %v2406
  %v2408 = vsub.f32 1.0, %v2407
  %v2409 = vmul.f32 %v2406, %v2408
  %v2410 = vadd.f32 %v2406, %v2409
  %vm2411 = vweird.f32 %v2252
  %vm2412 = vweird.f32 %v2406
  %vm2413 = vmor %vm2411, %vm2412
  %v2414 = vsel %vm2413, %v2406, %v2410
  %v2415 = vand.u32 2147483647, %v2252
  %vm2416 = vcmp.eq.f32.partialorder %v2415, 8.507059e+37
  %v2417 = vand.u32 %v2252, 2147483648
  %v2418 = vor.u32 1.1754944e-38, %v2417
  %v2419 = vsel %vm2416, %v2418, %v2414
  %v2420 = vmul.f32 %v2210, %v2419
  %v2421 = vrcp.pop %v2255
  %v2422 = vmul.f32 %v2255, %v2421
  %v2423 = vsub.f32 1.0, %v2422
  %v2424 = vmul.f32 %v2421, %v2423
  %v2425 = vadd.f32 %v2421, %v2424
  %vm2426 = vweird.f32 %v2255
  %vm2427 = vweird.f32 %v2421
  %vm2428 = vmor %vm2426, %vm2427
  %v2429 = vsel %vm2428, %v2421, %v2425
  %v2430 = vand.u32 2147483647, %v2255
  %vm2431 = vcmp.eq.f32.partialorder %v2430, 8.507059e+37
  %v2432 = vand.u32 %v2255, 2147483648
  %v2433 = vor.u32 1.1754944e-38, %v2432
  %v2434 = vsel %vm2431, %v2433, %v2429
  %v2435 = vmul.f32 %v2212, %v2434
  %v2436 = vrcp.pop %v2258
  %v2437 = vmul.f32 %v2258, %v2436
  %v2438 = vsub.f32 1.0, %v2437
  %v2439 = vmul.f32 %v2436, %v2438
  %v2440 = vadd.f32 %v2436, %v2439
  %vm2441 = vweird.f32 %v2258
  %vm2442 = vweird.f32 %v2436
  %vm2443 = vmor %vm2441, %vm2442
  %v2444 = vsel %vm2443, %v2436, %v2440
  %v2445 = vand.u32 2147483647, %v2258
  %vm2446 = vcmp.eq.f32.partialorder %v2445, 8.507059e+37
  %v2447 = vand.u32 %v2258, 2147483648
  %v2448 = vor.u32 1.1754944e-38, %v2447
  %v2449 = vsel %vm2446, %v2448, %v2444
  %v2450 = vmul.f32 %v2214, %v2449
  %v2451 = vrcp.pop %v2261
  %v2452 = vmul.f32 %v2261, %v2451
  %v2453 = vsub.f32 1.0, %v2452
  %v2454 = vmul.f32 %v2451, %v2453
  %v2455 = vadd.f32 %v2451, %v2454
  %vm2456 = vweird.f32 %v2261
  %vm2457 = vweird.f32 %v2451
  %vm2458 = vmor %vm2456, %vm2457
  %v2459 = vsel %vm2458, %v2451, %v2455
  %v2460 = vand.u32 2147483647, %v2261
  %vm2461 = vcmp.eq.f32.partialorder %v2460, 8.507059e+37
  %v2462 = vand.u32 %v2261, 2147483648
  %v2463 = vor.u32 1.1754944e-38, %v2462
  %v2464 = vsel %vm2461, %v2463, %v2459
  %v2465 = vmul.f32 %v2216, %v2464
  %v2466 = vrcp.pop %v2264
  %v2467 = vmul.f32 %v2264, %v2466
  %v2468 = vsub.f32 1.0, %v2467
  %v2469 = vmul.f32 %v2466, %v2468
  %v2470 = vadd.f32 %v2466, %v2469
  %vm2471 = vweird.f32 %v2264
  %vm2472 = vweird.f32 %v2466
  %vm2473 = vmor %vm2471, %vm2472
  %v2474 = vsel %vm2473, %v2466, %v2470
  %v2475 = vand.u32 2147483647, %v2264
  %vm2476 = vcmp.eq.f32.partialorder %v2475, 8.507059e+37
  %v2477 = vand.u32 %v2264, 2147483648
  %v2478 = vor.u32 1.1754944e-38, %v2477
  %v2479 = vsel %vm2476, %v2478, %v2474
  %v2480 = vmul.f32 %v2218, %v2479
  %v2481 = vrcp.pop %v2267
  %v2482 = vmul.f32 %v2267, %v2481
  %v2483 = vsub.f32 1.0, %v2482
  %v2484 = vmul.f32 %v2481, %v2483
  %v2485 = vadd.f32 %v2481, %v2484
  %vm2486 = vweird.f32 %v2267
  %vm2487 = vweird.f32 %v2481
  %vm2488 = vmor %vm2486, %vm2487
  %v2489 = vsel %vm2488, %v2481, %v2485
  %v2490 = vand.u32 2147483647, %v2267
  %vm2491 = vcmp.eq.f32.partialorder %v2490, 8.507059e+37
  %v2492 = vand.u32 %v2267, 2147483648
  %v2493 = vor.u32 1.1754944e-38, %v2492
  %v2494 = vsel %vm2491, %v2493, %v2489
  %v2495 = vmul.f32 %v2220, %v2494
  %v2496 = vrcp.pop %v2270
  %v2497 = vmul.f32 %v2270, %v2496
  %v2498 = vsub.f32 1.0, %v2497
  %v2499 = vmul.f32 %v2496, %v2498
  %v2500 = vadd.f32 %v2496, %v2499
  %vm2501 = vweird.f32 %v2270
  %vm2502 = vweird.f32 %v2496
  %vm2503 = vmor %vm2501, %vm2502
  %v2504 = vsel %vm2503, %v2496, %v2500
  %v2505 = vand.u32 2147483647, %v2270
  %vm2506 = vcmp.eq.f32.partialorder %v2505, 8.507059e+37
  %v2507 = vand.u32 %v2270, 2147483648
  %v2508 = vor.u32 1.1754944e-38, %v2507
  %v2509 = vsel %vm2506, %v2508, %v2504
  %v2510 = vmul.f32 %v2222, %v2509
  %2511 = vst [vmem:[#allocation1] ss:$2 sm:$0xff] %v126
  %v2512 = vld.sshfl [vmem:[#allocation1] sm:$0xff pattern:$0x75316420]
  %2513 = vrot.lane.b32.xlu0 %v2512, 56
  %v2514 = vpop.permute.xlu0 %2513
  %v2516 = vsel %vm1024, %v2285, 0
  %v2518 = vsel %vm1028, %v2514, 0
  %2520 = vmatpush.msra.mxu0 0.0
  %2521 = vmatpush.msra.mxu0 0.0
  %2522 = vmatpush.msra.mxu0 0.0
  %2523 = vmatpush.msra.mxu0 0.0
  %2524 = vmatpush.msra.mxu0 0.0
  %2525 = vmatpush.msra.mxu0 0.0
  %2526 = vmatpush.msra.mxu0 0.0
  %2527 = vmatpush.msra.mxu0 0.0
  %2528 = vmatpush.msra.mxu0 0.0
  %2529 = vmatpush.msra.mxu0 0.0
  %2530 = vmatpush.msra.mxu0 0.0
  %2531 = vmatpush.msra.mxu0 0.0
  %2532 = vmatpush.msra.mxu0 0.0
  %2533 = vmatpush.msra.mxu0 0.0
  %2534 = vmatpush.msra.mxu0 0.0
  %2535 = vmatpush.msra.mxu0 %v2518
  %2536 = vmatmul.f32.gmra.mxu0 %v2516
  %v2537 = vpop.f32.mrf.mxu0
  %v2538 = vadd.f32 0.0, %v2537
  %2539 = vdwg.mxu0
  %2540 = vst [vmem:[#allocation1] ss:$2 sm:$0xff] %v157
  %v2541 = vld.sshfl [vmem:[#allocation1] sm:$0xff pattern:$0x75316420]
  %2542 = vrot.lane.b32.xlu0 %v2541, 56
  %v2543 = vpop.permute.xlu0 %2542
  %v2545 = vsel %vm1024, %v2300, 0
  %v2547 = vsel %vm1028, %v2543, 0
  %2549 = vmatpush.msra.mxu0 0.0
  %2550 = vmatpush.msra.mxu0 0.0
  %2551 = vmatpush.msra.mxu0 0.0
  %2552 = vmatpush.msra.mxu0 0.0
  %2553 = vmatpush.msra.mxu0 0.0
  %2554 = vmatpush.msra.mxu0 0.0
  %2555 = vmatpush.msra.mxu0 0.0
  %2556 = vmatpush.msra.mxu0 0.0
  %2557 = vmatpush.msra.mxu0 0.0
  %2558 = vmatpush.msra.mxu0 0.0
  %2559 = vmatpush.msra.mxu0 0.0
  %2560 = vmatpush.msra.mxu0 0.0
  %2561 = vmatpush.msra.mxu0 0.0
  %2562 = vmatpush.msra.mxu0 0.0
  %2563 = vmatpush.msra.mxu0 0.0
  %2564 = vmatpush.msra.mxu0 %v2547
  %2565 = vmatmul.f32.gmra.mxu0 %v2545
  %v2566 = vpop.f32.mrf.mxu0
  %v2567 = vadd.f32 0.0, %v2566
  %2568 = vdwg.mxu0
  %2569 = vst [vmem:[#allocation1] ss:$2 sm:$0xff] %v129
  %v2570 = vld.sshfl [vmem:[#allocation1] sm:$0xff pattern:$0x75316420]
  %2571 = vrot.lane.b32.xlu0 %v2570, 56
  %v2572 = vpop.permute.xlu0 %2571
  %v2574 = vsel %vm1024, %v2315, 0
  %v2576 = vsel %vm1028, %v2572, 0
  %2578 = vmatpush.msra.mxu0 0.0
  %2579 = vmatpush.msra.mxu0 0.0
  %2580 = vmatpush.msra.mxu0 0.0
  %2581 = vmatpush.msra.mxu0 0.0
  %2582 = vmatpush.msra.mxu0 0.0
  %2583 = vmatpush.msra.mxu0 0.0
  %2584 = vmatpush.msra.mxu0 0.0
  %2585 = vmatpush.msra.mxu0 0.0
  %2586 = vmatpush.msra.mxu0 0.0
  %2587 = vmatpush.msra.mxu0 0.0
  %2588 = vmatpush.msra.mxu0 0.0
  %2589 = vmatpush.msra.mxu0 0.0
  %2590 = vmatpush.msra.mxu0 0.0
  %2591 = vmatpush.msra.mxu0 0.0
  %2592 = vmatpush.msra.mxu0 0.0
  %2593 = vmatpush.msra.mxu0 %v2576
  %2594 = vmatmul.f32.gmra.mxu0 %v2574
  %v2595 = vpop.f32.mrf.mxu0
  %v2596 = vadd.f32 0.0, %v2595
  %2597 = vdwg.mxu0
  %2598 = vst [vmem:[#allocation1] ss:$2 sm:$0xff] %v158
  %v2599 = vld.sshfl [vmem:[#allocation1] sm:$0xff pattern:$0x75316420]
  %2600 = vrot.lane.b32.xlu0 %v2599, 56
  %v2601 = vpop.permute.xlu0 %2600
  %v2603 = vsel %vm1024, %v2330, 0
  %v2605 = vsel %vm1028, %v2601, 0
  %2607 = vmatpush.msra.mxu0 0.0
  %2608 = vmatpush.msra.mxu0 0.0
  %2609 = vmatpush.msra.mxu0 0.0
  %2610 = vmatpush.msra.mxu0 0.0
  %2611 = vmatpush.msra.mxu0 0.0
  %2612 = vmatpush.msra.mxu0 0.0
  %2613 = vmatpush.msra.mxu0 0.0
  %2614 = vmatpush.msra.mxu0 0.0
  %2615 = vmatpush.msra.mxu0 0.0
  %2616 = vmatpush.msra.mxu0 0.0
  %2617 = vmatpush.msra.mxu0 0.0
  %2618 = vmatpush.msra.mxu0 0.0
  %2619 = vmatpush.msra.mxu0 0.0
  %2620 = vmatpush.msra.mxu0 0.0
  %2621 = vmatpush.msra.mxu0 0.0
  %2622 = vmatpush.msra.mxu0 %v2605
  %2623 = vmatmul.f32.gmra.mxu0 %v2603
  %v2624 = vpop.f32.mrf.mxu0
  %v2625 = vadd.f32 0.0, %v2624
  %2626 = vdwg.mxu0
  %2627 = vst [vmem:[#allocation1] ss:$2 sm:$0xff] %v132
  %v2628 = vld.sshfl [vmem:[#allocation1] sm:$0xff pattern:$0x75316420]
  %2629 = vrot.lane.b32.xlu0 %v2628, 56
  %v2630 = vpop.permute.xlu0 %2629
  %v2632 = vsel %vm1024, %v2345, 0
  %v2634 = vsel %vm1028, %v2630, 0
  %2636 = vmatpush.msra.mxu0 0.0
  %2637 = vmatpush.msra.mxu0 0.0
  %2638 = vmatpush.msra.mxu0 0.0
  %2639 = vmatpush.msra.mxu0 0.0
  %2640 = vmatpush.msra.mxu0 0.0
  %2641 = vmatpush.msra.mxu0 0.0
  %2642 = vmatpush.msra.mxu0 0.0
  %2643 = vmatpush.msra.mxu0 0.0
  %2644 = vmatpush.msra.mxu0 0.0
  %2645 = vmatpush.msra.mxu0 0.0
  %2646 = vmatpush.msra.mxu0 0.0
  %2647 = vmatpush.msra.mxu0 0.0
  %2648 = vmatpush.msra.mxu0 0.0
  %2649 = vmatpush.msra.mxu0 0.0
  %2650 = vmatpush.msra.mxu0 0.0
  %2651 = vmatpush.msra.mxu0 %v2634
  %2652 = vmatmul.f32.gmra.mxu0 %v2632
  %v2653 = vpop.f32.mrf.mxu0
  %v2654 = vadd.f32 0.0, %v2653
  %2655 = vdwg.mxu0
  %2656 = vst [vmem:[#allocation1] ss:$2 sm:$0xff] %v159
  %v2657 = vld.sshfl [vmem:[#allocation1] sm:$0xff pattern:$0x75316420]
  %2658 = vrot.lane.b32.xlu0 %v2657, 56
  %v2659 = vpop.permute.xlu0 %2658
  %v2661 = vsel %vm1024, %v2360, 0
  %v2663 = vsel %vm1028, %v2659, 0
  %2665 = vmatpush.msra.mxu0 0.0
  %2666 = vmatpush.msra.mxu0 0.0
  %2667 = vmatpush.msra.mxu0 0.0
  %2668 = vmatpush.msra.mxu0 0.0
  %2669 = vmatpush.msra.mxu0 0.0
  %2670 = vmatpush.msra.mxu0 0.0
  %2671 = vmatpush.msra.mxu0 0.0
  %2672 = vmatpush.msra.mxu0 0.0
  %2673 = vmatpush.msra.mxu0 0.0
  %2674 = vmatpush.msra.mxu0 0.0
  %2675 = vmatpush.msra.mxu0 0.0
  %2676 = vmatpush.msra.mxu0 0.0
  %2677 = vmatpush.msra.mxu0 0.0
  %2678 = vmatpush.msra.mxu0 0.0
  %2679 = vmatpush.msra.mxu0 0.0
  %2680 = vmatpush.msra.mxu0 %v2663
  %2681 = vmatmul.f32.gmra.mxu0 %v2661
  %v2682 = vpop.f32.mrf.mxu0
  %v2683 = vadd.f32 0.0, %v2682
  %2684 = vdwg.mxu0
  %2685 = vst [vmem:[#allocation1] ss:$2 sm:$0xff] %v135
  %v2686 = vld.sshfl [vmem:[#allocation1] sm:$0xff pattern:$0x75316420]
  %2687 = vrot.lane.b32.xlu0 %v2686, 56
  %v2688 = vpop.permute.xlu0 %2687
  %v2690 = vsel %vm1024, %v2375, 0
  %v2692 = vsel %vm1028, %v2688, 0
  %2694 = vmatpush.msra.mxu0 0.0
  %2695 = vmatpush.msra.mxu0 0.0
  %2696 = vmatpush.msra.mxu0 0.0
  %2697 = vmatpush.msra.mxu0 0.0
  %2698 = vmatpush.msra.mxu0 0.0
  %2699 = vmatpush.msra.mxu0 0.0
  %2700 = vmatpush.msra.mxu0 0.0
  %2701 = vmatpush.msra.mxu0 0.0
  %2702 = vmatpush.msra.mxu0 0.0
  %2703 = vmatpush.msra.mxu0 0.0
  %2704 = vmatpush.msra.mxu0 0.0
  %2705 = vmatpush.msra.mxu0 0.0
  %2706 = vmatpush.msra.mxu0 0.0
  %2707 = vmatpush.msra.mxu0 0.0
  %2708 = vmatpush.msra.mxu0 0.0
  %2709 = vmatpush.msra.mxu0 %v2692
  %2710 = vmatmul.f32.gmra.mxu0 %v2690
  %v2711 = vpop.f32.mrf.mxu0
  %v2712 = vadd.f32 0.0, %v2711
  %2713 = vdwg.mxu0
  %2714 = vst [vmem:[#allocation1] ss:$2 sm:$0xff] %v160
  %v2715 = vld.sshfl [vmem:[#allocation1] sm:$0xff pattern:$0x75316420]
  %2716 = vrot.lane.b32.xlu0 %v2715, 56
  %v2717 = vpop.permute.xlu0 %2716
  %v2719 = vsel %vm1024, %v2390, 0
  %v2721 = vsel %vm1028, %v2717, 0
  %2723 = vmatpush.msra.mxu0 0.0
  %2724 = vmatpush.msra.mxu0 0.0
  %2725 = vmatpush.msra.mxu0 0.0
  %2726 = vmatpush.msra.mxu0 0.0
  %2727 = vmatpush.msra.mxu0 0.0
  %2728 = vmatpush.msra.mxu0 0.0
  %2729 = vmatpush.msra.mxu0 0.0
  %2730 = vmatpush.msra.mxu0 0.0
  %2731 = vmatpush.msra.mxu0 0.0
  %2732 = vmatpush.msra.mxu0 0.0
  %2733 = vmatpush.msra.mxu0 0.0
  %2734 = vmatpush.msra.mxu0 0.0
  %2735 = vmatpush.msra.mxu0 0.0
  %2736 = vmatpush.msra.mxu0 0.0
  %2737 = vmatpush.msra.mxu0 0.0
  %2738 = vmatpush.msra.mxu0 %v2721
  %2739 = vmatmul.f32.gmra.mxu0 %v2719
  %v2740 = vpop.f32.mrf.mxu0
  %v2741 = vadd.f32 0.0, %v2740
  %2742 = vdwg.mxu0
  %2743 = vst [vmem:[#allocation1] ss:$2 sm:$0xff] %v138
  %v2744 = vld.sshfl [vmem:[#allocation1] sm:$0xff pattern:$0x75316420]
  %2745 = vrot.lane.b32.xlu0 %v2744, 56
  %v2746 = vpop.permute.xlu0 %2745
  %v2748 = vsel %vm1024, %v2405, 0
  %v2750 = vsel %vm1028, %v2746, 0
  %2752 = vmatpush.msra.mxu0 0.0
  %2753 = vmatpush.msra.mxu0 0.0
  %2754 = vmatpush.msra.mxu0 0.0
  %2755 = vmatpush.msra.mxu0 0.0
  %2756 = vmatpush.msra.mxu0 0.0
  %2757 = vmatpush.msra.mxu0 0.0
  %2758 = vmatpush.msra.mxu0 0.0
  %2759 = vmatpush.msra.mxu0 0.0
  %2760 = vmatpush.msra.mxu0 0.0
  %2761 = vmatpush.msra.mxu0 0.0
  %2762 = vmatpush.msra.mxu0 0.0
  %2763 = vmatpush.msra.mxu0 0.0
  %2764 = vmatpush.msra.mxu0 0.0
  %2765 = vmatpush.msra.mxu0 0.0
  %2766 = vmatpush.msra.mxu0 0.0
  %2767 = vmatpush.msra.mxu0 %v2750
  %2768 = vmatmul.f32.gmra.mxu0 %v2748
  %v2769 = vpop.f32.mrf.mxu0
  %v2770 = vadd.f32 0.0, %v2769
  %2771 = vdwg.mxu0
  %2772 = vst [vmem:[#allocation1] ss:$2 sm:$0xff] %v161
  %v2773 = vld.sshfl [vmem:[#allocation1] sm:$0xff pattern:$0x75316420]
  %2774 = vrot.lane.b32.xlu0 %v2773, 56
  %v2775 = vpop.permute.xlu0 %2774
  %v2777 = vsel %vm1024, %v2420, 0
  %v2779 = vsel %vm1028, %v2775, 0
  %2781 = vmatpush.msra.mxu0 0.0
  %2782 = vmatpush.msra.mxu0 0.0
  %2783 = vmatpush.msra.mxu0 0.0
  %2784 = vmatpush.msra.mxu0 0.0
  %2785 = vmatpush.msra.mxu0 0.0
  %2786 = vmatpush.msra.mxu0 0.0
  %2787 = vmatpush.msra.mxu0 0.0
  %2788 = vmatpush.msra.mxu0 0.0
  %2789 = vmatpush.msra.mxu0 0.0
  %2790 = vmatpush.msra.mxu0 0.0
  %2791 = vmatpush.msra.mxu0 0.0
  %2792 = vmatpush.msra.mxu0 0.0
  %2793 = vmatpush.msra.mxu0 0.0
  %2794 = vmatpush.msra.mxu0 0.0
  %2795 = vmatpush.msra.mxu0 0.0
  %2796 = vmatpush.msra.mxu0 %v2779
  %2797 = vmatmul.f32.gmra.mxu0 %v2777
  %v2798 = vpop.f32.mrf.mxu0
  %v2799 = vadd.f32 0.0, %v2798
  %2800 = vdwg.mxu0
  %2801 = vst [vmem:[#allocation1] ss:$2 sm:$0xff] %v141
  %v2802 = vld.sshfl [vmem:[#allocation1] sm:$0xff pattern:$0x75316420]
  %2803 = vrot.lane.b32.xlu0 %v2802, 56
  %v2804 = vpop.permute.xlu0 %2803
  %v2806 = vsel %vm1024, %v2435, 0
  %v2808 = vsel %vm1028, %v2804, 0
  %2810 = vmatpush.msra.mxu0 0.0
  %2811 = vmatpush.msra.mxu0 0.0
  %2812 = vmatpush.msra.mxu0 0.0
  %2813 = vmatpush.msra.mxu0 0.0
  %2814 = vmatpush.msra.mxu0 0.0
  %2815 = vmatpush.msra.mxu0 0.0
  %2816 = vmatpush.msra.mxu0 0.0
  %2817 = vmatpush.msra.mxu0 0.0
  %2818 = vmatpush.msra.mxu0 0.0
  %2819 = vmatpush.msra.mxu0 0.0
  %2820 = vmatpush.msra.mxu0 0.0
  %2821 = vmatpush.msra.mxu0 0.0
  %2822 = vmatpush.msra.mxu0 0.0
  %2823 = vmatpush.msra.mxu0 0.0
  %2824 = vmatpush.msra.mxu0 0.0
  %2825 = vmatpush.msra.mxu0 %v2808
  %2826 = vmatmul.f32.gmra.mxu0 %v2806
  %v2827 = vpop.f32.mrf.mxu0
  %v2828 = vadd.f32 0.0, %v2827
  %2829 = vdwg.mxu0
  %2830 = vst [vmem:[#allocation1] ss:$2 sm:$0xff] %v162
  %v2831 = vld.sshfl [vmem:[#allocation1] sm:$0xff pattern:$0x75316420]
  %2832 = vrot.lane.b32.xlu0 %v2831, 56
  %v2833 = vpop.permute.xlu0 %2832
  %v2835 = vsel %vm1024, %v2450, 0
  %v2837 = vsel %vm1028, %v2833, 0
  %2839 = vmatpush.msra.mxu0 0.0
  %2840 = vmatpush.msra.mxu0 0.0
  %2841 = vmatpush.msra.mxu0 0.0
  %2842 = vmatpush.msra.mxu0 0.0
  %2843 = vmatpush.msra.mxu0 0.0
  %2844 = vmatpush.msra.mxu0 0.0
  %2845 = vmatpush.msra.mxu0 0.0
  %2846 = vmatpush.msra.mxu0 0.0
  %2847 = vmatpush.msra.mxu0 0.0
  %2848 = vmatpush.msra.mxu0 0.0
  %2849 = vmatpush.msra.mxu0 0.0
  %2850 = vmatpush.msra.mxu0 0.0
  %2851 = vmatpush.msra.mxu0 0.0
  %2852 = vmatpush.msra.mxu0 0.0
  %2853 = vmatpush.msra.mxu0 0.0
  %2854 = vmatpush.msra.mxu0 %v2837
  %2855 = vmatmul.f32.gmra.mxu0 %v2835
  %v2856 = vpop.f32.mrf.mxu0
  %v2857 = vadd.f32 0.0, %v2856
  %2858 = vdwg.mxu0
  %2859 = vst [vmem:[#allocation1] ss:$2 sm:$0xff] %v144
  %v2860 = vld.sshfl [vmem:[#allocation1] sm:$0xff pattern:$0x75316420]
  %2861 = vrot.lane.b32.xlu0 %v2860, 56
  %v2862 = vpop.permute.xlu0 %2861
  %v2864 = vsel %vm1024, %v2465, 0
  %v2866 = vsel %vm1028, %v2862, 0
  %2868 = vmatpush.msra.mxu0 0.0
  %2869 = vmatpush.msra.mxu0 0.0
  %2870 = vmatpush.msra.mxu0 0.0
  %2871 = vmatpush.msra.mxu0 0.0
  %2872 = vmatpush.msra.mxu0 0.0
  %2873 = vmatpush.msra.mxu0 0.0
  %2874 = vmatpush.msra.mxu0 0.0
  %2875 = vmatpush.msra.mxu0 0.0
  %2876 = vmatpush.msra.mxu0 0.0
  %2877 = vmatpush.msra.mxu0 0.0
  %2878 = vmatpush.msra.mxu0 0.0
  %2879 = vmatpush.msra.mxu0 0.0
  %2880 = vmatpush.msra.mxu0 0.0
  %2881 = vmatpush.msra.mxu0 0.0
  %2882 = vmatpush.msra.mxu0 0.0
  %2883 = vmatpush.msra.mxu0 %v2866
  %2884 = vmatmul.f32.gmra.mxu0 %v2864
  %v2885 = vpop.f32.mrf.mxu0
  %v2886 = vadd.f32 0.0, %v2885
  %2887 = vdwg.mxu0
  %2888 = vst [vmem:[#allocation1] ss:$2 sm:$0xff] %v163
  %v2889 = vld.sshfl [vmem:[#allocation1] sm:$0xff pattern:$0x75316420]
  %2890 = vrot.lane.b32.xlu0 %v2889, 56
  %v2891 = vpop.permute.xlu0 %2890
  %v2893 = vsel %vm1024, %v2480, 0
  %v2895 = vsel %vm1028, %v2891, 0
  %2897 = vmatpush.msra.mxu0 0.0
  %2898 = vmatpush.msra.mxu0 0.0
  %2899 = vmatpush.msra.mxu0 0.0
  %2900 = vmatpush.msra.mxu0 0.0
  %2901 = vmatpush.msra.mxu0 0.0
  %2902 = vmatpush.msra.mxu0 0.0
  %2903 = vmatpush.msra.mxu0 0.0
  %2904 = vmatpush.msra.mxu0 0.0
  %2905 = vmatpush.msra.mxu0 0.0
  %2906 = vmatpush.msra.mxu0 0.0
  %2907 = vmatpush.msra.mxu0 0.0
  %2908 = vmatpush.msra.mxu0 0.0
  %2909 = vmatpush.msra.mxu0 0.0
  %2910 = vmatpush.msra.mxu0 0.0
  %2911 = vmatpush.msra.mxu0 0.0
  %2912 = vmatpush.msra.mxu0 %v2895
  %2913 = vmatmul.f32.gmra.mxu0 %v2893
  %v2914 = vpop.f32.mrf.mxu0
  %v2915 = vadd.f32 0.0, %v2914
  %2916 = vdwg.mxu0
  %2917 = vst [vmem:[#allocation1] ss:$2 sm:$0xff] %v147
  %v2918 = vld.sshfl [vmem:[#allocation1] sm:$0xff pattern:$0x75316420]
  %2919 = vrot.lane.b32.xlu0 %v2918, 56
  %v2920 = vpop.permute.xlu0 %2919
  %v2922 = vsel %vm1024, %v2495, 0
  %v2924 = vsel %vm1028, %v2920, 0
  %2926 = vmatpush.msra.mxu0 0.0
  %2927 = vmatpush.msra.mxu0 0.0
  %2928 = vmatpush.msra.mxu0 0.0
  %2929 = vmatpush.msra.mxu0 0.0
  %2930 = vmatpush.msra.mxu0 0.0
  %2931 = vmatpush.msra.mxu0 0.0
  %2932 = vmatpush.msra.mxu0 0.0
  %2933 = vmatpush.msra.mxu0 0.0
  %2934 = vmatpush.msra.mxu0 0.0
  %2935 = vmatpush.msra.mxu0 0.0
  %2936 = vmatpush.msra.mxu0 0.0
  %2937 = vmatpush.msra.mxu0 0.0
  %2938 = vmatpush.msra.mxu0 0.0
  %2939 = vmatpush.msra.mxu0 0.0
  %2940 = vmatpush.msra.mxu0 0.0
  %2941 = vmatpush.msra.mxu0 %v2924
  %2942 = vmatmul.f32.gmra.mxu0 %v2922
  %v2943 = vpop.f32.mrf.mxu0
  %v2944 = vadd.f32 0.0, %v2943
  %2945 = vdwg.mxu0
  %2946 = vst [vmem:[#allocation1] ss:$2 sm:$0xff] %v164
  %v2947 = vld.sshfl [vmem:[#allocation1] sm:$0xff pattern:$0x75316420]
  %2948 = vrot.lane.b32.xlu0 %v2947, 56
  %v2949 = vpop.permute.xlu0 %2948
  %v2951 = vsel %vm1024, %v2510, 0
  %v2953 = vsel %vm1028, %v2949, 0
  %2955 = vmatpush.msra.mxu0 0.0
  %2956 = vmatpush.msra.mxu0 0.0
  %2957 = vmatpush.msra.mxu0 0.0
  %2958 = vmatpush.msra.mxu0 0.0
  %2959 = vmatpush.msra.mxu0 0.0
  %2960 = vmatpush.msra.mxu0 0.0
  %2961 = vmatpush.msra.mxu0 0.0
  %2962 = vmatpush.msra.mxu0 0.0
  %2963 = vmatpush.msra.mxu0 0.0
  %2964 = vmatpush.msra.mxu0 0.0
  %2965 = vmatpush.msra.mxu0 0.0
  %2966 = vmatpush.msra.mxu0 0.0
  %2967 = vmatpush.msra.mxu0 0.0
  %2968 = vmatpush.msra.mxu0 0.0
  %2969 = vmatpush.msra.mxu0 0.0
  %2970 = vmatpush.msra.mxu0 %v2953
  %2971 = vmatmul.f32.gmra.mxu0 %v2951
  %v2972 = vpop.f32.mrf.mxu0
  %v2973 = vadd.f32 0.0, %v2972
  %2974 = vdwg.mxu0
  %v2975 = vld [vmem:[%s3 + $0x8] sm:$0xff]
  %2992 = vst [vmem:[#allocation1] ss:$2 sm:$0xff] %v2538
  %s2993 = scalar_lea.vmem [#allocation1], 1
  %2994 = vst [vmem:[%s2993] ss:$2 sm:$0xff] %v2567
  %s2995 = scalar_lea.vmem [#allocation1], 16
  %2996 = vst [vmem:[%s2995] ss:$2 sm:$0xff] %v2596
  %s2997 = scalar_lea.vmem [#allocation1], 17
  %2998 = vst [vmem:[%s2997] ss:$2 sm:$0xff] %v2625
  %s2999 = scalar_lea.vmem [#allocation1], 32
  %3000 = vst [vmem:[%s2999] ss:$2 sm:$0xff] %v2654
  %s3001 = scalar_lea.vmem [#allocation1], 33
  %3002 = vst [vmem:[%s3001] ss:$2 sm:$0xff] %v2683
  %s3003 = scalar_lea.vmem [#allocation1], 48
  %3004 = vst [vmem:[%s3003] ss:$2 sm:$0xff] %v2712
  %s3005 = scalar_lea.vmem [#allocation1], 49
  %3006 = vst [vmem:[%s3005] ss:$2 sm:$0xff] %v2741
  %v3007 = vld.sshfl [vmem:[#allocation1] sm:$0xff pattern:$0x75316420]
  %v3008 = vld.sshfl [vmem:[#allocation1 + $0x10] sm:$0xff pattern:$0x75316420]
  %v3009 = vld.sshfl [vmem:[#allocation1 + $0x20] sm:$0xff pattern:$0x75316420]
  %v3010 = vld.sshfl [vmem:[#allocation1 + $0x30] sm:$0xff pattern:$0x75316420]
  %3011 = vst [vmem:[#allocation1] ss:$2 sm:$0xff] %v2770
  %3012 = vst [vmem:[%s2993] ss:$2 sm:$0xff] %v2799
  %3013 = vst [vmem:[%s2995] ss:$2 sm:$0xff] %v2828
  %3014 = vst [vmem:[%s2997] ss:$2 sm:$0xff] %v2857
  %3015 = vst [vmem:[%s2999] ss:$2 sm:$0xff] %v2886
  %3016 = vst [vmem:[%s3001] ss:$2 sm:$0xff] %v2915
  %3017 = vst [vmem:[%s3003] ss:$2 sm:$0xff] %v2944
  %3018 = vst [vmem:[%s3005] ss:$2 sm:$0xff] %v2973
  %v3019 = vld.sshfl [vmem:[#allocation1] sm:$0xff pattern:$0x75316420]
  %v3020 = vld.sshfl [vmem:[#allocation1 + $0x10] sm:$0xff pattern:$0x75316420]
  %v3021 = vld.sshfl [vmem:[#allocation1 + $0x20] sm:$0xff pattern:$0x75316420]
  %v3022 = vld.sshfl [vmem:[#allocation1 + $0x30] sm:$0xff pattern:$0x75316420]
  %v3023 = vsel %vm174, %v3007, 0
  %v3025 = vsel %vm174, %v3008, 0
  %v3027 = vsel %vm174, %v3009, 0
  %v3029 = vsel %vm174, %v3010, 0
  %v3031 = vsel %vm174, %v3019, 0
  %v3033 = vsel %vm174, %v3020, 0
  %v3035 = vsel %vm174, %v3021, 0
  %v3037 = vsel %vm174, %v3022, 0
  %3039 = vmatpush.msra.mxu0 0.0
  %3040 = vmatpush.msra.mxu0 0.0
  %3041 = vmatpush.msra.mxu0 0.0
  %3042 = vmatpush.msra.mxu0 0.0
  %3043 = vmatpush.msra.mxu0 0.0
  %3044 = vmatpush.msra.mxu0 0.0
  %3045 = vmatpush.msra.mxu0 0.0
  %3046 = vmatpush.msra.mxu0 0.0
  %3047 = vmatpush.msra.mxu0 0.0
  %3048 = vmatpush.msra.mxu0 0.0
  %3049 = vmatpush.msra.mxu0 0.0
  %3050 = vmatpush.msra.mxu0 0.0
  %3051 = vmatpush.msra.mxu0 0.0
  %3052 = vmatpush.msra.mxu0 0.0
  %3053 = vmatpush.msra.mxu0 0.0
  %3054 = vmatpush.msra.mxu0 %v2975
  %3055 = vmatmul.f32.gmra.mxu0 %v3023
  %v3056 = vpop.f32.mrf.mxu0
  %v3057 = vadd.f32 0.0, %v3056
  %3058 = vmatmul.f32.gmra.mxu0 %v3025
  %v3059 = vpop.f32.mrf.mxu0
  %v3060 = vadd.f32 0.0, %v3059
  %3061 = vmatmul.f32.gmra.mxu0 %v3027
  %v3062 = vpop.f32.mrf.mxu0
  %v3063 = vadd.f32 0.0, %v3062
  %3064 = vmatmul.f32.gmra.mxu0 %v3029
  %v3065 = vpop.f32.mrf.mxu0
  %v3066 = vadd.f32 0.0, %v3065
  %3067 = vmatmul.f32.gmra.mxu0 %v3031
  %v3068 = vpop.f32.mrf.mxu0
  %v3069 = vadd.f32 0.0, %v3068
  %3070 = vmatmul.f32.gmra.mxu0 %v3033
  %v3071 = vpop.f32.mrf.mxu0
  %v3072 = vadd.f32 0.0, %v3071
  %3073 = vmatmul.f32.gmra.mxu0 %v3035
  %v3074 = vpop.f32.mrf.mxu0
  %v3075 = vadd.f32 0.0, %v3074
  %3076 = vmatmul.f32.gmra.mxu0 %v3037
  %v3077 = vpop.f32.mrf.mxu0
  %v3078 = vadd.f32 0.0, %v3077
  %3079 = vdwg.mxu0
  %v3080 = vadd.f32 %v1591, %v3057
  %v3081 = vadd.f32 %v1592, %v3060
  %v3082 = vadd.f32 %v1593, %v3063
  %v3083 = vadd.f32 %v1594, %v3066
  %v3084 = vadd.f32 %v1595, %v3069
  %v3085 = vadd.f32 %v1596, %v3072
  %v3086 = vadd.f32 %v1597, %v3075
  %v3087 = vadd.f32 %v1598, %v3078
  %3088 = vst [vmem:[#allocation1] ss:$2 sm:$0xff] %v126
  %v3089 = vld.sshfl [vmem:[#allocation1] sm:$0xff pattern:$0x75316420]
  %3090 = vrot.lane.b32.xlu0 %v3089, 112
  %v3091 = vpop.permute.xlu0 %3090
  %3092 = vst [vmem:[#allocation1] ss:$2 sm:$0xff] %v126
  %v3093 = vld.sshfl [vmem:[#allocation1] sm:$0xff pattern:$0x75316420]
  %3094 = vrot.lane.b32.xlu0 %v3093, 80
  %v3095 = vpop.permute.xlu0 %3094
  %v3096 = vsel %vm174, %v3091, 0
  %v3098 = vsel %vm174, %v3095, 0
  %3100 = vmatpush.xpose.msra.mxu0 0.0
  %3101 = vmatpush.xpose.msra.mxu0 0.0
  %3102 = vmatpush.xpose.msra.mxu0 0.0
  %3103 = vmatpush.xpose.msra.mxu0 0.0
  %3104 = vmatpush.xpose.msra.mxu0 0.0
  %3105 = vmatpush.xpose.msra.mxu0 0.0
  %3106 = vmatpush.xpose.msra.mxu0 0.0
  %3107 = vmatpush.xpose.msra.mxu0 0.0
  %3108 = vmatpush.xpose.msra.mxu0 0.0
  %3109 = vmatpush.xpose.msra.mxu0 0.0
  %3110 = vmatpush.xpose.msra.mxu0 0.0
  %3111 = vmatpush.xpose.msra.mxu0 0.0
  %3112 = vmatpush.xpose.msra.mxu0 0.0
  %3113 = vmatpush.xpose.msra.mxu0 0.0
  %3114 = vmatpush.xpose.msra.mxu0 0.0
  %3115 = vmatpush.xpose.msra.mxu0 %v3098
  %3116 = vmatmul.f32.gmra.mxu0 %v3096
  %v3117 = vpop.f32.mrf.mxu0
  %v3118 = vadd.f32 0.0, %v3117
  %3119 = vdwg.mxu0
  %3120 = vst [vmem:[#allocation1] ss:$2 sm:$0xff] %v157
  %v3121 = vld.sshfl [vmem:[#allocation1] sm:$0xff pattern:$0x75316420]
  %3122 = vrot.lane.b32.xlu0 %v3121, 112
  %v3123 = vpop.permute.xlu0 %3122
  %3124 = vst [vmem:[#allocation1] ss:$2 sm:$0xff] %v157
  %v3125 = vld.sshfl [vmem:[#allocation1] sm:$0xff pattern:$0x75316420]
  %3126 = vrot.lane.b32.xlu0 %v3125, 80
  %v3127 = vpop.permute.xlu0 %3126
  %v3128 = vsel %vm174, %v3123, 0
  %v3130 = vsel %vm174, %v3127, 0
  %3132 = vmatpush.xpose.msra.mxu0 0.0
  %3133 = vmatpush.xpose.msra.mxu0 0.0
  %3134 = vmatpush.xpose.msra.mxu0 0.0
  %3135 = vmatpush.xpose.msra.mxu0 0.0
  %3136 = vmatpush.xpose.msra.mxu0 0.0
  %3137 = vmatpush.xpose.msra.mxu0 0.0
  %3138 = vmatpush.xpose.msra.mxu0 0.0
  %3139 = vmatpush.xpose.msra.mxu0 0.0
  %3140 = vmatpush.xpose.msra.mxu0 0.0
  %3141 = vmatpush.xpose.msra.mxu0 0.0
  %3142 = vmatpush.xpose.msra.mxu0 0.0
  %3143 = vmatpush.xpose.msra.mxu0 0.0
  %3144 = vmatpush.xpose.msra.mxu0 0.0
  %3145 = vmatpush.xpose.msra.mxu0 0.0
  %3146 = vmatpush.xpose.msra.mxu0 0.0
  %3147 = vmatpush.xpose.msra.mxu0 %v3130
  %3148 = vmatmul.f32.gmra.mxu0 %v3128
  %v3149 = vpop.f32.mrf.mxu0
  %v3150 = vadd.f32 0.0, %v3149
  %3151 = vdwg.mxu0
  %3152 = vst [vmem:[#allocation1] ss:$2 sm:$0xff] %v129
  %v3153 = vld.sshfl [vmem:[#allocation1] sm:$0xff pattern:$0x75316420]
  %3154 = vrot.lane.b32.xlu0 %v3153, 112
  %v3155 = vpop.permute.xlu0 %3154
  %3156 = vst [vmem:[#allocation1] ss:$2 sm:$0xff] %v129
  %v3157 = vld.sshfl [vmem:[#allocation1] sm:$0xff pattern:$0x75316420]
  %3158 = vrot.lane.b32.xlu0 %v3157, 80
  %v3159 = vpop.permute.xlu0 %3158
  %v3160 = vsel %vm174, %v3155, 0
  %v3162 = vsel %vm174, %v3159, 0
  %3164 = vmatpush.xpose.msra.mxu0 0.0
  %3165 = vmatpush.xpose.msra.mxu0 0.0
  %3166 = vmatpush.xpose.msra.mxu0 0.0
  %3167 = vmatpush.xpose.msra.mxu0 0.0
  %3168 = vmatpush.xpose.msra.mxu0 0.0
  %3169 = vmatpush.xpose.msra.mxu0 0.0
  %3170 = vmatpush.xpose.msra.mxu0 0.0
  %3171 = vmatpush.xpose.msra.mxu0 0.0
  %3172 = vmatpush.xpose.msra.mxu0 0.0
  %3173 = vmatpush.xpose.msra.mxu0 0.0
  %3174 = vmatpush.xpose.msra.mxu0 0.0
  %3175 = vmatpush.xpose.msra.mxu0 0.0
  %3176 = vmatpush.xpose.msra.mxu0 0.0
  %3177 = vmatpush.xpose.msra.mxu0 0.0
  %3178 = vmatpush.xpose.msra.mxu0 0.0
  %3179 = vmatpush.xpose.msra.mxu0 %v3162
  %3180 = vmatmul.f32.gmra.mxu0 %v3160
  %v3181 = vpop.f32.mrf.mxu0
  %v3182 = vadd.f32 0.0, %v3181
  %3183 = vdwg.mxu0
  %3184 = vst [vmem:[#allocation1] ss:$2 sm:$0xff] %v158
  %v3185 = vld.sshfl [vmem:[#allocation1] sm:$0xff pattern:$0x75316420]
  %3186 = vrot.lane.b32.xlu0 %v3185, 112
  %v3187 = vpop.permute.xlu0 %3186
  %3188 = vst [vmem:[#allocation1] ss:$2 sm:$0xff] %v158
  %v3189 = vld.sshfl [vmem:[#allocation1] sm:$0xff pattern:$0x75316420]
  %3190 = vrot.lane.b32.xlu0 %v3189, 80
  %v3191 = vpop.permute.xlu0 %3190
  %v3192 = vsel %vm174, %v3187, 0
  %v3194 = vsel %vm174, %v3191, 0
  %3196 = vmatpush.xpose.msra.mxu0 0.0
  %3197 = vmatpush.xpose.msra.mxu0 0.0
  %3198 = vmatpush.xpose.msra.mxu0 0.0
  %3199 = vmatpush.xpose.msra.mxu0 0.0
  %3200 = vmatpush.xpose.msra.mxu0 0.0
  %3201 = vmatpush.xpose.msra.mxu0 0.0
  %3202 = vmatpush.xpose.msra.mxu0 0.0
  %3203 = vmatpush.xpose.msra.mxu0 0.0
  %3204 = vmatpush.xpose.msra.mxu0 0.0
  %3205 = vmatpush.xpose.msra.mxu0 0.0
  %3206 = vmatpush.xpose.msra.mxu0 0.0
  %3207 = vmatpush.xpose.msra.mxu0 0.0
  %3208 = vmatpush.xpose.msra.mxu0 0.0
  %3209 = vmatpush.xpose.msra.mxu0 0.0
  %3210 = vmatpush.xpose.msra.mxu0 0.0
  %3211 = vmatpush.xpose.msra.mxu0 %v3194
  %3212 = vmatmul.f32.gmra.mxu0 %v3192
  %v3213 = vpop.f32.mrf.mxu0
  %v3214 = vadd.f32 0.0, %v3213
  %3215 = vdwg.mxu0
  %3216 = vst [vmem:[#allocation1] ss:$2 sm:$0xff] %v132
  %v3217 = vld.sshfl [vmem:[#allocation1] sm:$0xff pattern:$0x75316420]
  %3218 = vrot.lane.b32.xlu0 %v3217, 112
  %v3219 = vpop.permute.xlu0 %3218
  %3220 = vst [vmem:[#allocation1] ss:$2 sm:$0xff] %v132
  %v3221 = vld.sshfl [vmem:[#allocation1] sm:$0xff pattern:$0x75316420]
  %3222 = vrot.lane.b32.xlu0 %v3221, 80
  %v3223 = vpop.permute.xlu0 %3222
  %v3224 = vsel %vm174, %v3219, 0
  %v3226 = vsel %vm174, %v3223, 0
  %3228 = vmatpush.xpose.msra.mxu0 0.0
  %3229 = vmatpush.xpose.msra.mxu0 0.0
  %3230 = vmatpush.xpose.msra.mxu0 0.0
  %3231 = vmatpush.xpose.msra.mxu0 0.0
  %3232 = vmatpush.xpose.msra.mxu0 0.0
  %3233 = vmatpush.xpose.msra.mxu0 0.0
  %3234 = vmatpush.xpose.msra.mxu0 0.0
  %3235 = vmatpush.xpose.msra.mxu0 0.0
  %3236 = vmatpush.xpose.msra.mxu0 0.0
  %3237 = vmatpush.xpose.msra.mxu0 0.0
  %3238 = vmatpush.xpose.msra.mxu0 0.0
  %3239 = vmatpush.xpose.msra.mxu0 0.0
  %3240 = vmatpush.xpose.msra.mxu0 0.0
  %3241 = vmatpush.xpose.msra.mxu0 0.0
  %3242 = vmatpush.xpose.msra.mxu0 0.0
  %3243 = vmatpush.xpose.msra.mxu0 %v3226
  %3244 = vmatmul.f32.gmra.mxu0 %v3224
  %v3245 = vpop.f32.mrf.mxu0
  %v3246 = vadd.f32 0.0, %v3245
  %3247 = vdwg.mxu0
  %3248 = vst [vmem:[#allocation1] ss:$2 sm:$0xff] %v159
  %v3249 = vld.sshfl [vmem:[#allocation1] sm:$0xff pattern:$0x75316420]
  %3250 = vrot.lane.b32.xlu0 %v3249, 112
  %v3251 = vpop.permute.xlu0 %3250
  %3252 = vst [vmem:[#allocation1] ss:$2 sm:$0xff] %v159
  %v3253 = vld.sshfl [vmem:[#allocation1] sm:$0xff pattern:$0x75316420]
  %3254 = vrot.lane.b32.xlu0 %v3253, 80
  %v3255 = vpop.permute.xlu0 %3254
  %v3256 = vsel %vm174, %v3251, 0
  %v3258 = vsel %vm174, %v3255, 0
  %3260 = vmatpush.xpose.msra.mxu0 0.0
  %3261 = vmatpush.xpose.msra.mxu0 0.0
  %3262 = vmatpush.xpose.msra.mxu0 0.0
  %3263 = vmatpush.xpose.msra.mxu0 0.0
  %3264 = vmatpush.xpose.msra.mxu0 0.0
  %3265 = vmatpush.xpose.msra.mxu0 0.0
  %3266 = vmatpush.xpose.msra.mxu0 0.0
  %3267 = vmatpush.xpose.msra.mxu0 0.0
  %3268 = vmatpush.xpose.msra.mxu0 0.0
  %3269 = vmatpush.xpose.msra.mxu0 0.0
  %3270 = vmatpush.xpose.msra.mxu0 0.0
  %3271 = vmatpush.xpose.msra.mxu0 0.0
  %3272 = vmatpush.xpose.msra.mxu0 0.0
  %3273 = vmatpush.xpose.msra.mxu0 0.0
  %3274 = vmatpush.xpose.msra.mxu0 0.0
  %3275 = vmatpush.xpose.msra.mxu0 %v3258
  %3276 = vmatmul.f32.gmra.mxu0 %v3256
  %v3277 = vpop.f32.mrf.mxu0
  %v3278 = vadd.f32 0.0, %v3277
  %3279 = vdwg.mxu0
  %3280 = vst [vmem:[#allocation1] ss:$2 sm:$0xff] %v135
  %v3281 = vld.sshfl [vmem:[#allocation1] sm:$0xff pattern:$0x75316420]
  %3282 = vrot.lane.b32.xlu0 %v3281, 112
  %v3283 = vpop.permute.xlu0 %3282
  %3284 = vst [vmem:[#allocation1] ss:$2 sm:$0xff] %v135
  %v3285 = vld.sshfl [vmem:[#allocation1] sm:$0xff pattern:$0x75316420]
  %3286 = vrot.lane.b32.xlu0 %v3285, 80
  %v3287 = vpop.permute.xlu0 %3286
  %v3288 = vsel %vm174, %v3283, 0
  %v3290 = vsel %vm174, %v3287, 0
  %3292 = vmatpush.xpose.msra.mxu0 0.0
  %3293 = vmatpush.xpose.msra.mxu0 0.0
  %3294 = vmatpush.xpose.msra.mxu0 0.0
  %3295 = vmatpush.xpose.msra.mxu0 0.0
  %3296 = vmatpush.xpose.msra.mxu0 0.0
  %3297 = vmatpush.xpose.msra.mxu0 0.0
  %3298 = vmatpush.xpose.msra.mxu0 0.0
  %3299 = vmatpush.xpose.msra.mxu0 0.0
  %3300 = vmatpush.xpose.msra.mxu0 0.0
  %3301 = vmatpush.xpose.msra.mxu0 0.0
  %3302 = vmatpush.xpose.msra.mxu0 0.0
  %3303 = vmatpush.xpose.msra.mxu0 0.0
  %3304 = vmatpush.xpose.msra.mxu0 0.0
  %3305 = vmatpush.xpose.msra.mxu0 0.0
  %3306 = vmatpush.xpose.msra.mxu0 0.0
  %3307 = vmatpush.xpose.msra.mxu0 %v3290
  %3308 = vmatmul.f32.gmra.mxu0 %v3288
  %v3309 = vpop.f32.mrf.mxu0
  %v3310 = vadd.f32 0.0, %v3309
  %3311 = vdwg.mxu0
  %3312 = vst [vmem:[#allocation1] ss:$2 sm:$0xff] %v160
  %v3313 = vld.sshfl [vmem:[#allocation1] sm:$0xff pattern:$0x75316420]
  %3314 = vrot.lane.b32.xlu0 %v3313, 112
  %v3315 = vpop.permute.xlu0 %3314
  %3316 = vst [vmem:[#allocation1] ss:$2 sm:$0xff] %v160
  %v3317 = vld.sshfl [vmem:[#allocation1] sm:$0xff pattern:$0x75316420]
  %3318 = vrot.lane.b32.xlu0 %v3317, 80
  %v3319 = vpop.permute.xlu0 %3318
  %v3320 = vsel %vm174, %v3315, 0
  %v3322 = vsel %vm174, %v3319, 0
  %3324 = vmatpush.xpose.msra.mxu0 0.0
  %3325 = vmatpush.xpose.msra.mxu0 0.0
  %3326 = vmatpush.xpose.msra.mxu0 0.0
  %3327 = vmatpush.xpose.msra.mxu0 0.0
  %3328 = vmatpush.xpose.msra.mxu0 0.0
  %3329 = vmatpush.xpose.msra.mxu0 0.0
  %3330 = vmatpush.xpose.msra.mxu0 0.0
  %3331 = vmatpush.xpose.msra.mxu0 0.0
  %3332 = vmatpush.xpose.msra.mxu0 0.0
  %3333 = vmatpush.xpose.msra.mxu0 0.0
  %3334 = vmatpush.xpose.msra.mxu0 0.0
  %3335 = vmatpush.xpose.msra.mxu0 0.0
  %3336 = vmatpush.xpose.msra.mxu0 0.0
  %3337 = vmatpush.xpose.msra.mxu0 0.0
  %3338 = vmatpush.xpose.msra.mxu0 0.0
  %3339 = vmatpush.xpose.msra.mxu0 %v3322
  %3340 = vmatmul.f32.gmra.mxu0 %v3320
  %v3341 = vpop.f32.mrf.mxu0
  %v3342 = vadd.f32 0.0, %v3341
  %3343 = vdwg.mxu0
  %3344 = vst [vmem:[#allocation1] ss:$2 sm:$0xff] %v138
  %v3345 = vld.sshfl [vmem:[#allocation1] sm:$0xff pattern:$0x75316420]
  %3346 = vrot.lane.b32.xlu0 %v3345, 112
  %v3347 = vpop.permute.xlu0 %3346
  %3348 = vst [vmem:[#allocation1] ss:$2 sm:$0xff] %v138
  %v3349 = vld.sshfl [vmem:[#allocation1] sm:$0xff pattern:$0x75316420]
  %3350 = vrot.lane.b32.xlu0 %v3349, 80
  %v3351 = vpop.permute.xlu0 %3350
  %v3352 = vsel %vm174, %v3347, 0
  %v3354 = vsel %vm174, %v3351, 0
  %3356 = vmatpush.xpose.msra.mxu0 0.0
  %3357 = vmatpush.xpose.msra.mxu0 0.0
  %3358 = vmatpush.xpose.msra.mxu0 0.0
  %3359 = vmatpush.xpose.msra.mxu0 0.0
  %3360 = vmatpush.xpose.msra.mxu0 0.0
  %3361 = vmatpush.xpose.msra.mxu0 0.0
  %3362 = vmatpush.xpose.msra.mxu0 0.0
  %3363 = vmatpush.xpose.msra.mxu0 0.0
  %3364 = vmatpush.xpose.msra.mxu0 0.0
  %3365 = vmatpush.xpose.msra.mxu0 0.0
  %3366 = vmatpush.xpose.msra.mxu0 0.0
  %3367 = vmatpush.xpose.msra.mxu0 0.0
  %3368 = vmatpush.xpose.msra.mxu0 0.0
  %3369 = vmatpush.xpose.msra.mxu0 0.0
  %3370 = vmatpush.xpose.msra.mxu0 0.0
  %3371 = vmatpush.xpose.msra.mxu0 %v3354
  %3372 = vmatmul.f32.gmra.mxu0 %v3352
  %v3373 = vpop.f32.mrf.mxu0
  %v3374 = vadd.f32 0.0, %v3373
  %3375 = vdwg.mxu0
  %3376 = vst [vmem:[#allocation1] ss:$2 sm:$0xff] %v161
  %v3377 = vld.sshfl [vmem:[#allocation1] sm:$0xff pattern:$0x75316420]
  %3378 = vrot.lane.b32.xlu0 %v3377, 112
  %v3379 = vpop.permute.xlu0 %3378
  %3380 = vst [vmem:[#allocation1] ss:$2 sm:$0xff] %v161
  %v3381 = vld.sshfl [vmem:[#allocation1] sm:$0xff pattern:$0x75316420]
  %3382 = vrot.lane.b32.xlu0 %v3381, 80
  %v3383 = vpop.permute.xlu0 %3382
  %v3384 = vsel %vm174, %v3379, 0
  %v3386 = vsel %vm174, %v3383, 0
  %3388 = vmatpush.xpose.msra.mxu0 0.0
  %3389 = vmatpush.xpose.msra.mxu0 0.0
  %3390 = vmatpush.xpose.msra.mxu0 0.0
  %3391 = vmatpush.xpose.msra.mxu0 0.0
  %3392 = vmatpush.xpose.msra.mxu0 0.0
  %3393 = vmatpush.xpose.msra.mxu0 0.0
  %3394 = vmatpush.xpose.msra.mxu0 0.0
  %3395 = vmatpush.xpose.msra.mxu0 0.0
  %3396 = vmatpush.xpose.msra.mxu0 0.0
  %3397 = vmatpush.xpose.msra.mxu0 0.0
  %3398 = vmatpush.xpose.msra.mxu0 0.0
  %3399 = vmatpush.xpose.msra.mxu0 0.0
  %3400 = vmatpush.xpose.msra.mxu0 0.0
  %3401 = vmatpush.xpose.msra.mxu0 0.0
  %3402 = vmatpush.xpose.msra.mxu0 0.0
  %3403 = vmatpush.xpose.msra.mxu0 %v3386
  %3404 = vmatmul.f32.gmra.mxu0 %v3384
  %v3405 = vpop.f32.mrf.mxu0
  %v3406 = vadd.f32 0.0, %v3405
  %3407 = vdwg.mxu0
  %3408 = vst [vmem:[#allocation1] ss:$2 sm:$0xff] %v141
  %v3409 = vld.sshfl [vmem:[#allocation1] sm:$0xff pattern:$0x75316420]
  %3410 = vrot.lane.b32.xlu0 %v3409, 112
  %v3411 = vpop.permute.xlu0 %3410
  %3412 = vst [vmem:[#allocation1] ss:$2 sm:$0xff] %v141
  %v3413 = vld.sshfl [vmem:[#allocation1] sm:$0xff pattern:$0x75316420]
  %3414 = vrot.lane.b32.xlu0 %v3413, 80
  %v3415 = vpop.permute.xlu0 %3414
  %v3416 = vsel %vm174, %v3411, 0
  %v3418 = vsel %vm174, %v3415, 0
  %3420 = vmatpush.xpose.msra.mxu0 0.0
  %3421 = vmatpush.xpose.msra.mxu0 0.0
  %3422 = vmatpush.xpose.msra.mxu0 0.0
  %3423 = vmatpush.xpose.msra.mxu0 0.0
  %3424 = vmatpush.xpose.msra.mxu0 0.0
  %3425 = vmatpush.xpose.msra.mxu0 0.0
  %3426 = vmatpush.xpose.msra.mxu0 0.0
  %3427 = vmatpush.xpose.msra.mxu0 0.0
  %3428 = vmatpush.xpose.msra.mxu0 0.0
  %3429 = vmatpush.xpose.msra.mxu0 0.0
  %3430 = vmatpush.xpose.msra.mxu0 0.0
  %3431 = vmatpush.xpose.msra.mxu0 0.0
  %3432 = vmatpush.xpose.msra.mxu0 0.0
  %3433 = vmatpush.xpose.msra.mxu0 0.0
  %3434 = vmatpush.xpose.msra.mxu0 0.0
  %3435 = vmatpush.xpose.msra.mxu0 %v3418
  %3436 = vmatmul.f32.gmra.mxu0 %v3416
  %v3437 = vpop.f32.mrf.mxu0
  %v3438 = vadd.f32 0.0, %v3437
  %3439 = vdwg.mxu0
  %3440 = vst [vmem:[#allocation1] ss:$2 sm:$0xff] %v162
  %v3441 = vld.sshfl [vmem:[#allocation1] sm:$0xff pattern:$0x75316420]
  %3442 = vrot.lane.b32.xlu0 %v3441, 112
  %v3443 = vpop.permute.xlu0 %3442
  %3444 = vst [vmem:[#allocation1] ss:$2 sm:$0xff] %v162
  %v3445 = vld.sshfl [vmem:[#allocation1] sm:$0xff pattern:$0x75316420]
  %3446 = vrot.lane.b32.xlu0 %v3445, 80
  %v3447 = vpop.permute.xlu0 %3446
  %v3448 = vsel %vm174, %v3443, 0
  %v3450 = vsel %vm174, %v3447, 0
  %3452 = vmatpush.xpose.msra.mxu0 0.0
  %3453 = vmatpush.xpose.msra.mxu0 0.0
  %3454 = vmatpush.xpose.msra.mxu0 0.0
  %3455 = vmatpush.xpose.msra.mxu0 0.0
  %3456 = vmatpush.xpose.msra.mxu0 0.0
  %3457 = vmatpush.xpose.msra.mxu0 0.0
  %3458 = vmatpush.xpose.msra.mxu0 0.0
  %3459 = vmatpush.xpose.msra.mxu0 0.0
  %3460 = vmatpush.xpose.msra.mxu0 0.0
  %3461 = vmatpush.xpose.msra.mxu0 0.0
  %3462 = vmatpush.xpose.msra.mxu0 0.0
  %3463 = vmatpush.xpose.msra.mxu0 0.0
  %3464 = vmatpush.xpose.msra.mxu0 0.0
  %3465 = vmatpush.xpose.msra.mxu0 0.0
  %3466 = vmatpush.xpose.msra.mxu0 0.0
  %3467 = vmatpush.xpose.msra.mxu0 %v3450
  %3468 = vmatmul.f32.gmra.mxu0 %v3448
  %v3469 = vpop.f32.mrf.mxu0
  %v3470 = vadd.f32 0.0, %v3469
  %3471 = vdwg.mxu0
  %3472 = vst [vmem:[#allocation1] ss:$2 sm:$0xff] %v144
  %v3473 = vld.sshfl [vmem:[#allocation1] sm:$0xff pattern:$0x75316420]
  %3474 = vrot.lane.b32.xlu0 %v3473, 112
  %v3475 = vpop.permute.xlu0 %3474
  %3476 = vst [vmem:[#allocation1] ss:$2 sm:$0xff] %v144
  %v3477 = vld.sshfl [vmem:[#allocation1] sm:$0xff pattern:$0x75316420]
  %3478 = vrot.lane.b32.xlu0 %v3477, 80
  %v3479 = vpop.permute.xlu0 %3478
  %v3480 = vsel %vm174, %v3475, 0
  %v3482 = vsel %vm174, %v3479, 0
  %3484 = vmatpush.xpose.msra.mxu0 0.0
  %3485 = vmatpush.xpose.msra.mxu0 0.0
  %3486 = vmatpush.xpose.msra.mxu0 0.0
  %3487 = vmatpush.xpose.msra.mxu0 0.0
  %3488 = vmatpush.xpose.msra.mxu0 0.0
  %3489 = vmatpush.xpose.msra.mxu0 0.0
  %3490 = vmatpush.xpose.msra.mxu0 0.0
  %3491 = vmatpush.xpose.msra.mxu0 0.0
  %3492 = vmatpush.xpose.msra.mxu0 0.0
  %3493 = vmatpush.xpose.msra.mxu0 0.0
  %3494 = vmatpush.xpose.msra.mxu0 0.0
  %3495 = vmatpush.xpose.msra.mxu0 0.0
  %3496 = vmatpush.xpose.msra.mxu0 0.0
  %3497 = vmatpush.xpose.msra.mxu0 0.0
  %3498 = vmatpush.xpose.msra.mxu0 0.0
  %3499 = vmatpush.xpose.msra.mxu0 %v3482
  %3500 = vmatmul.f32.gmra.mxu0 %v3480
  %v3501 = vpop.f32.mrf.mxu0
  %v3502 = vadd.f32 0.0, %v3501
  %3503 = vdwg.mxu0
  %3504 = vst [vmem:[#allocation1] ss:$2 sm:$0xff] %v163
  %v3505 = vld.sshfl [vmem:[#allocation1] sm:$0xff pattern:$0x75316420]
  %3506 = vrot.lane.b32.xlu0 %v3505, 112
  %v3507 = vpop.permute.xlu0 %3506
  %3508 = vst [vmem:[#allocation1] ss:$2 sm:$0xff] %v163
  %v3509 = vld.sshfl [vmem:[#allocation1] sm:$0xff pattern:$0x75316420]
  %3510 = vrot.lane.b32.xlu0 %v3509, 80
  %v3511 = vpop.permute.xlu0 %3510
  %v3512 = vsel %vm174, %v3507, 0
  %v3514 = vsel %vm174, %v3511, 0
  %3516 = vmatpush.xpose.msra.mxu0 0.0
  %3517 = vmatpush.xpose.msra.mxu0 0.0
  %3518 = vmatpush.xpose.msra.mxu0 0.0
  %3519 = vmatpush.xpose.msra.mxu0 0.0
  %3520 = vmatpush.xpose.msra.mxu0 0.0
  %3521 = vmatpush.xpose.msra.mxu0 0.0
  %3522 = vmatpush.xpose.msra.mxu0 0.0
  %3523 = vmatpush.xpose.msra.mxu0 0.0
  %3524 = vmatpush.xpose.msra.mxu0 0.0
  %3525 = vmatpush.xpose.msra.mxu0 0.0
  %3526 = vmatpush.xpose.msra.mxu0 0.0
  %3527 = vmatpush.xpose.msra.mxu0 0.0
  %3528 = vmatpush.xpose.msra.mxu0 0.0
  %3529 = vmatpush.xpose.msra.mxu0 0.0
  %3530 = vmatpush.xpose.msra.mxu0 0.0
  %3531 = vmatpush.xpose.msra.mxu0 %v3514
  %3532 = vmatmul.f32.gmra.mxu0 %v3512
  %v3533 = vpop.f32.mrf.mxu0
  %v3534 = vadd.f32 0.0, %v3533
  %3535 = vdwg.mxu0
  %3536 = vst [vmem:[#allocation1] ss:$2 sm:$0xff] %v147
  %v3537 = vld.sshfl [vmem:[#allocation1] sm:$0xff pattern:$0x75316420]
  %3538 = vrot.lane.b32.xlu0 %v3537, 112
  %v3539 = vpop.permute.xlu0 %3538
  %3540 = vst [vmem:[#allocation1] ss:$2 sm:$0xff] %v147
  %v3541 = vld.sshfl [vmem:[#allocation1] sm:$0xff pattern:$0x75316420]
  %3542 = vrot.lane.b32.xlu0 %v3541, 80
  %v3543 = vpop.permute.xlu0 %3542
  %v3544 = vsel %vm174, %v3539, 0
  %v3546 = vsel %vm174, %v3543, 0
  %3548 = vmatpush.xpose.msra.mxu0 0.0
  %3549 = vmatpush.xpose.msra.mxu0 0.0
  %3550 = vmatpush.xpose.msra.mxu0 0.0
  %3551 = vmatpush.xpose.msra.mxu0 0.0
  %3552 = vmatpush.xpose.msra.mxu0 0.0
  %3553 = vmatpush.xpose.msra.mxu0 0.0
  %3554 = vmatpush.xpose.msra.mxu0 0.0
  %3555 = vmatpush.xpose.msra.mxu0 0.0
  %3556 = vmatpush.xpose.msra.mxu0 0.0
  %3557 = vmatpush.xpose.msra.mxu0 0.0
  %3558 = vmatpush.xpose.msra.mxu0 0.0
  %3559 = vmatpush.xpose.msra.mxu0 0.0
  %3560 = vmatpush.xpose.msra.mxu0 0.0
  %3561 = vmatpush.xpose.msra.mxu0 0.0
  %3562 = vmatpush.xpose.msra.mxu0 0.0
  %3563 = vmatpush.xpose.msra.mxu0 %v3546
  %3564 = vmatmul.f32.gmra.mxu0 %v3544
  %v3565 = vpop.f32.mrf.mxu0
  %v3566 = vadd.f32 0.0, %v3565
  %3567 = vdwg.mxu0
  %3568 = vst [vmem:[#allocation1] ss:$2 sm:$0xff] %v164
  %v3569 = vld.sshfl [vmem:[#allocation1] sm:$0xff pattern:$0x75316420]
  %3570 = vrot.lane.b32.xlu0 %v3569, 112
  %v3571 = vpop.permute.xlu0 %3570
  %3572 = vst [vmem:[#allocation1] ss:$2 sm:$0xff] %v164
  %v3573 = vld.sshfl [vmem:[#allocation1] sm:$0xff pattern:$0x75316420]
  %3574 = vrot.lane.b32.xlu0 %v3573, 80
  %v3575 = vpop.permute.xlu0 %3574
  %v3576 = vsel %vm174, %v3571, 0
  %v3578 = vsel %vm174, %v3575, 0
  %3580 = vmatpush.xpose.msra.mxu0 0.0
  %3581 = vmatpush.xpose.msra.mxu0 0.0
  %3582 = vmatpush.xpose.msra.mxu0 0.0
  %3583 = vmatpush.xpose.msra.mxu0 0.0
  %3584 = vmatpush.xpose.msra.mxu0 0.0
  %3585 = vmatpush.xpose.msra.mxu0 0.0
  %3586 = vmatpush.xpose.msra.mxu0 0.0
  %3587 = vmatpush.xpose.msra.mxu0 0.0
  %3588 = vmatpush.xpose.msra.mxu0 0.0
  %3589 = vmatpush.xpose.msra.mxu0 0.0
  %3590 = vmatpush.xpose.msra.mxu0 0.0
  %3591 = vmatpush.xpose.msra.mxu0 0.0
  %3592 = vmatpush.xpose.msra.mxu0 0.0
  %3593 = vmatpush.xpose.msra.mxu0 0.0
  %3594 = vmatpush.xpose.msra.mxu0 0.0
  %3595 = vmatpush.xpose.msra.mxu0 %v3578
  %3596 = vmatmul.f32.gmra.mxu0 %v3576
  %v3597 = vpop.f32.mrf.mxu0
  %v3598 = vadd.f32 0.0, %v3597
  %3599 = vdwg.mxu0
  %v3600 = vmul.f32 %v3118, 0.35355338
  %v3601 = vmul.f32 %v3150, 0.35355338
  %v3602 = vmul.f32 %v3182, 0.35355338
  %v3603 = vmul.f32 %v3214, 0.35355338
  %v3604 = vmul.f32 %v3246, 0.35355338
  %v3605 = vmul.f32 %v3278, 0.35355338
  %v3606 = vmul.f32 %v3310, 0.35355338
  %v3607 = vmul.f32 %v3342, 0.35355338
  %v3608 = vmul.f32 %v3374, 0.35355338
  %v3609 = vmul.f32 %v3406, 0.35355338
  %v3610 = vmul.f32 %v3438, 0.35355338
  %v3611 = vmul.f32 %v3470, 0.35355338
  %v3612 = vmul.f32 %v3502, 0.35355338
  %v3613 = vmul.f32 %v3534, 0.35355338
  %v3614 = vmul.f32 %v3566, 0.35355338
  %v3615 = vmul.f32 %v3598, 0.35355338
  %v3616 = vsel %vm635, %v3600, -inf
  %3617 = vmax.xlane.f32.xlu0 %v3616
  %v3618 = vpop.xlane.xlu0 %3617
  %v3619 = vsel %vm635, %v3601, -inf
  %3620 = vmax.xlane.f32.xlu0 %v3619
  %v3621 = vpop.xlane.xlu0 %3620
  %v3622 = vsel %vm635, %v3602, -inf
  %3623 = vmax.xlane.f32.xlu0 %v3622
  %v3624 = vpop.xlane.xlu0 %3623
  %v3625 = vsel %vm635, %v3603, -inf
  %3626 = vmax.xlane.f32.xlu0 %v3625
  %v3627 = vpop.xlane.xlu0 %3626
  %v3628 = vsel %vm635, %v3604, -inf
  %3629 = vmax.xlane.f32.xlu0 %v3628
  %v3630 = vpop.xlane.xlu0 %3629
  %v3631 = vsel %vm635, %v3605, -inf
  %3632 = vmax.xlane.f32.xlu0 %v3631
  %v3633 = vpop.xlane.xlu0 %3632
  %v3634 = vsel %vm635, %v3606, -inf
  %3635 = vmax.xlane.f32.xlu0 %v3634
  %v3636 = vpop.xlane.xlu0 %3635
  %v3637 = vsel %vm635, %v3607, -inf
  %3638 = vmax.xlane.f32.xlu0 %v3637
  %v3639 = vpop.xlane.xlu0 %3638
  %v3640 = vsel %vm635, %v3608, -inf
  %3641 = vmax.xlane.f32.xlu0 %v3640
  %v3642 = vpop.xlane.xlu0 %3641
  %v3643 = vsel %vm635, %v3609, -inf
  %3644 = vmax.xlane.f32.xlu0 %v3643
  %v3645 = vpop.xlane.xlu0 %3644
  %v3646 = vsel %vm635, %v3610, -inf
  %3647 = vmax.xlane.f32.xlu0 %v3646
  %v3648 = vpop.xlane.xlu0 %3647
  %v3649 = vsel %vm635, %v3611, -inf
  %3650 = vmax.xlane.f32.xlu0 %v3649
  %v3651 = vpop.xlane.xlu0 %3650
  %v3652 = vsel %vm635, %v3612, -inf
  %3653 = vmax.xlane.f32.xlu0 %v3652
  %v3654 = vpop.xlane.xlu0 %3653
  %v3655 = vsel %vm635, %v3613, -inf
  %3656 = vmax.xlane.f32.xlu0 %v3655
  %v3657 = vpop.xlane.xlu0 %3656
  %v3658 = vsel %vm635, %v3614, -inf
  %3659 = vmax.xlane.f32.xlu0 %v3658
  %v3660 = vpop.xlane.xlu0 %3659
  %v3661 = vsel %vm635, %v3615, -inf
  %3662 = vmax.xlane.f32.xlu0 %v3661
  %v3663 = vpop.xlane.xlu0 %3662
  %v3664 = vsub.f32 %v3600, %v3618
  %v3665 = vsub.f32 %v3601, %v3621
  %v3666 = vsub.f32 %v3602, %v3624
  %v3667 = vsub.f32 %v3603, %v3627
  %v3668 = vsub.f32 %v3604, %v3630
  %v3669 = vsub.f32 %v3605, %v3633
  %v3670 = vsub.f32 %v3606, %v3636
  %v3671 = vsub.f32 %v3607, %v3639
  %v3672 = vsub.f32 %v3608, %v3642
  %v3673 = vsub.f32 %v3609, %v3645
  %v3674 = vsub.f32 %v3610, %v3648
  %v3675 = vsub.f32 %v3611, %v3651
  %v3676 = vsub.f32 %v3612, %v3654
  %v3677 = vsub.f32 %v3613, %v3657
  %v3678 = vsub.f32 %v3614, %v3660
  %v3679 = vsub.f32 %v3615, %v3663
  %v3680 = vmul.f32 %v3664, 1.442695
  %v3681 = vpow.pop %v3680
  %v3682 = vmul.f32 %v3665, 1.442695
  %v3683 = vpow.pop %v3682
  %v3684 = vmul.f32 %v3666, 1.442695
  %v3685 = vpow.pop %v3684
  %v3686 = vmul.f32 %v3667, 1.442695
  %v3687 = vpow.pop %v3686
  %v3688 = vmul.f32 %v3668, 1.442695
  %v3689 = vpow.pop %v3688
  %v3690 = vmul.f32 %v3669, 1.442695
  %v3691 = vpow.pop %v3690
  %v3692 = vmul.f32 %v3670, 1.442695
  %v3693 = vpow.pop %v3692
  %v3694 = vmul.f32 %v3671, 1.442695
  %v3695 = vpow.pop %v3694
  %v3696 = vmul.f32 %v3672, 1.442695
  %v3697 = vpow.pop %v3696
  %v3698 = vmul.f32 %v3673, 1.442695
  %v3699 = vpow.pop %v3698
  %v3700 = vmul.f32 %v3674, 1.442695
  %v3701 = vpow.pop %v3700
  %v3702 = vmul.f32 %v3675, 1.442695
  %v3703 = vpow.pop %v3702
  %v3704 = vmul.f32 %v3676, 1.442695
  %v3705 = vpow.pop %v3704
  %v3706 = vmul.f32 %v3677, 1.442695
  %v3707 = vpow.pop %v3706
  %v3708 = vmul.f32 %v3678, 1.442695
  %v3709 = vpow.pop %v3708
  %v3710 = vmul.f32 %v3679, 1.442695
  %v3711 = vpow.pop %v3710
  %v3712 = vsel %vm635, %v3681, 0.0
  %3713 = vadd.xlane.f32.xlu0 %v3712
  %v3714 = vpop.xlane.xlu0 %3713
  %v3715 = vsel %vm635, %v3683, 0.0
  %3716 = vadd.xlane.f32.xlu0 %v3715
  %v3717 = vpop.xlane.xlu0 %3716
  %v3718 = vsel %vm635, %v3685, 0.0
  %3719 = vadd.xlane.f32.xlu0 %v3718
  %v3720 = vpop.xlane.xlu0 %3719
  %v3721 = vsel %vm635, %v3687, 0.0
  %3722 = vadd.xlane.f32.xlu0 %v3721
  %v3723 = vpop.xlane.xlu0 %3722
  %v3724 = vsel %vm635, %v3689, 0.0
  %3725 = vadd.xlane.f32.xlu0 %v3724
  %v3726 = vpop.xlane.xlu0 %3725
  %v3727 = vsel %vm635, %v3691, 0.0
  %3728 = vadd.xlane.f32.xlu0 %v3727
  %v3729 = vpop.xlane.xlu0 %3728
  %v3730 = vsel %vm635, %v3693, 0.0
  %3731 = vadd.xlane.f32.xlu0 %v3730
  %v3732 = vpop.xlane.xlu0 %3731
  %v3733 = vsel %vm635, %v3695, 0.0
  %3734 = vadd.xlane.f32.xlu0 %v3733
  %v3735 = vpop.xlane.xlu0 %3734
  %v3736 = vsel %vm635, %v3697, 0.0
  %3737 = vadd.xlane.f32.xlu0 %v3736
  %v3738 = vpop.xlane.xlu0 %3737
  %v3739 = vsel %vm635, %v3699, 0.0
  %3740 = vadd.xlane.f32.xlu0 %v3739
  %v3741 = vpop.xlane.xlu0 %3740
  %v3742 = vsel %vm635, %v3701, 0.0
  %3743 = vadd.xlane.f32.xlu0 %v3742
  %v3744 = vpop.xlane.xlu0 %3743
  %v3745 = vsel %vm635, %v3703, 0.0
  %3746 = vadd.xlane.f32.xlu0 %v3745
  %v3747 = vpop.xlane.xlu0 %3746
  %v3748 = vsel %vm635, %v3705, 0.0
  %3749 = vadd.xlane.f32.xlu0 %v3748
  %v3750 = vpop.xlane.xlu0 %3749
  %v3751 = vsel %vm635, %v3707, 0.0
  %3752 = vadd.xlane.f32.xlu0 %v3751
  %v3753 = vpop.xlane.xlu0 %3752
  %v3754 = vsel %vm635, %v3709, 0.0
  %3755 = vadd.xlane.f32.xlu0 %v3754
  %v3756 = vpop.xlane.xlu0 %3755
  %v3757 = vsel %vm635, %v3711, 0.0
  %3758 = vadd.xlane.f32.xlu0 %v3757
  %v3759 = vpop.xlane.xlu0 %3758
  %v3760 = vrcp.pop %v3714
  %v3761 = vmul.f32 %v3714, %v3760
  %v3762 = vsub.f32 1.0, %v3761
  %v3763 = vmul.f32 %v3760, %v3762
  %v3764 = vadd.f32 %v3760, %v3763
  %vm3765 = vweird.f32 %v3714
  %vm3766 = vweird.f32 %v3760
  %vm3767 = vmor %vm3765, %vm3766
  %v3768 = vsel %vm3767, %v3760, %v3764
  %v3769 = vand.u32 2147483647, %v3714
  %vm3770 = vcmp.eq.f32.partialorder %v3769, 8.507059e+37
  %v3771 = vand.u32 %v3714, 2147483648
  %v3772 = vor.u32 1.1754944e-38, %v3771
  %v3773 = vsel %vm3770, %v3772, %v3768
  %v3774 = vmul.f32 %v3681, %v3773
  %v3775 = vrcp.pop %v3717
  %v3776 = vmul.f32 %v3717, %v3775
  %v3777 = vsub.f32 1.0, %v3776
  %v3778 = vmul.f32 %v3775, %v3777
  %v3779 = vadd.f32 %v3775, %v3778
  %vm3780 = vweird.f32 %v3717
  %vm3781 = vweird.f32 %v3775
  %vm3782 = vmor %vm3780, %vm3781
  %v3783 = vsel %vm3782, %v3775, %v3779
  %v3784 = vand.u32 2147483647, %v3717
  %vm3785 = vcmp.eq.f32.partialorder %v3784, 8.507059e+37
  %v3786 = vand.u32 %v3717, 2147483648
  %v3787 = vor.u32 1.1754944e-38, %v3786
  %v3788 = vsel %vm3785, %v3787, %v3783
  %v3789 = vmul.f32 %v3683, %v3788
  %v3790 = vrcp.pop %v3720
  %v3791 = vmul.f32 %v3720, %v3790
  %v3792 = vsub.f32 1.0, %v3791
  %v3793 = vmul.f32 %v3790, %v3792
  %v3794 = vadd.f32 %v3790, %v3793
  %vm3795 = vweird.f32 %v3720
  %vm3796 = vweird.f32 %v3790
  %vm3797 = vmor %vm3795, %vm3796
  %v3798 = vsel %vm3797, %v3790, %v3794
  %v3799 = vand.u32 2147483647, %v3720
  %vm3800 = vcmp.eq.f32.partialorder %v3799, 8.507059e+37
  %v3801 = vand.u32 %v3720, 2147483648
  %v3802 = vor.u32 1.1754944e-38, %v3801
  %v3803 = vsel %vm3800, %v3802, %v3798
  %v3804 = vmul.f32 %v3685, %v3803
  %v3805 = vrcp.pop %v3723
  %v3806 = vmul.f32 %v3723, %v3805
  %v3807 = vsub.f32 1.0, %v3806
  %v3808 = vmul.f32 %v3805, %v3807
  %v3809 = vadd.f32 %v3805, %v3808
  %vm3810 = vweird.f32 %v3723
  %vm3811 = vweird.f32 %v3805
  %vm3812 = vmor %vm3810, %vm3811
  %v3813 = vsel %vm3812, %v3805, %v3809
  %v3814 = vand.u32 2147483647, %v3723
  %vm3815 = vcmp.eq.f32.partialorder %v3814, 8.507059e+37
  %v3816 = vand.u32 %v3723, 2147483648
  %v3817 = vor.u32 1.1754944e-38, %v3816
  %v3818 = vsel %vm3815, %v3817, %v3813
  %v3819 = vmul.f32 %v3687, %v3818
  %v3820 = vrcp.pop %v3726
  %v3821 = vmul.f32 %v3726, %v3820
  %v3822 = vsub.f32 1.0, %v3821
  %v3823 = vmul.f32 %v3820, %v3822
  %v3824 = vadd.f32 %v3820, %v3823
  %vm3825 = vweird.f32 %v3726
  %vm3826 = vweird.f32 %v3820
  %vm3827 = vmor %vm3825, %vm3826
  %v3828 = vsel %vm3827, %v3820, %v3824
  %v3829 = vand.u32 2147483647, %v3726
  %vm3830 = vcmp.eq.f32.partialorder %v3829, 8.507059e+37
  %v3831 = vand.u32 %v3726, 2147483648
  %v3832 = vor.u32 1.1754944e-38, %v3831
  %v3833 = vsel %vm3830, %v3832, %v3828
  %v3834 = vmul.f32 %v3689, %v3833
  %v3835 = vrcp.pop %v3729
  %v3836 = vmul.f32 %v3729, %v3835
  %v3837 = vsub.f32 1.0, %v3836
  %v3838 = vmul.f32 %v3835, %v3837
  %v3839 = vadd.f32 %v3835, %v3838
  %vm3840 = vweird.f32 %v3729
  %vm3841 = vweird.f32 %v3835
  %vm3842 = vmor %vm3840, %vm3841
  %v3843 = vsel %vm3842, %v3835, %v3839
  %v3844 = vand.u32 2147483647, %v3729
  %vm3845 = vcmp.eq.f32.partialorder %v3844, 8.507059e+37
  %v3846 = vand.u32 %v3729, 2147483648
  %v3847 = vor.u32 1.1754944e-38, %v3846
  %v3848 = vsel %vm3845, %v3847, %v3843
  %v3849 = vmul.f32 %v3691, %v3848
  %v3850 = vrcp.pop %v3732
  %v3851 = vmul.f32 %v3732, %v3850
  %v3852 = vsub.f32 1.0, %v3851
  %v3853 = vmul.f32 %v3850, %v3852
  %v3854 = vadd.f32 %v3850, %v3853
  %vm3855 = vweird.f32 %v3732
  %vm3856 = vweird.f32 %v3850
  %vm3857 = vmor %vm3855, %vm3856
  %v3858 = vsel %vm3857, %v3850, %v3854
  %v3859 = vand.u32 2147483647, %v3732
  %vm3860 = vcmp.eq.f32.partialorder %v3859, 8.507059e+37
  %v3861 = vand.u32 %v3732, 2147483648
  %v3862 = vor.u32 1.1754944e-38, %v3861
  %v3863 = vsel %vm3860, %v3862, %v3858
  %v3864 = vmul.f32 %v3693, %v3863
  %v3865 = vrcp.pop %v3735
  %v3866 = vmul.f32 %v3735, %v3865
  %v3867 = vsub.f32 1.0, %v3866
  %v3868 = vmul.f32 %v3865, %v3867
  %v3869 = vadd.f32 %v3865, %v3868
  %vm3870 = vweird.f32 %v3735
  %vm3871 = vweird.f32 %v3865
  %vm3872 = vmor %vm3870, %vm3871
  %v3873 = vsel %vm3872, %v3865, %v3869
  %v3874 = vand.u32 2147483647, %v3735
  %vm3875 = vcmp.eq.f32.partialorder %v3874, 8.507059e+37
  %v3876 = vand.u32 %v3735, 2147483648
  %v3877 = vor.u32 1.1754944e-38, %v3876
  %v3878 = vsel %vm3875, %v3877, %v3873
  %v3879 = vmul.f32 %v3695, %v3878
  %v3880 = vrcp.pop %v3738
  %v3881 = vmul.f32 %v3738, %v3880
  %v3882 = vsub.f32 1.0, %v3881
  %v3883 = vmul.f32 %v3880, %v3882
  %v3884 = vadd.f32 %v3880, %v3883
  %vm3885 = vweird.f32 %v3738
  %vm3886 = vweird.f32 %v3880
  %vm3887 = vmor %vm3885, %vm3886
  %v3888 = vsel %vm3887, %v3880, %v3884
  %v3889 = vand.u32 2147483647, %v3738
  %vm3890 = vcmp.eq.f32.partialorder %v3889, 8.507059e+37
  %v3891 = vand.u32 %v3738, 2147483648
  %v3892 = vor.u32 1.1754944e-38, %v3891
  %v3893 = vsel %vm3890, %v3892, %v3888
  %v3894 = vmul.f32 %v3697, %v3893
  %v3895 = vrcp.pop %v3741
  %v3896 = vmul.f32 %v3741, %v3895
  %v3897 = vsub.f32 1.0, %v3896
  %v3898 = vmul.f32 %v3895, %v3897
  %v3899 = vadd.f32 %v3895, %v3898
  %vm3900 = vweird.f32 %v3741
  %vm3901 = vweird.f32 %v3895
  %vm3902 = vmor %vm3900, %vm3901
  %v3903 = vsel %vm3902, %v3895, %v3899
  %v3904 = vand.u32 2147483647, %v3741
  %vm3905 = vcmp.eq.f32.partialorder %v3904, 8.507059e+37
  %v3906 = vand.u32 %v3741, 2147483648
  %v3907 = vor.u32 1.1754944e-38, %v3906
  %v3908 = vsel %vm3905, %v3907, %v3903
  %v3909 = vmul.f32 %v3699, %v3908
  %v3910 = vrcp.pop %v3744
  %v3911 = vmul.f32 %v3744, %v3910
  %v3912 = vsub.f32 1.0, %v3911
  %v3913 = vmul.f32 %v3910, %v3912
  %v3914 = vadd.f32 %v3910, %v3913
  %vm3915 = vweird.f32 %v3744
  %vm3916 = vweird.f32 %v3910
  %vm3917 = vmor %vm3915, %vm3916
  %v3918 = vsel %vm3917, %v3910, %v3914
  %v3919 = vand.u32 2147483647, %v3744
  %vm3920 = vcmp.eq.f32.partialorder %v3919, 8.507059e+37
  %v3921 = vand.u32 %v3744, 2147483648
  %v3922 = vor.u32 1.1754944e-38, %v3921
  %v3923 = vsel %vm3920, %v3922, %v3918
  %v3924 = vmul.f32 %v3701, %v3923
  %v3925 = vrcp.pop %v3747
  %v3926 = vmul.f32 %v3747, %v3925
  %v3927 = vsub.f32 1.0, %v3926
  %v3928 = vmul.f32 %v3925, %v3927
  %v3929 = vadd.f32 %v3925, %v3928
  %vm3930 = vweird.f32 %v3747
  %vm3931 = vweird.f32 %v3925
  %vm3932 = vmor %vm3930, %vm3931
  %v3933 = vsel %vm3932, %v3925, %v3929
  %v3934 = vand.u32 2147483647, %v3747
  %vm3935 = vcmp.eq.f32.partialorder %v3934, 8.507059e+37
  %v3936 = vand.u32 %v3747, 2147483648
  %v3937 = vor.u32 1.1754944e-38, %v3936
  %v3938 = vsel %vm3935, %v3937, %v3933
  %v3939 = vmul.f32 %v3703, %v3938
  %v3940 = vrcp.pop %v3750
  %v3941 = vmul.f32 %v3750, %v3940
  %v3942 = vsub.f32 1.0, %v3941
  %v3943 = vmul.f32 %v3940, %v3942
  %v3944 = vadd.f32 %v3940, %v3943
  %vm3945 = vweird.f32 %v3750
  %vm3946 = vweird.f32 %v3940
  %vm3947 = vmor %vm3945, %vm3946
  %v3948 = vsel %vm3947, %v3940, %v3944
  %v3949 = vand.u32 2147483647, %v3750
  %vm3950 = vcmp.eq.f32.partialorder %v3949, 8.507059e+37
  %v3951 = vand.u32 %v3750, 2147483648
  %v3952 = vor.u32 1.1754944e-38, %v3951
  %v3953 = vsel %vm3950, %v3952, %v3948
  %v3954 = vmul.f32 %v3705, %v3953
  %v3955 = vrcp.pop %v3753
  %v3956 = vmul.f32 %v3753, %v3955
  %v3957 = vsub.f32 1.0, %v3956
  %v3958 = vmul.f32 %v3955, %v3957
  %v3959 = vadd.f32 %v3955, %v3958
  %vm3960 = vweird.f32 %v3753
  %vm3961 = vweird.f32 %v3955
  %vm3962 = vmor %vm3960, %vm3961
  %v3963 = vsel %vm3962, %v3955, %v3959
  %v3964 = vand.u32 2147483647, %v3753
  %vm3965 = vcmp.eq.f32.partialorder %v3964, 8.507059e+37
  %v3966 = vand.u32 %v3753, 2147483648
  %v3967 = vor.u32 1.1754944e-38, %v3966
  %v3968 = vsel %vm3965, %v3967, %v3963
  %v3969 = vmul.f32 %v3707, %v3968
  %v3970 = vrcp.pop %v3756
  %v3971 = vmul.f32 %v3756, %v3970
  %v3972 = vsub.f32 1.0, %v3971
  %v3973 = vmul.f32 %v3970, %v3972
  %v3974 = vadd.f32 %v3970, %v3973
  %vm3975 = vweird.f32 %v3756
  %vm3976 = vweird.f32 %v3970
  %vm3977 = vmor %vm3975, %vm3976
  %v3978 = vsel %vm3977, %v3970, %v3974
  %v3979 = vand.u32 2147483647, %v3756
  %vm3980 = vcmp.eq.f32.partialorder %v3979, 8.507059e+37
  %v3981 = vand.u32 %v3756, 2147483648
  %v3982 = vor.u32 1.1754944e-38, %v3981
  %v3983 = vsel %vm3980, %v3982, %v3978
  %v3984 = vmul.f32 %v3709, %v3983
  %v3985 = vrcp.pop %v3759
  %v3986 = vmul.f32 %v3759, %v3985
  %v3987 = vsub.f32 1.0, %v3986
  %v3988 = vmul.f32 %v3985, %v3987
  %v3989 = vadd.f32 %v3985, %v3988
  %vm3990 = vweird.f32 %v3759
  %vm3991 = vweird.f32 %v3985
  %vm3992 = vmor %vm3990, %vm3991
  %v3993 = vsel %vm3992, %v3985, %v3989
  %v3994 = vand.u32 2147483647, %v3759
  %vm3995 = vcmp.eq.f32.partialorder %v3994, 8.507059e+37
  %v3996 = vand.u32 %v3759, 2147483648
  %v3997 = vor.u32 1.1754944e-38, %v3996
  %v3998 = vsel %vm3995, %v3997, %v3993
  %v3999 = vmul.f32 %v3711, %v3998
  %4000 = vst [vmem:[#allocation1] ss:$2 sm:$0xff] %v126
  %v4001 = vld.sshfl [vmem:[#allocation1] sm:$0xff pattern:$0x75316420]
  %4002 = vrot.lane.b32.xlu0 %v4001, 48
  %v4003 = vpop.permute.xlu0 %4002
  %v4005 = vsel %vm1024, %v3774, 0
  %v4007 = vsel %vm1028, %v4003, 0
  %4009 = vmatpush.msra.mxu0 0.0
  %4010 = vmatpush.msra.mxu0 0.0
  %4011 = vmatpush.msra.mxu0 0.0
  %4012 = vmatpush.msra.mxu0 0.0
  %4013 = vmatpush.msra.mxu0 0.0
  %4014 = vmatpush.msra.mxu0 0.0
  %4015 = vmatpush.msra.mxu0 0.0
  %4016 = vmatpush.msra.mxu0 0.0
  %4017 = vmatpush.msra.mxu0 0.0
  %4018 = vmatpush.msra.mxu0 0.0
  %4019 = vmatpush.msra.mxu0 0.0
  %4020 = vmatpush.msra.mxu0 0.0
  %4021 = vmatpush.msra.mxu0 0.0
  %4022 = vmatpush.msra.mxu0 0.0
  %4023 = vmatpush.msra.mxu0 0.0
  %4024 = vmatpush.msra.mxu0 %v4007
  %4025 = vmatmul.f32.gmra.mxu0 %v4005
  %v4026 = vpop.f32.mrf.mxu0
  %v4027 = vadd.f32 0.0, %v4026
  %4028 = vdwg.mxu0
  %4029 = vst [vmem:[#allocation1] ss:$2 sm:$0xff] %v157
  %v4030 = vld.sshfl [vmem:[#allocation1] sm:$0xff pattern:$0x75316420]
  %4031 = vrot.lane.b32.xlu0 %v4030, 48
  %v4032 = vpop.permute.xlu0 %4031
  %v4034 = vsel %vm1024, %v3789, 0
  %v4036 = vsel %vm1028, %v4032, 0
  %4038 = vmatpush.msra.mxu0 0.0
  %4039 = vmatpush.msra.mxu0 0.0
  %4040 = vmatpush.msra.mxu0 0.0
  %4041 = vmatpush.msra.mxu0 0.0
  %4042 = vmatpush.msra.mxu0 0.0
  %4043 = vmatpush.msra.mxu0 0.0
  %4044 = vmatpush.msra.mxu0 0.0
  %4045 = vmatpush.msra.mxu0 0.0
  %4046 = vmatpush.msra.mxu0 0.0
  %4047 = vmatpush.msra.mxu0 0.0
  %4048 = vmatpush.msra.mxu0 0.0
  %4049 = vmatpush.msra.mxu0 0.0
  %4050 = vmatpush.msra.mxu0 0.0
  %4051 = vmatpush.msra.mxu0 0.0
  %4052 = vmatpush.msra.mxu0 0.0
  %4053 = vmatpush.msra.mxu0 %v4036
  %4054 = vmatmul.f32.gmra.mxu0 %v4034
  %v4055 = vpop.f32.mrf.mxu0
  %v4056 = vadd.f32 0.0, %v4055
  %4057 = vdwg.mxu0
  %4058 = vst [vmem:[#allocation1] ss:$2 sm:$0xff] %v129
  %v4059 = vld.sshfl [vmem:[#allocation1] sm:$0xff pattern:$0x75316420]
  %4060 = vrot.lane.b32.xlu0 %v4059, 48
  %v4061 = vpop.permute.xlu0 %4060
  %v4063 = vsel %vm1024, %v3804, 0
  %v4065 = vsel %vm1028, %v4061, 0
  %4067 = vmatpush.msra.mxu0 0.0
  %4068 = vmatpush.msra.mxu0 0.0
  %4069 = vmatpush.msra.mxu0 0.0
  %4070 = vmatpush.msra.mxu0 0.0
  %4071 = vmatpush.msra.mxu0 0.0
  %4072 = vmatpush.msra.mxu0 0.0
  %4073 = vmatpush.msra.mxu0 0.0
  %4074 = vmatpush.msra.mxu0 0.0
  %4075 = vmatpush.msra.mxu0 0.0
  %4076 = vmatpush.msra.mxu0 0.0
  %4077 = vmatpush.msra.mxu0 0.0
  %4078 = vmatpush.msra.mxu0 0.0
  %4079 = vmatpush.msra.mxu0 0.0
  %4080 = vmatpush.msra.mxu0 0.0
  %4081 = vmatpush.msra.mxu0 0.0
  %4082 = vmatpush.msra.mxu0 %v4065
  %4083 = vmatmul.f32.gmra.mxu0 %v4063
  %v4084 = vpop.f32.mrf.mxu0
  %v4085 = vadd.f32 0.0, %v4084
  %4086 = vdwg.mxu0
  %4087 = vst [vmem:[#allocation1] ss:$2 sm:$0xff] %v158
  %v4088 = vld.sshfl [vmem:[#allocation1] sm:$0xff pattern:$0x75316420]
  %4089 = vrot.lane.b32.xlu0 %v4088, 48
  %v4090 = vpop.permute.xlu0 %4089
  %v4092 = vsel %vm1024, %v3819, 0
  %v4094 = vsel %vm1028, %v4090, 0
  %4096 = vmatpush.msra.mxu0 0.0
  %4097 = vmatpush.msra.mxu0 0.0
  %4098 = vmatpush.msra.mxu0 0.0
  %4099 = vmatpush.msra.mxu0 0.0
  %4100 = vmatpush.msra.mxu0 0.0
  %4101 = vmatpush.msra.mxu0 0.0
  %4102 = vmatpush.msra.mxu0 0.0
  %4103 = vmatpush.msra.mxu0 0.0
  %4104 = vmatpush.msra.mxu0 0.0
  %4105 = vmatpush.msra.mxu0 0.0
  %4106 = vmatpush.msra.mxu0 0.0
  %4107 = vmatpush.msra.mxu0 0.0
  %4108 = vmatpush.msra.mxu0 0.0
  %4109 = vmatpush.msra.mxu0 0.0
  %4110 = vmatpush.msra.mxu0 0.0
  %4111 = vmatpush.msra.mxu0 %v4094
  %4112 = vmatmul.f32.gmra.mxu0 %v4092
  %v4113 = vpop.f32.mrf.mxu0
  %v4114 = vadd.f32 0.0, %v4113
  %4115 = vdwg.mxu0
  %4116 = vst [vmem:[#allocation1] ss:$2 sm:$0xff] %v132
  %v4117 = vld.sshfl [vmem:[#allocation1] sm:$0xff pattern:$0x75316420]
  %4118 = vrot.lane.b32.xlu0 %v4117, 48
  %v4119 = vpop.permute.xlu0 %4118
  %v4121 = vsel %vm1024, %v3834, 0
  %v4123 = vsel %vm1028, %v4119, 0
  %4125 = vmatpush.msra.mxu0 0.0
  %4126 = vmatpush.msra.mxu0 0.0
  %4127 = vmatpush.msra.mxu0 0.0
  %4128 = vmatpush.msra.mxu0 0.0
  %4129 = vmatpush.msra.mxu0 0.0
  %4130 = vmatpush.msra.mxu0 0.0
  %4131 = vmatpush.msra.mxu0 0.0
  %4132 = vmatpush.msra.mxu0 0.0
  %4133 = vmatpush.msra.mxu0 0.0
  %4134 = vmatpush.msra.mxu0 0.0
  %4135 = vmatpush.msra.mxu0 0.0
  %4136 = vmatpush.msra.mxu0 0.0
  %4137 = vmatpush.msra.mxu0 0.0
  %4138 = vmatpush.msra.mxu0 0.0
  %4139 = vmatpush.msra.mxu0 0.0
  %4140 = vmatpush.msra.mxu0 %v4123
  %4141 = vmatmul.f32.gmra.mxu0 %v4121
  %v4142 = vpop.f32.mrf.mxu0
  %v4143 = vadd.f32 0.0, %v4142
  %4144 = vdwg.mxu0
  %4145 = vst [vmem:[#allocation1] ss:$2 sm:$0xff] %v159
  %v4146 = vld.sshfl [vmem:[#allocation1] sm:$0xff pattern:$0x75316420]
  %4147 = vrot.lane.b32.xlu0 %v4146, 48
  %v4148 = vpop.permute.xlu0 %4147
  %v4150 = vsel %vm1024, %v3849, 0
  %v4152 = vsel %vm1028, %v4148, 0
  %4154 = vmatpush.msra.mxu0 0.0
  %4155 = vmatpush.msra.mxu0 0.0
  %4156 = vmatpush.msra.mxu0 0.0
  %4157 = vmatpush.msra.mxu0 0.0
  %4158 = vmatpush.msra.mxu0 0.0
  %4159 = vmatpush.msra.mxu0 0.0
  %4160 = vmatpush.msra.mxu0 0.0
  %4161 = vmatpush.msra.mxu0 0.0
  %4162 = vmatpush.msra.mxu0 0.0
  %4163 = vmatpush.msra.mxu0 0.0
  %4164 = vmatpush.msra.mxu0 0.0
  %4165 = vmatpush.msra.mxu0 0.0
  %4166 = vmatpush.msra.mxu0 0.0
  %4167 = vmatpush.msra.mxu0 0.0
  %4168 = vmatpush.msra.mxu0 0.0
  %4169 = vmatpush.msra.mxu0 %v4152
  %4170 = vmatmul.f32.gmra.mxu0 %v4150
  %v4171 = vpop.f32.mrf.mxu0
  %v4172 = vadd.f32 0.0, %v4171
  %4173 = vdwg.mxu0
  %4174 = vst [vmem:[#allocation1] ss:$2 sm:$0xff] %v135
  %v4175 = vld.sshfl [vmem:[#allocation1] sm:$0xff pattern:$0x75316420]
  %4176 = vrot.lane.b32.xlu0 %v4175, 48
  %v4177 = vpop.permute.xlu0 %4176
  %v4179 = vsel %vm1024, %v3864, 0
  %v4181 = vsel %vm1028, %v4177, 0
  %4183 = vmatpush.msra.mxu0 0.0
  %4184 = vmatpush.msra.mxu0 0.0
  %4185 = vmatpush.msra.mxu0 0.0
  %4186 = vmatpush.msra.mxu0 0.0
  %4187 = vmatpush.msra.mxu0 0.0
  %4188 = vmatpush.msra.mxu0 0.0
  %4189 = vmatpush.msra.mxu0 0.0
  %4190 = vmatpush.msra.mxu0 0.0
  %4191 = vmatpush.msra.mxu0 0.0
  %4192 = vmatpush.msra.mxu0 0.0
  %4193 = vmatpush.msra.mxu0 0.0
  %4194 = vmatpush.msra.mxu0 0.0
  %4195 = vmatpush.msra.mxu0 0.0
  %4196 = vmatpush.msra.mxu0 0.0
  %4197 = vmatpush.msra.mxu0 0.0
  %4198 = vmatpush.msra.mxu0 %v4181
  %4199 = vmatmul.f32.gmra.mxu0 %v4179
  %v4200 = vpop.f32.mrf.mxu0
  %v4201 = vadd.f32 0.0, %v4200
  %4202 = vdwg.mxu0
  %4203 = vst [vmem:[#allocation1] ss:$2 sm:$0xff] %v160
  %v4204 = vld.sshfl [vmem:[#allocation1] sm:$0xff pattern:$0x75316420]
  %4205 = vrot.lane.b32.xlu0 %v4204, 48
  %v4206 = vpop.permute.xlu0 %4205
  %v4208 = vsel %vm1024, %v3879, 0
  %v4210 = vsel %vm1028, %v4206, 0
  %4212 = vmatpush.msra.mxu0 0.0
  %4213 = vmatpush.msra.mxu0 0.0
  %4214 = vmatpush.msra.mxu0 0.0
  %4215 = vmatpush.msra.mxu0 0.0
  %4216 = vmatpush.msra.mxu0 0.0
  %4217 = vmatpush.msra.mxu0 0.0
  %4218 = vmatpush.msra.mxu0 0.0
  %4219 = vmatpush.msra.mxu0 0.0
  %4220 = vmatpush.msra.mxu0 0.0
  %4221 = vmatpush.msra.mxu0 0.0
  %4222 = vmatpush.msra.mxu0 0.0
  %4223 = vmatpush.msra.mxu0 0.0
  %4224 = vmatpush.msra.mxu0 0.0
  %4225 = vmatpush.msra.mxu0 0.0
  %4226 = vmatpush.msra.mxu0 0.0
  %4227 = vmatpush.msra.mxu0 %v4210
  %4228 = vmatmul.f32.gmra.mxu0 %v4208
  %v4229 = vpop.f32.mrf.mxu0
  %v4230 = vadd.f32 0.0, %v4229
  %4231 = vdwg.mxu0
  %4232 = vst [vmem:[#allocation1] ss:$2 sm:$0xff] %v138
  %v4233 = vld.sshfl [vmem:[#allocation1] sm:$0xff pattern:$0x75316420]
  %4234 = vrot.lane.b32.xlu0 %v4233, 48
  %v4235 = vpop.permute.xlu0 %4234
  %v4237 = vsel %vm1024, %v3894, 0
  %v4239 = vsel %vm1028, %v4235, 0
  %4241 = vmatpush.msra.mxu0 0.0
  %4242 = vmatpush.msra.mxu0 0.0
  %4243 = vmatpush.msra.mxu0 0.0
  %4244 = vmatpush.msra.mxu0 0.0
  %4245 = vmatpush.msra.mxu0 0.0
  %4246 = vmatpush.msra.mxu0 0.0
  %4247 = vmatpush.msra.mxu0 0.0
  %4248 = vmatpush.msra.mxu0 0.0
  %4249 = vmatpush.msra.mxu0 0.0
  %4250 = vmatpush.msra.mxu0 0.0
  %4251 = vmatpush.msra.mxu0 0.0
  %4252 = vmatpush.msra.mxu0 0.0
  %4253 = vmatpush.msra.mxu0 0.0
  %4254 = vmatpush.msra.mxu0 0.0
  %4255 = vmatpush.msra.mxu0 0.0
  %4256 = vmatpush.msra.mxu0 %v4239
  %4257 = vmatmul.f32.gmra.mxu0 %v4237
  %v4258 = vpop.f32.mrf.mxu0
  %v4259 = vadd.f32 0.0, %v4258
  %4260 = vdwg.mxu0
  %4261 = vst [vmem:[#allocation1] ss:$2 sm:$0xff] %v161
  %v4262 = vld.sshfl [vmem:[#allocation1] sm:$0xff pattern:$0x75316420]
  %4263 = vrot.lane.b32.xlu0 %v4262, 48
  %v4264 = vpop.permute.xlu0 %4263
  %v4266 = vsel %vm1024, %v3909, 0
  %v4268 = vsel %vm1028, %v4264, 0
  %4270 = vmatpush.msra.mxu0 0.0
  %4271 = vmatpush.msra.mxu0 0.0
  %4272 = vmatpush.msra.mxu0 0.0
  %4273 = vmatpush.msra.mxu0 0.0
  %4274 = vmatpush.msra.mxu0 0.0
  %4275 = vmatpush.msra.mxu0 0.0
  %4276 = vmatpush.msra.mxu0 0.0
  %4277 = vmatpush.msra.mxu0 0.0
  %4278 = vmatpush.msra.mxu0 0.0
  %4279 = vmatpush.msra.mxu0 0.0
  %4280 = vmatpush.msra.mxu0 0.0
  %4281 = vmatpush.msra.mxu0 0.0
  %4282 = vmatpush.msra.mxu0 0.0
  %4283 = vmatpush.msra.mxu0 0.0
  %4284 = vmatpush.msra.mxu0 0.0
  %4285 = vmatpush.msra.mxu0 %v4268
  %4286 = vmatmul.f32.gmra.mxu0 %v4266
  %v4287 = vpop.f32.mrf.mxu0
  %v4288 = vadd.f32 0.0, %v4287
  %4289 = vdwg.mxu0
  %4290 = vst [vmem:[#allocation1] ss:$2 sm:$0xff] %v141
  %v4291 = vld.sshfl [vmem:[#allocation1] sm:$0xff pattern:$0x75316420]
  %4292 = vrot.lane.b32.xlu0 %v4291, 48
  %v4293 = vpop.permute.xlu0 %4292
  %v4295 = vsel %vm1024, %v3924, 0
  %v4297 = vsel %vm1028, %v4293, 0
  %4299 = vmatpush.msra.mxu0 0.0
  %4300 = vmatpush.msra.mxu0 0.0
  %4301 = vmatpush.msra.mxu0 0.0
  %4302 = vmatpush.msra.mxu0 0.0
  %4303 = vmatpush.msra.mxu0 0.0
  %4304 = vmatpush.msra.mxu0 0.0
  %4305 = vmatpush.msra.mxu0 0.0
  %4306 = vmatpush.msra.mxu0 0.0
  %4307 = vmatpush.msra.mxu0 0.0
  %4308 = vmatpush.msra.mxu0 0.0
  %4309 = vmatpush.msra.mxu0 0.0
  %4310 = vmatpush.msra.mxu0 0.0
  %4311 = vmatpush.msra.mxu0 0.0
  %4312 = vmatpush.msra.mxu0 0.0
  %4313 = vmatpush.msra.mxu0 0.0
  %4314 = vmatpush.msra.mxu0 %v4297
  %4315 = vmatmul.f32.gmra.mxu0 %v4295
  %v4316 = vpop.f32.mrf.mxu0
  %v4317 = vadd.f32 0.0, %v4316
  %4318 = vdwg.mxu0
  %4319 = vst [vmem:[#allocation1] ss:$2 sm:$0xff] %v162
  %v4320 = vld.sshfl [vmem:[#allocation1] sm:$0xff pattern:$0x75316420]
  %4321 = vrot.lane.b32.xlu0 %v4320, 48
  %v4322 = vpop.permute.xlu0 %4321
  %v4324 = vsel %vm1024, %v3939, 0
  %v4326 = vsel %vm1028, %v4322, 0
  %4328 = vmatpush.msra.mxu0 0.0
  %4329 = vmatpush.msra.mxu0 0.0
  %4330 = vmatpush.msra.mxu0 0.0
  %4331 = vmatpush.msra.mxu0 0.0
  %4332 = vmatpush.msra.mxu0 0.0
  %4333 = vmatpush.msra.mxu0 0.0
  %4334 = vmatpush.msra.mxu0 0.0
  %4335 = vmatpush.msra.mxu0 0.0
  %4336 = vmatpush.msra.mxu0 0.0
  %4337 = vmatpush.msra.mxu0 0.0
  %4338 = vmatpush.msra.mxu0 0.0
  %4339 = vmatpush.msra.mxu0 0.0
  %4340 = vmatpush.msra.mxu0 0.0
  %4341 = vmatpush.msra.mxu0 0.0
  %4342 = vmatpush.msra.mxu0 0.0
  %4343 = vmatpush.msra.mxu0 %v4326
  %4344 = vmatmul.f32.gmra.mxu0 %v4324
  %v4345 = vpop.f32.mrf.mxu0
  %v4346 = vadd.f32 0.0, %v4345
  %4347 = vdwg.mxu0
  %4348 = vst [vmem:[#allocation1] ss:$2 sm:$0xff] %v144
  %v4349 = vld.sshfl [vmem:[#allocation1] sm:$0xff pattern:$0x75316420]
  %4350 = vrot.lane.b32.xlu0 %v4349, 48
  %v4351 = vpop.permute.xlu0 %4350
  %v4353 = vsel %vm1024, %v3954, 0
  %v4355 = vsel %vm1028, %v4351, 0
  %4357 = vmatpush.msra.mxu0 0.0
  %4358 = vmatpush.msra.mxu0 0.0
  %4359 = vmatpush.msra.mxu0 0.0
  %4360 = vmatpush.msra.mxu0 0.0
  %4361 = vmatpush.msra.mxu0 0.0
  %4362 = vmatpush.msra.mxu0 0.0
  %4363 = vmatpush.msra.mxu0 0.0
  %4364 = vmatpush.msra.mxu0 0.0
  %4365 = vmatpush.msra.mxu0 0.0
  %4366 = vmatpush.msra.mxu0 0.0
  %4367 = vmatpush.msra.mxu0 0.0
  %4368 = vmatpush.msra.mxu0 0.0
  %4369 = vmatpush.msra.mxu0 0.0
  %4370 = vmatpush.msra.mxu0 0.0
  %4371 = vmatpush.msra.mxu0 0.0
  %4372 = vmatpush.msra.mxu0 %v4355
  %4373 = vmatmul.f32.gmra.mxu0 %v4353
  %v4374 = vpop.f32.mrf.mxu0
  %v4375 = vadd.f32 0.0, %v4374
  %4376 = vdwg.mxu0
  %4377 = vst [vmem:[#allocation1] ss:$2 sm:$0xff] %v163
  %v4378 = vld.sshfl [vmem:[#allocation1] sm:$0xff pattern:$0x75316420]
  %4379 = vrot.lane.b32.xlu0 %v4378, 48
  %v4380 = vpop.permute.xlu0 %4379
  %v4382 = vsel %vm1024, %v3969, 0
  %v4384 = vsel %vm1028, %v4380, 0
  %4386 = vmatpush.msra.mxu0 0.0
  %4387 = vmatpush.msra.mxu0 0.0
  %4388 = vmatpush.msra.mxu0 0.0
  %4389 = vmatpush.msra.mxu0 0.0
  %4390 = vmatpush.msra.mxu0 0.0
  %4391 = vmatpush.msra.mxu0 0.0
  %4392 = vmatpush.msra.mxu0 0.0
  %4393 = vmatpush.msra.mxu0 0.0
  %4394 = vmatpush.msra.mxu0 0.0
  %4395 = vmatpush.msra.mxu0 0.0
  %4396 = vmatpush.msra.mxu0 0.0
  %4397 = vmatpush.msra.mxu0 0.0
  %4398 = vmatpush.msra.mxu0 0.0
  %4399 = vmatpush.msra.mxu0 0.0
  %4400 = vmatpush.msra.mxu0 0.0
  %4401 = vmatpush.msra.mxu0 %v4384
  %4402 = vmatmul.f32.gmra.mxu0 %v4382
  %v4403 = vpop.f32.mrf.mxu0
  %v4404 = vadd.f32 0.0, %v4403
  %4405 = vdwg.mxu0
  %4406 = vst [vmem:[#allocation1] ss:$2 sm:$0xff] %v147
  %v4407 = vld.sshfl [vmem:[#allocation1] sm:$0xff pattern:$0x75316420]
  %4408 = vrot.lane.b32.xlu0 %v4407, 48
  %v4409 = vpop.permute.xlu0 %4408
  %v4411 = vsel %vm1024, %v3984, 0
  %v4413 = vsel %vm1028, %v4409, 0
  %4415 = vmatpush.msra.mxu0 0.0
  %4416 = vmatpush.msra.mxu0 0.0
  %4417 = vmatpush.msra.mxu0 0.0
  %4418 = vmatpush.msra.mxu0 0.0
  %4419 = vmatpush.msra.mxu0 0.0
  %4420 = vmatpush.msra.mxu0 0.0
  %4421 = vmatpush.msra.mxu0 0.0
  %4422 = vmatpush.msra.mxu0 0.0
  %4423 = vmatpush.msra.mxu0 0.0
  %4424 = vmatpush.msra.mxu0 0.0
  %4425 = vmatpush.msra.mxu0 0.0
  %4426 = vmatpush.msra.mxu0 0.0
  %4427 = vmatpush.msra.mxu0 0.0
  %4428 = vmatpush.msra.mxu0 0.0
  %4429 = vmatpush.msra.mxu0 0.0
  %4430 = vmatpush.msra.mxu0 %v4413
  %4431 = vmatmul.f32.gmra.mxu0 %v4411
  %v4432 = vpop.f32.mrf.mxu0
  %v4433 = vadd.f32 0.0, %v4432
  %4434 = vdwg.mxu0
  %4435 = vst [vmem:[#allocation1] ss:$2 sm:$0xff] %v164
  %v4436 = vld.sshfl [vmem:[#allocation1] sm:$0xff pattern:$0x75316420]
  %4437 = vrot.lane.b32.xlu0 %v4436, 48
  %v4438 = vpop.permute.xlu0 %4437
  %v4440 = vsel %vm1024, %v3999, 0
  %v4442 = vsel %vm1028, %v4438, 0
  %4444 = vmatpush.msra.mxu0 0.0
  %4445 = vmatpush.msra.mxu0 0.0
  %4446 = vmatpush.msra.mxu0 0.0
  %4447 = vmatpush.msra.mxu0 0.0
  %4448 = vmatpush.msra.mxu0 0.0
  %4449 = vmatpush.msra.mxu0 0.0
  %4450 = vmatpush.msra.mxu0 0.0
  %4451 = vmatpush.msra.mxu0 0.0
  %4452 = vmatpush.msra.mxu0 0.0
  %4453 = vmatpush.msra.mxu0 0.0
  %4454 = vmatpush.msra.mxu0 0.0
  %4455 = vmatpush.msra.mxu0 0.0
  %4456 = vmatpush.msra.mxu0 0.0
  %4457 = vmatpush.msra.mxu0 0.0
  %4458 = vmatpush.msra.mxu0 0.0
  %4459 = vmatpush.msra.mxu0 %v4442
  %4460 = vmatmul.f32.gmra.mxu0 %v4440
  %v4461 = vpop.f32.mrf.mxu0
  %v4462 = vadd.f32 0.0, %v4461
  %4463 = vdwg.mxu0
  %v4464 = vld [vmem:[%s3 + $0x10] sm:$0xff]
  %4481 = vst [vmem:[#allocation1] ss:$2 sm:$0xff] %v4027
  %s4482 = scalar_lea.vmem [#allocation1], 1
  %4483 = vst [vmem:[%s4482] ss:$2 sm:$0xff] %v4056
  %s4484 = scalar_lea.vmem [#allocation1], 16
  %4485 = vst [vmem:[%s4484] ss:$2 sm:$0xff] %v4085
  %s4486 = scalar_lea.vmem [#allocation1], 17
  %4487 = vst [vmem:[%s4486] ss:$2 sm:$0xff] %v4114
  %s4488 = scalar_lea.vmem [#allocation1], 32
  %4489 = vst [vmem:[%s4488] ss:$2 sm:$0xff] %v4143
  %s4490 = scalar_lea.vmem [#allocation1], 33
  %4491 = vst [vmem:[%s4490] ss:$2 sm:$0xff] %v4172
  %s4492 = scalar_lea.vmem [#allocation1], 48
  %4493 = vst [vmem:[%s4492] ss:$2 sm:$0xff] %v4201
  %s4494 = scalar_lea.vmem [#allocation1], 49
  %4495 = vst [vmem:[%s4494] ss:$2 sm:$0xff] %v4230
  %v4496 = vld.sshfl [vmem:[#allocation1] sm:$0xff pattern:$0x75316420]
  %v4497 = vld.sshfl [vmem:[#allocation1 + $0x10] sm:$0xff pattern:$0x75316420]
  %v4498 = vld.sshfl [vmem:[#allocation1 + $0x20] sm:$0xff pattern:$0x75316420]
  %v4499 = vld.sshfl [vmem:[#allocation1 + $0x30] sm:$0xff pattern:$0x75316420]
  %4500 = vst [vmem:[#allocation1] ss:$2 sm:$0xff] %v4259
  %4501 = vst [vmem:[%s4482] ss:$2 sm:$0xff] %v4288
  %4502 = vst [vmem:[%s4484] ss:$2 sm:$0xff] %v4317
  %4503 = vst [vmem:[%s4486] ss:$2 sm:$0xff] %v4346
  %4504 = vst [vmem:[%s4488] ss:$2 sm:$0xff] %v4375
  %4505 = vst [vmem:[%s4490] ss:$2 sm:$0xff] %v4404
  %4506 = vst [vmem:[%s4492] ss:$2 sm:$0xff] %v4433
  %4507 = vst [vmem:[%s4494] ss:$2 sm:$0xff] %v4462
  %v4508 = vld.sshfl [vmem:[#allocation1] sm:$0xff pattern:$0x75316420]
  %v4509 = vld.sshfl [vmem:[#allocation1 + $0x10] sm:$0xff pattern:$0x75316420]
  %v4510 = vld.sshfl [vmem:[#allocation1 + $0x20] sm:$0xff pattern:$0x75316420]
  %v4511 = vld.sshfl [vmem:[#allocation1 + $0x30] sm:$0xff pattern:$0x75316420]
  %v4512 = vsel %vm174, %v4496, 0
  %v4514 = vsel %vm174, %v4497, 0
  %v4516 = vsel %vm174, %v4498, 0
  %v4518 = vsel %vm174, %v4499, 0
  %v4520 = vsel %vm174, %v4508, 0
  %v4522 = vsel %vm174, %v4509, 0
  %v4524 = vsel %vm174, %v4510, 0
  %v4526 = vsel %vm174, %v4511, 0
  %4528 = vmatpush.msra.mxu0 0.0
  %4529 = vmatpush.msra.mxu0 0.0
  %4530 = vmatpush.msra.mxu0 0.0
  %4531 = vmatpush.msra.mxu0 0.0
  %4532 = vmatpush.msra.mxu0 0.0
  %4533 = vmatpush.msra.mxu0 0.0
  %4534 = vmatpush.msra.mxu0 0.0
  %4535 = vmatpush.msra.mxu0 0.0
  %4536 = vmatpush.msra.mxu0 0.0
  %4537 = vmatpush.msra.mxu0 0.0
  %4538 = vmatpush.msra.mxu0 0.0
  %4539 = vmatpush.msra.mxu0 0.0
  %4540 = vmatpush.msra.mxu0 0.0
  %4541 = vmatpush.msra.mxu0 0.0
  %4542 = vmatpush.msra.mxu0 0.0
  %4543 = vmatpush.msra.mxu0 %v4464
  %4544 = vmatmul.f32.gmra.mxu0 %v4512
  %v4545 = vpop.f32.mrf.mxu0
  %v4546 = vadd.f32 0.0, %v4545
  %4547 = vmatmul.f32.gmra.mxu0 %v4514
  %v4548 = vpop.f32.mrf.mxu0
  %v4549 = vadd.f32 0.0, %v4548
  %4550 = vmatmul.f32.gmra.mxu0 %v4516
  %v4551 = vpop.f32.mrf.mxu0
  %v4552 = vadd.f32 0.0, %v4551
  %4553 = vmatmul.f32.gmra.mxu0 %v4518
  %v4554 = vpop.f32.mrf.mxu0
  %v4555 = vadd.f32 0.0, %v4554
  %4556 = vmatmul.f32.gmra.mxu0 %v4520
  %v4557 = vpop.f32.mrf.mxu0
  %v4558 = vadd.f32 0.0, %v4557
  %4559 = vmatmul.f32.gmra.mxu0 %v4522
  %v4560 = vpop.f32.mrf.mxu0
  %v4561 = vadd.f32 0.0, %v4560
  %4562 = vmatmul.f32.gmra.mxu0 %v4524
  %v4563 = vpop.f32.mrf.mxu0
  %v4564 = vadd.f32 0.0, %v4563
  %4565 = vmatmul.f32.gmra.mxu0 %v4526
  %v4566 = vpop.f32.mrf.mxu0
  %v4567 = vadd.f32 0.0, %v4566
  %4568 = vdwg.mxu0
  %v4569 = vadd.f32 %v3080, %v4546
  %v4570 = vadd.f32 %v3081, %v4549
  %v4571 = vadd.f32 %v3082, %v4552
  %v4572 = vadd.f32 %v3083, %v4555
  %v4573 = vadd.f32 %v3084, %v4558
  %v4574 = vadd.f32 %v3085, %v4561
  %v4575 = vadd.f32 %v3086, %v4564
  %v4576 = vadd.f32 %v3087, %v4567
  %4577 = vst [vmem:[#allocation1] ss:$2 sm:$0xff] %v126
  %v4578 = vld.sshfl [vmem:[#allocation1] sm:$0xff pattern:$0x75316420]
  %4579 = vrot.lane.b32.xlu0 %v4578, 104
  %v4580 = vpop.permute.xlu0 %4579
  %4581 = vst [vmem:[#allocation1] ss:$2 sm:$0xff] %v126
  %v4582 = vld.sshfl [vmem:[#allocation1] sm:$0xff pattern:$0x75316420]
  %4583 = vrot.lane.b32.xlu0 %v4582, 72
  %v4584 = vpop.permute.xlu0 %4583
  %v4585 = vsel %vm174, %v4580, 0
  %v4587 = vsel %vm174, %v4584, 0
  %4589 = vmatpush.xpose.msra.mxu0 0.0
  %4590 = vmatpush.xpose.msra.mxu0 0.0
  %4591 = vmatpush.xpose.msra.mxu0 0.0
  %4592 = vmatpush.xpose.msra.mxu0 0.0
  %4593 = vmatpush.xpose.msra.mxu0 0.0
  %4594 = vmatpush.xpose.msra.mxu0 0.0
  %4595 = vmatpush.xpose.msra.mxu0 0.0
  %4596 = vmatpush.xpose.msra.mxu0 0.0
  %4597 = vmatpush.xpose.msra.mxu0 0.0
  %4598 = vmatpush.xpose.msra.mxu0 0.0
  %4599 = vmatpush.xpose.msra.mxu0 0.0
  %4600 = vmatpush.xpose.msra.mxu0 0.0
  %4601 = vmatpush.xpose.msra.mxu0 0.0
  %4602 = vmatpush.xpose.msra.mxu0 0.0
  %4603 = vmatpush.xpose.msra.mxu0 0.0
  %4604 = vmatpush.xpose.msra.mxu0 %v4587
  %4605 = vmatmul.f32.gmra.mxu0 %v4585
  %v4606 = vpop.f32.mrf.mxu0
  %v4607 = vadd.f32 0.0, %v4606
  %4608 = vdwg.mxu0
  %4609 = vst [vmem:[#allocation1] ss:$2 sm:$0xff] %v157
  %v4610 = vld.sshfl [vmem:[#allocation1] sm:$0xff pattern:$0x75316420]
  %4611 = vrot.lane.b32.xlu0 %v4610, 104
  %v4612 = vpop.permute.xlu0 %4611
  %4613 = vst [vmem:[#allocation1] ss:$2 sm:$0xff] %v157
  %v4614 = vld.sshfl [vmem:[#allocation1] sm:$0xff pattern:$0x75316420]
  %4615 = vrot.lane.b32.xlu0 %v4614, 72
  %v4616 = vpop.permute.xlu0 %4615
  %v4617 = vsel %vm174, %v4612, 0
  %v4619 = vsel %vm174, %v4616, 0
  %4621 = vmatpush.xpose.msra.mxu0 0.0
  %4622 = vmatpush.xpose.msra.mxu0 0.0
  %4623 = vmatpush.xpose.msra.mxu0 0.0
  %4624 = vmatpush.xpose.msra.mxu0 0.0
  %4625 = vmatpush.xpose.msra.mxu0 0.0
  %4626 = vmatpush.xpose.msra.mxu0 0.0
  %4627 = vmatpush.xpose.msra.mxu0 0.0
  %4628 = vmatpush.xpose.msra.mxu0 0.0
  %4629 = vmatpush.xpose.msra.mxu0 0.0
  %4630 = vmatpush.xpose.msra.mxu0 0.0
  %4631 = vmatpush.xpose.msra.mxu0 0.0
  %4632 = vmatpush.xpose.msra.mxu0 0.0
  %4633 = vmatpush.xpose.msra.mxu0 0.0
  %4634 = vmatpush.xpose.msra.mxu0 0.0
  %4635 = vmatpush.xpose.msra.mxu0 0.0
  %4636 = vmatpush.xpose.msra.mxu0 %v4619
  %4637 = vmatmul.f32.gmra.mxu0 %v4617
  %v4638 = vpop.f32.mrf.mxu0
  %v4639 = vadd.f32 0.0, %v4638
  %4640 = vdwg.mxu0
  %4641 = vst [vmem:[#allocation1] ss:$2 sm:$0xff] %v129
  %v4642 = vld.sshfl [vmem:[#allocation1] sm:$0xff pattern:$0x75316420]
  %4643 = vrot.lane.b32.xlu0 %v4642, 104
  %v4644 = vpop.permute.xlu0 %4643
  %4645 = vst [vmem:[#allocation1] ss:$2 sm:$0xff] %v129
  %v4646 = vld.sshfl [vmem:[#allocation1] sm:$0xff pattern:$0x75316420]
  %4647 = vrot.lane.b32.xlu0 %v4646, 72
  %v4648 = vpop.permute.xlu0 %4647
  %v4649 = vsel %vm174, %v4644, 0
  %v4651 = vsel %vm174, %v4648, 0
  %4653 = vmatpush.xpose.msra.mxu0 0.0
  %4654 = vmatpush.xpose.msra.mxu0 0.0
  %4655 = vmatpush.xpose.msra.mxu0 0.0
  %4656 = vmatpush.xpose.msra.mxu0 0.0
  %4657 = vmatpush.xpose.msra.mxu0 0.0
  %4658 = vmatpush.xpose.msra.mxu0 0.0
  %4659 = vmatpush.xpose.msra.mxu0 0.0
  %4660 = vmatpush.xpose.msra.mxu0 0.0
  %4661 = vmatpush.xpose.msra.mxu0 0.0
  %4662 = vmatpush.xpose.msra.mxu0 0.0
  %4663 = vmatpush.xpose.msra.mxu0 0.0
  %4664 = vmatpush.xpose.msra.mxu0 0.0
  %4665 = vmatpush.xpose.msra.mxu0 0.0
  %4666 = vmatpush.xpose.msra.mxu0 0.0
  %4667 = vmatpush.xpose.msra.mxu0 0.0
  %4668 = vmatpush.xpose.msra.mxu0 %v4651
  %4669 = vmatmul.f32.gmra.mxu0 %v4649
  %v4670 = vpop.f32.mrf.mxu0
  %v4671 = vadd.f32 0.0, %v4670
  %4672 = vdwg.mxu0
  %4673 = vst [vmem:[#allocation1] ss:$2 sm:$0xff] %v158
  %v4674 = vld.sshfl [vmem:[#allocation1] sm:$0xff pattern:$0x75316420]
  %4675 = vrot.lane.b32.xlu0 %v4674, 104
  %v4676 = vpop.permute.xlu0 %4675
  %4677 = vst [vmem:[#allocation1] ss:$2 sm:$0xff] %v158
  %v4678 = vld.sshfl [vmem:[#allocation1] sm:$0xff pattern:$0x75316420]
  %4679 = vrot.lane.b32.xlu0 %v4678, 72
  %v4680 = vpop.permute.xlu0 %4679
  %v4681 = vsel %vm174, %v4676, 0
  %v4683 = vsel %vm174, %v4680, 0
  %4685 = vmatpush.xpose.msra.mxu0 0.0
  %4686 = vmatpush.xpose.msra.mxu0 0.0
  %4687 = vmatpush.xpose.msra.mxu0 0.0
  %4688 = vmatpush.xpose.msra.mxu0 0.0
  %4689 = vmatpush.xpose.msra.mxu0 0.0
  %4690 = vmatpush.xpose.msra.mxu0 0.0
  %4691 = vmatpush.xpose.msra.mxu0 0.0
  %4692 = vmatpush.xpose.msra.mxu0 0.0
  %4693 = vmatpush.xpose.msra.mxu0 0.0
  %4694 = vmatpush.xpose.msra.mxu0 0.0
  %4695 = vmatpush.xpose.msra.mxu0 0.0
  %4696 = vmatpush.xpose.msra.mxu0 0.0
  %4697 = vmatpush.xpose.msra.mxu0 0.0
  %4698 = vmatpush.xpose.msra.mxu0 0.0
  %4699 = vmatpush.xpose.msra.mxu0 0.0
  %4700 = vmatpush.xpose.msra.mxu0 %v4683
  %4701 = vmatmul.f32.gmra.mxu0 %v4681
  %v4702 = vpop.f32.mrf.mxu0
  %v4703 = vadd.f32 0.0, %v4702
  %4704 = vdwg.mxu0
  %4705 = vst [vmem:[#allocation1] ss:$2 sm:$0xff] %v132
  %v4706 = vld.sshfl [vmem:[#allocation1] sm:$0xff pattern:$0x75316420]
  %4707 = vrot.lane.b32.xlu0 %v4706, 104
  %v4708 = vpop.permute.xlu0 %4707
  %4709 = vst [vmem:[#allocation1] ss:$2 sm:$0xff] %v132
  %v4710 = vld.sshfl [vmem:[#allocation1] sm:$0xff pattern:$0x75316420]
  %4711 = vrot.lane.b32.xlu0 %v4710, 72
  %v4712 = vpop.permute.xlu0 %4711
  %v4713 = vsel %vm174, %v4708, 0
  %v4715 = vsel %vm174, %v4712, 0
  %4717 = vmatpush.xpose.msra.mxu0 0.0
  %4718 = vmatpush.xpose.msra.mxu0 0.0
  %4719 = vmatpush.xpose.msra.mxu0 0.0
  %4720 = vmatpush.xpose.msra.mxu0 0.0
  %4721 = vmatpush.xpose.msra.mxu0 0.0
  %4722 = vmatpush.xpose.msra.mxu0 0.0
  %4723 = vmatpush.xpose.msra.mxu0 0.0
  %4724 = vmatpush.xpose.msra.mxu0 0.0
  %4725 = vmatpush.xpose.msra.mxu0 0.0
  %4726 = vmatpush.xpose.msra.mxu0 0.0
  %4727 = vmatpush.xpose.msra.mxu0 0.0
  %4728 = vmatpush.xpose.msra.mxu0 0.0
  %4729 = vmatpush.xpose.msra.mxu0 0.0
  %4730 = vmatpush.xpose.msra.mxu0 0.0
  %4731 = vmatpush.xpose.msra.mxu0 0.0
  %4732 = vmatpush.xpose.msra.mxu0 %v4715
  %4733 = vmatmul.f32.gmra.mxu0 %v4713
  %v4734 = vpop.f32.mrf.mxu0
  %v4735 = vadd.f32 0.0, %v4734
  %4736 = vdwg.mxu0
  %4737 = vst [vmem:[#allocation1] ss:$2 sm:$0xff] %v159
  %v4738 = vld.sshfl [vmem:[#allocation1] sm:$0xff pattern:$0x75316420]
  %4739 = vrot.lane.b32.xlu0 %v4738, 104
  %v4740 = vpop.permute.xlu0 %4739
  %4741 = vst [vmem:[#allocation1] ss:$2 sm:$0xff] %v159
  %v4742 = vld.sshfl [vmem:[#allocation1] sm:$0xff pattern:$0x75316420]
  %4743 = vrot.lane.b32.xlu0 %v4742, 72
  %v4744 = vpop.permute.xlu0 %4743
  %v4745 = vsel %vm174, %v4740, 0
  %v4747 = vsel %vm174, %v4744, 0
  %4749 = vmatpush.xpose.msra.mxu0 0.0
  %4750 = vmatpush.xpose.msra.mxu0 0.0
  %4751 = vmatpush.xpose.msra.mxu0 0.0
  %4752 = vmatpush.xpose.msra.mxu0 0.0
  %4753 = vmatpush.xpose.msra.mxu0 0.0
  %4754 = vmatpush.xpose.msra.mxu0 0.0
  %4755 = vmatpush.xpose.msra.mxu0 0.0
  %4756 = vmatpush.xpose.msra.mxu0 0.0
  %4757 = vmatpush.xpose.msra.mxu0 0.0
  %4758 = vmatpush.xpose.msra.mxu0 0.0
  %4759 = vmatpush.xpose.msra.mxu0 0.0
  %4760 = vmatpush.xpose.msra.mxu0 0.0
  %4761 = vmatpush.xpose.msra.mxu0 0.0
  %4762 = vmatpush.xpose.msra.mxu0 0.0
  %4763 = vmatpush.xpose.msra.mxu0 0.0
  %4764 = vmatpush.xpose.msra.mxu0 %v4747
  %4765 = vmatmul.f32.gmra.mxu0 %v4745
  %v4766 = vpop.f32.mrf.mxu0
  %v4767 = vadd.f32 0.0, %v4766
  %4768 = vdwg.mxu0
  %4769 = vst [vmem:[#allocation1] ss:$2 sm:$0xff] %v135
  %v4770 = vld.sshfl [vmem:[#allocation1] sm:$0xff pattern:$0x75316420]
  %4771 = vrot.lane.b32.xlu0 %v4770, 104
  %v4772 = vpop.permute.xlu0 %4771
  %4773 = vst [vmem:[#allocation1] ss:$2 sm:$0xff] %v135
  %v4774 = vld.sshfl [vmem:[#allocation1] sm:$0xff pattern:$0x75316420]
  %4775 = vrot.lane.b32.xlu0 %v4774, 72
  %v4776 = vpop.permute.xlu0 %4775
  %v4777 = vsel %vm174, %v4772, 0
  %v4779 = vsel %vm174, %v4776, 0
  %4781 = vmatpush.xpose.msra.mxu0 0.0
  %4782 = vmatpush.xpose.msra.mxu0 0.0
  %4783 = vmatpush.xpose.msra.mxu0 0.0
  %4784 = vmatpush.xpose.msra.mxu0 0.0
  %4785 = vmatpush.xpose.msra.mxu0 0.0
  %4786 = vmatpush.xpose.msra.mxu0 0.0
  %4787 = vmatpush.xpose.msra.mxu0 0.0
  %4788 = vmatpush.xpose.msra.mxu0 0.0
  %4789 = vmatpush.xpose.msra.mxu0 0.0
  %4790 = vmatpush.xpose.msra.mxu0 0.0
  %4791 = vmatpush.xpose.msra.mxu0 0.0
  %4792 = vmatpush.xpose.msra.mxu0 0.0
  %4793 = vmatpush.xpose.msra.mxu0 0.0
  %4794 = vmatpush.xpose.msra.mxu0 0.0
  %4795 = vmatpush.xpose.msra.mxu0 0.0
  %4796 = vmatpush.xpose.msra.mxu0 %v4779
  %4797 = vmatmul.f32.gmra.mxu0 %v4777
  %v4798 = vpop.f32.mrf.mxu0
  %v4799 = vadd.f32 0.0, %v4798
  %4800 = vdwg.mxu0
  %4801 = vst [vmem:[#allocation1] ss:$2 sm:$0xff] %v160
  %v4802 = vld.sshfl [vmem:[#allocation1] sm:$0xff pattern:$0x75316420]
  %4803 = vrot.lane.b32.xlu0 %v4802, 104
  %v4804 = vpop.permute.xlu0 %4803
  %4805 = vst [vmem:[#allocation1] ss:$2 sm:$0xff] %v160
  %v4806 = vld.sshfl [vmem:[#allocation1] sm:$0xff pattern:$0x75316420]
  %4807 = vrot.lane.b32.xlu0 %v4806, 72
  %v4808 = vpop.permute.xlu0 %4807
  %v4809 = vsel %vm174, %v4804, 0
  %v4811 = vsel %vm174, %v4808, 0
  %4813 = vmatpush.xpose.msra.mxu0 0.0
  %4814 = vmatpush.xpose.msra.mxu0 0.0
  %4815 = vmatpush.xpose.msra.mxu0 0.0
  %4816 = vmatpush.xpose.msra.mxu0 0.0
  %4817 = vmatpush.xpose.msra.mxu0 0.0
  %4818 = vmatpush.xpose.msra.mxu0 0.0
  %4819 = vmatpush.xpose.msra.mxu0 0.0
  %4820 = vmatpush.xpose.msra.mxu0 0.0
  %4821 = vmatpush.xpose.msra.mxu0 0.0
  %4822 = vmatpush.xpose.msra.mxu0 0.0
  %4823 = vmatpush.xpose.msra.mxu0 0.0
  %4824 = vmatpush.xpose.msra.mxu0 0.0
  %4825 = vmatpush.xpose.msra.mxu0 0.0
  %4826 = vmatpush.xpose.msra.mxu0 0.0
  %4827 = vmatpush.xpose.msra.mxu0 0.0
  %4828 = vmatpush.xpose.msra.mxu0 %v4811
  %4829 = vmatmul.f32.gmra.mxu0 %v4809
  %v4830 = vpop.f32.mrf.mxu0
  %v4831 = vadd.f32 0.0, %v4830
  %4832 = vdwg.mxu0
  %4833 = vst [vmem:[#allocation1] ss:$2 sm:$0xff] %v138
  %v4834 = vld.sshfl [vmem:[#allocation1] sm:$0xff pattern:$0x75316420]
  %4835 = vrot.lane.b32.xlu0 %v4834, 104
  %v4836 = vpop.permute.xlu0 %4835
  %4837 = vst [vmem:[#allocation1] ss:$2 sm:$0xff] %v138
  %v4838 = vld.sshfl [vmem:[#allocation1] sm:$0xff pattern:$0x75316420]
  %4839 = vrot.lane.b32.xlu0 %v4838, 72
  %v4840 = vpop.permute.xlu0 %4839
  %v4841 = vsel %vm174, %v4836, 0
  %v4843 = vsel %vm174, %v4840, 0
  %4845 = vmatpush.xpose.msra.mxu0 0.0
  %4846 = vmatpush.xpose.msra.mxu0 0.0
  %4847 = vmatpush.xpose.msra.mxu0 0.0
  %4848 = vmatpush.xpose.msra.mxu0 0.0
  %4849 = vmatpush.xpose.msra.mxu0 0.0
  %4850 = vmatpush.xpose.msra.mxu0 0.0
  %4851 = vmatpush.xpose.msra.mxu0 0.0
  %4852 = vmatpush.xpose.msra.mxu0 0.0
  %4853 = vmatpush.xpose.msra.mxu0 0.0
  %4854 = vmatpush.xpose.msra.mxu0 0.0
  %4855 = vmatpush.xpose.msra.mxu0 0.0
  %4856 = vmatpush.xpose.msra.mxu0 0.0
  %4857 = vmatpush.xpose.msra.mxu0 0.0
  %4858 = vmatpush.xpose.msra.mxu0 0.0
  %4859 = vmatpush.xpose.msra.mxu0 0.0
  %4860 = vmatpush.xpose.msra.mxu0 %v4843
  %4861 = vmatmul.f32.gmra.mxu0 %v4841
  %v4862 = vpop.f32.mrf.mxu0
  %v4863 = vadd.f32 0.0, %v4862
  %4864 = vdwg.mxu0
  %4865 = vst [vmem:[#allocation1] ss:$2 sm:$0xff] %v161
  %v4866 = vld.sshfl [vmem:[#allocation1] sm:$0xff pattern:$0x75316420]
  %4867 = vrot.lane.b32.xlu0 %v4866, 104
  %v4868 = vpop.permute.xlu0 %4867
  %4869 = vst [vmem:[#allocation1] ss:$2 sm:$0xff] %v161
  %v4870 = vld.sshfl [vmem:[#allocation1] sm:$0xff pattern:$0x75316420]
  %4871 = vrot.lane.b32.xlu0 %v4870, 72
  %v4872 = vpop.permute.xlu0 %4871
  %v4873 = vsel %vm174, %v4868, 0
  %v4875 = vsel %vm174, %v4872, 0
  %4877 = vmatpush.xpose.msra.mxu0 0.0
  %4878 = vmatpush.xpose.msra.mxu0 0.0
  %4879 = vmatpush.xpose.msra.mxu0 0.0
  %4880 = vmatpush.xpose.msra.mxu0 0.0
  %4881 = vmatpush.xpose.msra.mxu0 0.0
  %4882 = vmatpush.xpose.msra.mxu0 0.0
  %4883 = vmatpush.xpose.msra.mxu0 0.0
  %4884 = vmatpush.xpose.msra.mxu0 0.0
  %4885 = vmatpush.xpose.msra.mxu0 0.0
  %4886 = vmatpush.xpose.msra.mxu0 0.0
  %4887 = vmatpush.xpose.msra.mxu0 0.0
  %4888 = vmatpush.xpose.msra.mxu0 0.0
  %4889 = vmatpush.xpose.msra.mxu0 0.0
  %4890 = vmatpush.xpose.msra.mxu0 0.0
  %4891 = vmatpush.xpose.msra.mxu0 0.0
  %4892 = vmatpush.xpose.msra.mxu0 %v4875
  %4893 = vmatmul.f32.gmra.mxu0 %v4873
  %v4894 = vpop.f32.mrf.mxu0
  %v4895 = vadd.f32 0.0, %v4894
  %4896 = vdwg.mxu0
  %4897 = vst [vmem:[#allocation1] ss:$2 sm:$0xff] %v141
  %v4898 = vld.sshfl [vmem:[#allocation1] sm:$0xff pattern:$0x75316420]
  %4899 = vrot.lane.b32.xlu0 %v4898, 104
  %v4900 = vpop.permute.xlu0 %4899
  %4901 = vst [vmem:[#allocation1] ss:$2 sm:$0xff] %v141
  %v4902 = vld.sshfl [vmem:[#allocation1] sm:$0xff pattern:$0x75316420]
  %4903 = vrot.lane.b32.xlu0 %v4902, 72
  %v4904 = vpop.permute.xlu0 %4903
  %v4905 = vsel %vm174, %v4900, 0
  %v4907 = vsel %vm174, %v4904, 0
  %4909 = vmatpush.xpose.msra.mxu0 0.0
  %4910 = vmatpush.xpose.msra.mxu0 0.0
  %4911 = vmatpush.xpose.msra.mxu0 0.0
  %4912 = vmatpush.xpose.msra.mxu0 0.0
  %4913 = vmatpush.xpose.msra.mxu0 0.0
  %4914 = vmatpush.xpose.msra.mxu0 0.0
  %4915 = vmatpush.xpose.msra.mxu0 0.0
  %4916 = vmatpush.xpose.msra.mxu0 0.0
  %4917 = vmatpush.xpose.msra.mxu0 0.0
  %4918 = vmatpush.xpose.msra.mxu0 0.0
  %4919 = vmatpush.xpose.msra.mxu0 0.0
  %4920 = vmatpush.xpose.msra.mxu0 0.0
  %4921 = vmatpush.xpose.msra.mxu0 0.0
  %4922 = vmatpush.xpose.msra.mxu0 0.0
  %4923 = vmatpush.xpose.msra.mxu0 0.0
  %4924 = vmatpush.xpose.msra.mxu0 %v4907
  %4925 = vmatmul.f32.gmra.mxu0 %v4905
  %v4926 = vpop.f32.mrf.mxu0
  %v4927 = vadd.f32 0.0, %v4926
  %4928 = vdwg.mxu0
  %4929 = vst [vmem:[#allocation1] ss:$2 sm:$0xff] %v162
  %v4930 = vld.sshfl [vmem:[#allocation1] sm:$0xff pattern:$0x75316420]
  %4931 = vrot.lane.b32.xlu0 %v4930, 104
  %v4932 = vpop.permute.xlu0 %4931
  %4933 = vst [vmem:[#allocation1] ss:$2 sm:$0xff] %v162
  %v4934 = vld.sshfl [vmem:[#allocation1] sm:$0xff pattern:$0x75316420]
  %4935 = vrot.lane.b32.xlu0 %v4934, 72
  %v4936 = vpop.permute.xlu0 %4935
  %v4937 = vsel %vm174, %v4932, 0
  %v4939 = vsel %vm174, %v4936, 0
  %4941 = vmatpush.xpose.msra.mxu0 0.0
  %4942 = vmatpush.xpose.msra.mxu0 0.0
  %4943 = vmatpush.xpose.msra.mxu0 0.0
  %4944 = vmatpush.xpose.msra.mxu0 0.0
  %4945 = vmatpush.xpose.msra.mxu0 0.0
  %4946 = vmatpush.xpose.msra.mxu0 0.0
  %4947 = vmatpush.xpose.msra.mxu0 0.0
  %4948 = vmatpush.xpose.msra.mxu0 0.0
  %4949 = vmatpush.xpose.msra.mxu0 0.0
  %4950 = vmatpush.xpose.msra.mxu0 0.0
  %4951 = vmatpush.xpose.msra.mxu0 0.0
  %4952 = vmatpush.xpose.msra.mxu0 0.0
  %4953 = vmatpush.xpose.msra.mxu0 0.0
  %4954 = vmatpush.xpose.msra.mxu0 0.0
  %4955 = vmatpush.xpose.msra.mxu0 0.0
  %4956 = vmatpush.xpose.msra.mxu0 %v4939
  %4957 = vmatmul.f32.gmra.mxu0 %v4937
  %v4958 = vpop.f32.mrf.mxu0
  %v4959 = vadd.f32 0.0, %v4958
  %4960 = vdwg.mxu0
  %4961 = vst [vmem:[#allocation1] ss:$2 sm:$0xff] %v144
  %v4962 = vld.sshfl [vmem:[#allocation1] sm:$0xff pattern:$0x75316420]
  %4963 = vrot.lane.b32.xlu0 %v4962, 104
  %v4964 = vpop.permute.xlu0 %4963
  %4965 = vst [vmem:[#allocation1] ss:$2 sm:$0xff] %v144
  %v4966 = vld.sshfl [vmem:[#allocation1] sm:$0xff pattern:$0x75316420]
  %4967 = vrot.lane.b32.xlu0 %v4966, 72
  %v4968 = vpop.permute.xlu0 %4967
  %v4969 = vsel %vm174, %v4964, 0
  %v4971 = vsel %vm174, %v4968, 0
  %4973 = vmatpush.xpose.msra.mxu0 0.0
  %4974 = vmatpush.xpose.msra.mxu0 0.0
  %4975 = vmatpush.xpose.msra.mxu0 0.0
  %4976 = vmatpush.xpose.msra.mxu0 0.0
  %4977 = vmatpush.xpose.msra.mxu0 0.0
  %4978 = vmatpush.xpose.msra.mxu0 0.0
  %4979 = vmatpush.xpose.msra.mxu0 0.0
  %4980 = vmatpush.xpose.msra.mxu0 0.0
  %4981 = vmatpush.xpose.msra.mxu0 0.0
  %4982 = vmatpush.xpose.msra.mxu0 0.0
  %4983 = vmatpush.xpose.msra.mxu0 0.0
  %4984 = vmatpush.xpose.msra.mxu0 0.0
  %4985 = vmatpush.xpose.msra.mxu0 0.0
  %4986 = vmatpush.xpose.msra.mxu0 0.0
  %4987 = vmatpush.xpose.msra.mxu0 0.0
  %4988 = vmatpush.xpose.msra.mxu0 %v4971
  %4989 = vmatmul.f32.gmra.mxu0 %v4969
  %v4990 = vpop.f32.mrf.mxu0
  %v4991 = vadd.f32 0.0, %v4990
  %4992 = vdwg.mxu0
  %4993 = vst [vmem:[#allocation1] ss:$2 sm:$0xff] %v163
  %v4994 = vld.sshfl [vmem:[#allocation1] sm:$0xff pattern:$0x75316420]
  %4995 = vrot.lane.b32.xlu0 %v4994, 104
  %v4996 = vpop.permute.xlu0 %4995
  %4997 = vst [vmem:[#allocation1] ss:$2 sm:$0xff] %v163
  %v4998 = vld.sshfl [vmem:[#allocation1] sm:$0xff pattern:$0x75316420]
  %4999 = vrot.lane.b32.xlu0 %v4998, 72
  %v5000 = vpop.permute.xlu0 %4999
  %v5001 = vsel %vm174, %v4996, 0
  %v5003 = vsel %vm174, %v5000, 0
  %5005 = vmatpush.xpose.msra.mxu0 0.0
  %5006 = vmatpush.xpose.msra.mxu0 0.0
  %5007 = vmatpush.xpose.msra.mxu0 0.0
  %5008 = vmatpush.xpose.msra.mxu0 0.0
  %5009 = vmatpush.xpose.msra.mxu0 0.0
  %5010 = vmatpush.xpose.msra.mxu0 0.0
  %5011 = vmatpush.xpose.msra.mxu0 0.0
  %5012 = vmatpush.xpose.msra.mxu0 0.0
  %5013 = vmatpush.xpose.msra.mxu0 0.0
  %5014 = vmatpush.xpose.msra.mxu0 0.0
  %5015 = vmatpush.xpose.msra.mxu0 0.0
  %5016 = vmatpush.xpose.msra.mxu0 0.0
  %5017 = vmatpush.xpose.msra.mxu0 0.0
  %5018 = vmatpush.xpose.msra.mxu0 0.0
  %5019 = vmatpush.xpose.msra.mxu0 0.0
  %5020 = vmatpush.xpose.msra.mxu0 %v5003
  %5021 = vmatmul.f32.gmra.mxu0 %v5001
  %v5022 = vpop.f32.mrf.mxu0
  %v5023 = vadd.f32 0.0, %v5022
  %5024 = vdwg.mxu0
  %5025 = vst [vmem:[#allocation1] ss:$2 sm:$0xff] %v147
  %v5026 = vld.sshfl [vmem:[#allocation1] sm:$0xff pattern:$0x75316420]
  %5027 = vrot.lane.b32.xlu0 %v5026, 104
  %v5028 = vpop.permute.xlu0 %5027
  %5029 = vst [vmem:[#allocation1] ss:$2 sm:$0xff] %v147
  %v5030 = vld.sshfl [vmem:[#allocation1] sm:$0xff pattern:$0x75316420]
  %5031 = vrot.lane.b32.xlu0 %v5030, 72
  %v5032 = vpop.permute.xlu0 %5031
  %v5033 = vsel %vm174, %v5028, 0
  %v5035 = vsel %vm174, %v5032, 0
  %5037 = vmatpush.xpose.msra.mxu0 0.0
  %5038 = vmatpush.xpose.msra.mxu0 0.0
  %5039 = vmatpush.xpose.msra.mxu0 0.0
  %5040 = vmatpush.xpose.msra.mxu0 0.0
  %5041 = vmatpush.xpose.msra.mxu0 0.0
  %5042 = vmatpush.xpose.msra.mxu0 0.0
  %5043 = vmatpush.xpose.msra.mxu0 0.0
  %5044 = vmatpush.xpose.msra.mxu0 0.0
  %5045 = vmatpush.xpose.msra.mxu0 0.0
  %5046 = vmatpush.xpose.msra.mxu0 0.0
  %5047 = vmatpush.xpose.msra.mxu0 0.0
  %5048 = vmatpush.xpose.msra.mxu0 0.0
  %5049 = vmatpush.xpose.msra.mxu0 0.0
  %5050 = vmatpush.xpose.msra.mxu0 0.0
  %5051 = vmatpush.xpose.msra.mxu0 0.0
  %5052 = vmatpush.xpose.msra.mxu0 %v5035
  %5053 = vmatmul.f32.gmra.mxu0 %v5033
  %v5054 = vpop.f32.mrf.mxu0
  %v5055 = vadd.f32 0.0, %v5054
  %5056 = vdwg.mxu0
  %5057 = vst [vmem:[#allocation1] ss:$2 sm:$0xff] %v164
  %v5058 = vld.sshfl [vmem:[#allocation1] sm:$0xff pattern:$0x75316420]
  %5059 = vrot.lane.b32.xlu0 %v5058, 104
  %v5060 = vpop.permute.xlu0 %5059
  %5061 = vst [vmem:[#allocation1] ss:$2 sm:$0xff] %v164
  %v5062 = vld.sshfl [vmem:[#allocation1] sm:$0xff pattern:$0x75316420]
  %5063 = vrot.lane.b32.xlu0 %v5062, 72
  %v5064 = vpop.permute.xlu0 %5063
  %v5065 = vsel %vm174, %v5060, 0
  %v5067 = vsel %vm174, %v5064, 0
  %5069 = vmatpush.xpose.msra.mxu0 0.0
  %5070 = vmatpush.xpose.msra.mxu0 0.0
  %5071 = vmatpush.xpose.msra.mxu0 0.0
  %5072 = vmatpush.xpose.msra.mxu0 0.0
  %5073 = vmatpush.xpose.msra.mxu0 0.0
  %5074 = vmatpush.xpose.msra.mxu0 0.0
  %5075 = vmatpush.xpose.msra.mxu0 0.0
  %5076 = vmatpush.xpose.msra.mxu0 0.0
  %5077 = vmatpush.xpose.msra.mxu0 0.0
  %5078 = vmatpush.xpose.msra.mxu0 0.0
  %5079 = vmatpush.xpose.msra.mxu0 0.0
  %5080 = vmatpush.xpose.msra.mxu0 0.0
  %5081 = vmatpush.xpose.msra.mxu0 0.0
  %5082 = vmatpush.xpose.msra.mxu0 0.0
  %5083 = vmatpush.xpose.msra.mxu0 0.0
  %5084 = vmatpush.xpose.msra.mxu0 %v5067
  %5085 = vmatmul.f32.gmra.mxu0 %v5065
  %v5086 = vpop.f32.mrf.mxu0
  %v5087 = vadd.f32 0.0, %v5086
  %5088 = vdwg.mxu0
  %v5089 = vmul.f32 %v4607, 0.35355338
  %v5090 = vmul.f32 %v4639, 0.35355338
  %v5091 = vmul.f32 %v4671, 0.35355338
  %v5092 = vmul.f32 %v4703, 0.35355338
  %v5093 = vmul.f32 %v4735, 0.35355338
  %v5094 = vmul.f32 %v4767, 0.35355338
  %v5095 = vmul.f32 %v4799, 0.35355338
  %v5096 = vmul.f32 %v4831, 0.35355338
  %v5097 = vmul.f32 %v4863, 0.35355338
  %v5098 = vmul.f32 %v4895, 0.35355338
  %v5099 = vmul.f32 %v4927, 0.35355338
  %v5100 = vmul.f32 %v4959, 0.35355338
  %v5101 = vmul.f32 %v4991, 0.35355338
  %v5102 = vmul.f32 %v5023, 0.35355338
  %v5103 = vmul.f32 %v5055, 0.35355338
  %v5104 = vmul.f32 %v5087, 0.35355338
  %v5105 = vsel %vm635, %v5089, -inf
  %5106 = vmax.xlane.f32.xlu0 %v5105
  %v5107 = vpop.xlane.xlu0 %5106
  %v5108 = vsel %vm635, %v5090, -inf
  %5109 = vmax.xlane.f32.xlu0 %v5108
  %v5110 = vpop.xlane.xlu0 %5109
  %v5111 = vsel %vm635, %v5091, -inf
  %5112 = vmax.xlane.f32.xlu0 %v5111
  %v5113 = vpop.xlane.xlu0 %5112
  %v5114 = vsel %vm635, %v5092, -inf
  %5115 = vmax.xlane.f32.xlu0 %v5114
  %v5116 = vpop.xlane.xlu0 %5115
  %v5117 = vsel %vm635, %v5093, -inf
  %5118 = vmax.xlane.f32.xlu0 %v5117
  %v5119 = vpop.xlane.xlu0 %5118
  %v5120 = vsel %vm635, %v5094, -inf
  %5121 = vmax.xlane.f32.xlu0 %v5120
  %v5122 = vpop.xlane.xlu0 %5121
  %v5123 = vsel %vm635, %v5095, -inf
  %5124 = vmax.xlane.f32.xlu0 %v5123
  %v5125 = vpop.xlane.xlu0 %5124
  %v5126 = vsel %vm635, %v5096, -inf
  %5127 = vmax.xlane.f32.xlu0 %v5126
  %v5128 = vpop.xlane.xlu0 %5127
  %v5129 = vsel %vm635, %v5097, -inf
  %5130 = vmax.xlane.f32.xlu0 %v5129
  %v5131 = vpop.xlane.xlu0 %5130
  %v5132 = vsel %vm635, %v5098, -inf
  %5133 = vmax.xlane.f32.xlu0 %v5132
  %v5134 = vpop.xlane.xlu0 %5133
  %v5135 = vsel %vm635, %v5099, -inf
  %5136 = vmax.xlane.f32.xlu0 %v5135
  %v5137 = vpop.xlane.xlu0 %5136
  %v5138 = vsel %vm635, %v5100, -inf
  %5139 = vmax.xlane.f32.xlu0 %v5138
  %v5140 = vpop.xlane.xlu0 %5139
  %v5141 = vsel %vm635, %v5101, -inf
  %5142 = vmax.xlane.f32.xlu0 %v5141
  %v5143 = vpop.xlane.xlu0 %5142
  %v5144 = vsel %vm635, %v5102, -inf
  %5145 = vmax.xlane.f32.xlu0 %v5144
  %v5146 = vpop.xlane.xlu0 %5145
  %v5147 = vsel %vm635, %v5103, -inf
  %5148 = vmax.xlane.f32.xlu0 %v5147
  %v5149 = vpop.xlane.xlu0 %5148
  %v5150 = vsel %vm635, %v5104, -inf
  %5151 = vmax.xlane.f32.xlu0 %v5150
  %v5152 = vpop.xlane.xlu0 %5151
  %v5153 = vsub.f32 %v5089, %v5107
  %v5154 = vsub.f32 %v5090, %v5110
  %v5155 = vsub.f32 %v5091, %v5113
  %v5156 = vsub.f32 %v5092, %v5116
  %v5157 = vsub.f32 %v5093, %v5119
  %v5158 = vsub.f32 %v5094, %v5122
  %v5159 = vsub.f32 %v5095, %v5125
  %v5160 = vsub.f32 %v5096, %v5128
  %v5161 = vsub.f32 %v5097, %v5131
  %v5162 = vsub.f32 %v5098, %v5134
  %v5163 = vsub.f32 %v5099, %v5137
  %v5164 = vsub.f32 %v5100, %v5140
  %v5165 = vsub.f32 %v5101, %v5143
  %v5166 = vsub.f32 %v5102, %v5146
  %v5167 = vsub.f32 %v5103, %v5149
  %v5168 = vsub.f32 %v5104, %v5152
  %v5169 = vmul.f32 %v5153, 1.442695
  %v5170 = vpow.pop %v5169
  %v5171 = vmul.f32 %v5154, 1.442695
  %v5172 = vpow.pop %v5171
  %v5173 = vmul.f32 %v5155, 1.442695
  %v5174 = vpow.pop %v5173
  %v5175 = vmul.f32 %v5156, 1.442695
  %v5176 = vpow.pop %v5175
  %v5177 = vmul.f32 %v5157, 1.442695
  %v5178 = vpow.pop %v5177
  %v5179 = vmul.f32 %v5158, 1.442695
  %v5180 = vpow.pop %v5179
  %v5181 = vmul.f32 %v5159, 1.442695
  %v5182 = vpow.pop %v5181
  %v5183 = vmul.f32 %v5160, 1.442695
  %v5184 = vpow.pop %v5183
  %v5185 = vmul.f32 %v5161, 1.442695
  %v5186 = vpow.pop %v5185
  %v5187 = vmul.f32 %v5162, 1.442695
  %v5188 = vpow.pop %v5187
  %v5189 = vmul.f32 %v5163, 1.442695
  %v5190 = vpow.pop %v5189
  %v5191 = vmul.f32 %v5164, 1.442695
  %v5192 = vpow.pop %v5191
  %v5193 = vmul.f32 %v5165, 1.442695
  %v5194 = vpow.pop %v5193
  %v5195 = vmul.f32 %v5166, 1.442695
  %v5196 = vpow.pop %v5195
  %v5197 = vmul.f32 %v5167, 1.442695
  %v5198 = vpow.pop %v5197
  %v5199 = vmul.f32 %v5168, 1.442695
  %v5200 = vpow.pop %v5199
  %v5201 = vsel %vm635, %v5170, 0.0
  %5202 = vadd.xlane.f32.xlu0 %v5201
  %v5203 = vpop.xlane.xlu0 %5202
  %v5204 = vsel %vm635, %v5172, 0.0
  %5205 = vadd.xlane.f32.xlu0 %v5204
  %v5206 = vpop.xlane.xlu0 %5205
  %v5207 = vsel %vm635, %v5174, 0.0
  %5208 = vadd.xlane.f32.xlu0 %v5207
  %v5209 = vpop.xlane.xlu0 %5208
  %v5210 = vsel %vm635, %v5176, 0.0
  %5211 = vadd.xlane.f32.xlu0 %v5210
  %v5212 = vpop.xlane.xlu0 %5211
  %v5213 = vsel %vm635, %v5178, 0.0
  %5214 = vadd.xlane.f32.xlu0 %v5213
  %v5215 = vpop.xlane.xlu0 %5214
  %v5216 = vsel %vm635, %v5180, 0.0
  %5217 = vadd.xlane.f32.xlu0 %v5216
  %v5218 = vpop.xlane.xlu0 %5217
  %v5219 = vsel %vm635, %v5182, 0.0
  %5220 = vadd.xlane.f32.xlu0 %v5219
  %v5221 = vpop.xlane.xlu0 %5220
  %v5222 = vsel %vm635, %v5184, 0.0
  %5223 = vadd.xlane.f32.xlu0 %v5222
  %v5224 = vpop.xlane.xlu0 %5223
  %v5225 = vsel %vm635, %v5186, 0.0
  %5226 = vadd.xlane.f32.xlu0 %v5225
  %v5227 = vpop.xlane.xlu0 %5226
  %v5228 = vsel %vm635, %v5188, 0.0
  %5229 = vadd.xlane.f32.xlu0 %v5228
  %v5230 = vpop.xlane.xlu0 %5229
  %v5231 = vsel %vm635, %v5190, 0.0
  %5232 = vadd.xlane.f32.xlu0 %v5231
  %v5233 = vpop.xlane.xlu0 %5232
  %v5234 = vsel %vm635, %v5192, 0.0
  %5235 = vadd.xlane.f32.xlu0 %v5234
  %v5236 = vpop.xlane.xlu0 %5235
  %v5237 = vsel %vm635, %v5194, 0.0
  %5238 = vadd.xlane.f32.xlu0 %v5237
  %v5239 = vpop.xlane.xlu0 %5238
  %v5240 = vsel %vm635, %v5196, 0.0
  %5241 = vadd.xlane.f32.xlu0 %v5240
  %v5242 = vpop.xlane.xlu0 %5241
  %v5243 = vsel %vm635, %v5198, 0.0
  %5244 = vadd.xlane.f32.xlu0 %v5243
  %v5245 = vpop.xlane.xlu0 %5244
  %v5246 = vsel %vm635, %v5200, 0.0
  %5247 = vadd.xlane.f32.xlu0 %v5246
  %v5248 = vpop.xlane.xlu0 %5247
  %v5249 = vrcp.pop %v5203
  %v5250 = vmul.f32 %v5203, %v5249
  %v5251 = vsub.f32 1.0, %v5250
  %v5252 = vmul.f32 %v5249, %v5251
  %v5253 = vadd.f32 %v5249, %v5252
  %vm5254 = vweird.f32 %v5203
  %vm5255 = vweird.f32 %v5249
  %vm5256 = vmor %vm5254, %vm5255
  %v5257 = vsel %vm5256, %v5249, %v5253
  %v5258 = vand.u32 2147483647, %v5203
  %vm5259 = vcmp.eq.f32.partialorder %v5258, 8.507059e+37
  %v5260 = vand.u32 %v5203, 2147483648
  %v5261 = vor.u32 1.1754944e-38, %v5260
  %v5262 = vsel %vm5259, %v5261, %v5257
  %v5263 = vmul.f32 %v5170, %v5262
  %v5264 = vrcp.pop %v5206
  %v5265 = vmul.f32 %v5206, %v5264
  %v5266 = vsub.f32 1.0, %v5265
  %v5267 = vmul.f32 %v5264, %v5266
  %v5268 = vadd.f32 %v5264, %v5267
  %vm5269 = vweird.f32 %v5206
  %vm5270 = vweird.f32 %v5264
  %vm5271 = vmor %vm5269, %vm5270
  %v5272 = vsel %vm5271, %v5264, %v5268
  %v5273 = vand.u32 2147483647, %v5206
  %vm5274 = vcmp.eq.f32.partialorder %v5273, 8.507059e+37
  %v5275 = vand.u32 %v5206, 2147483648
  %v5276 = vor.u32 1.1754944e-38, %v5275
  %v5277 = vsel %vm5274, %v5276, %v5272
  %v5278 = vmul.f32 %v5172, %v5277
  %v5279 = vrcp.pop %v5209
  %v5280 = vmul.f32 %v5209, %v5279
  %v5281 = vsub.f32 1.0, %v5280
  %v5282 = vmul.f32 %v5279, %v5281
  %v5283 = vadd.f32 %v5279, %v5282
  %vm5284 = vweird.f32 %v5209
  %vm5285 = vweird.f32 %v5279
  %vm5286 = vmor %vm5284, %vm5285
  %v5287 = vsel %vm5286, %v5279, %v5283
  %v5288 = vand.u32 2147483647, %v5209
  %vm5289 = vcmp.eq.f32.partialorder %v5288, 8.507059e+37
  %v5290 = vand.u32 %v5209, 2147483648
  %v5291 = vor.u32 1.1754944e-38, %v5290
  %v5292 = vsel %vm5289, %v5291, %v5287
  %v5293 = vmul.f32 %v5174, %v5292
  %v5294 = vrcp.pop %v5212
  %v5295 = vmul.f32 %v5212, %v5294
  %v5296 = vsub.f32 1.0, %v5295
  %v5297 = vmul.f32 %v5294, %v5296
  %v5298 = vadd.f32 %v5294, %v5297
  %vm5299 = vweird.f32 %v5212
  %vm5300 = vweird.f32 %v5294
  %vm5301 = vmor %vm5299, %vm5300
  %v5302 = vsel %vm5301, %v5294, %v5298
  %v5303 = vand.u32 2147483647, %v5212
  %vm5304 = vcmp.eq.f32.partialorder %v5303, 8.507059e+37
  %v5305 = vand.u32 %v5212, 2147483648
  %v5306 = vor.u32 1.1754944e-38, %v5305
  %v5307 = vsel %vm5304, %v5306, %v5302
  %v5308 = vmul.f32 %v5176, %v5307
  %v5309 = vrcp.pop %v5215
  %v5310 = vmul.f32 %v5215, %v5309
  %v5311 = vsub.f32 1.0, %v5310
  %v5312 = vmul.f32 %v5309, %v5311
  %v5313 = vadd.f32 %v5309, %v5312
  %vm5314 = vweird.f32 %v5215
  %vm5315 = vweird.f32 %v5309
  %vm5316 = vmor %vm5314, %vm5315
  %v5317 = vsel %vm5316, %v5309, %v5313
  %v5318 = vand.u32 2147483647, %v5215
  %vm5319 = vcmp.eq.f32.partialorder %v5318, 8.507059e+37
  %v5320 = vand.u32 %v5215, 2147483648
  %v5321 = vor.u32 1.1754944e-38, %v5320
  %v5322 = vsel %vm5319, %v5321, %v5317
  %v5323 = vmul.f32 %v5178, %v5322
  %v5324 = vrcp.pop %v5218
  %v5325 = vmul.f32 %v5218, %v5324
  %v5326 = vsub.f32 1.0, %v5325
  %v5327 = vmul.f32 %v5324, %v5326
  %v5328 = vadd.f32 %v5324, %v5327
  %vm5329 = vweird.f32 %v5218
  %vm5330 = vweird.f32 %v5324
  %vm5331 = vmor %vm5329, %vm5330
  %v5332 = vsel %vm5331, %v5324, %v5328
  %v5333 = vand.u32 2147483647, %v5218
  %vm5334 = vcmp.eq.f32.partialorder %v5333, 8.507059e+37
  %v5335 = vand.u32 %v5218, 2147483648
  %v5336 = vor.u32 1.1754944e-38, %v5335
  %v5337 = vsel %vm5334, %v5336, %v5332
  %v5338 = vmul.f32 %v5180, %v5337
  %v5339 = vrcp.pop %v5221
  %v5340 = vmul.f32 %v5221, %v5339
  %v5341 = vsub.f32 1.0, %v5340
  %v5342 = vmul.f32 %v5339, %v5341
  %v5343 = vadd.f32 %v5339, %v5342
  %vm5344 = vweird.f32 %v5221
  %vm5345 = vweird.f32 %v5339
  %vm5346 = vmor %vm5344, %vm5345
  %v5347 = vsel %vm5346, %v5339, %v5343
  %v5348 = vand.u32 2147483647, %v5221
  %vm5349 = vcmp.eq.f32.partialorder %v5348, 8.507059e+37
  %v5350 = vand.u32 %v5221, 2147483648
  %v5351 = vor.u32 1.1754944e-38, %v5350
  %v5352 = vsel %vm5349, %v5351, %v5347
  %v5353 = vmul.f32 %v5182, %v5352
  %v5354 = vrcp.pop %v5224
  %v5355 = vmul.f32 %v5224, %v5354
  %v5356 = vsub.f32 1.0, %v5355
  %v5357 = vmul.f32 %v5354, %v5356
  %v5358 = vadd.f32 %v5354, %v5357
  %vm5359 = vweird.f32 %v5224
  %vm5360 = vweird.f32 %v5354
  %vm5361 = vmor %vm5359, %vm5360
  %v5362 = vsel %vm5361, %v5354, %v5358
  %v5363 = vand.u32 2147483647, %v5224
  %vm5364 = vcmp.eq.f32.partialorder %v5363, 8.507059e+37
  %v5365 = vand.u32 %v5224, 2147483648
  %v5366 = vor.u32 1.1754944e-38, %v5365
  %v5367 = vsel %vm5364, %v5366, %v5362
  %v5368 = vmul.f32 %v5184, %v5367
  %v5369 = vrcp.pop %v5227
  %v5370 = vmul.f32 %v5227, %v5369
  %v5371 = vsub.f32 1.0, %v5370
  %v5372 = vmul.f32 %v5369, %v5371
  %v5373 = vadd.f32 %v5369, %v5372
  %vm5374 = vweird.f32 %v5227
  %vm5375 = vweird.f32 %v5369
  %vm5376 = vmor %vm5374, %vm5375
  %v5377 = vsel %vm5376, %v5369, %v5373
  %v5378 = vand.u32 2147483647, %v5227
  %vm5379 = vcmp.eq.f32.partialorder %v5378, 8.507059e+37
  %v5380 = vand.u32 %v5227, 2147483648
  %v5381 = vor.u32 1.1754944e-38, %v5380
  %v5382 = vsel %vm5379, %v5381, %v5377
  %v5383 = vmul.f32 %v5186, %v5382
  %v5384 = vrcp.pop %v5230
  %v5385 = vmul.f32 %v5230, %v5384
  %v5386 = vsub.f32 1.0, %v5385
  %v5387 = vmul.f32 %v5384, %v5386
  %v5388 = vadd.f32 %v5384, %v5387
  %vm5389 = vweird.f32 %v5230
  %vm5390 = vweird.f32 %v5384
  %vm5391 = vmor %vm5389, %vm5390
  %v5392 = vsel %vm5391, %v5384, %v5388
  %v5393 = vand.u32 2147483647, %v5230
  %vm5394 = vcmp.eq.f32.partialorder %v5393, 8.507059e+37
  %v5395 = vand.u32 %v5230, 2147483648
  %v5396 = vor.u32 1.1754944e-38, %v5395
  %v5397 = vsel %vm5394, %v5396, %v5392
  %v5398 = vmul.f32 %v5188, %v5397
  %v5399 = vrcp.pop %v5233
  %v5400 = vmul.f32 %v5233, %v5399
  %v5401 = vsub.f32 1.0, %v5400
  %v5402 = vmul.f32 %v5399, %v5401
  %v5403 = vadd.f32 %v5399, %v5402
  %vm5404 = vweird.f32 %v5233
  %vm5405 = vweird.f32 %v5399
  %vm5406 = vmor %vm5404, %vm5405
  %v5407 = vsel %vm5406, %v5399, %v5403
  %v5408 = vand.u32 2147483647, %v5233
  %vm5409 = vcmp.eq.f32.partialorder %v5408, 8.507059e+37
  %v5410 = vand.u32 %v5233, 2147483648
  %v5411 = vor.u32 1.1754944e-38, %v5410
  %v5412 = vsel %vm5409, %v5411, %v5407
  %v5413 = vmul.f32 %v5190, %v5412
  %v5414 = vrcp.pop %v5236
  %v5415 = vmul.f32 %v5236, %v5414
  %v5416 = vsub.f32 1.0, %v5415
  %v5417 = vmul.f32 %v5414, %v5416
  %v5418 = vadd.f32 %v5414, %v5417
  %vm5419 = vweird.f32 %v5236
  %vm5420 = vweird.f32 %v5414
  %vm5421 = vmor %vm5419, %vm5420
  %v5422 = vsel %vm5421, %v5414, %v5418
  %v5423 = vand.u32 2147483647, %v5236
  %vm5424 = vcmp.eq.f32.partialorder %v5423, 8.507059e+37
  %v5425 = vand.u32 %v5236, 2147483648
  %v5426 = vor.u32 1.1754944e-38, %v5425
  %v5427 = vsel %vm5424, %v5426, %v5422
  %v5428 = vmul.f32 %v5192, %v5427
  %v5429 = vrcp.pop %v5239
  %v5430 = vmul.f32 %v5239, %v5429
  %v5431 = vsub.f32 1.0, %v5430
  %v5432 = vmul.f32 %v5429, %v5431
  %v5433 = vadd.f32 %v5429, %v5432
  %vm5434 = vweird.f32 %v5239
  %vm5435 = vweird.f32 %v5429
  %vm5436 = vmor %vm5434, %vm5435
  %v5437 = vsel %vm5436, %v5429, %v5433
  %v5438 = vand.u32 2147483647, %v5239
  %vm5439 = vcmp.eq.f32.partialorder %v5438, 8.507059e+37
  %v5440 = vand.u32 %v5239, 2147483648
  %v5441 = vor.u32 1.1754944e-38, %v5440
  %v5442 = vsel %vm5439, %v5441, %v5437
  %v5443 = vmul.f32 %v5194, %v5442
  %v5444 = vrcp.pop %v5242
  %v5445 = vmul.f32 %v5242, %v5444
  %v5446 = vsub.f32 1.0, %v5445
  %v5447 = vmul.f32 %v5444, %v5446
  %v5448 = vadd.f32 %v5444, %v5447
  %vm5449 = vweird.f32 %v5242
  %vm5450 = vweird.f32 %v5444
  %vm5451 = vmor %vm5449, %vm5450
  %v5452 = vsel %vm5451, %v5444, %v5448
  %v5453 = vand.u32 2147483647, %v5242
  %vm5454 = vcmp.eq.f32.partialorder %v5453, 8.507059e+37
  %v5455 = vand.u32 %v5242, 2147483648
  %v5456 = vor.u32 1.1754944e-38, %v5455
  %v5457 = vsel %vm5454, %v5456, %v5452
  %v5458 = vmul.f32 %v5196, %v5457
  %v5459 = vrcp.pop %v5245
  %v5460 = vmul.f32 %v5245, %v5459
  %v5461 = vsub.f32 1.0, %v5460
  %v5462 = vmul.f32 %v5459, %v5461
  %v5463 = vadd.f32 %v5459, %v5462
  %vm5464 = vweird.f32 %v5245
  %vm5465 = vweird.f32 %v5459
  %vm5466 = vmor %vm5464, %vm5465
  %v5467 = vsel %vm5466, %v5459, %v5463
  %v5468 = vand.u32 2147483647, %v5245
  %vm5469 = vcmp.eq.f32.partialorder %v5468, 8.507059e+37
  %v5470 = vand.u32 %v5245, 2147483648
  %v5471 = vor.u32 1.1754944e-38, %v5470
  %v5472 = vsel %vm5469, %v5471, %v5467
  %v5473 = vmul.f32 %v5198, %v5472
  %v5474 = vrcp.pop %v5248
  %v5475 = vmul.f32 %v5248, %v5474
  %v5476 = vsub.f32 1.0, %v5475
  %v5477 = vmul.f32 %v5474, %v5476
  %v5478 = vadd.f32 %v5474, %v5477
  %vm5479 = vweird.f32 %v5248
  %vm5480 = vweird.f32 %v5474
  %vm5481 = vmor %vm5479, %vm5480
  %v5482 = vsel %vm5481, %v5474, %v5478
  %v5483 = vand.u32 2147483647, %v5248
  %vm5484 = vcmp.eq.f32.partialorder %v5483, 8.507059e+37
  %v5485 = vand.u32 %v5248, 2147483648
  %v5486 = vor.u32 1.1754944e-38, %v5485
  %v5487 = vsel %vm5484, %v5486, %v5482
  %v5488 = vmul.f32 %v5200, %v5487
  %5489 = vst [vmem:[#allocation1] ss:$2 sm:$0xff] %v126
  %v5490 = vld.sshfl [vmem:[#allocation1] sm:$0xff pattern:$0x75316420]
  %5491 = vrot.lane.b32.xlu0 %v5490, 40
  %v5492 = vpop.permute.xlu0 %5491
  %v5494 = vsel %vm1024, %v5263, 0
  %v5496 = vsel %vm1028, %v5492, 0
  %5498 = vmatpush.msra.mxu0 0.0
  %5499 = vmatpush.msra.mxu0 0.0
  %5500 = vmatpush.msra.mxu0 0.0
  %5501 = vmatpush.msra.mxu0 0.0
  %5502 = vmatpush.msra.mxu0 0.0
  %5503 = vmatpush.msra.mxu0 0.0
  %5504 = vmatpush.msra.mxu0 0.0
  %5505 = vmatpush.msra.mxu0 0.0
  %5506 = vmatpush.msra.mxu0 0.0
  %5507 = vmatpush.msra.mxu0 0.0
  %5508 = vmatpush.msra.mxu0 0.0
  %5509 = vmatpush.msra.mxu0 0.0
  %5510 = vmatpush.msra.mxu0 0.0
  %5511 = vmatpush.msra.mxu0 0.0
  %5512 = vmatpush.msra.mxu0 0.0
  %5513 = vmatpush.msra.mxu0 %v5496
  %5514 = vmatmul.f32.gmra.mxu0 %v5494
  %v5515 = vpop.f32.mrf.mxu0
  %v5516 = vadd.f32 0.0, %v5515
  %5517 = vdwg.mxu0
  %5518 = vst [vmem:[#allocation1] ss:$2 sm:$0xff] %v157
  %v5519 = vld.sshfl [vmem:[#allocation1] sm:$0xff pattern:$0x75316420]
  %5520 = vrot.lane.b32.xlu0 %v5519, 40
  %v5521 = vpop.permute.xlu0 %5520
  %v5523 = vsel %vm1024, %v5278, 0
  %v5525 = vsel %vm1028, %v5521, 0
  %5527 = vmatpush.msra.mxu0 0.0
  %5528 = vmatpush.msra.mxu0 0.0
  %5529 = vmatpush.msra.mxu0 0.0
  %5530 = vmatpush.msra.mxu0 0.0
  %5531 = vmatpush.msra.mxu0 0.0
  %5532 = vmatpush.msra.mxu0 0.0
  %5533 = vmatpush.msra.mxu0 0.0
  %5534 = vmatpush.msra.mxu0 0.0
  %5535 = vmatpush.msra.mxu0 0.0
  %5536 = vmatpush.msra.mxu0 0.0
  %5537 = vmatpush.msra.mxu0 0.0
  %5538 = vmatpush.msra.mxu0 0.0
  %5539 = vmatpush.msra.mxu0 0.0
  %5540 = vmatpush.msra.mxu0 0.0
  %5541 = vmatpush.msra.mxu0 0.0
  %5542 = vmatpush.msra.mxu0 %v5525
  %5543 = vmatmul.f32.gmra.mxu0 %v5523
  %v5544 = vpop.f32.mrf.mxu0
  %v5545 = vadd.f32 0.0, %v5544
  %5546 = vdwg.mxu0
  %5547 = vst [vmem:[#allocation1] ss:$2 sm:$0xff] %v129
  %v5548 = vld.sshfl [vmem:[#allocation1] sm:$0xff pattern:$0x75316420]
  %5549 = vrot.lane.b32.xlu0 %v5548, 40
  %v5550 = vpop.permute.xlu0 %5549
  %v5552 = vsel %vm1024, %v5293, 0
  %v5554 = vsel %vm1028, %v5550, 0
  %5556 = vmatpush.msra.mxu0 0.0
  %5557 = vmatpush.msra.mxu0 0.0
  %5558 = vmatpush.msra.mxu0 0.0
  %5559 = vmatpush.msra.mxu0 0.0
  %5560 = vmatpush.msra.mxu0 0.0
  %5561 = vmatpush.msra.mxu0 0.0
  %5562 = vmatpush.msra.mxu0 0.0
  %5563 = vmatpush.msra.mxu0 0.0
  %5564 = vmatpush.msra.mxu0 0.0
  %5565 = vmatpush.msra.mxu0 0.0
  %5566 = vmatpush.msra.mxu0 0.0
  %5567 = vmatpush.msra.mxu0 0.0
  %5568 = vmatpush.msra.mxu0 0.0
  %5569 = vmatpush.msra.mxu0 0.0
  %5570 = vmatpush.msra.mxu0 0.0
  %5571 = vmatpush.msra.mxu0 %v5554
  %5572 = vmatmul.f32.gmra.mxu0 %v5552
  %v5573 = vpop.f32.mrf.mxu0
  %v5574 = vadd.f32 0.0, %v5573
  %5575 = vdwg.mxu0
  %5576 = vst [vmem:[#allocation1] ss:$2 sm:$0xff] %v158
  %v5577 = vld.sshfl [vmem:[#allocation1] sm:$0xff pattern:$0x75316420]
  %5578 = vrot.lane.b32.xlu0 %v5577, 40
  %v5579 = vpop.permute.xlu0 %5578
  %v5581 = vsel %vm1024, %v5308, 0
  %v5583 = vsel %vm1028, %v5579, 0
  %5585 = vmatpush.msra.mxu0 0.0
  %5586 = vmatpush.msra.mxu0 0.0
  %5587 = vmatpush.msra.mxu0 0.0
  %5588 = vmatpush.msra.mxu0 0.0
  %5589 = vmatpush.msra.mxu0 0.0
  %5590 = vmatpush.msra.mxu0 0.0
  %5591 = vmatpush.msra.mxu0 0.0
  %5592 = vmatpush.msra.mxu0 0.0
  %5593 = vmatpush.msra.mxu0 0.0
  %5594 = vmatpush.msra.mxu0 0.0
  %5595 = vmatpush.msra.mxu0 0.0
  %5596 = vmatpush.msra.mxu0 0.0
  %5597 = vmatpush.msra.mxu0 0.0
  %5598 = vmatpush.msra.mxu0 0.0
  %5599 = vmatpush.msra.mxu0 0.0
  %5600 = vmatpush.msra.mxu0 %v5583
  %5601 = vmatmul.f32.gmra.mxu0 %v5581
  %v5602 = vpop.f32.mrf.mxu0
  %v5603 = vadd.f32 0.0, %v5602
  %5604 = vdwg.mxu0
  %5605 = vst [vmem:[#allocation1] ss:$2 sm:$0xff] %v132
  %v5606 = vld.sshfl [vmem:[#allocation1] sm:$0xff pattern:$0x75316420]
  %5607 = vrot.lane.b32.xlu0 %v5606, 40
  %v5608 = vpop.permute.xlu0 %5607
  %v5610 = vsel %vm1024, %v5323, 0
  %v5612 = vsel %vm1028, %v5608, 0
  %5614 = vmatpush.msra.mxu0 0.0
  %5615 = vmatpush.msra.mxu0 0.0
  %5616 = vmatpush.msra.mxu0 0.0
  %5617 = vmatpush.msra.mxu0 0.0
  %5618 = vmatpush.msra.mxu0 0.0
  %5619 = vmatpush.msra.mxu0 0.0
  %5620 = vmatpush.msra.mxu0 0.0
  %5621 = vmatpush.msra.mxu0 0.0
  %5622 = vmatpush.msra.mxu0 0.0
  %5623 = vmatpush.msra.mxu0 0.0
  %5624 = vmatpush.msra.mxu0 0.0
  %5625 = vmatpush.msra.mxu0 0.0
  %5626 = vmatpush.msra.mxu0 0.0
  %5627 = vmatpush.msra.mxu0 0.0
  %5628 = vmatpush.msra.mxu0 0.0
  %5629 = vmatpush.msra.mxu0 %v5612
  %5630 = vmatmul.f32.gmra.mxu0 %v5610
  %v5631 = vpop.f32.mrf.mxu0
  %v5632 = vadd.f32 0.0, %v5631
  %5633 = vdwg.mxu0
  %5634 = vst [vmem:[#allocation1] ss:$2 sm:$0xff] %v159
  %v5635 = vld.sshfl [vmem:[#allocation1] sm:$0xff pattern:$0x75316420]
  %5636 = vrot.lane.b32.xlu0 %v5635, 40
  %v5637 = vpop.permute.xlu0 %5636
  %v5639 = vsel %vm1024, %v5338, 0
  %v5641 = vsel %vm1028, %v5637, 0
  %5643 = vmatpush.msra.mxu0 0.0
  %5644 = vmatpush.msra.mxu0 0.0
  %5645 = vmatpush.msra.mxu0 0.0
  %5646 = vmatpush.msra.mxu0 0.0
  %5647 = vmatpush.msra.mxu0 0.0
  %5648 = vmatpush.msra.mxu0 0.0
  %5649 = vmatpush.msra.mxu0 0.0
  %5650 = vmatpush.msra.mxu0 0.0
  %5651 = vmatpush.msra.mxu0 0.0
  %5652 = vmatpush.msra.mxu0 0.0
  %5653 = vmatpush.msra.mxu0 0.0
  %5654 = vmatpush.msra.mxu0 0.0
  %5655 = vmatpush.msra.mxu0 0.0
  %5656 = vmatpush.msra.mxu0 0.0
  %5657 = vmatpush.msra.mxu0 0.0
  %5658 = vmatpush.msra.mxu0 %v5641
  %5659 = vmatmul.f32.gmra.mxu0 %v5639
  %v5660 = vpop.f32.mrf.mxu0
  %v5661 = vadd.f32 0.0, %v5660
  %5662 = vdwg.mxu0
  %5663 = vst [vmem:[#allocation1] ss:$2 sm:$0xff] %v135
  %v5664 = vld.sshfl [vmem:[#allocation1] sm:$0xff pattern:$0x75316420]
  %5665 = vrot.lane.b32.xlu0 %v5664, 40
  %v5666 = vpop.permute.xlu0 %5665
  %v5668 = vsel %vm1024, %v5353, 0
  %v5670 = vsel %vm1028, %v5666, 0
  %5672 = vmatpush.msra.mxu0 0.0
  %5673 = vmatpush.msra.mxu0 0.0
  %5674 = vmatpush.msra.mxu0 0.0
  %5675 = vmatpush.msra.mxu0 0.0
  %5676 = vmatpush.msra.mxu0 0.0
  %5677 = vmatpush.msra.mxu0 0.0
  %5678 = vmatpush.msra.mxu0 0.0
  %5679 = vmatpush.msra.mxu0 0.0
  %5680 = vmatpush.msra.mxu0 0.0
  %5681 = vmatpush.msra.mxu0 0.0
  %5682 = vmatpush.msra.mxu0 0.0
  %5683 = vmatpush.msra.mxu0 0.0
  %5684 = vmatpush.msra.mxu0 0.0
  %5685 = vmatpush.msra.mxu0 0.0
  %5686 = vmatpush.msra.mxu0 0.0
  %5687 = vmatpush.msra.mxu0 %v5670
  %5688 = vmatmul.f32.gmra.mxu0 %v5668
  %v5689 = vpop.f32.mrf.mxu0
  %v5690 = vadd.f32 0.0, %v5689
  %5691 = vdwg.mxu0
  %5692 = vst [vmem:[#allocation1] ss:$2 sm:$0xff] %v160
  %v5693 = vld.sshfl [vmem:[#allocation1] sm:$0xff pattern:$0x75316420]
  %5694 = vrot.lane.b32.xlu0 %v5693, 40
  %v5695 = vpop.permute.xlu0 %5694
  %v5697 = vsel %vm1024, %v5368, 0
  %v5699 = vsel %vm1028, %v5695, 0
  %5701 = vmatpush.msra.mxu0 0.0
  %5702 = vmatpush.msra.mxu0 0.0
  %5703 = vmatpush.msra.mxu0 0.0
  %5704 = vmatpush.msra.mxu0 0.0
  %5705 = vmatpush.msra.mxu0 0.0
  %5706 = vmatpush.msra.mxu0 0.0
  %5707 = vmatpush.msra.mxu0 0.0
  %5708 = vmatpush.msra.mxu0 0.0
  %5709 = vmatpush.msra.mxu0 0.0
  %5710 = vmatpush.msra.mxu0 0.0
  %5711 = vmatpush.msra.mxu0 0.0
  %5712 = vmatpush.msra.mxu0 0.0
  %5713 = vmatpush.msra.mxu0 0.0
  %5714 = vmatpush.msra.mxu0 0.0
  %5715 = vmatpush.msra.mxu0 0.0
  %5716 = vmatpush.msra.mxu0 %v5699
  %5717 = vmatmul.f32.gmra.mxu0 %v5697
  %v5718 = vpop.f32.mrf.mxu0
  %v5719 = vadd.f32 0.0, %v5718
  %5720 = vdwg.mxu0
  %5721 = vst [vmem:[#allocation1] ss:$2 sm:$0xff] %v138
  %v5722 = vld.sshfl [vmem:[#allocation1] sm:$0xff pattern:$0x75316420]
  %5723 = vrot.lane.b32.xlu0 %v5722, 40
  %v5724 = vpop.permute.xlu0 %5723
  %v5726 = vsel %vm1024, %v5383, 0
  %v5728 = vsel %vm1028, %v5724, 0
  %5730 = vmatpush.msra.mxu0 0.0
  %5731 = vmatpush.msra.mxu0 0.0
  %5732 = vmatpush.msra.mxu0 0.0
  %5733 = vmatpush.msra.mxu0 0.0
  %5734 = vmatpush.msra.mxu0 0.0
  %5735 = vmatpush.msra.mxu0 0.0
  %5736 = vmatpush.msra.mxu0 0.0
  %5737 = vmatpush.msra.mxu0 0.0
  %5738 = vmatpush.msra.mxu0 0.0
  %5739 = vmatpush.msra.mxu0 0.0
  %5740 = vmatpush.msra.mxu0 0.0
  %5741 = vmatpush.msra.mxu0 0.0
  %5742 = vmatpush.msra.mxu0 0.0
  %5743 = vmatpush.msra.mxu0 0.0
  %5744 = vmatpush.msra.mxu0 0.0
  %5745 = vmatpush.msra.mxu0 %v5728
  %5746 = vmatmul.f32.gmra.mxu0 %v5726
  %v5747 = vpop.f32.mrf.mxu0
  %v5748 = vadd.f32 0.0, %v5747
  %5749 = vdwg.mxu0
  %5750 = vst [vmem:[#allocation1] ss:$2 sm:$0xff] %v161
  %v5751 = vld.sshfl [vmem:[#allocation1] sm:$0xff pattern:$0x75316420]
  %5752 = vrot.lane.b32.xlu0 %v5751, 40
  %v5753 = vpop.permute.xlu0 %5752
  %v5755 = vsel %vm1024, %v5398, 0
  %v5757 = vsel %vm1028, %v5753, 0
  %5759 = vmatpush.msra.mxu0 0.0
  %5760 = vmatpush.msra.mxu0 0.0
  %5761 = vmatpush.msra.mxu0 0.0
  %5762 = vmatpush.msra.mxu0 0.0
  %5763 = vmatpush.msra.mxu0 0.0
  %5764 = vmatpush.msra.mxu0 0.0
  %5765 = vmatpush.msra.mxu0 0.0
  %5766 = vmatpush.msra.mxu0 0.0
  %5767 = vmatpush.msra.mxu0 0.0
  %5768 = vmatpush.msra.mxu0 0.0
  %5769 = vmatpush.msra.mxu0 0.0
  %5770 = vmatpush.msra.mxu0 0.0
  %5771 = vmatpush.msra.mxu0 0.0
  %5772 = vmatpush.msra.mxu0 0.0
  %5773 = vmatpush.msra.mxu0 0.0
  %5774 = vmatpush.msra.mxu0 %v5757
  %5775 = vmatmul.f32.gmra.mxu0 %v5755
  %v5776 = vpop.f32.mrf.mxu0
  %v5777 = vadd.f32 0.0, %v5776
  %5778 = vdwg.mxu0
  %5779 = vst [vmem:[#allocation1] ss:$2 sm:$0xff] %v141
  %v5780 = vld.sshfl [vmem:[#allocation1] sm:$0xff pattern:$0x75316420]
  %5781 = vrot.lane.b32.xlu0 %v5780, 40
  %v5782 = vpop.permute.xlu0 %5781
  %v5784 = vsel %vm1024, %v5413, 0
  %v5786 = vsel %vm1028, %v5782, 0
  %5788 = vmatpush.msra.mxu0 0.0
  %5789 = vmatpush.msra.mxu0 0.0
  %5790 = vmatpush.msra.mxu0 0.0
  %5791 = vmatpush.msra.mxu0 0.0
  %5792 = vmatpush.msra.mxu0 0.0
  %5793 = vmatpush.msra.mxu0 0.0
  %5794 = vmatpush.msra.mxu0 0.0
  %5795 = vmatpush.msra.mxu0 0.0
  %5796 = vmatpush.msra.mxu0 0.0
  %5797 = vmatpush.msra.mxu0 0.0
  %5798 = vmatpush.msra.mxu0 0.0
  %5799 = vmatpush.msra.mxu0 0.0
  %5800 = vmatpush.msra.mxu0 0.0
  %5801 = vmatpush.msra.mxu0 0.0
  %5802 = vmatpush.msra.mxu0 0.0
  %5803 = vmatpush.msra.mxu0 %v5786
  %5804 = vmatmul.f32.gmra.mxu0 %v5784
  %v5805 = vpop.f32.mrf.mxu0
  %v5806 = vadd.f32 0.0, %v5805
  %5807 = vdwg.mxu0
  %5808 = vst [vmem:[#allocation1] ss:$2 sm:$0xff] %v162
  %v5809 = vld.sshfl [vmem:[#allocation1] sm:$0xff pattern:$0x75316420]
  %5810 = vrot.lane.b32.xlu0 %v5809, 40
  %v5811 = vpop.permute.xlu0 %5810
  %v5813 = vsel %vm1024, %v5428, 0
  %v5815 = vsel %vm1028, %v5811, 0
  %5817 = vmatpush.msra.mxu0 0.0
  %5818 = vmatpush.msra.mxu0 0.0
  %5819 = vmatpush.msra.mxu0 0.0
  %5820 = vmatpush.msra.mxu0 0.0
  %5821 = vmatpush.msra.mxu0 0.0
  %5822 = vmatpush.msra.mxu0 0.0
  %5823 = vmatpush.msra.mxu0 0.0
  %5824 = vmatpush.msra.mxu0 0.0
  %5825 = vmatpush.msra.mxu0 0.0
  %5826 = vmatpush.msra.mxu0 0.0
  %5827 = vmatpush.msra.mxu0 0.0
  %5828 = vmatpush.msra.mxu0 0.0
  %5829 = vmatpush.msra.mxu0 0.0
  %5830 = vmatpush.msra.mxu0 0.0
  %5831 = vmatpush.msra.mxu0 0.0
  %5832 = vmatpush.msra.mxu0 %v5815
  %5833 = vmatmul.f32.gmra.mxu0 %v5813
  %v5834 = vpop.f32.mrf.mxu0
  %v5835 = vadd.f32 0.0, %v5834
  %5836 = vdwg.mxu0
  %5837 = vst [vmem:[#allocation1] ss:$2 sm:$0xff] %v144
  %v5838 = vld.sshfl [vmem:[#allocation1] sm:$0xff pattern:$0x75316420]
  %5839 = vrot.lane.b32.xlu0 %v5838, 40
  %v5840 = vpop.permute.xlu0 %5839
  %v5842 = vsel %vm1024, %v5443, 0
  %v5844 = vsel %vm1028, %v5840, 0
  %5846 = vmatpush.msra.mxu0 0.0
  %5847 = vmatpush.msra.mxu0 0.0
  %5848 = vmatpush.msra.mxu0 0.0
  %5849 = vmatpush.msra.mxu0 0.0
  %5850 = vmatpush.msra.mxu0 0.0
  %5851 = vmatpush.msra.mxu0 0.0
  %5852 = vmatpush.msra.mxu0 0.0
  %5853 = vmatpush.msra.mxu0 0.0
  %5854 = vmatpush.msra.mxu0 0.0
  %5855 = vmatpush.msra.mxu0 0.0
  %5856 = vmatpush.msra.mxu0 0.0
  %5857 = vmatpush.msra.mxu0 0.0
  %5858 = vmatpush.msra.mxu0 0.0
  %5859 = vmatpush.msra.mxu0 0.0
  %5860 = vmatpush.msra.mxu0 0.0
  %5861 = vmatpush.msra.mxu0 %v5844
  %5862 = vmatmul.f32.gmra.mxu0 %v5842
  %v5863 = vpop.f32.mrf.mxu0
  %v5864 = vadd.f32 0.0, %v5863
  %5865 = vdwg.mxu0
  %5866 = vst [vmem:[#allocation1] ss:$2 sm:$0xff] %v163
  %v5867 = vld.sshfl [vmem:[#allocation1] sm:$0xff pattern:$0x75316420]
  %5868 = vrot.lane.b32.xlu0 %v5867, 40
  %v5869 = vpop.permute.xlu0 %5868
  %v5871 = vsel %vm1024, %v5458, 0
  %v5873 = vsel %vm1028, %v5869, 0
  %5875 = vmatpush.msra.mxu0 0.0
  %5876 = vmatpush.msra.mxu0 0.0
  %5877 = vmatpush.msra.mxu0 0.0
  %5878 = vmatpush.msra.mxu0 0.0
  %5879 = vmatpush.msra.mxu0 0.0
  %5880 = vmatpush.msra.mxu0 0.0
  %5881 = vmatpush.msra.mxu0 0.0
  %5882 = vmatpush.msra.mxu0 0.0
  %5883 = vmatpush.msra.mxu0 0.0
  %5884 = vmatpush.msra.mxu0 0.0
  %5885 = vmatpush.msra.mxu0 0.0
  %5886 = vmatpush.msra.mxu0 0.0
  %5887 = vmatpush.msra.mxu0 0.0
  %5888 = vmatpush.msra.mxu0 0.0
  %5889 = vmatpush.msra.mxu0 0.0
  %5890 = vmatpush.msra.mxu0 %v5873
  %5891 = vmatmul.f32.gmra.mxu0 %v5871
  %v5892 = vpop.f32.mrf.mxu0
  %v5893 = vadd.f32 0.0, %v5892
  %5894 = vdwg.mxu0
  %5895 = vst [vmem:[#allocation1] ss:$2 sm:$0xff] %v147
  %v5896 = vld.sshfl [vmem:[#allocation1] sm:$0xff pattern:$0x75316420]
  %5897 = vrot.lane.b32.xlu0 %v5896, 40
  %v5898 = vpop.permute.xlu0 %5897
  %v5900 = vsel %vm1024, %v5473, 0
  %v5902 = vsel %vm1028, %v5898, 0
  %5904 = vmatpush.msra.mxu0 0.0
  %5905 = vmatpush.msra.mxu0 0.0
  %5906 = vmatpush.msra.mxu0 0.0
  %5907 = vmatpush.msra.mxu0 0.0
  %5908 = vmatpush.msra.mxu0 0.0
  %5909 = vmatpush.msra.mxu0 0.0
  %5910 = vmatpush.msra.mxu0 0.0
  %5911 = vmatpush.msra.mxu0 0.0
  %5912 = vmatpush.msra.mxu0 0.0
  %5913 = vmatpush.msra.mxu0 0.0
  %5914 = vmatpush.msra.mxu0 0.0
  %5915 = vmatpush.msra.mxu0 0.0
  %5916 = vmatpush.msra.mxu0 0.0
  %5917 = vmatpush.msra.mxu0 0.0
  %5918 = vmatpush.msra.mxu0 0.0
  %5919 = vmatpush.msra.mxu0 %v5902
  %5920 = vmatmul.f32.gmra.mxu0 %v5900
  %v5921 = vpop.f32.mrf.mxu0
  %v5922 = vadd.f32 0.0, %v5921
  %5923 = vdwg.mxu0
  %5924 = vst [vmem:[#allocation1] ss:$2 sm:$0xff] %v164
  %v5925 = vld.sshfl [vmem:[#allocation1] sm:$0xff pattern:$0x75316420]
  %5926 = vrot.lane.b32.xlu0 %v5925, 40
  %v5927 = vpop.permute.xlu0 %5926
  %v5929 = vsel %vm1024, %v5488, 0
  %v5931 = vsel %vm1028, %v5927, 0
  %5933 = vmatpush.msra.mxu0 0.0
  %5934 = vmatpush.msra.mxu0 0.0
  %5935 = vmatpush.msra.mxu0 0.0
  %5936 = vmatpush.msra.mxu0 0.0
  %5937 = vmatpush.msra.mxu0 0.0
  %5938 = vmatpush.msra.mxu0 0.0
  %5939 = vmatpush.msra.mxu0 0.0
  %5940 = vmatpush.msra.mxu0 0.0
  %5941 = vmatpush.msra.mxu0 0.0
  %5942 = vmatpush.msra.mxu0 0.0
  %5943 = vmatpush.msra.mxu0 0.0
  %5944 = vmatpush.msra.mxu0 0.0
  %5945 = vmatpush.msra.mxu0 0.0
  %5946 = vmatpush.msra.mxu0 0.0
  %5947 = vmatpush.msra.mxu0 0.0
  %5948 = vmatpush.msra.mxu0 %v5931
  %5949 = vmatmul.f32.gmra.mxu0 %v5929
  %v5950 = vpop.f32.mrf.mxu0
  %v5951 = vadd.f32 0.0, %v5950
  %5952 = vdwg.mxu0
  %v5953 = vld [vmem:[%s3 + $0x18] sm:$0xff]
  %5970 = vst [vmem:[#allocation1] ss:$2 sm:$0xff] %v5516
  %s5971 = scalar_lea.vmem [#allocation1], 1
  %5972 = vst [vmem:[%s5971] ss:$2 sm:$0xff] %v5545
  %s5973 = scalar_lea.vmem [#allocation1], 16
  %5974 = vst [vmem:[%s5973] ss:$2 sm:$0xff] %v5574
  %s5975 = scalar_lea.vmem [#allocation1], 17
  %5976 = vst [vmem:[%s5975] ss:$2 sm:$0xff] %v5603
  %s5977 = scalar_lea.vmem [#allocation1], 32
  %5978 = vst [vmem:[%s5977] ss:$2 sm:$0xff] %v5632
  %s5979 = scalar_lea.vmem [#allocation1], 33
  %5980 = vst [vmem:[%s5979] ss:$2 sm:$0xff] %v5661
  %s5981 = scalar_lea.vmem [#allocation1], 48
  %5982 = vst [vmem:[%s5981] ss:$2 sm:$0xff] %v5690
  %s5983 = scalar_lea.vmem [#allocation1], 49
  %5984 = vst [vmem:[%s5983] ss:$2 sm:$0xff] %v5719
  %v5985 = vld.sshfl [vmem:[#allocation1] sm:$0xff pattern:$0x75316420]
  %v5986 = vld.sshfl [vmem:[#allocation1 + $0x10] sm:$0xff pattern:$0x75316420]
  %v5987 = vld.sshfl [vmem:[#allocation1 + $0x20] sm:$0xff pattern:$0x75316420]
  %v5988 = vld.sshfl [vmem:[#allocation1 + $0x30] sm:$0xff pattern:$0x75316420]
  %5989 = vst [vmem:[#allocation1] ss:$2 sm:$0xff] %v5748
  %5990 = vst [vmem:[%s5971] ss:$2 sm:$0xff] %v5777
  %5991 = vst [vmem:[%s5973] ss:$2 sm:$0xff] %v5806
  %5992 = vst [vmem:[%s5975] ss:$2 sm:$0xff] %v5835
  %5993 = vst [vmem:[%s5977] ss:$2 sm:$0xff] %v5864
  %5994 = vst [vmem:[%s5979] ss:$2 sm:$0xff] %v5893
  %5995 = vst [vmem:[%s5981] ss:$2 sm:$0xff] %v5922
  %5996 = vst [vmem:[%s5983] ss:$2 sm:$0xff] %v5951
  %v5997 = vld.sshfl [vmem:[#allocation1] sm:$0xff pattern:$0x75316420]
  %v5998 = vld.sshfl [vmem:[#allocation1 + $0x10] sm:$0xff pattern:$0x75316420]
  %v5999 = vld.sshfl [vmem:[#allocation1 + $0x20] sm:$0xff pattern:$0x75316420]
  %v6000 = vld.sshfl [vmem:[#allocation1 + $0x30] sm:$0xff pattern:$0x75316420]
  %v6001 = vsel %vm174, %v5985, 0
  %v6003 = vsel %vm174, %v5986, 0
  %v6005 = vsel %vm174, %v5987, 0
  %v6007 = vsel %vm174, %v5988, 0
  %v6009 = vsel %vm174, %v5997, 0
  %v6011 = vsel %vm174, %v5998, 0
  %v6013 = vsel %vm174, %v5999, 0
  %v6015 = vsel %vm174, %v6000, 0
  %6017 = vmatpush.msra.mxu0 0.0
  %6018 = vmatpush.msra.mxu0 0.0
  %6019 = vmatpush.msra.mxu0 0.0
  %6020 = vmatpush.msra.mxu0 0.0
  %6021 = vmatpush.msra.mxu0 0.0
  %6022 = vmatpush.msra.mxu0 0.0
  %6023 = vmatpush.msra.mxu0 0.0
  %6024 = vmatpush.msra.mxu0 0.0
  %6025 = vmatpush.msra.mxu0 0.0
  %6026 = vmatpush.msra.mxu0 0.0
  %6027 = vmatpush.msra.mxu0 0.0
  %6028 = vmatpush.msra.mxu0 0.0
  %6029 = vmatpush.msra.mxu0 0.0
  %6030 = vmatpush.msra.mxu0 0.0
  %6031 = vmatpush.msra.mxu0 0.0
  %6032 = vmatpush.msra.mxu0 %v5953
  %6033 = vmatmul.f32.gmra.mxu0 %v6001
  %v6034 = vpop.f32.mrf.mxu0
  %v6035 = vadd.f32 0.0, %v6034
  %6036 = vmatmul.f32.gmra.mxu0 %v6003
  %v6037 = vpop.f32.mrf.mxu0
  %v6038 = vadd.f32 0.0, %v6037
  %6039 = vmatmul.f32.gmra.mxu0 %v6005
  %v6040 = vpop.f32.mrf.mxu0
  %v6041 = vadd.f32 0.0, %v6040
  %6042 = vmatmul.f32.gmra.mxu0 %v6007
  %v6043 = vpop.f32.mrf.mxu0
  %v6044 = vadd.f32 0.0, %v6043
  %6045 = vmatmul.f32.gmra.mxu0 %v6009
  %v6046 = vpop.f32.mrf.mxu0
  %v6047 = vadd.f32 0.0, %v6046
  %6048 = vmatmul.f32.gmra.mxu0 %v6011
  %v6049 = vpop.f32.mrf.mxu0
  %v6050 = vadd.f32 0.0, %v6049
  %6051 = vmatmul.f32.gmra.mxu0 %v6013
  %v6052 = vpop.f32.mrf.mxu0
  %v6053 = vadd.f32 0.0, %v6052
  %6054 = vmatmul.f32.gmra.mxu0 %v6015
  %v6055 = vpop.f32.mrf.mxu0
  %v6056 = vadd.f32 0.0, %v6055
  %6057 = vdwg.mxu0
  %v6058 = vadd.f32 %v4569, %v6035
  %v6059 = vadd.f32 %v4570, %v6038
  %v6060 = vadd.f32 %v4571, %v6041
  %v6061 = vadd.f32 %v4572, %v6044
  %v6062 = vadd.f32 %v4573, %v6047
  %v6063 = vadd.f32 %v4574, %v6050
  %v6064 = vadd.f32 %v4575, %v6053
  %v6065 = vadd.f32 %v4576, %v6056
  %v6074 = vrot.slane %v6058, 4
  %v6075 = vrot.slane %v6059, 4
  %v6076 = vrot.slane %v6060, 4
  %v6077 = vrot.slane %v6061, 4
  %v6078 = vrot.slane %v6062, 4
  %v6079 = vrot.slane %v6063, 4
  %v6080 = vrot.slane %v6064, 4
  %v6081 = vrot.slane %v6065, 4
  %v6090 = vadd.f32 %v20, %v6058
  %v6091 = vadd.f32 %v21, %v6074
  %v6092 = vadd.f32 %v22, %v6059
  %v6093 = vadd.f32 %v23, %v6075
  %v6094 = vadd.f32 %v24, %v6060
  %v6095 = vadd.f32 %v25, %v6076
  %v6096 = vadd.f32 %v26, %v6061
  %v6097 = vadd.f32 %v27, %v6077
  %v6098 = vadd.f32 %v28, %v6062
  %v6099 = vadd.f32 %v29, %v6078
  %v6100 = vadd.f32 %v30, %v6063
  %v6101 = vadd.f32 %v31, %v6079
  %v6102 = vadd.f32 %v32, %v6064
  %v6103 = vadd.f32 %v33, %v6080
  %v6104 = vadd.f32 %v34, %v6065
  %v6105 = vadd.f32 %v35, %v6081
  %vm6106 = vcmask 257024
  %6107 = vst.msk [vmem:[%s5] sm:$0xf] %vm6106, %v6090
  %6108 = vst.msk [vmem:[%s5 + $0x4] sm:$0xf] %vm6106, %v6091
  %6109 = vst.msk [vmem:[%s5 + $0x8] sm:$0xf] %vm6106, %v6092
  %6110 = vst.msk [vmem:[%s5 + $0xc] sm:$0xf] %vm6106, %v6093
  %6111 = vst.msk [vmem:[%s5 + $0x10] sm:$0xf] %vm6106, %v6094
  %6112 = vst.msk [vmem:[%s5 + $0x14] sm:$0xf] %vm6106, %v6095
  %6113 = vst.msk [vmem:[%s5 + $0x18] sm:$0xf] %vm6106, %v6096
  %6114 = vst.msk [vmem:[%s5 + $0x1c] sm:$0xf] %vm6106, %v6097
  %6115 = vst.msk [vmem:[%s5 + $0x20] sm:$0xf] %vm6106, %v6098
  %6116 = vst.msk [vmem:[%s5 + $0x24] sm:$0xf] %vm6106, %v6099
  %6117 = vst.msk [vmem:[%s5 + $0x28] sm:$0xf] %vm6106, %v6100
  %6118 = vst.msk [vmem:[%s5 + $0x2c] sm:$0xf] %vm6106, %v6101
  %6119 = vst.msk [vmem:[%s5 + $0x30] sm:$0xf] %vm6106, %v6102
  %6120 = vst.msk [vmem:[%s5 + $0x34] sm:$0xf] %vm6106, %v6103
  %6121 = vst.msk [vmem:[%s5 + $0x38] sm:$0xf] %vm6106, %v6104
  %6122 = vst.msk [vmem:[%s5 + $0x3c] sm:$0xf] %vm6106, %v6105
  // Predicated region
  $region22: #{_lambda_.4} parent=0 // pred_check
    _
  $region23: #{_lambda_.4} parent=0 // pred_check_branch
    %6124 = sbr.rel (0) target = $region25
  $region24: #{_lambda_.4} parent=0 // pred_region
    _
  $region25: #{_lambda_.4} parent=0 // pred_fallthru
    _
  // Predicated region
  $region26: #{_lambda_.4} parent=0 // pred_check
    _
  $region27: #{_lambda_.4} parent=0 // pred_check_branch
    %6126 = sbr.rel (0) target = $region29
  $region28: #{_lambda_.4} parent=0 // pred_region
    _
  $region29: #{_lambda_.4} parent=0 // pred_fallthru
    _

</llo_original>
